<compile_context>
chip_gen: v5e
topology: v5e:2x2
jax: 0.10.0
libtpu: 0.0.40
codegen_flags: <defaults>
</compile_context>

<pallas_src>
import math
from functools import partial

import jax
import jax.numpy as jnp
from jax.experimental import pallas as pl
from jax.experimental.pallas import tpu as pltpu


# ----------------------------------------------------------------------------
# small helpers
# ----------------------------------------------------------------------------
def _round_up(v, m):
    return ((v + m - 1) // m) * m


def _pick_tm(M):
    # Large-M calls get 512-row tiles (per-step overhead amortized, ~roofline);
    # small-M calls get a single tile with no wasted padded rows.
    return min(512, _round_up(M, 16))


def _erf_approx(x):
    # Abramowitz & Stegun 7.1.26, |err| < 1.5e-7 (~f32 eps). Built only from
    # exp / mul / add / abs / where so it lowers in Mosaic on v5e/v6e/v7x.
    p = 0.3275911
    a1, a2, a3, a4, a5 = (0.254829592, -0.284496736, 1.421413741,
                          -1.453152027, 1.061405429)
    ax = jnp.abs(x)
    t = 1.0 / (1.0 + p * ax)
    poly = ((((a5 * t + a4) * t + a3) * t + a2) * t + a1) * t
    r = 1.0 - poly * jnp.exp(-ax * ax)
    return jnp.where(x >= 0, r, -r)


def _gelu_exact(x):
    # exact (erf-based) GELU, matching nn.GELU default, computed in f32.
    return 0.5 * x * (1.0 + _erf_approx(x * 0.7071067811865476))


def _apply_act(x, act):
    if act == "gelu":
        return _gelu_exact(x)
    if act == "relu":
        return jnp.maximum(x, 0.0)
    return x


# ----------------------------------------------------------------------------
# Pallas kernels
# ----------------------------------------------------------------------------
def _linear_kernel(x_ref, w_ref, b_ref, o_ref, *, act):
    # x, w are bf16 (MXU operands); accumulate f32; fused bias + optional act.
    acc = jnp.dot(x_ref[...], w_ref[...], preferred_element_type=jnp.float32)
    acc = acc + b_ref[...]
    o_ref[...] = _apply_act(acc, act)


def _ln_linear_kernel(x_ref, g_ref, bln_ref, w_ref, b_ref, o_ref, *, eps, act):
    # fused LayerNorm (f32) -> matmul (bf16 operands, f32 acc) -> bias -> act.
    x = x_ref[...]
    mean = jnp.mean(x, axis=-1, keepdims=True)
    var = jnp.mean(jnp.square(x - mean), axis=-1, keepdims=True)
    xn = (x - mean) * jax.lax.rsqrt(var + eps) * g_ref[...] + bln_ref[...]
    acc = jnp.dot(xn.astype(jnp.bfloat16), w_ref[...],
                  preferred_element_type=jnp.float32)
    acc = acc + b_ref[...]
    o_ref[...] = _apply_act(acc, act)


def _ln_dual_linear_kernel(x_ref, g_ref, bln_ref, w_ref, b_ref,
                           xn_ref, o_ref, *, eps):
    # fused LayerNorm producing both the normalized activations and their
    # linear projection from one HBM read of x (outlooker norm1 -> v).
    x = x_ref[...]
    mean = jnp.mean(x, axis=-1, keepdims=True)
    var = jnp.mean(jnp.square(x - mean), axis=-1, keepdims=True)
    xn = (x - mean) * jax.lax.rsqrt(var + eps) * g_ref[...] + bln_ref[...]
    xn_ref[...] = xn
    acc = jnp.dot(xn.astype(jnp.bfloat16), w_ref[...],
                  preferred_element_type=jnp.float32)
    o_ref[...] = acc + b_ref[...]


def _layernorm_kernel(x_ref, g_ref, b_ref, o_ref, *, eps):
    x = x_ref[...]
    mean = jnp.mean(x, axis=-1, keepdims=True)
    var = jnp.mean(jnp.square(x - mean), axis=-1, keepdims=True)
    o_ref[...] = (x - mean) * jax.lax.rsqrt(var + eps) * g_ref[...] + b_ref[...]


def _self_attn_kernel(q_ref, k_ref, v_ref, o_ref, *, scale):
    # one fused block over all batch*head groups; softmax math in f32.
    q, k, v = q_ref[...], k_ref[...], v_ref[...]
    s = jnp.einsum("gnd,gmd->gnm", q, k,
                   preferred_element_type=jnp.float32) * scale
    s = s - jnp.max(s, axis=-1, keepdims=True)
    p = jnp.exp(s)
    p = p / jnp.sum(p, axis=-1, keepdims=True)
    o_ref[...] = jnp.einsum("gnm,gmd->gnd", p.astype(v.dtype), v,
                            preferred_element_type=jnp.float32)


def _outlook_attn_kernel(a_ref, v_ref, o_ref, *, scale):
    # one fused block over all batch*head groups; softmax in f32, matmul in bf16.
    a = a_ref[...] * scale                                  # (G, hw, kk, kk)
    a = a - jnp.max(a, axis=-1, keepdims=True)
    p = jnp.exp(a)
    p = p / jnp.sum(p, axis=-1, keepdims=True)
    v = v_ref[...]                                          # (G, hw, kk, Dh)
    G, hw, kk, _ = a.shape
    dh = v.shape[-1]
    p2 = p.reshape(G * hw, kk, kk).astype(v.dtype)
    v2 = v.reshape(G * hw, kk, dh)
    o = jnp.einsum("nij,njd->nid", p2, v2, preferred_element_type=jnp.float32)
    o_ref[...] = o.reshape(G, hw, kk, dh)


# ----------------------------------------------------------------------------
# Pallas wrappers
# ----------------------------------------------------------------------------
def pallas_linear(x, w, b=None, act=None):
    """(M,K) @ (K,N) + b [+ act].  bf16 MXU operands, f32 accumulation,
    lane-dense (N padded to 128) stores, adaptive M tiles, parallel grid."""
    M, K = x.shape
    N = w.shape[1]
    N_pad = _round_up(N, 128)
    tm = _pick_tm(M)
    m_pad = _round_up(M, tm)
    xp = jnp.pad(x.astype(jnp.float32), ((0, m_pad - M), (0, 0))).astype(jnp.bfloat16)
    w_p = jnp.pad(w.astype(jnp.float32), ((0, 0), (0, N_pad - N))).astype(jnp.bfloat16)
    if b is None:
        b_p = jnp.zeros((1, N_pad), jnp.float32)
    else:
        b_p = jnp.pad(b.astype(jnp.float32), (0, N_pad - N)).reshape(1, N_pad)
    out = pl.pallas_call(
        partial(_linear_kernel, act=act),
        out_shape=jax.ShapeDtypeStruct((m_pad, N_pad), jnp.float32),
        grid=(m_pad // tm,),
        in_specs=[
            pl.BlockSpec((tm, K), lambda i: (i, 0)),
            pl.BlockSpec((K, N_pad), lambda i: (0, 0)),
            pl.BlockSpec((1, N_pad), lambda i: (0, 0)),
        ],
        out_specs=pl.BlockSpec((tm, N_pad), lambda i: (i, 0)),
        compiler_params=pltpu.CompilerParams(dimension_semantics=("parallel",)),
    )(xp, w_p, b_p)
    return out[:M, :N]


def pallas_ln_linear(x, gamma, beta, w, b=None, act=None, eps=1e-5):
    """Fused LayerNorm(x) @ w + b [+ act]."""
    M, K = x.shape
    N = w.shape[1]
    N_pad = _round_up(N, 128)
    tm = _pick_tm(M)
    m_pad = _round_up(M, tm)
    xp = jnp.pad(x.astype(jnp.float32), ((0, m_pad - M), (0, 0)))
    w_p = jnp.pad(w.astype(jnp.float32), ((0, 0), (0, N_pad - N))).astype(jnp.bfloat16)
    if b is None:
        b_p = jnp.zeros((1, N_pad), jnp.float32)
    else:
        b_p = jnp.pad(b.astype(jnp.float32), (0, N_pad - N)).reshape(1, N_pad)
    out = pl.pallas_call(
        partial(_ln_linear_kernel, eps=eps, act=act),
        out_shape=jax.ShapeDtypeStruct((m_pad, N_pad), jnp.float32),
        grid=(m_pad // tm,),
        in_specs=[
            pl.BlockSpec((tm, K), lambda i: (i, 0)),
            pl.BlockSpec((1, K), lambda i: (0, 0)),
            pl.BlockSpec((1, K), lambda i: (0, 0)),
            pl.BlockSpec((K, N_pad), lambda i: (0, 0)),
            pl.BlockSpec((1, N_pad), lambda i: (0, 0)),
        ],
        out_specs=pl.BlockSpec((tm, N_pad), lambda i: (i, 0)),
        compiler_params=pltpu.CompilerParams(dimension_semantics=("parallel",)),
    )(xp, gamma.reshape(1, K).astype(jnp.float32),
      beta.reshape(1, K).astype(jnp.float32), w_p, b_p)
    return out[:M, :N]


def pallas_ln_linear_dual(x, gamma, beta, w, b=None, eps=1e-5):
    """Fused LayerNorm producing (layernorm(x), layernorm(x) @ w + b)."""
    M, K = x.shape
    N = w.shape[1]
    N_pad = _round_up(N, 128)
    tm = _pick_tm(M)
    m_pad = _round_up(M, tm)
    xp = jnp.pad(x.astype(jnp.float32), ((0, m_pad - M), (0, 0)))
    w_p = jnp.pad(w.astype(jnp.float32), ((0, 0), (0, N_pad - N))).astype(jnp.bfloat16)
    if b is None:
        b_p = jnp.zeros((1, N_pad), jnp.float32)
    else:
        b_p = jnp.pad(b.astype(jnp.float32), (0, N_pad - N)).reshape(1, N_pad)
    xn, out = pl.pallas_call(
        partial(_ln_dual_linear_kernel, eps=eps),
        out_shape=(jax.ShapeDtypeStruct((m_pad, K), jnp.float32),
                   jax.ShapeDtypeStruct((m_pad, N_pad), jnp.float32)),
        grid=(m_pad // tm,),
        in_specs=[
            pl.BlockSpec((tm, K), lambda i: (i, 0)),
            pl.BlockSpec((1, K), lambda i: (0, 0)),
            pl.BlockSpec((1, K), lambda i: (0, 0)),
            pl.BlockSpec((K, N_pad), lambda i: (0, 0)),
            pl.BlockSpec((1, N_pad), lambda i: (0, 0)),
        ],
        out_specs=[pl.BlockSpec((tm, K), lambda i: (i, 0)),
                   pl.BlockSpec((tm, N_pad), lambda i: (i, 0))],
        compiler_params=pltpu.CompilerParams(dimension_semantics=("parallel",)),
    )(xp, gamma.reshape(1, K).astype(jnp.float32),
      beta.reshape(1, K).astype(jnp.float32), w_p, b_p)
    return xn[:M], out[:M, :N]


def pallas_layernorm(x, gamma, beta, eps=1e-5):
    """Standalone tiled LayerNorm (only the final norm uses this)."""
    M, C = x.shape
    tm = _pick_tm(M)
    m_pad = _round_up(M, tm)
    xp = jnp.pad(x.astype(jnp.float32), ((0, m_pad - M), (0, 0)))
    out = pl.pallas_call(
        partial(_layernorm_kernel, eps=eps),
        out_shape=jax.ShapeDtypeStruct((m_pad, C), jnp.float32),
        grid=(m_pad // tm,),
        in_specs=[
            pl.BlockSpec((tm, C), lambda i: (i, 0)),
            pl.BlockSpec((1, C), lambda i: (0, 0)),
            pl.BlockSpec((1, C), lambda i: (0, 0)),
        ],
        out_specs=pl.BlockSpec((tm, C), lambda i: (i, 0)),
        compiler_params=pltpu.CompilerParams(dimension_semantics=("parallel",)),
    )(xp, gamma.reshape(1, C).astype(jnp.float32),
      beta.reshape(1, C).astype(jnp.float32))
    return out[:M]


def pallas_self_attention(q, k, v, scale):
    """q,k,v: (G, N, Dh) with G = batch*heads; single fused block over G."""
    G, N, Dh = q.shape
    q = q.astype(jnp.bfloat16)
    k = k.astype(jnp.bfloat16)
    v = v.astype(jnp.bfloat16)
    return pl.pallas_call(
        partial(_self_attn_kernel, scale=scale),
        out_shape=jax.ShapeDtypeStruct((G, N, Dh), jnp.float32),
        grid=(1,),
        in_specs=[pl.BlockSpec((G, N, Dh), lambda i: (0, 0, 0))] * 3,
        out_specs=pl.BlockSpec((G, N, Dh), lambda i: (0, 0, 0)),
        compiler_params=pltpu.CompilerParams(dimension_semantics=("parallel",)),
    )(q, k, v)


def pallas_outlook_attention(attn_logits, v, scale):
    """attn_logits: (G, hw, kk, kk) f32; v: (G, hw, kk, Dh); single fused block."""
    G, hw, kk, _ = attn_logits.shape
    Dh = v.shape[-1]
    return pl.pallas_call(
        partial(_outlook_attn_kernel, scale=scale),
        out_shape=jax.ShapeDtypeStruct((G, hw, kk, Dh), jnp.float32),
        grid=(1,),
        in_specs=[
            pl.BlockSpec((G, hw, kk, kk), lambda i: (0, 0, 0, 0)),
            pl.BlockSpec((G, hw, kk, Dh), lambda i: (0, 0, 0, 0)),
        ],
        out_specs=pl.BlockSpec((G, hw, kk, Dh), lambda i: (0, 0, 0, 0)),
        compiler_params=pltpu.CompilerParams(dimension_semantics=("parallel",)),
    )(attn_logits.astype(jnp.float32), v.astype(jnp.bfloat16))


# ----------------------------------------------------------------------------
# JAX glue (patch extraction / pooling / normalization statistics)
# ----------------------------------------------------------------------------
def conv2d_nhwc(x, w, b, stride, padding):
    """x: (B,H,W,Cin); w: (Cout,Cin,kh,kw) (PyTorch layout). im2col + Pallas matmul."""
    # TODO(synk): the im2col patch tensor is still materialized by XLA; a fully
    # in-kernel Pallas conv needs strided window DMA not expressible via BlockSpec.
    B, H, W, Cin = x.shape
    Cout, _, kh, kw = w.shape
    sh, sw = stride
    ph, pw = padding
    Ho = (H + 2 * ph - kh) // sh + 1
    Wo = (W + 2 * pw - kw) // sw + 1
    xp = jnp.pad(x, ((0, 0), (ph, ph), (pw, pw), (0, 0)))
    cols = []
    for i in range(kh):
        for j in range(kw):
            cols.append(xp[:, i:i + sh * Ho:sh, j:j + sw * Wo:sw, :])
    patches = jnp.stack(cols, axis=3).reshape(B * Ho * Wo, kh * kw * Cin)
    w_mat = jnp.transpose(w, (2, 3, 1, 0)).reshape(kh * kw * Cin, Cout)
    out = pallas_linear(patches, w_mat, b)
    return out.reshape(B, Ho, Wo, Cout)


def batchnorm_train_nhwc(x, gamma, beta, eps=1e-5):
    # nn.BatchNorm2d in training mode (batch statistics) — intentional.
    mean = jnp.mean(x, axis=(0, 1, 2), keepdims=True)
    var = jnp.mean(jnp.square(x - mean), axis=(0, 1, 2), keepdims=True)
    return (x - mean) * jax.lax.rsqrt(var + eps) * gamma + beta


def avg_pool_ceil_nhwc(x, k):
    """nn.AvgPool2d(kernel_size=k, stride=k, ceil_mode=True)."""
    B, H, W, C = x.shape
    h, w = math.ceil(H / k), math.ceil(W / k)
    if H % k == 0 and W % k == 0:
        return x.reshape(B, h, k, w, k, C).mean(axis=(2, 4))
    Hp, Wp = h * k, w * k
    xp = jnp.pad(x, ((0, 0), (0, Hp - H), (0, Wp - W), (0, 0)))
    s = xp.reshape(B, h, k, w, k, C).sum(axis=(2, 4))
    ones = jnp.pad(jnp.ones((1, H, W, 1), x.dtype),
                   ((0, 0), (0, Hp - H), (0, Wp - W), (0, 0)))
    cnt = ones.reshape(1, h, k, w, k, 1).sum(axis=(2, 4))
    return s / cnt


def mlp_fused(x2d, p):
    # norm2 + fc1 + bias + exact GELU fused into one kernel; fc2 separate.
    h = pallas_ln_linear(x2d, p["norm2_w"], p["norm2_b"],
                         p["fc1_w"], p["fc1_b"], act="gelu")
    return pallas_linear(h, p["fc2_w"], p["fc2_b"])


# ----------------------------------------------------------------------------
# VOLO building blocks
# ----------------------------------------------------------------------------
def outlook_attention(xn, v, p, num_heads, kernel_size=3, padding=1, stride=2):
    """xn: pre-normalized features (B,H,W,C); v: their value projection (B,H,W,C)."""
    B, H, W, C = xn.shape
    Dh = C // num_heads
    kk = kernel_size * kernel_size
    scale = Dh ** -0.5
    h = math.ceil(H / stride)
    w = math.ceil(W / stride)

    # unfold v -> (B, heads, h*w, kk, Dh)  (kernel-position ordering matches nn.Unfold)
    vp = jnp.pad(v, ((0, 0), (padding, padding), (padding, padding), (0, 0)))
    cols = []
    for ki in range(kernel_size):
        for kj in range(kernel_size):
            cols.append(vp[:, ki:ki + stride * h:stride, kj:kj + stride * w:stride, :])
    v_patches = jnp.stack(cols, axis=3).reshape(B, h * w, kk, num_heads, Dh)
    v_patches = jnp.transpose(v_patches, (0, 3, 1, 2, 4))   # (B, heads, hw, kk, Dh)

    # attention logits from avg-pooled normalized features
    pooled = avg_pool_ceil_nhwc(xn, stride) if stride > 1 else xn
    a = pallas_linear(pooled.reshape(-1, C), p["attn_w"], p["attn_b"])
    a = a.reshape(B, h * w, num_heads, kk, kk)
    a = jnp.transpose(a, (0, 2, 1, 3, 4))                   # (B, heads, hw, kk, kk)

    out = pallas_outlook_attention(
        a.reshape(B * num_heads, h * w, kk, kk),
        v_patches.reshape(B * num_heads, h * w, kk, Dh),
        scale)
    out = out.reshape(B, num_heads, h * w, kk, Dh)
    out = jnp.transpose(out, (0, 2, 3, 1, 4)).reshape(B, h, w, kk, C)

    # F.fold: sum overlapping patches back to (B, H, W, C).
    # TODO(synk): fold stays as 9 static strided adds in XLA (tiny at these shapes).
    folded = jnp.zeros((B, H + 2 * padding, W + 2 * padding, C), jnp.float32)
    for ki in range(kernel_size):
        for kj in range(kernel_size):
            folded = folded.at[:, ki:ki + stride * h:stride,
                               kj:kj + stride * w:stride, :].add(
                out[:, :, :, ki * kernel_size + kj, :])
    folded = folded[:, padding:padding + H, padding:padding + W, :]

    y = pallas_linear(folded.reshape(-1, C), p["proj_w"], p["proj_b"])
    return y.reshape(B, H, W, C)


def self_attention(x, p, num_heads):
    """norm1 fused into the qkv projection."""
    B, H, W, C = x.shape
    N = H * W
    Dh = C // num_heads
    scale = Dh ** -0.5
    qkv = pallas_ln_linear(x.reshape(-1, C), p["norm1_w"], p["norm1_b"],
                           p["qkv_w"], None)
    qkv = qkv.reshape(B, N, 3, num_heads, Dh)
    qkv = jnp.transpose(qkv, (2, 0, 3, 1, 4))                # (3, B, heads, N, Dh)
    q, k, v = qkv[0], qkv[1], qkv[2]
    out = pallas_self_attention(q.reshape(B * num_heads, N, Dh),
                                k.reshape(B * num_heads, N, Dh),
                                v.reshape(B * num_heads, N, Dh), scale)
    out = out.reshape(B, num_heads, N, Dh)
    out = jnp.transpose(out, (0, 2, 1, 3)).reshape(B, H, W, C)
    y = pallas_linear(out.reshape(-1, C), p["proj_w"], p["proj_b"])
    return y.reshape(B, H, W, C)


def outlooker_block(x, p, num_heads):
    B, H, W, C = x.shape
    # norm1 fused with the v projection; xn also returned for the pooled attn path.
    xn, v = pallas_ln_linear_dual(x.reshape(-1, C), p["norm1_w"], p["norm1_b"],
                                  p["v_w"], None)
    x = x + outlook_attention(xn.reshape(B, H, W, C), v.reshape(B, H, W, C),
                              p, num_heads, kernel_size=3, padding=1, stride=2)
    x = x + mlp_fused(x.reshape(-1, C), p).reshape(B, H, W, C)
    return x


def transformer_block(x, p, num_heads):
    B, H, W, C = x.shape
    x = x + self_attention(x, p, num_heads)
    x = x + mlp_fused(x.reshape(-1, C), p).reshape(B, H, W, C)
    return x


def patch_embed(x, p):
    # stem: 3x (Conv 3x3 stride (2,1) pad 1, no bias -> BN -> ReLU), then proj conv.
    for i in range(3):
        x = conv2d_nhwc(x, p[f"conv{i}_w"], None, stride=(2, 1), padding=(1, 1))
        x = batchnorm_train_nhwc(x, p[f"bn{i}_w"], p[f"bn{i}_b"])
        x = jnp.maximum(x, 0.0)
    x = conv2d_nhwc(x, p["proj_w"], p["proj_b"], stride=(2, 2), padding=(0, 0))
    return x


def downsample(x, p):
    return conv2d_nhwc(x, p["w"], p["b"], stride=(2, 2), padding=(0, 0))


def volo_forward(x_nchw, params, num_heads):
    # layout: input NCHW like PyTorch; converted to NHWC internally.
    x = jnp.transpose(x_nchw, (0, 2, 3, 1)).astype(jnp.float32)
    x = patch_embed(x, params["patch_embed"])                 # (B, H1, W1, C0)

    # network = [Outlooker stage (idx 0), Downsample (idx 1), Transformer stage (idx 2)]
    x = outlooker_block(x, params["outlooker"], num_heads[0])
    x = downsample(x, params["downsample"])

    # idx == 2 -> add (resized) positional embedding
    pos = params["pos_embed"]
    if pos.shape[1:3] != x.shape[1:3]:
        # TODO(synk): bilinear pos-embed resize stays in JAX (jax.image.resize);
        # no clean Pallas equivalent for the general interpolation gather.
        pos = jax.image.resize(pos, (1, x.shape[1], x.shape[2], pos.shape[-1]),
                               method="bilinear", antialias=False)
    x = x + pos

    x = transformer_block(x, params["transformer"], num_heads[1])

    B, H, W, C = x.shape
    x = pallas_layernorm(x.reshape(-1, C), params["norm_w"], params["norm_b"])
    x = x.reshape(B, H * W, C)
    x = jnp.transpose(x, (0, 2, 1)).reshape(B, C, 1, H * W)
    return x


# ----------------------------------------------------------------------------
# Deterministic synthetic parameter init (shapes follow the torch __init__)
# ----------------------------------------------------------------------------
def init_params(key, in_chans=3, stem_hidden=16, embed_dims=(32, 64),
                mlp_ratios=(2.0, 2.0), out_kernel=3, num_heads=(1, 2),
                patch_size=(4, 4), pooling_scale=2):
    keys = iter(jax.random.split(key, 64))

    def nrm(shape, std=0.02):
        return jax.random.normal(next(keys), shape, jnp.float32) * std

    c0, c1 = embed_dims
    kk4 = out_kernel ** 4

    pe = {
        "conv0_w": nrm((stem_hidden, in_chans, 3, 3)),
        "conv1_w": nrm((stem_hidden, stem_hidden, 3, 3)),
        "conv2_w": nrm((stem_hidden, stem_hidden, 3, 3)),
        "bn0_w": jnp.ones((stem_hidden,)), "bn0_b": jnp.zeros((stem_hidden,)),
        "bn1_w": jnp.ones((stem_hidden,)), "bn1_b": jnp.zeros((stem_hidden,)),
        "bn2_w": jnp.ones((stem_hidden,)), "bn2_b": jnp.zeros((stem_hidden,)),
        "proj_w": nrm((c0, stem_hidden, patch_size[0] // 2, patch_size[1] // 2)),
        "proj_b": jnp.zeros((c0,)),
    }

    h1 = int(c0 * mlp_ratios[0])
    outl = {
        "norm1_w": jnp.ones((c0,)), "norm1_b": jnp.zeros((c0,)),
        "v_w": nrm((c0, c0)),
        "attn_w": nrm((c0, kk4 * num_heads[0])),
        "attn_b": jnp.zeros((kk4 * num_heads[0],)),
        "proj_w": nrm((c0, c0)), "proj_b": jnp.zeros((c0,)),
        "norm2_w": jnp.ones((c0,)), "norm2_b": jnp.zeros((c0,)),
        "fc1_w": nrm((c0, h1)), "fc1_b": jnp.zeros((h1,)),
        "fc2_w": nrm((h1, c0)), "fc2_b": jnp.zeros((c0,)),
    }

    h2 = int(c1 * mlp_ratios[1])
    trans = {
        "norm1_w": jnp.ones((c1,)), "norm1_b": jnp.zeros((c1,)),
        "qkv_w": nrm((c1, 3 * c1)),
        "proj_w": nrm((c1, c1)), "proj_b": jnp.zeros((c1,)),
        "norm2_w": jnp.ones((c1,)), "norm2_b": jnp.zeros((c1,)),
        "fc1_w": nrm((c1, h2)), "fc1_b": jnp.zeros((h2,)),
        "fc2_w": nrm((h2, c1)), "fc2_b": jnp.zeros((c1,)),
    }

    params = {
        "patch_embed": pe,
        # pos_embed shape hard-coded from img_size=(32, 256) in the torch module.
        "pos_embed": nrm((1, 32 // patch_size[0] // pooling_scale,
                          256 // patch_size[1] // pooling_scale, c1)),
        "outlooker": outl,
        "downsample": {"w": nrm((c1, c0, 2, 2)), "b": jnp.zeros((c1,))},
        "transformer": trans,
        "norm_w": jnp.ones((c1,)), "norm_b": jnp.zeros((c1,)),
    }
    return params


if __name__ == "__main__":
    # Small synthetic config: layers=[1,1], embed_dims=[32,64], num_heads=[1,2],
    # outlook_attention=[True,False], downsamples=[True,False], mlp_ratios=[2,2].
    num_heads = (1, 2)
    key = jax.random.PRNGKey(0)
    kp, kx = jax.random.split(key)
    params = init_params(kp, num_heads=num_heads)

    # Input image (NCHW, like PyTorch): B=2, C=3, H=64, W=32.
    x = jax.random.normal(kx, (2, 3, 64, 32), jnp.float32)

    fwd = jax.jit(lambda inp: volo_forward(inp, params, num_heads))
    out = fwd(x)
    out = jax.block_until_ready(out)

    assert out.shape == (2, 64, 1, 16), out.shape
    assert bool(jnp.all(jnp.isfinite(out)))
    print("KERNEL_OK")
</pallas_src>

<mosaic_0001>
module attributes {stable_mosaic.version = 11 : i64} {
  func.func @_linear_kernel(%arg0: i32, %arg1: memref<512x27xbf16, #tpu.memory_space<vmem>>, %arg2: memref<27x128xbf16, #tpu.memory_space<vmem>>, %arg3: memref<1x128xf32, #tpu.memory_space<vmem>>, %arg4: memref<512x128xf32, #tpu.memory_space<vmem>>) attributes {dimension_semantics = [#tpu.dimension_semantics<parallel>], iteration_bounds = array<i64: 4>, scalar_prefetch = 0 : i64, scratch_operands = 0 : i64, tpu.core_type = #tpu.core_type<tc>, window_params = [{transform_indices = @transform_0, window_bounds = array<i64: 512, 27>}, {pipeline_mode = #tpu.pipeline_mode<synchronous>, transform_indices = @transform_1, window_bounds = array<i64: 27, 128>}, {pipeline_mode = #tpu.pipeline_mode<synchronous>, transform_indices = @transform_2, window_bounds = array<i64: 1, 128>}, {transform_indices = @transform_3, window_bounds = array<i64: 512, 128>}]} {
    %c0 = arith.constant 0 : index
    %c0_0 = arith.constant 0 : index
    %0 = vector.load %arg1[%c0, %c0_0] : memref<512x27xbf16, #tpu.memory_space<vmem>>, vector<512x27xbf16>
    %c0_1 = arith.constant 0 : index
    %c0_2 = arith.constant 0 : index
    %1 = vector.load %arg2[%c0_1, %c0_2] : memref<27x128xbf16, #tpu.memory_space<vmem>>, vector<27x128xbf16>
    %cst = arith.constant dense<0.000000e+00> : vector<512x128xf32>
    %2 = tpu.matmul %0, %1, %cst {dimension_numbers = #tpu.dot_dimension_numbers<[1], [0], [0], [1], [0, 0, 1, 1], [], []>} : vector<512x27xbf16>, vector<27x128xbf16>, vector<512x128xf32> -> vector<512x128xf32>
    %c0_3 = arith.constant 0 : index
    %c0_4 = arith.constant 0 : index
    %3 = vector.load %arg3[%c0_3, %c0_4] : memref<1x128xf32, #tpu.memory_space<vmem>>, vector<1x128xf32>
    %4 = vector.broadcast %3 : vector<1x128xf32> to vector<512x128xf32>
    %5 = arith.addf %2, %4 : vector<512x128xf32>
    %c0_5 = arith.constant 0 : index
    %c0_6 = arith.constant 0 : index
    %6 = vector.load %arg4[%c0_5, %c0_6] : memref<512x128xf32, #tpu.memory_space<vmem>>, vector<512x128xf32>
    tpu.vector_store %arg4[%c0_5, %c0_6], %5 {strides = array<i32>} : memref<512x128xf32, #tpu.memory_space<vmem>>, vector<512x128xf32>,
    return
  }
  func.func @transform_0(%arg0: i32) -> (i32, i32) {
    %c0_i32 = arith.constant 0 : i32
    %c0_i32_0 = arith.constant 0 : i32
    return %arg0, %c0_i32 : i32, i32
  }
  func.func @transform_1(%arg0: i32) -> (i32, i32) {
    %c0_i32 = arith.constant 0 : i32
    %c0_i32_0 = arith.constant 0 : i32
    %c0_i32_1 = arith.constant 0 : i32
    return %c0_i32, %c0_i32_0 : i32, i32
  }
  func.func @transform_2(%arg0: i32) -> (i32, i32) {
    %c0_i32 = arith.constant 0 : i32
    %c0_i32_0 = arith.constant 0 : i32
    %c0_i32_1 = arith.constant 0 : i32
    return %c0_i32, %c0_i32_0 : i32, i32
  }
  func.func @transform_3(%arg0: i32) -> (i32, i32) {
    %c0_i32 = arith.constant 0 : i32
    %c0_i32_0 = arith.constant 0 : i32
    return %arg0, %c0_i32 : i32, i32
  }
}

module attributes {stable_mosaic.version = 11 : i64} {
  func.func @_linear_kernel(%arg0: i32, %arg1: memref<512x144xbf16, #tpu.memory_space<vmem>>, %arg2: memref<144x128xbf16, #tpu.memory_space<vmem>>, %arg3: memref<1x128xf32, #tpu.memory_space<vmem>>, %arg4: memref<512x128xf32, #tpu.memory_space<vmem>>) attributes {dimension_semantics = [#tpu.dimension_semantics<parallel>], iteration_bounds = array<i64: 2>, scalar_prefetch = 0 : i64, scratch_operands = 0 : i64, tpu.core_type = #tpu.core_type<tc>, window_params = [{transform_indices = @transform_0, window_bounds = array<i64: 512, 144>}, {pipeline_mode = #tpu.pipeline_mode<synchronous>, transform_indices = @transform_1, window_bounds = array<i64: 144, 128>}, {pipeline_mode = #tpu.pipeline_mode<synchronous>, transform_indices = @transform_2, window_bounds = array<i64: 1, 128>}, {transform_indices = @transform_3, window_bounds = array<i64: 512, 128>}]} {
    %c0 = arith.constant 0 : index
    %c0_0 = arith.constant 0 : index
    %0 = vector.load %arg1[%c0, %c0_0] : memref<512x144xbf16, #tpu.memory_space<vmem>>, vector<512x144xbf16>
    %c0_1 = arith.constant 0 : index
    %c0_2 = arith.constant 0 : index
    %1 = vector.load %arg2[%c0_1, %c0_2] : memref<144x128xbf16, #tpu.memory_space<vmem>>, vector<144x128xbf16>
    %cst = arith.constant dense<0.000000e+00> : vector<512x128xf32>
    %2 = tpu.matmul %0, %1, %cst {dimension_numbers = #tpu.dot_dimension_numbers<[1], [0], [0], [1], [0, 0, 1, 1], [], []>} : vector<512x144xbf16>, vector<144x128xbf16>, vector<512x128xf32> -> vector<512x128xf32>
    %c0_3 = arith.constant 0 : index
    %c0_4 = arith.constant 0 : index
    %3 = vector.load %arg3[%c0_3, %c0_4] : memref<1x128xf32, #tpu.memory_space<vmem>>, vector<1x128xf32>
    %4 = vector.broadcast %3 : vector<1x128xf32> to vector<512x128xf32>
    %5 = arith.addf %2, %4 : vector<512x128xf32>
    %c0_5 = arith.constant 0 : index
    %c0_6 = arith.constant 0 : index
    %6 = vector.load %arg4[%c0_5, %c0_6] : memref<512x128xf32, #tpu.memory_space<vmem>>, vector<512x128xf32>
    tpu.vector_store %arg4[%c0_5, %c0_6], %5 {strides = array<i32>} : memref<512x128xf32, #tpu.memory_space<vmem>>, vector<512x128xf32>,
    return
  }
  func.func @transform_0(%arg0: i32) -> (i32, i32) {
    %c0_i32 = arith.constant 0 : i32
    %c0_i32_0 = arith.constant 0 : i32
    return %arg0, %c0_i32 : i32, i32
  }
  func.func @transform_1(%arg0: i32) -> (i32, i32) {
    %c0_i32 = arith.constant 0 : i32
    %c0_i32_0 = arith.constant 0 : i32
    %c0_i32_1 = arith.constant 0 : i32
    return %c0_i32, %c0_i32_0 : i32, i32
  }
  func.func @transform_2(%arg0: i32) -> (i32, i32) {
    %c0_i32 = arith.constant 0 : i32
    %c0_i32_0 = arith.constant 0 : i32
    %c0_i32_1 = arith.constant 0 : i32
    return %c0_i32, %c0_i32_0 : i32, i32
  }
  func.func @transform_3(%arg0: i32) -> (i32, i32) {
    %c0_i32 = arith.constant 0 : i32
    %c0_i32_0 = arith.constant 0 : i32
    return %arg0, %c0_i32 : i32, i32
  }
}

module attributes {stable_mosaic.version = 11 : i64} {
  func.func @_linear_kernel(%arg0: i32, %arg1: memref<512x144xbf16, #tpu.memory_space<vmem>>, %arg2: memref<144x128xbf16, #tpu.memory_space<vmem>>, %arg3: memref<1x128xf32, #tpu.memory_space<vmem>>, %arg4: memref<512x128xf32, #tpu.memory_space<vmem>>) attributes {dimension_semantics = [#tpu.dimension_semantics<parallel>], iteration_bounds = array<i64: 1>, scalar_prefetch = 0 : i64, scratch_operands = 0 : i64, tpu.core_type = #tpu.core_type<tc>, window_params = [{transform_indices = @transform_0, window_bounds = array<i64: 512, 144>}, {pipeline_mode = #tpu.pipeline_mode<synchronous>, transform_indices = @transform_1, window_bounds = array<i64: 144, 128>}, {pipeline_mode = #tpu.pipeline_mode<synchronous>, transform_indices = @transform_2, window_bounds = array<i64: 1, 128>}, {transform_indices = @transform_3, window_bounds = array<i64: 512, 128>}]} {
    %c0 = arith.constant 0 : index
    %c0_0 = arith.constant 0 : index
    %0 = vector.load %arg1[%c0, %c0_0] : memref<512x144xbf16, #tpu.memory_space<vmem>>, vector<512x144xbf16>
    %c0_1 = arith.constant 0 : index
    %c0_2 = arith.constant 0 : index
    %1 = vector.load %arg2[%c0_1, %c0_2] : memref<144x128xbf16, #tpu.memory_space<vmem>>, vector<144x128xbf16>
    %cst = arith.constant dense<0.000000e+00> : vector<512x128xf32>
    %2 = tpu.matmul %0, %1, %cst {dimension_numbers = #tpu.dot_dimension_numbers<[1], [0], [0], [1], [0, 0, 1, 1], [], []>} : vector<512x144xbf16>, vector<144x128xbf16>, vector<512x128xf32> -> vector<512x128xf32>
    %c0_3 = arith.constant 0 : index
    %c0_4 = arith.constant 0 : index
    %3 = vector.load %arg3[%c0_3, %c0_4] : memref<1x128xf32, #tpu.memory_space<vmem>>, vector<1x128xf32>
    %4 = vector.broadcast %3 : vector<1x128xf32> to vector<512x128xf32>
    %5 = arith.addf %2, %4 : vector<512x128xf32>
    %c0_5 = arith.constant 0 : index
    %c0_6 = arith.constant 0 : index
    %6 = vector.load %arg4[%c0_5, %c0_6] : memref<512x128xf32, #tpu.memory_space<vmem>>, vector<512x128xf32>
    tpu.vector_store %arg4[%c0_5, %c0_6], %5 {strides = array<i32>} : memref<512x128xf32, #tpu.memory_space<vmem>>, vector<512x128xf32>,
    return
  }
  func.func @transform_0(%arg0: i32) -> (i32, i32) {
    %c0_i32 = arith.constant 0 : i32
    %c0_i32_0 = arith.constant 0 : i32
    return %arg0, %c0_i32 : i32, i32
  }
  func.func @transform_1(%arg0: i32) -> (i32, i32) {
    %c0_i32 = arith.constant 0 : i32
    %c0_i32_0 = arith.constant 0 : i32
    %c0_i32_1 = arith.constant 0 : i32
    return %c0_i32, %c0_i32_0 : i32, i32
  }
  func.func @transform_2(%arg0: i32) -> (i32, i32) {
    %c0_i32 = arith.constant 0 : i32
    %c0_i32_0 = arith.constant 0 : i32
    %c0_i32_1 = arith.constant 0 : i32
    return %c0_i32, %c0_i32_0 : i32, i32
  }
  func.func @transform_3(%arg0: i32) -> (i32, i32) {
    %c0_i32 = arith.constant 0 : i32
    %c0_i32_0 = arith.constant 0 : i32
    return %arg0, %c0_i32 : i32, i32
  }
}

module attributes {stable_mosaic.version = 11 : i64} {
  func.func @_linear_kernel(%arg0: i32, %arg1: memref<128x64xbf16, #tpu.memory_space<vmem>>, %arg2: memref<64x128xbf16, #tpu.memory_space<vmem>>, %arg3: memref<1x128xf32, #tpu.memory_space<vmem>>, %arg4: memref<128x128xf32, #tpu.memory_space<vmem>>) attributes {dimension_semantics = [#tpu.dimension_semantics<parallel>], iteration_bounds = array<i64: 1>, scalar_prefetch = 0 : i64, scratch_operands = 0 : i64, tpu.core_type = #tpu.core_type<tc>, window_params = [{transform_indices = @transform_0, window_bounds = array<i64: 128, 64>}, {pipeline_mode = #tpu.pipeline_mode<synchronous>, transform_indices = @transform_1, window_bounds = array<i64: 64, 128>}, {pipeline_mode = #tpu.pipeline_mode<synchronous>, transform_indices = @transform_2, window_bounds = array<i64: 1, 128>}, {transform_indices = @transform_3, window_bounds = array<i64: 128, 128>}]} {
    %c0 = arith.constant 0 : index
    %c0_0 = arith.constant 0 : index
    %0 = vector.load %arg1[%c0, %c0_0] : memref<128x64xbf16, #tpu.memory_space<vmem>>, vector<128x64xbf16>
    %c0_1 = arith.constant 0 : index
    %c0_2 = arith.constant 0 : index
    %1 = vector.load %arg2[%c0_1, %c0_2] : memref<64x128xbf16, #tpu.memory_space<vmem>>, vector<64x128xbf16>
    %cst = arith.constant dense<0.000000e+00> : vector<128x128xf32>
    %2 = tpu.matmul %0, %1, %cst {dimension_numbers = #tpu.dot_dimension_numbers<[1], [0], [0], [1], [0, 0, 1, 1], [], []>} : vector<128x64xbf16>, vector<64x128xbf16>, vector<128x128xf32> -> vector<128x128xf32>
    %c0_3 = arith.constant 0 : index
    %c0_4 = arith.constant 0 : index
    %3 = vector.load %arg3[%c0_3, %c0_4] : memref<1x128xf32, #tpu.memory_space<vmem>>, vector<1x128xf32>
    %4 = vector.broadcast %3 : vector<1x128xf32> to vector<128x128xf32>
    %5 = arith.addf %2, %4 : vector<128x128xf32>
    %c0_5 = arith.constant 0 : index
    %c0_6 = arith.constant 0 : index
    %6 = vector.load %arg4[%c0_5, %c0_6] : memref<128x128xf32, #tpu.memory_space<vmem>>, vector<128x128xf32>
    tpu.vector_store %arg4[%c0_5, %c0_6], %5 {strides = array<i32>} : memref<128x128xf32, #tpu.memory_space<vmem>>, vector<128x128xf32>,
    return
  }
  func.func @transform_0(%arg0: i32) -> (i32, i32) {
    %c0_i32 = arith.constant 0 : i32
    %c0_i32_0 = arith.constant 0 : i32
    return %arg0, %c0_i32 : i32, i32
  }
  func.func @transform_1(%arg0: i32) -> (i32, i32) {
    %c0_i32 = arith.constant 0 : i32
    %c0_i32_0 = arith.constant 0 : i32
    %c0_i32_1 = arith.constant 0 : i32
    return %c0_i32, %c0_i32_0 : i32, i32
  }
  func.func @transform_2(%arg0: i32) -> (i32, i32) {
    %c0_i32 = arith.constant 0 : i32
    %c0_i32_0 = arith.constant 0 : i32
    %c0_i32_1 = arith.constant 0 : i32
    return %c0_i32, %c0_i32_0 : i32, i32
  }
  func.func @transform_3(%arg0: i32) -> (i32, i32) {
    %c0_i32 = arith.constant 0 : i32
    %c0_i32_0 = arith.constant 0 : i32
    return %arg0, %c0_i32 : i32, i32
  }
}

module attributes {stable_mosaic.version = 11 : i64} {
  func.func @_ln_dual_linear_kernel(%arg0: i32, %arg1: memref<128x32xf32, #tpu.memory_space<vmem>>, %arg2: memref<1x32xf32, #tpu.memory_space<vmem>>, %arg3: memref<1x32xf32, #tpu.memory_space<vmem>>, %arg4: memref<32x128xbf16, #tpu.memory_space<vmem>>, %arg5: memref<1x128xf32, #tpu.memory_space<vmem>>, %arg6: memref<128x32xf32, #tpu.memory_space<vmem>>, %arg7: memref<128x128xf32, #tpu.memory_space<vmem>>) attributes {dimension_semantics = [#tpu.dimension_semantics<parallel>], iteration_bounds = array<i64: 1>, scalar_prefetch = 0 : i64, scratch_operands = 0 : i64, tpu.core_type = #tpu.core_type<tc>, window_params = [{transform_indices = @transform_0, window_bounds = array<i64: 128, 32>}, {pipeline_mode = #tpu.pipeline_mode<synchronous>, transform_indices = @transform_1, window_bounds = array<i64: 1, 32>}, {pipeline_mode = #tpu.pipeline_mode<synchronous>, transform_indices = @transform_2, window_bounds = array<i64: 1, 32>}, {pipeline_mode = #tpu.pipeline_mode<synchronous>, transform_indices = @transform_3, window_bounds = array<i64: 32, 128>}, {pipeline_mode = #tpu.pipeline_mode<synchronous>, transform_indices = @transform_4, window_bounds = array<i64: 1, 128>}, {transform_indices = @transform_5, window_bounds = array<i64: 128, 32>}, {transform_indices = @transform_6, window_bounds = array<i64: 128, 128>}]} {
    %c0 = arith.constant 0 : index
    %c0_0 = arith.constant 0 : index
    %0 = vector.load %arg1[%c0, %c0_0] : memref<128x32xf32, #tpu.memory_space<vmem>>, vector<128x32xf32>
    %cst = arith.constant dense<0.000000e+00> : vector<128xf32>
    %1 = vector.multi_reduction <add>, %0, %cst [1] : vector<128x32xf32> to vector<128xf32>
    %2 = vector.shape_cast %1 : vector<128xf32> to vector<128x1xf32>
    %cst_1 = arith.constant 3.200000e+01 : f32
    %3 = vector.broadcast %cst_1 : f32 to vector<128x1xf32>
    %4 = arith.divf %2, %3 : vector<128x1xf32>
    %5 = vector.broadcast %4 : vector<128x1xf32> to vector<128x32xf32>
    %6 = arith.subf %0, %5 : vector<128x32xf32>
    %7 = arith.mulf %6, %6 : vector<128x32xf32>
    %cst_2 = arith.constant dense<0.000000e+00> : vector<128xf32>
    %8 = vector.multi_reduction <add>, %7, %cst_2 [1] : vector<128x32xf32> to vector<128xf32>
    %9 = vector.shape_cast %8 : vector<128xf32> to vector<128x1xf32>
    %cst_3 = arith.constant 3.200000e+01 : f32
    %10 = vector.broadcast %cst_3 : f32 to vector<128x1xf32>
    %11 = arith.divf %9, %10 : vector<128x1xf32>
    %12 = vector.broadcast %4 : vector<128x1xf32> to vector<128x32xf32>
    %13 = arith.subf %0, %12 : vector<128x32xf32>
    %cst_4 = arith.constant 9.99999974E-6 : f32
    %14 = vector.broadcast %cst_4 : f32 to vector<128x1xf32>
    %15 = arith.addf %11, %14 : vector<128x1xf32>
    %16 = math.rsqrt %15 : vector<128x1xf32>
    %17 = vector.broadcast %16 : vector<128x1xf32> to vector<128x32xf32>
    %18 = arith.mulf %13, %17 : vector<128x32xf32>
    %c0_5 = arith.constant 0 : index
    %c0_6 = arith.constant 0 : index
    %19 = vector.load %arg2[%c0_5, %c0_6] : memref<1x32xf32, #tpu.memory_space<vmem>>, vector<1x32xf32>
    %20 = vector.broadcast %19 : vector<1x32xf32> to vector<128x32xf32>
    %21 = arith.mulf %18, %20 : vector<128x32xf32>
    %c0_7 = arith.constant 0 : index
    %c0_8 = arith.constant 0 : index
    %22 = vector.load %arg3[%c0_7, %c0_8] : memref<1x32xf32, #tpu.memory_space<vmem>>, vector<1x32xf32>
    %23 = vector.broadcast %22 : vector<1x32xf32> to vector<128x32xf32>
    %24 = arith.addf %21, %23 : vector<128x32xf32>
    %c0_9 = arith.constant 0 : index
    %c0_10 = arith.constant 0 : index
    %25 = vector.load %arg6[%c0_9, %c0_10] : memref<128x32xf32, #tpu.memory_space<vmem>>, vector<128x32xf32>
    tpu.vector_store %arg6[%c0_9, %c0_10], %24 {strides = array<i32>} : memref<128x32xf32, #tpu.memory_space<vmem>>, vector<128x32xf32>,
    %26 = arith.truncf %24 : vector<128x32xf32> to vector<128x32xbf16>
    %c0_11 = arith.constant 0 : index
    %c0_12 = arith.constant 0 : index
    %27 = vector.load %arg4[%c0_11, %c0_12] : memref<32x128xbf16, #tpu.memory_space<vmem>>, vector<32x128xbf16>
    %cst_13 = arith.constant dense<0.000000e+00> : vector<128x128xf32>
    %28 = tpu.matmul %26, %27, %cst_13 {dimension_numbers = #tpu.dot_dimension_numbers<[1], [0], [0], [1], [0, 0, 1, 1], [], []>} : vector<128x32xbf16>, vector<32x128xbf16>, vector<128x128xf32> -> vector<128x128xf32>
    %c0_14 = arith.constant 0 : index
    %c0_15 = arith.constant 0 : index
    %29 = vector.load %arg5[%c0_14, %c0_15] : memref<1x128xf32, #tpu.memory_space<vmem>>, vector<1x128xf32>
    %30 = vector.broadcast %29 : vector<1x128xf32> to vector<128x128xf32>
    %31 = arith.addf %28, %30 : vector<128x128xf32>
    %c0_16 = arith.constant 0 : index
    %c0_17 = arith.constant 0 : index
    %32 = vector.load %arg7[%c0_16, %c0_17] : memref<128x128xf32, #tpu.memory_space<vmem>>, vector<128x128xf32>
    tpu.vector_store %arg7[%c0_16, %c0_17], %31 {strides = array<i32>} : memref<128x128xf32, #tpu.memory_space<vmem>>, vector<128x128xf32>,
    return
  }
  func.func @transform_0(%arg0: i32) -> (i32, i32) {
    %c0_i32 = arith.constant 0 : i32
    %c0_i32_0 = arith.constant 0 : i32
    return %arg0, %c0_i32 : i32, i32
  }
  func.func @transform_1(%arg0: i32) -> (i32, i32) {
    %c0_i32 = arith.constant 0 : i32
    %c0_i32_0 = arith.constant 0 : i32
    %c0_i32_1 = arith.constant 0 : i32
    return %c0_i32, %c0_i32_0 : i32, i32
  }
  func.func @transform_2(%arg0: i32) -> (i32, i32) {
    %c0_i32 = arith.constant 0 : i32
    %c0_i32_0 = arith.constant 0 : i32
    %c0_i32_1 = arith.constant 0 : i32
    return %c0_i32, %c0_i32_0 : i32, i32
  }
  func.func @transform_3(%arg0: i32) -> (i32, i32) {
    %c0_i32 = arith.constant 0 : i32
    %c0_i32_0 = arith.constant 0 : i32
    %c0_i32_1 = arith.constant 0 : i32
    return %c0_i32, %c0_i32_0 : i32, i32
  }
  func.func @transform_4(%arg0: i32) -> (i32, i32) {
    %c0_i32 = arith.constant 0 : i32
    %c0_i32_0 = arith.constant 0 : i32
    %c0_i32_1 = arith.constant 0 : i32
    return %c0_i32, %c0_i32_0 : i32, i32
  }
  func.func @transform_5(%arg0: i32) -> (i32, i32) {
    %c0_i32 = arith.constant 0 : i32
    %c0_i32_0 = arith.constant 0 : i32
    return %arg0, %c0_i32 : i32, i32
  }
  func.func @transform_6(%arg0: i32) -> (i32, i32) {
    %c0_i32 = arith.constant 0 : i32
    %c0_i32_0 = arith.constant 0 : i32
    return %arg0, %c0_i32 : i32, i32
  }
}

module attributes {stable_mosaic.version = 11 : i64} {
  func.func @_linear_kernel(%arg0: i32, %arg1: memref<32x32xbf16, #tpu.memory_space<vmem>>, %arg2: memref<32x128xbf16, #tpu.memory_space<vmem>>, %arg3: memref<1x128xf32, #tpu.memory_space<vmem>>, %arg4: memref<32x128xf32, #tpu.memory_space<vmem>>) attributes {dimension_semantics = [#tpu.dimension_semantics<parallel>], iteration_bounds = array<i64: 1>, scalar_prefetch = 0 : i64, scratch_operands = 0 : i64, tpu.core_type = #tpu.core_type<tc>, window_params = [{transform_indices = @transform_0, window_bounds = array<i64: 32, 32>}, {pipeline_mode = #tpu.pipeline_mode<synchronous>, transform_indices = @transform_1, window_bounds = array<i64: 32, 128>}, {pipeline_mode = #tpu.pipeline_mode<synchronous>, transform_indices = @transform_2, window_bounds = array<i64: 1, 128>}, {transform_indices = @transform_3, window_bounds = array<i64: 32, 128>}]} {
    %c0 = arith.constant 0 : index
    %c0_0 = arith.constant 0 : index
    %0 = vector.load %arg1[%c0, %c0_0] : memref<32x32xbf16, #tpu.memory_space<vmem>>, vector<32x32xbf16>
    %c0_1 = arith.constant 0 : index
    %c0_2 = arith.constant 0 : index
    %1 = vector.load %arg2[%c0_1, %c0_2] : memref<32x128xbf16, #tpu.memory_space<vmem>>, vector<32x128xbf16>
    %cst = arith.constant dense<0.000000e+00> : vector<32x128xf32>
    %2 = tpu.matmul %0, %1, %cst {dimension_numbers = #tpu.dot_dimension_numbers<[1], [0], [0], [1], [0, 0, 1, 1], [], []>} : vector<32x32xbf16>, vector<32x128xbf16>, vector<32x128xf32> -> vector<32x128xf32>
    %c0_3 = arith.constant 0 : index
    %c0_4 = arith.constant 0 : index
    %3 = vector.load %arg3[%c0_3, %c0_4] : memref<1x128xf32, #tpu.memory_space<vmem>>, vector<1x128xf32>
    %4 = vector.broadcast %3 : vector<1x128xf32> to vector<32x128xf32>
    %5 = arith.addf %2, %4 : vector<32x128xf32>
    %c0_5 = arith.constant 0 : index
    %c0_6 = arith.constant 0 : index
    %6 = vector.load %arg4[%c0_5, %c0_6] : memref<32x128xf32, #tpu.memory_space<vmem>>, vector<32x128xf32>
    tpu.vector_store %arg4[%c0_5, %c0_6], %5 {strides = array<i32>} : memref<32x128xf32, #tpu.memory_space<vmem>>, vector<32x128xf32>,
    return
  }
  func.func @transform_0(%arg0: i32) -> (i32, i32) {
    %c0_i32 = arith.constant 0 : i32
    %c0_i32_0 = arith.constant 0 : i32
    return %arg0, %c0_i32 : i32, i32
  }
  func.func @transform_1(%arg0: i32) -> (i32, i32) {
    %c0_i32 = arith.constant 0 : i32
    %c0_i32_0 = arith.constant 0 : i32
    %c0_i32_1 = arith.constant 0 : i32
    return %c0_i32, %c0_i32_0 : i32, i32
  }
  func.func @transform_2(%arg0: i32) -> (i32, i32) {
    %c0_i32 = arith.constant 0 : i32
    %c0_i32_0 = arith.constant 0 : i32
    %c0_i32_1 = arith.constant 0 : i32
    return %c0_i32, %c0_i32_0 : i32, i32
  }
  func.func @transform_3(%arg0: i32) -> (i32, i32) {
    %c0_i32 = arith.constant 0 : i32
    %c0_i32_0 = arith.constant 0 : i32
    return %arg0, %c0_i32 : i32, i32
  }
}

module attributes {stable_mosaic.version = 11 : i64} {
  func.func @_outlook_attn_kernel(%arg0: i32, %arg1: memref<2x16x9x9xf32, #tpu.memory_space<vmem>>, %arg2: memref<2x16x9x32xbf16, #tpu.memory_space<vmem>>, %arg3: memref<2x16x9x32xf32, #tpu.memory_space<vmem>>) attributes {dimension_semantics = [#tpu.dimension_semantics<parallel>], iteration_bounds = array<i64: 1>, scalar_prefetch = 0 : i64, scratch_operands = 0 : i64, tpu.core_type = #tpu.core_type<tc>, window_params = [{pipeline_mode = #tpu.pipeline_mode<synchronous>, transform_indices = @transform_0, window_bounds = array<i64: 2, 16, 9, 9>}, {pipeline_mode = #tpu.pipeline_mode<synchronous>, transform_indices = @transform_1, window_bounds = array<i64: 2, 16, 9, 32>}, {pipeline_mode = #tpu.pipeline_mode<synchronous>, transform_indices = @transform_2, window_bounds = array<i64: 2, 16, 9, 32>}]} {
    %c0 = arith.constant 0 : index
    %c0_0 = arith.constant 0 : index
    %c0_1 = arith.constant 0 : index
    %c0_2 = arith.constant 0 : index
    %0 = vector.load %arg1[%c0, %c0_0, %c0_1, %c0_2] : memref<2x16x9x9xf32, #tpu.memory_space<vmem>>, vector<2x16x9x9xf32>
    %cst = arith.constant 0.176776692 : f32
    %1 = vector.broadcast %cst : f32 to vector<2x16x9x9xf32>
    %2 = arith.mulf %0, %1 : vector<2x16x9x9xf32>
    %cst_3 = arith.constant dense<0xFF800000> : vector<2x16x9xf32>
    %3 = vector.multi_reduction <maximumf>, %2, %cst_3 [3] : vector<2x16x9x9xf32> to vector<2x16x9xf32>
    %4 = vector.shape_cast %3 : vector<2x16x9xf32> to vector<2x16x9x1xf32>
    %5 = vector.broadcast %4 : vector<2x16x9x1xf32> to vector<2x16x9x9xf32>
    %6 = arith.subf %2, %5 : vector<2x16x9x9xf32>
    %7 = math.exp %6 : vector<2x16x9x9xf32>
    %cst_4 = arith.constant dense<0.000000e+00> : vector<2x16x9xf32>
    %8 = vector.multi_reduction <add>, %7, %cst_4 [3] : vector<2x16x9x9xf32> to vector<2x16x9xf32>
    %9 = vector.shape_cast %8 : vector<2x16x9xf32> to vector<2x16x9x1xf32>
    %10 = vector.broadcast %9 : vector<2x16x9x1xf32> to vector<2x16x9x9xf32>
    %11 = arith.divf %7, %10 : vector<2x16x9x9xf32>
    %c0_5 = arith.constant 0 : index
    %c0_6 = arith.constant 0 : index
    %c0_7 = arith.constant 0 : index
    %c0_8 = arith.constant 0 : index
    %12 = vector.load %arg2[%c0_5, %c0_6, %c0_7, %c0_8] : memref<2x16x9x32xbf16, #tpu.memory_space<vmem>>, vector<2x16x9x32xbf16>
    %13 = vector.shape_cast %11 : vector<2x16x9x9xf32> to vector<32x9x9xf32>
    %14 = arith.truncf %13 : vector<32x9x9xf32> to vector<32x9x9xbf16>
    %15 = vector.shape_cast %12 : vector<2x16x9x32xbf16> to vector<32x9x32xbf16>
    "tpu.trace_start"() <{level = 10 : i32, message = "nij,njd->nid"}> : () -> ()
    %cst_9 = arith.constant dense<0.000000e+00> : vector<32x9x32xf32>
    %16 = tpu.matmul %14, %15, %cst_9 {dimension_numbers = #tpu.dot_dimension_numbers<[2], [1], [1], [2], [0, 0, 0, 1, 1, 2], [0], [0]>} : vector<32x9x9xbf16>, vector<32x9x32xbf16>, vector<32x9x32xf32> -> vector<32x9x32xf32>
    "tpu.trace_stop"() : () -> ()
    %17 = vector.shape_cast %16 : vector<32x9x32xf32> to vector<2x16x9x32xf32>
    %c0_10 = arith.constant 0 : index
    %c0_11 = arith.constant 0 : index
    %c0_12 = arith.constant 0 : index
    %c0_13 = arith.constant 0 : index
    %18 = vector.load %arg3[%c0_10, %c0_11, %c0_12, %c0_13] : memref<2x16x9x32xf32, #tpu.memory_space<vmem>>, vector<2x16x9x32xf32>
    tpu.vector_store %arg3[%c0_10, %c0_11, %c0_12, %c0_13], %17 {strides = array<i32>} : memref<2x16x9x32xf32, #tpu.memory_space<vmem>>, vector<2x16x9x32xf32>,
    return
  }
  func.func @transform_0(%arg0: i32) -> (i32, i32, i32, i32) {
    %c0_i32 = arith.constant 0 : i32
    %c0_i32_0 = arith.constant 0 : i32
    %c0_i32_1 = arith.constant 0 : i32
    %c0_i32_2 = arith.constant 0 : i32
    %c0_i32_3 = arith.constant 0 : i32
    return %c0_i32, %c0_i32_0, %c0_i32_1, %c0_i32_2 : i32, i32, i32, i32
  }
  func.func @transform_1(%arg0: i32) -> (i32, i32, i32, i32) {
    %c0_i32 = arith.constant 0 : i32
    %c0_i32_0 = arith.constant 0 : i32
    %c0_i32_1 = arith.constant 0 : i32
    %c0_i32_2 = arith.constant 0 : i32
    %c0_i32_3 = arith.constant 0 : i32
    return %c0_i32, %c0_i32_0, %c0_i32_1, %c0_i32_2 : i32, i32, i32, i32
  }
  func.func @transform_2(%arg0: i32) -> (i32, i32, i32, i32) {
    %c0_i32 = arith.constant 0 : i32
    %c0_i32_0 = arith.constant 0 : i32
    %c0_i32_1 = arith.constant 0 : i32
    %c0_i32_2 = arith.constant 0 : i32
    %c0_i32_3 = arith.constant 0 : i32
    return %c0_i32, %c0_i32_0, %c0_i32_1, %c0_i32_2 : i32, i32, i32, i32
  }
}

module attributes {stable_mosaic.version = 11 : i64} {
  func.func @_linear_kernel(%arg0: i32, %arg1: memref<128x32xbf16, #tpu.memory_space<vmem>>, %arg2: memref<32x128xbf16, #tpu.memory_space<vmem>>, %arg3: memref<1x128xf32, #tpu.memory_space<vmem>>, %arg4: memref<128x128xf32, #tpu.memory_space<vmem>>) attributes {dimension_semantics = [#tpu.dimension_semantics<parallel>], iteration_bounds = array<i64: 1>, scalar_prefetch = 0 : i64, scratch_operands = 0 : i64, tpu.core_type = #tpu.core_type<tc>, window_params = [{transform_indices = @transform_0, window_bounds = array<i64: 128, 32>}, {pipeline_mode = #tpu.pipeline_mode<synchronous>, transform_indices = @transform_1, window_bounds = array<i64: 32, 128>}, {pipeline_mode = #tpu.pipeline_mode<synchronous>, transform_indices = @transform_2, window_bounds = array<i64: 1, 128>}, {transform_indices = @transform_3, window_bounds = array<i64: 128, 128>}]} {
    %c0 = arith.constant 0 : index
    %c0_0 = arith.constant 0 : index
    %0 = vector.load %arg1[%c0, %c0_0] : memref<128x32xbf16, #tpu.memory_space<vmem>>, vector<128x32xbf16>
    %c0_1 = arith.constant 0 : index
    %c0_2 = arith.constant 0 : index
    %1 = vector.load %arg2[%c0_1, %c0_2] : memref<32x128xbf16, #tpu.memory_space<vmem>>, vector<32x128xbf16>
    %cst = arith.constant dense<0.000000e+00> : vector<128x128xf32>
    %2 = tpu.matmul %0, %1, %cst {dimension_numbers = #tpu.dot_dimension_numbers<[1], [0], [0], [1], [0, 0, 1, 1], [], []>} : vector<128x32xbf16>, vector<32x128xbf16>, vector<128x128xf32> -> vector<128x128xf32>
    %c0_3 = arith.constant 0 : index
    %c0_4 = arith.constant 0 : index
    %3 = vector.load %arg3[%c0_3, %c0_4] : memref<1x128xf32, #tpu.memory_space<vmem>>, vector<1x128xf32>
    %4 = vector.broadcast %3 : vector<1x128xf32> to vector<128x128xf32>
    %5 = arith.addf %2, %4 : vector<128x128xf32>
    %c0_5 = arith.constant 0 : index
    %c0_6 = arith.constant 0 : index
    %6 = vector.load %arg4[%c0_5, %c0_6] : memref<128x128xf32, #tpu.memory_space<vmem>>, vector<128x128xf32>
    tpu.vector_store %arg4[%c0_5, %c0_6], %5 {strides = array<i32>} : memref<128x128xf32, #tpu.memory_space<vmem>>, vector<128x128xf32>,
    return
  }
  func.func @transform_0(%arg0: i32) -> (i32, i32) {
    %c0_i32 = arith.constant 0 : i32
    %c0_i32_0 = arith.constant 0 : i32
    return %arg0, %c0_i32 : i32, i32
  }
  func.func @transform_1(%arg0: i32) -> (i32, i32) {
    %c0_i32 = arith.constant 0 : i32
    %c0_i32_0 = arith.constant 0 : i32
    %c0_i32_1 = arith.constant 0 : i32
    return %c0_i32, %c0_i32_0 : i32, i32
  }
  func.func @transform_2(%arg0: i32) -> (i32, i32) {
    %c0_i32 = arith.constant 0 : i32
    %c0_i32_0 = arith.constant 0 : i32
    %c0_i32_1 = arith.constant 0 : i32
    return %c0_i32, %c0_i32_0 : i32, i32
  }
  func.func @transform_3(%arg0: i32) -> (i32, i32) {
    %c0_i32 = arith.constant 0 : i32
    %c0_i32_0 = arith.constant 0 : i32
    return %arg0, %c0_i32 : i32, i32
  }
}

module attributes {stable_mosaic.version = 11 : i64} {
  func.func @_ln_linear_kernel(%arg0: i32, %arg1: memref<128x32xf32, #tpu.memory_space<vmem>>, %arg2: memref<1x32xf32, #tpu.memory_space<vmem>>, %arg3: memref<1x32xf32, #tpu.memory_space<vmem>>, %arg4: memref<32x128xbf16, #tpu.memory_space<vmem>>, %arg5: memref<1x128xf32, #tpu.memory_space<vmem>>, %arg6: memref<128x128xf32, #tpu.memory_space<vmem>>) attributes {dimension_semantics = [#tpu.dimension_semantics<parallel>], iteration_bounds = array<i64: 1>, scalar_prefetch = 0 : i64, scratch_operands = 0 : i64, tpu.core_type = #tpu.core_type<tc>, window_params = [{transform_indices = @transform_0, window_bounds = array<i64: 128, 32>}, {pipeline_mode = #tpu.pipeline_mode<synchronous>, transform_indices = @transform_1, window_bounds = array<i64: 1, 32>}, {pipeline_mode = #tpu.pipeline_mode<synchronous>, transform_indices = @transform_2, window_bounds = array<i64: 1, 32>}, {pipeline_mode = #tpu.pipeline_mode<synchronous>, transform_indices = @transform_3, window_bounds = array<i64: 32, 128>}, {pipeline_mode = #tpu.pipeline_mode<synchronous>, transform_indices = @transform_4, window_bounds = array<i64: 1, 128>}, {transform_indices = @transform_5, window_bounds = array<i64: 128, 128>}]} {
    %c0 = arith.constant 0 : index
    %c0_0 = arith.constant 0 : index
    %0 = vector.load %arg1[%c0, %c0_0] : memref<128x32xf32, #tpu.memory_space<vmem>>, vector<128x32xf32>
    %cst = arith.constant dense<0.000000e+00> : vector<128xf32>
    %1 = vector.multi_reduction <add>, %0, %cst [1] : vector<128x32xf32> to vector<128xf32>
    %2 = vector.shape_cast %1 : vector<128xf32> to vector<128x1xf32>
    %cst_1 = arith.constant 3.200000e+01 : f32
    %3 = vector.broadcast %cst_1 : f32 to vector<128x1xf32>
    %4 = arith.divf %2, %3 : vector<128x1xf32>
    %5 = vector.broadcast %4 : vector<128x1xf32> to vector<128x32xf32>
    %6 = arith.subf %0, %5 : vector<128x32xf32>
    %7 = arith.mulf %6, %6 : vector<128x32xf32>
    %cst_2 = arith.constant dense<0.000000e+00> : vector<128xf32>
    %8 = vector.multi_reduction <add>, %7, %cst_2 [1] : vector<128x32xf32> to vector<128xf32>
    %9 = vector.shape_cast %8 : vector<128xf32> to vector<128x1xf32>
    %cst_3 = arith.constant 3.200000e+01 : f32
    %10 = vector.broadcast %cst_3 : f32 to vector<128x1xf32>
    %11 = arith.divf %9, %10 : vector<128x1xf32>
    %12 = vector.broadcast %4 : vector<128x1xf32> to vector<128x32xf32>
    %13 = arith.subf %0, %12 : vector<128x32xf32>
    %cst_4 = arith.constant 9.99999974E-6 : f32
    %14 = vector.broadcast %cst_4 : f32 to vector<128x1xf32>
    %15 = arith.addf %11, %14 : vector<128x1xf32>
    %16 = math.rsqrt %15 : vector<128x1xf32>
    %17 = vector.broadcast %16 : vector<128x1xf32> to vector<128x32xf32>
    %18 = arith.mulf %13, %17 : vector<128x32xf32>
    %c0_5 = arith.constant 0 : index
    %c0_6 = arith.constant 0 : index
    %19 = vector.load %arg2[%c0_5, %c0_6] : memref<1x32xf32, #tpu.memory_space<vmem>>, vector<1x32xf32>
    %20 = vector.broadcast %19 : vector<1x32xf32> to vector<128x32xf32>
    %21 = arith.mulf %18, %20 : vector<128x32xf32>
    %c0_7 = arith.constant 0 : index
    %c0_8 = arith.constant 0 : index
    %22 = vector.load %arg3[%c0_7, %c0_8] : memref<1x32xf32, #tpu.memory_space<vmem>>, vector<1x32xf32>
    %23 = vector.broadcast %22 : vector<1x32xf32> to vector<128x32xf32>
    %24 = arith.addf %21, %23 : vector<128x32xf32>
    %25 = arith.truncf %24 : vector<128x32xf32> to vector<128x32xbf16>
    %c0_9 = arith.constant 0 : index
    %c0_10 = arith.constant 0 : index
    %26 = vector.load %arg4[%c0_9, %c0_10] : memref<32x128xbf16, #tpu.memory_space<vmem>>, vector<32x128xbf16>
    %cst_11 = arith.constant dense<0.000000e+00> : vector<128x128xf32>
    %27 = tpu.matmul %25, %26, %cst_11 {dimension_numbers = #tpu.dot_dimension_numbers<[1], [0], [0], [1], [0, 0, 1, 1], [], []>} : vector<128x32xbf16>, vector<32x128xbf16>, vector<128x128xf32> -> vector<128x128xf32>
    %c0_12 = arith.constant 0 : index
    %c0_13 = arith.constant 0 : index
    %28 = vector.load %arg5[%c0_12, %c0_13] : memref<1x128xf32, #tpu.memory_space<vmem>>, vector<1x128xf32>
    %29 = vector.broadcast %28 : vector<1x128xf32> to vector<128x128xf32>
    %30 = arith.addf %27, %29 : vector<128x128xf32>
    %cst_14 = arith.constant 5.000000e-01 : f32
    %31 = vector.broadcast %cst_14 : f32 to vector<128x128xf32>
    %32 = arith.mulf %31, %30 : vector<128x128xf32>
    %cst_15 = arith.constant 0.707106769 : f32
    %33 = vector.broadcast %cst_15 : f32 to vector<128x128xf32>
    %34 = arith.mulf %30, %33 : vector<128x128xf32>
    %35 = math.absf %34 : vector<128x128xf32>
    %cst_16 = arith.constant 0.327591091 : f32
    %36 = vector.broadcast %cst_16 : f32 to vector<128x128xf32>
    %37 = arith.mulf %36, %35 : vector<128x128xf32>
    %cst_17 = arith.constant 1.000000e+00 : f32
    %38 = vector.broadcast %cst_17 : f32 to vector<128x128xf32>
    %39 = arith.addf %38, %37 : vector<128x128xf32>
    %cst_18 = arith.constant 1.000000e+00 : f32
    %40 = vector.broadcast %cst_18 : f32 to vector<128x128xf32>
    %41 = arith.divf %40, %39 : vector<128x128xf32>
    %cst_19 = arith.constant 1.06140542 : f32
    %42 = vector.broadcast %cst_19 : f32 to vector<128x128xf32>
    %43 = arith.mulf %42, %41 : vector<128x128xf32>
    %cst_20 = arith.constant -1.45315206 : f32
    %44 = vector.broadcast %cst_20 : f32 to vector<128x128xf32>
    %45 = arith.addf %43, %44 : vector<128x128xf32>
    %46 = arith.mulf %45, %41 : vector<128x128xf32>
    %cst_21 = arith.constant 1.42141378 : f32
    %47 = vector.broadcast %cst_21 : f32 to vector<128x128xf32>
    %48 = arith.addf %46, %47 : vector<128x128xf32>
    %49 = arith.mulf %48, %41 : vector<128x128xf32>
    %cst_22 = arith.constant -0.284496725 : f32
    %50 = vector.broadcast %cst_22 : f32 to vector<128x128xf32>
    %51 = arith.addf %49, %50 : vector<128x128xf32>
    %52 = arith.mulf %51, %41 : vector<128x128xf32>
    %cst_23 = arith.constant 0.254829586 : f32
    %53 = vector.broadcast %cst_23 : f32 to vector<128x128xf32>
    %54 = arith.addf %52, %53 : vector<128x128xf32>
    %55 = arith.mulf %54, %41 : vector<128x128xf32>
    %cst_24 = arith.constant 0.000000e+00 : f32
    %56 = vector.broadcast %cst_24 : f32 to vector<128x128xf32>
    %57 = arith.subf %56, %35 : vector<128x128xf32>
    %58 = arith.mulf %57, %35 : vector<128x128xf32>
    %59 = math.exp %58 : vector<128x128xf32>
    %60 = arith.mulf %55, %59 : vector<128x128xf32>
    %cst_25 = arith.constant 1.000000e+00 : f32
    %61 = vector.broadcast %cst_25 : f32 to vector<128x128xf32>
    %62 = arith.subf %61, %60 : vector<128x128xf32>
    %cst_26 = arith.constant 0.000000e+00 : f32
    %63 = vector.broadcast %cst_26 : f32 to vector<128x128xf32>
    %64 = arith.cmpf oge, %34, %63 : vector<128x128xf32>
    %cst_27 = arith.constant 0.000000e+00 : f32
    %65 = vector.broadcast %cst_27 : f32 to vector<128x128xf32>
    %66 = arith.subf %65, %62 : vector<128x128xf32>
    %67 = arith.select %64, %62, %66 : vector<128x128xi1>, vector<128x128xf32>
    %cst_28 = arith.constant 1.000000e+00 : f32
    %68 = vector.broadcast %cst_28 : f32 to vector<128x128xf32>
    %69 = arith.addf %68, %67 : vector<128x128xf32>
    %70 = arith.mulf %32, %69 : vector<128x128xf32>
    %c0_29 = arith.constant 0 : index
    %c0_30 = arith.constant 0 : index
    %71 = vector.load %arg6[%c0_29, %c0_30] : memref<128x128xf32, #tpu.memory_space<vmem>>, vector<128x128xf32>
    tpu.vector_store %arg6[%c0_29, %c0_30], %70 {strides = array<i32>} : memref<128x128xf32, #tpu.memory_space<vmem>>, vector<128x128xf32>,
    return
  }
  func.func @transform_0(%arg0: i32) -> (i32, i32) {
    %c0_i32 = arith.constant 0 : i32
    %c0_i32_0 = arith.constant 0 : i32
    return %arg0, %c0_i32 : i32, i32
  }
  func.func @transform_1(%arg0: i32) -> (i32, i32) {
    %c0_i32 = arith.constant 0 : i32
    %c0_i32_0 = arith.constant 0 : i32
    %c0_i32_1 = arith.constant 0 : i32
    return %c0_i32, %c0_i32_0 : i32, i32
  }
  func.func @transform_2(%arg0: i32) -> (i32, i32) {
    %c0_i32 = arith.constant 0 : i32
    %c0_i32_0 = arith.constant 0 : i32
    %c0_i32_1 = arith.constant 0 : i32
    return %c0_i32, %c0_i32_0 : i32, i32
  }
  func.func @transform_3(%arg0: i32) -> (i32, i32) {
    %c0_i32 = arith.constant 0 : i32
    %c0_i32_0 = arith.constant 0 : i32
    %c0_i32_1 = arith.constant 0 : i32
    return %c0_i32, %c0_i32_0 : i32, i32
  }
  func.func @transform_4(%arg0: i32) -> (i32, i32) {
    %c0_i32 = arith.constant 0 : i32
    %c0_i32_0 = arith.constant 0 : i32
    %c0_i32_1 = arith.constant 0 : i32
    return %c0_i32, %c0_i32_0 : i32, i32
  }
  func.func @transform_5(%arg0: i32) -> (i32, i32) {
    %c0_i32 = arith.constant 0 : i32
    %c0_i32_0 = arith.constant 0 : i32
    return %arg0, %c0_i32 : i32, i32
  }
}

module attributes {stable_mosaic.version = 11 : i64} {
  func.func @_linear_kernel(%arg0: i32, %arg1: memref<32x128xbf16, #tpu.memory_space<vmem>>, %arg2: memref<128x128xbf16, #tpu.memory_space<vmem>>, %arg3: memref<1x128xf32, #tpu.memory_space<vmem>>, %arg4: memref<32x128xf32, #tpu.memory_space<vmem>>) attributes {dimension_semantics = [#tpu.dimension_semantics<parallel>], iteration_bounds = array<i64: 1>, scalar_prefetch = 0 : i64, scratch_operands = 0 : i64, tpu.core_type = #tpu.core_type<tc>, window_params = [{transform_indices = @transform_0, window_bounds = array<i64: 32, 128>}, {pipeline_mode = #tpu.pipeline_mode<synchronous>, transform_indices = @transform_1, window_bounds = array<i64: 128, 128>}, {pipeline_mode = #tpu.pipeline_mode<synchronous>, transform_indices = @transform_2, window_bounds = array<i64: 1, 128>}, {transform_indices = @transform_3, window_bounds = array<i64: 32, 128>}]} {
    %c0 = arith.constant 0 : index
    %c0_0 = arith.constant 0 : index
    %0 = vector.load %arg1[%c0, %c0_0] : memref<32x128xbf16, #tpu.memory_space<vmem>>, vector<32x128xbf16>
    %c0_1 = arith.constant 0 : index
    %c0_2 = arith.constant 0 : index
    %1 = vector.load %arg2[%c0_1, %c0_2] : memref<128x128xbf16, #tpu.memory_space<vmem>>, vector<128x128xbf16>
    %cst = arith.constant dense<0.000000e+00> : vector<32x128xf32>
    %2 = tpu.matmul %0, %1, %cst {dimension_numbers = #tpu.dot_dimension_numbers<[1], [0], [0], [1], [0, 0, 1, 1], [], []>} : vector<32x128xbf16>, vector<128x128xbf16>, vector<32x128xf32> -> vector<32x128xf32>
    %c0_3 = arith.constant 0 : index
    %c0_4 = arith.constant 0 : index
    %3 = vector.load %arg3[%c0_3, %c0_4] : memref<1x128xf32, #tpu.memory_space<vmem>>, vector<1x128xf32>
    %4 = vector.broadcast %3 : vector<1x128xf32> to vector<32x128xf32>
    %5 = arith.addf %2, %4 : vector<32x128xf32>
    %c0_5 = arith.constant 0 : index
    %c0_6 = arith.constant 0 : index
    %6 = vector.load %arg4[%c0_5, %c0_6] : memref<32x128xf32, #tpu.memory_space<vmem>>, vector<32x128xf32>
    tpu.vector_store %arg4[%c0_5, %c0_6], %5 {strides = array<i32>} : memref<32x128xf32, #tpu.memory_space<vmem>>, vector<32x128xf32>,
    return
  }
  func.func @transform_0(%arg0: i32) -> (i32, i32) {
    %c0_i32 = arith.constant 0 : i32
    %c0_i32_0 = arith.constant 0 : i32
    return %arg0, %c0_i32 : i32, i32
  }
  func.func @transform_1(%arg0: i32) -> (i32, i32) {
    %c0_i32 = arith.constant 0 : i32
    %c0_i32_0 = arith.constant 0 : i32
    %c0_i32_1 = arith.constant 0 : i32
    return %c0_i32, %c0_i32_0 : i32, i32
  }
  func.func @transform_2(%arg0: i32) -> (i32, i32) {
    %c0_i32 = arith.constant 0 : i32
    %c0_i32_0 = arith.constant 0 : i32
    %c0_i32_1 = arith.constant 0 : i32
    return %c0_i32, %c0_i32_0 : i32, i32
  }
  func.func @transform_3(%arg0: i32) -> (i32, i32) {
    %c0_i32 = arith.constant 0 : i32
    %c0_i32_0 = arith.constant 0 : i32
    return %arg0, %c0_i32 : i32, i32
  }
}

module attributes {stable_mosaic.version = 11 : i64} {
  func.func @_ln_linear_kernel(%arg0: i32, %arg1: memref<32x64xf32, #tpu.memory_space<vmem>>, %arg2: memref<1x64xf32, #tpu.memory_space<vmem>>, %arg3: memref<1x64xf32, #tpu.memory_space<vmem>>, %arg4: memref<64x256xbf16, #tpu.memory_space<vmem>>, %arg5: memref<1x256xf32, #tpu.memory_space<vmem>>, %arg6: memref<32x256xf32, #tpu.memory_space<vmem>>) attributes {dimension_semantics = [#tpu.dimension_semantics<parallel>], iteration_bounds = array<i64: 1>, scalar_prefetch = 0 : i64, scratch_operands = 0 : i64, tpu.core_type = #tpu.core_type<tc>, window_params = [{transform_indices = @transform_0, window_bounds = array<i64: 32, 64>}, {pipeline_mode = #tpu.pipeline_mode<synchronous>, transform_indices = @transform_1, window_bounds = array<i64: 1, 64>}, {pipeline_mode = #tpu.pipeline_mode<synchronous>, transform_indices = @transform_2, window_bounds = array<i64: 1, 64>}, {pipeline_mode = #tpu.pipeline_mode<synchronous>, transform_indices = @transform_3, window_bounds = array<i64: 64, 256>}, {pipeline_mode = #tpu.pipeline_mode<synchronous>, transform_indices = @transform_4, window_bounds = array<i64: 1, 256>}, {transform_indices = @transform_5, window_bounds = array<i64: 32, 256>}]} {
    %c0 = arith.constant 0 : index
    %c0_0 = arith.constant 0 : index
    %0 = vector.load %arg1[%c0, %c0_0] : memref<32x64xf32, #tpu.memory_space<vmem>>, vector<32x64xf32>
    %cst = arith.constant dense<0.000000e+00> : vector<32xf32>
    %1 = vector.multi_reduction <add>, %0, %cst [1] : vector<32x64xf32> to vector<32xf32>
    %2 = vector.shape_cast %1 : vector<32xf32> to vector<32x1xf32>
    %cst_1 = arith.constant 6.400000e+01 : f32
    %3 = vector.broadcast %cst_1 : f32 to vector<32x1xf32>
    %4 = arith.divf %2, %3 : vector<32x1xf32>
    %5 = vector.broadcast %4 : vector<32x1xf32> to vector<32x64xf32>
    %6 = arith.subf %0, %5 : vector<32x64xf32>
    %7 = arith.mulf %6, %6 : vector<32x64xf32>
    %cst_2 = arith.constant dense<0.000000e+00> : vector<32xf32>
    %8 = vector.multi_reduction <add>, %7, %cst_2 [1] : vector<32x64xf32> to vector<32xf32>
    %9 = vector.shape_cast %8 : vector<32xf32> to vector<32x1xf32>
    %cst_3 = arith.constant 6.400000e+01 : f32
    %10 = vector.broadcast %cst_3 : f32 to vector<32x1xf32>
    %11 = arith.divf %9, %10 : vector<32x1xf32>
    %12 = vector.broadcast %4 : vector<32x1xf32> to vector<32x64xf32>
    %13 = arith.subf %0, %12 : vector<32x64xf32>
    %cst_4 = arith.constant 9.99999974E-6 : f32
    %14 = vector.broadcast %cst_4 : f32 to vector<32x1xf32>
    %15 = arith.addf %11, %14 : vector<32x1xf32>
    %16 = math.rsqrt %15 : vector<32x1xf32>
    %17 = vector.broadcast %16 : vector<32x1xf32> to vector<32x64xf32>
    %18 = arith.mulf %13, %17 : vector<32x64xf32>
    %c0_5 = arith.constant 0 : index
    %c0_6 = arith.constant 0 : index
    %19 = vector.load %arg2[%c0_5, %c0_6] : memref<1x64xf32, #tpu.memory_space<vmem>>, vector<1x64xf32>
    %20 = vector.broadcast %19 : vector<1x64xf32> to vector<32x64xf32>
    %21 = arith.mulf %18, %20 : vector<32x64xf32>
    %c0_7 = arith.constant 0 : index
    %c0_8 = arith.constant 0 : index
    %22 = vector.load %arg3[%c0_7, %c0_8] : memref<1x64xf32, #tpu.memory_space<vmem>>, vector<1x64xf32>
    %23 = vector.broadcast %22 : vector<1x64xf32> to vector<32x64xf32>
    %24 = arith.addf %21, %23 : vector<32x64xf32>
    %25 = arith.truncf %24 : vector<32x64xf32> to vector<32x64xbf16>
    %c0_9 = arith.constant 0 : index
    %c0_10 = arith.constant 0 : index
    %26 = vector.load %arg4[%c0_9, %c0_10] : memref<64x256xbf16, #tpu.memory_space<vmem>>, vector<64x256xbf16>
    %cst_11 = arith.constant dense<0.000000e+00> : vector<32x256xf32>
    %27 = tpu.matmul %25, %26, %cst_11 {dimension_numbers = #tpu.dot_dimension_numbers<[1], [0], [0], [1], [0, 0, 1, 1], [], []>} : vector<32x64xbf16>, vector<64x256xbf16>, vector<32x256xf32> -> vector<32x256xf32>
    %c0_12 = arith.constant 0 : index
    %c0_13 = arith.constant 0 : index
    %28 = vector.load %arg5[%c0_12, %c0_13] : memref<1x256xf32, #tpu.memory_space<vmem>>, vector<1x256xf32>
    %29 = vector.broadcast %28 : vector<1x256xf32> to vector<32x256xf32>
    %30 = arith.addf %27, %29 : vector<32x256xf32>
    %c0_14 = arith.constant 0 : index
    %c0_15 = arith.constant 0 : index
    %31 = vector.load %arg6[%c0_14, %c0_15] : memref<32x256xf32, #tpu.memory_space<vmem>>, vector<32x256xf32>
    tpu.vector_store %arg6[%c0_14, %c0_15], %30 {strides = array<i32>} : memref<32x256xf32, #tpu.memory_space<vmem>>, vector<32x256xf32>,
    return
  }
  func.func @transform_0(%arg0: i32) -> (i32, i32) {
    %c0_i32 = arith.constant 0 : i32
    %c0_i32_0 = arith.constant 0 : i32
    return %arg0, %c0_i32 : i32, i32
  }
  func.func @transform_1(%arg0: i32) -> (i32, i32) {
    %c0_i32 = arith.constant 0 : i32
    %c0_i32_0 = arith.constant 0 : i32
    %c0_i32_1 = arith.constant 0 : i32
    return %c0_i32, %c0_i32_0 : i32, i32
  }
  func.func @transform_2(%arg0: i32) -> (i32, i32) {
    %c0_i32 = arith.constant 0 : i32
    %c0_i32_0 = arith.constant 0 : i32
    %c0_i32_1 = arith.constant 0 : i32
    return %c0_i32, %c0_i32_0 : i32, i32
  }
  func.func @transform_3(%arg0: i32) -> (i32, i32) {
    %c0_i32 = arith.constant 0 : i32
    %c0_i32_0 = arith.constant 0 : i32
    %c0_i32_1 = arith.constant 0 : i32
    return %c0_i32, %c0_i32_0 : i32, i32
  }
  func.func @transform_4(%arg0: i32) -> (i32, i32) {
    %c0_i32 = arith.constant 0 : i32
    %c0_i32_0 = arith.constant 0 : i32
    %c0_i32_1 = arith.constant 0 : i32
    return %c0_i32, %c0_i32_0 : i32, i32
  }
  func.func @transform_5(%arg0: i32) -> (i32, i32) {
    %c0_i32 = arith.constant 0 : i32
    %c0_i32_0 = arith.constant 0 : i32
    return %arg0, %c0_i32 : i32, i32
  }
}

module attributes {stable_mosaic.version = 11 : i64} {
  func.func @_self_attn_kernel(%arg0: i32, %arg1: memref<4x16x32xbf16, #tpu.memory_space<vmem>>, %arg2: memref<4x16x32xbf16, #tpu.memory_space<vmem>>, %arg3: memref<4x16x32xbf16, #tpu.memory_space<vmem>>, %arg4: memref<4x16x32xf32, #tpu.memory_space<vmem>>) attributes {dimension_semantics = [#tpu.dimension_semantics<parallel>], iteration_bounds = array<i64: 1>, scalar_prefetch = 0 : i64, scratch_operands = 0 : i64, tpu.core_type = #tpu.core_type<tc>, window_params = [{pipeline_mode = #tpu.pipeline_mode<synchronous>, transform_indices = @transform_0, window_bounds = array<i64: 4, 16, 32>}, {pipeline_mode = #tpu.pipeline_mode<synchronous>, transform_indices = @transform_1, window_bounds = array<i64: 4, 16, 32>}, {pipeline_mode = #tpu.pipeline_mode<synchronous>, transform_indices = @transform_2, window_bounds = array<i64: 4, 16, 32>}, {pipeline_mode = #tpu.pipeline_mode<synchronous>, transform_indices = @transform_3, window_bounds = array<i64: 4, 16, 32>}]} {
    %c0 = arith.constant 0 : index
    %c0_0 = arith.constant 0 : index
    %c0_1 = arith.constant 0 : index
    %0 = vector.load %arg1[%c0, %c0_0, %c0_1] : memref<4x16x32xbf16, #tpu.memory_space<vmem>>, vector<4x16x32xbf16>
    %c0_2 = arith.constant 0 : index
    %c0_3 = arith.constant 0 : index
    %c0_4 = arith.constant 0 : index
    %1 = vector.load %arg2[%c0_2, %c0_3, %c0_4] : memref<4x16x32xbf16, #tpu.memory_space<vmem>>, vector<4x16x32xbf16>
    %c0_5 = arith.constant 0 : index
    %c0_6 = arith.constant 0 : index
    %c0_7 = arith.constant 0 : index
    %2 = vector.load %arg3[%c0_5, %c0_6, %c0_7] : memref<4x16x32xbf16, #tpu.memory_space<vmem>>, vector<4x16x32xbf16>
    "tpu.trace_start"() <{level = 10 : i32, message = "gnd,gmd->gnm"}> : () -> ()
    %cst = arith.constant dense<0.000000e+00> : vector<4x16x16xf32>
    %3 = tpu.matmul %0, %1, %cst {dimension_numbers = #tpu.dot_dimension_numbers<[2], [2], [1], [1], [0, 0, 0, 1, 1, 1], [0], [0]>} : vector<4x16x32xbf16>, vector<4x16x32xbf16>, vector<4x16x16xf32> -> vector<4x16x16xf32>
    "tpu.trace_stop"() : () -> ()
    %cst_8 = arith.constant 0.176776692 : f32
    %4 = vector.broadcast %cst_8 : f32 to vector<4x16x16xf32>
    %5 = arith.mulf %3, %4 : vector<4x16x16xf32>
    %cst_9 = arith.constant dense<0xFF800000> : vector<4x16xf32>
    %6 = vector.multi_reduction <maximumf>, %5, %cst_9 [2] : vector<4x16x16xf32> to vector<4x16xf32>
    %7 = vector.shape_cast %6 : vector<4x16xf32> to vector<4x16x1xf32>
    %8 = vector.broadcast %7 : vector<4x16x1xf32> to vector<4x16x16xf32>
    %9 = arith.subf %5, %8 : vector<4x16x16xf32>
    %10 = math.exp %9 : vector<4x16x16xf32>
    %cst_10 = arith.constant dense<0.000000e+00> : vector<4x16xf32>
    %11 = vector.multi_reduction <add>, %10, %cst_10 [2] : vector<4x16x16xf32> to vector<4x16xf32>
    %12 = vector.shape_cast %11 : vector<4x16xf32> to vector<4x16x1xf32>
    %13 = vector.broadcast %12 : vector<4x16x1xf32> to vector<4x16x16xf32>
    %14 = arith.divf %10, %13 : vector<4x16x16xf32>
    %15 = arith.truncf %14 : vector<4x16x16xf32> to vector<4x16x16xbf16>
    "tpu.trace_start"() <{level = 10 : i32, message = "gnm,gmd->gnd"}> : () -> ()
    %cst_11 = arith.constant dense<0.000000e+00> : vector<4x16x32xf32>
    %16 = tpu.matmul %15, %2, %cst_11 {dimension_numbers = #tpu.dot_dimension_numbers<[2], [1], [1], [2], [0, 0, 0, 1, 1, 2], [0], [0]>} : vector<4x16x16xbf16>, vector<4x16x32xbf16>, vector<4x16x32xf32> -> vector<4x16x32xf32>
    "tpu.trace_stop"() : () -> ()
    %c0_12 = arith.constant 0 : index
    %c0_13 = arith.constant 0 : index
    %c0_14 = arith.constant 0 : index
    %17 = vector.load %arg4[%c0_12, %c0_13, %c0_14] : memref<4x16x32xf32, #tpu.memory_space<vmem>>, vector<4x16x32xf32>
    tpu.vector_store %arg4[%c0_12, %c0_13, %c0_14], %16 {strides = array<i32>} : memref<4x16x32xf32, #tpu.memory_space<vmem>>, vector<4x16x32xf32>,
    return
  }
  func.func @transform_0(%arg0: i32) -> (i32, i32, i32) {
    %c0_i32 = arith.constant 0 : i32
    %c0_i32_0 = arith.constant 0 : i32
    %c0_i32_1 = arith.constant 0 : i32
    %c0_i32_2 = arith.constant 0 : i32
    return %c0_i32, %c0_i32_0, %c0_i32_1 : i32, i32, i32
  }
  func.func @transform_1(%arg0: i32) -> (i32, i32, i32) {
    %c0_i32 = arith.constant 0 : i32
    %c0_i32_0 = arith.constant 0 : i32
    %c0_i32_1 = arith.constant 0 : i32
    %c0_i32_2 = arith.constant 0 : i32
    return %c0_i32, %c0_i32_0, %c0_i32_1 : i32, i32, i32
  }
  func.func @transform_2(%arg0: i32) -> (i32, i32, i32) {
    %c0_i32 = arith.constant 0 : i32
    %c0_i32_0 = arith.constant 0 : i32
    %c0_i32_1 = arith.constant 0 : i32
    %c0_i32_2 = arith.constant 0 : i32
    return %c0_i32, %c0_i32_0, %c0_i32_1 : i32, i32, i32
  }
  func.func @transform_3(%arg0: i32) -> (i32, i32, i32) {
    %c0_i32 = arith.constant 0 : i32
    %c0_i32_0 = arith.constant 0 : i32
    %c0_i32_1 = arith.constant 0 : i32
    %c0_i32_2 = arith.constant 0 : i32
    return %c0_i32, %c0_i32_0, %c0_i32_1 : i32, i32, i32
  }
}

module attributes {stable_mosaic.version = 11 : i64} {
  func.func @_linear_kernel(%arg0: i32, %arg1: memref<32x64xbf16, #tpu.memory_space<vmem>>, %arg2: memref<64x128xbf16, #tpu.memory_space<vmem>>, %arg3: memref<1x128xf32, #tpu.memory_space<vmem>>, %arg4: memref<32x128xf32, #tpu.memory_space<vmem>>) attributes {dimension_semantics = [#tpu.dimension_semantics<parallel>], iteration_bounds = array<i64: 1>, scalar_prefetch = 0 : i64, scratch_operands = 0 : i64, tpu.core_type = #tpu.core_type<tc>, window_params = [{transform_indices = @transform_0, window_bounds = array<i64: 32, 64>}, {pipeline_mode = #tpu.pipeline_mode<synchronous>, transform_indices = @transform_1, window_bounds = array<i64: 64, 128>}, {pipeline_mode = #tpu.pipeline_mode<synchronous>, transform_indices = @transform_2, window_bounds = array<i64: 1, 128>}, {transform_indices = @transform_3, window_bounds = array<i64: 32, 128>}]} {
    %c0 = arith.constant 0 : index
    %c0_0 = arith.constant 0 : index
    %0 = vector.load %arg1[%c0, %c0_0] : memref<32x64xbf16, #tpu.memory_space<vmem>>, vector<32x64xbf16>
    %c0_1 = arith.constant 0 : index
    %c0_2 = arith.constant 0 : index
    %1 = vector.load %arg2[%c0_1, %c0_2] : memref<64x128xbf16, #tpu.memory_space<vmem>>, vector<64x128xbf16>
    %cst = arith.constant dense<0.000000e+00> : vector<32x128xf32>
    %2 = tpu.matmul %0, %1, %cst {dimension_numbers = #tpu.dot_dimension_numbers<[1], [0], [0], [1], [0, 0, 1, 1], [], []>} : vector<32x64xbf16>, vector<64x128xbf16>, vector<32x128xf32> -> vector<32x128xf32>
    %c0_3 = arith.constant 0 : index
    %c0_4 = arith.constant 0 : index
    %3 = vector.load %arg3[%c0_3, %c0_4] : memref<1x128xf32, #tpu.memory_space<vmem>>, vector<1x128xf32>
    %4 = vector.broadcast %3 : vector<1x128xf32> to vector<32x128xf32>
    %5 = arith.addf %2, %4 : vector<32x128xf32>
    %c0_5 = arith.constant 0 : index
    %c0_6 = arith.constant 0 : index
    %6 = vector.load %arg4[%c0_5, %c0_6] : memref<32x128xf32, #tpu.memory_space<vmem>>, vector<32x128xf32>
    tpu.vector_store %arg4[%c0_5, %c0_6], %5 {strides = array<i32>} : memref<32x128xf32, #tpu.memory_space<vmem>>, vector<32x128xf32>,
    return
  }
  func.func @transform_0(%arg0: i32) -> (i32, i32) {
    %c0_i32 = arith.constant 0 : i32
    %c0_i32_0 = arith.constant 0 : i32
    return %arg0, %c0_i32 : i32, i32
  }
  func.func @transform_1(%arg0: i32) -> (i32, i32) {
    %c0_i32 = arith.constant 0 : i32
    %c0_i32_0 = arith.constant 0 : i32
    %c0_i32_1 = arith.constant 0 : i32
    return %c0_i32, %c0_i32_0 : i32, i32
  }
  func.func @transform_2(%arg0: i32) -> (i32, i32) {
    %c0_i32 = arith.constant 0 : i32
    %c0_i32_0 = arith.constant 0 : i32
    %c0_i32_1 = arith.constant 0 : i32
    return %c0_i32, %c0_i32_0 : i32, i32
  }
  func.func @transform_3(%arg0: i32) -> (i32, i32) {
    %c0_i32 = arith.constant 0 : i32
    %c0_i32_0 = arith.constant 0 : i32
    return %arg0, %c0_i32 : i32, i32
  }
}

module attributes {stable_mosaic.version = 11 : i64} {
  func.func @_ln_linear_kernel(%arg0: i32, %arg1: memref<32x64xf32, #tpu.memory_space<vmem>>, %arg2: memref<1x64xf32, #tpu.memory_space<vmem>>, %arg3: memref<1x64xf32, #tpu.memory_space<vmem>>, %arg4: memref<64x128xbf16, #tpu.memory_space<vmem>>, %arg5: memref<1x128xf32, #tpu.memory_space<vmem>>, %arg6: memref<32x128xf32, #tpu.memory_space<vmem>>) attributes {dimension_semantics = [#tpu.dimension_semantics<parallel>], iteration_bounds = array<i64: 1>, scalar_prefetch = 0 : i64, scratch_operands = 0 : i64, tpu.core_type = #tpu.core_type<tc>, window_params = [{transform_indices = @transform_0, window_bounds = array<i64: 32, 64>}, {pipeline_mode = #tpu.pipeline_mode<synchronous>, transform_indices = @transform_1, window_bounds = array<i64: 1, 64>}, {pipeline_mode = #tpu.pipeline_mode<synchronous>, transform_indices = @transform_2, window_bounds = array<i64: 1, 64>}, {pipeline_mode = #tpu.pipeline_mode<synchronous>, transform_indices = @transform_3, window_bounds = array<i64: 64, 128>}, {pipeline_mode = #tpu.pipeline_mode<synchronous>, transform_indices = @transform_4, window_bounds = array<i64: 1, 128>}, {transform_indices = @transform_5, window_bounds = array<i64: 32, 128>}]} {
    %c0 = arith.constant 0 : index
    %c0_0 = arith.constant 0 : index
    %0 = vector.load %arg1[%c0, %c0_0] : memref<32x64xf32, #tpu.memory_space<vmem>>, vector<32x64xf32>
    %cst = arith.constant dense<0.000000e+00> : vector<32xf32>
    %1 = vector.multi_reduction <add>, %0, %cst [1] : vector<32x64xf32> to vector<32xf32>
    %2 = vector.shape_cast %1 : vector<32xf32> to vector<32x1xf32>
    %cst_1 = arith.constant 6.400000e+01 : f32
    %3 = vector.broadcast %cst_1 : f32 to vector<32x1xf32>
    %4 = arith.divf %2, %3 : vector<32x1xf32>
    %5 = vector.broadcast %4 : vector<32x1xf32> to vector<32x64xf32>
    %6 = arith.subf %0, %5 : vector<32x64xf32>
    %7 = arith.mulf %6, %6 : vector<32x64xf32>
    %cst_2 = arith.constant dense<0.000000e+00> : vector<32xf32>
    %8 = vector.multi_reduction <add>, %7, %cst_2 [1] : vector<32x64xf32> to vector<32xf32>
    %9 = vector.shape_cast %8 : vector<32xf32> to vector<32x1xf32>
    %cst_3 = arith.constant 6.400000e+01 : f32
    %10 = vector.broadcast %cst_3 : f32 to vector<32x1xf32>
    %11 = arith.divf %9, %10 : vector<32x1xf32>
    %12 = vector.broadcast %4 : vector<32x1xf32> to vector<32x64xf32>
    %13 = arith.subf %0, %12 : vector<32x64xf32>
    %cst_4 = arith.constant 9.99999974E-6 : f32
    %14 = vector.broadcast %cst_4 : f32 to vector<32x1xf32>
    %15 = arith.addf %11, %14 : vector<32x1xf32>
    %16 = math.rsqrt %15 : vector<32x1xf32>
    %17 = vector.broadcast %16 : vector<32x1xf32> to vector<32x64xf32>
    %18 = arith.mulf %13, %17 : vector<32x64xf32>
    %c0_5 = arith.constant 0 : index
    %c0_6 = arith.constant 0 : index
    %19 = vector.load %arg2[%c0_5, %c0_6] : memref<1x64xf32, #tpu.memory_space<vmem>>, vector<1x64xf32>
    %20 = vector.broadcast %19 : vector<1x64xf32> to vector<32x64xf32>
    %21 = arith.mulf %18, %20 : vector<32x64xf32>
    %c0_7 = arith.constant 0 : index
    %c0_8 = arith.constant 0 : index
    %22 = vector.load %arg3[%c0_7, %c0_8] : memref<1x64xf32, #tpu.memory_space<vmem>>, vector<1x64xf32>
    %23 = vector.broadcast %22 : vector<1x64xf32> to vector<32x64xf32>
    %24 = arith.addf %21, %23 : vector<32x64xf32>
    %25 = arith.truncf %24 : vector<32x64xf32> to vector<32x64xbf16>
    %c0_9 = arith.constant 0 : index
    %c0_10 = arith.constant 0 : index
    %26 = vector.load %arg4[%c0_9, %c0_10] : memref<64x128xbf16, #tpu.memory_space<vmem>>, vector<64x128xbf16>
    %cst_11 = arith.constant dense<0.000000e+00> : vector<32x128xf32>
    %27 = tpu.matmul %25, %26, %cst_11 {dimension_numbers = #tpu.dot_dimension_numbers<[1], [0], [0], [1], [0, 0, 1, 1], [], []>} : vector<32x64xbf16>, vector<64x128xbf16>, vector<32x128xf32> -> vector<32x128xf32>
    %c0_12 = arith.constant 0 : index
    %c0_13 = arith.constant 0 : index
    %28 = vector.load %arg5[%c0_12, %c0_13] : memref<1x128xf32, #tpu.memory_space<vmem>>, vector<1x128xf32>
    %29 = vector.broadcast %28 : vector<1x128xf32> to vector<32x128xf32>
    %30 = arith.addf %27, %29 : vector<32x128xf32>
    %cst_14 = arith.constant 5.000000e-01 : f32
    %31 = vector.broadcast %cst_14 : f32 to vector<32x128xf32>
    %32 = arith.mulf %31, %30 : vector<32x128xf32>
    %cst_15 = arith.constant 0.707106769 : f32
    %33 = vector.broadcast %cst_15 : f32 to vector<32x128xf32>
    %34 = arith.mulf %30, %33 : vector<32x128xf32>
    %35 = math.absf %34 : vector<32x128xf32>
    %cst_16 = arith.constant 0.327591091 : f32
    %36 = vector.broadcast %cst_16 : f32 to vector<32x128xf32>
    %37 = arith.mulf %36, %35 : vector<32x128xf32>
    %cst_17 = arith.constant 1.000000e+00 : f32
    %38 = vector.broadcast %cst_17 : f32 to vector<32x128xf32>
    %39 = arith.addf %38, %37 : vector<32x128xf32>
    %cst_18 = arith.constant 1.000000e+00 : f32
    %40 = vector.broadcast %cst_18 : f32 to vector<32x128xf32>
    %41 = arith.divf %40, %39 : vector<32x128xf32>
    %cst_19 = arith.constant 1.06140542 : f32
    %42 = vector.broadcast %cst_19 : f32 to vector<32x128xf32>
    %43 = arith.mulf %42, %41 : vector<32x128xf32>
    %cst_20 = arith.constant -1.45315206 : f32
    %44 = vector.broadcast %cst_20 : f32 to vector<32x128xf32>
    %45 = arith.addf %43, %44 : vector<32x128xf32>
    %46 = arith.mulf %45, %41 : vector<32x128xf32>
    %cst_21 = arith.constant 1.42141378 : f32
    %47 = vector.broadcast %cst_21 : f32 to vector<32x128xf32>
    %48 = arith.addf %46, %47 : vector<32x128xf32>
    %49 = arith.mulf %48, %41 : vector<32x128xf32>
    %cst_22 = arith.constant -0.284496725 : f32
    %50 = vector.broadcast %cst_22 : f32 to vector<32x128xf32>
    %51 = arith.addf %49, %50 : vector<32x128xf32>
    %52 = arith.mulf %51, %41 : vector<32x128xf32>
    %cst_23 = arith.constant 0.254829586 : f32
    %53 = vector.broadcast %cst_23 : f32 to vector<32x128xf32>
    %54 = arith.addf %52, %53 : vector<32x128xf32>
    %55 = arith.mulf %54, %41 : vector<32x128xf32>
    %cst_24 = arith.constant 0.000000e+00 : f32
    %56 = vector.broadcast %cst_24 : f32 to vector<32x128xf32>
    %57 = arith.subf %56, %35 : vector<32x128xf32>
    %58 = arith.mulf %57, %35 : vector<32x128xf32>
    %59 = math.exp %58 : vector<32x128xf32>
    %60 = arith.mulf %55, %59 : vector<32x128xf32>
    %cst_25 = arith.constant 1.000000e+00 : f32
    %61 = vector.broadcast %cst_25 : f32 to vector<32x128xf32>
    %62 = arith.subf %61, %60 : vector<32x128xf32>
    %cst_26 = arith.constant 0.000000e+00 : f32
    %63 = vector.broadcast %cst_26 : f32 to vector<32x128xf32>
    %64 = arith.cmpf oge, %34, %63 : vector<32x128xf32>
    %cst_27 = arith.constant 0.000000e+00 : f32
    %65 = vector.broadcast %cst_27 : f32 to vector<32x128xf32>
    %66 = arith.subf %65, %62 : vector<32x128xf32>
    %67 = arith.select %64, %62, %66 : vector<32x128xi1>, vector<32x128xf32>
    %cst_28 = arith.constant 1.000000e+00 : f32
    %68 = vector.broadcast %cst_28 : f32 to vector<32x128xf32>
    %69 = arith.addf %68, %67 : vector<32x128xf32>
    %70 = arith.mulf %32, %69 : vector<32x128xf32>
    %c0_29 = arith.constant 0 : index
    %c0_30 = arith.constant 0 : index
    %71 = vector.load %arg6[%c0_29, %c0_30] : memref<32x128xf32, #tpu.memory_space<vmem>>, vector<32x128xf32>
    tpu.vector_store %arg6[%c0_29, %c0_30], %70 {strides = array<i32>} : memref<32x128xf32, #tpu.memory_space<vmem>>, vector<32x128xf32>,
    return
  }
  func.func @transform_0(%arg0: i32) -> (i32, i32) {
    %c0_i32 = arith.constant 0 : i32
    %c0_i32_0 = arith.constant 0 : i32
    return %arg0, %c0_i32 : i32, i32
  }
  func.func @transform_1(%arg0: i32) -> (i32, i32) {
    %c0_i32 = arith.constant 0 : i32
    %c0_i32_0 = arith.constant 0 : i32
    %c0_i32_1 = arith.constant 0 : i32
    return %c0_i32, %c0_i32_0 : i32, i32
  }
  func.func @transform_2(%arg0: i32) -> (i32, i32) {
    %c0_i32 = arith.constant 0 : i32
    %c0_i32_0 = arith.constant 0 : i32
    %c0_i32_1 = arith.constant 0 : i32
    return %c0_i32, %c0_i32_0 : i32, i32
  }
  func.func @transform_3(%arg0: i32) -> (i32, i32) {
    %c0_i32 = arith.constant 0 : i32
    %c0_i32_0 = arith.constant 0 : i32
    %c0_i32_1 = arith.constant 0 : i32
    return %c0_i32, %c0_i32_0 : i32, i32
  }
  func.func @transform_4(%arg0: i32) -> (i32, i32) {
    %c0_i32 = arith.constant 0 : i32
    %c0_i32_0 = arith.constant 0 : i32
    %c0_i32_1 = arith.constant 0 : i32
    return %c0_i32, %c0_i32_0 : i32, i32
  }
  func.func @transform_5(%arg0: i32) -> (i32, i32) {
    %c0_i32 = arith.constant 0 : i32
    %c0_i32_0 = arith.constant 0 : i32
    return %arg0, %c0_i32 : i32, i32
  }
}

module attributes {stable_mosaic.version = 11 : i64} {
  func.func @_layernorm_kernel(%arg0: i32, %arg1: memref<32x64xf32, #tpu.memory_space<vmem>>, %arg2: memref<1x64xf32, #tpu.memory_space<vmem>>, %arg3: memref<1x64xf32, #tpu.memory_space<vmem>>, %arg4: memref<32x64xf32, #tpu.memory_space<vmem>>) attributes {dimension_semantics = [#tpu.dimension_semantics<parallel>], iteration_bounds = array<i64: 1>, scalar_prefetch = 0 : i64, scratch_operands = 0 : i64, tpu.core_type = #tpu.core_type<tc>, window_params = [{transform_indices = @transform_0, window_bounds = array<i64: 32, 64>}, {pipeline_mode = #tpu.pipeline_mode<synchronous>, transform_indices = @transform_1, window_bounds = array<i64: 1, 64>}, {pipeline_mode = #tpu.pipeline_mode<synchronous>, transform_indices = @transform_2, window_bounds = array<i64: 1, 64>}, {transform_indices = @transform_3, window_bounds = array<i64: 32, 64>}]} {
    %c0 = arith.constant 0 : index
    %c0_0 = arith.constant 0 : index
    %0 = vector.load %arg1[%c0, %c0_0] : memref<32x64xf32, #tpu.memory_space<vmem>>, vector<32x64xf32>
    %cst = arith.constant dense<0.000000e+00> : vector<32xf32>
    %1 = vector.multi_reduction <add>, %0, %cst [1] : vector<32x64xf32> to vector<32xf32>
    %2 = vector.shape_cast %1 : vector<32xf32> to vector<32x1xf32>
    %cst_1 = arith.constant 6.400000e+01 : f32
    %3 = vector.broadcast %cst_1 : f32 to vector<32x1xf32>
    %4 = arith.divf %2, %3 : vector<32x1xf32>
    %5 = vector.broadcast %4 : vector<32x1xf32> to vector<32x64xf32>
    %6 = arith.subf %0, %5 : vector<32x64xf32>
    %7 = arith.mulf %6, %6 : vector<32x64xf32>
    %cst_2 = arith.constant dense<0.000000e+00> : vector<32xf32>
    %8 = vector.multi_reduction <add>, %7, %cst_2 [1] : vector<32x64xf32> to vector<32xf32>
    %9 = vector.shape_cast %8 : vector<32xf32> to vector<32x1xf32>
    %cst_3 = arith.constant 6.400000e+01 : f32
    %10 = vector.broadcast %cst_3 : f32 to vector<32x1xf32>
    %11 = arith.divf %9, %10 : vector<32x1xf32>
    %12 = vector.broadcast %4 : vector<32x1xf32> to vector<32x64xf32>
    %13 = arith.subf %0, %12 : vector<32x64xf32>
    %cst_4 = arith.constant 9.99999974E-6 : f32
    %14 = vector.broadcast %cst_4 : f32 to vector<32x1xf32>
    %15 = arith.addf %11, %14 : vector<32x1xf32>
    %16 = math.rsqrt %15 : vector<32x1xf32>
    %17 = vector.broadcast %16 : vector<32x1xf32> to vector<32x64xf32>
    %18 = arith.mulf %13, %17 : vector<32x64xf32>
    %c0_5 = arith.constant 0 : index
    %c0_6 = arith.constant 0 : index
    %19 = vector.load %arg2[%c0_5, %c0_6] : memref<1x64xf32, #tpu.memory_space<vmem>>, vector<1x64xf32>
    %20 = vector.broadcast %19 : vector<1x64xf32> to vector<32x64xf32>
    %21 = arith.mulf %18, %20 : vector<32x64xf32>
    %c0_7 = arith.constant 0 : index
    %c0_8 = arith.constant 0 : index
    %22 = vector.load %arg3[%c0_7, %c0_8] : memref<1x64xf32, #tpu.memory_space<vmem>>, vector<1x64xf32>
    %23 = vector.broadcast %22 : vector<1x64xf32> to vector<32x64xf32>
    %24 = arith.addf %21, %23 : vector<32x64xf32>
    %c0_9 = arith.constant 0 : index
    %c0_10 = arith.constant 0 : index
    %25 = vector.load %arg4[%c0_9, %c0_10] : memref<32x64xf32, #tpu.memory_space<vmem>>, vector<32x64xf32>
    tpu.vector_store %arg4[%c0_9, %c0_10], %24 {strides = array<i32>} : memref<32x64xf32, #tpu.memory_space<vmem>>, vector<32x64xf32>,
    return
  }
  func.func @transform_0(%arg0: i32) -> (i32, i32) {
    %c0_i32 = arith.constant 0 : i32
    %c0_i32_0 = arith.constant 0 : i32
    return %arg0, %c0_i32 : i32, i32
  }
  func.func @transform_1(%arg0: i32) -> (i32, i32) {
    %c0_i32 = arith.constant 0 : i32
    %c0_i32_0 = arith.constant 0 : i32
    %c0_i32_1 = arith.constant 0 : i32
    return %c0_i32, %c0_i32_0 : i32, i32
  }
  func.func @transform_2(%arg0: i32) -> (i32, i32) {
    %c0_i32 = arith.constant 0 : i32
    %c0_i32_0 = arith.constant 0 : i32
    %c0_i32_1 = arith.constant 0 : i32
    return %c0_i32, %c0_i32_0 : i32, i32
  }
  func.func @transform_3(%arg0: i32) -> (i32, i32) {
    %c0_i32 = arith.constant 0 : i32
    %c0_i32_0 = arith.constant 0 : i32
    return %arg0, %c0_i32 : i32, i32
  }
}

</mosaic_0001>

<llo_original>
// kernel: _lambda_.17
$region0: #{_lambda_.17}
  #allocation0 [shape = 'u32[]', space=smem, size = 0x4, offset = 0x4, fixed_abs, tag = 'smem constant byte address 0x4 - core index']
  #allocation1 [shape = 'u32[72,128]{1,0:T(1,128)}', space=vmem, size = 0x9000, scoped, tag = 'internal scratch']
  %s0 = inlined_call_operand.vmem [shape: bf16[2048,27], index: 0, kind: input, shape index: {}]
  %s1 = inlined_call_operand.vmem [shape: bf16[27,128], index: 1, kind: input, shape index: {}]
  %s2 = inlined_call_operand.vmem [shape: f32[1,128], index: 2, kind: input, shape index: {}]
  %s3 = inlined_call_operand.vmem [shape: f32[2048,128], index: 3, kind: output, shape index: {}]
  %s4 = sld [smem:[#allocation0]]
  $region45: #{_lambda_.17} parent=0
    _
  %s6 = ssub.s32 1, %s4
  %s7 = scalar_select 0, %s6, %s4
  loop: start=0, step=1, limit=6
  $region2: #{_lambda_.17} parent=0 // loop_pre_header
    _
  $region3: #{_lambda_.17} parent=0 // loop_header
    %s9 = sphi 0, %s13
    %p10 = scmp.ge.s32.totalorder %s9, 6
    %s19 = sphi 0, %s21
    %s22 = sphi 0, %s19
    %s23 = sphi 0, %s22
    %s39 = sphi 0, %s23
    %s43 = sphi 0, %s43
    %s45 = sphi 0, %s43
    %s46 = sphi 0, %s45
    %s60 = sphi 0, %s46
    %s64 = sphi 0, %s64
    %s66 = sphi 0, %s64
    %s67 = sphi 0, %s66
    %s81 = sphi 0, %s67
    %s87 = sphi 0, %s89
    %s90 = sphi 0, %s87
    %s91 = sphi 0, %s90
    %s107 = sphi 0, %s91
  $region4: #{_lambda_.17} parent=0 // loop_header_branch
    %12 = sbr.rel (%p10) target = $region8
  $region5: #{_lambda_.17} parent=0 // loop_body
    %s14 = ssub.s32 %s9, 1
    %s15 = ssub.s32 %s9, 2
    %s16 = sadd.s32 %s9, 1
    %s17 = ssub.s32 %s9, %s16
    %p18 = scmp.eq.s32.totalorder %s17, 0
    %s20 = sadd.s32 %s19, 1
    %s21 = scalar_select %p18, %s19, %s20
    %p24 = pneg %p18
    %p25 = scmp.eq.s32.totalorder %s9, 3
    %p26 = por %p24, %p25
    %p27 = scmp.ne.s32.totalorder %s19, %s22
    %p28 = scmp.eq.s32.totalorder %s9, 0
    %p29 = por %p27, %p28
    %p30 = scmp.ne.s32.totalorder %s19, %s22
    %p31 = scmp.eq.s32.totalorder %s14, 3
    %p32 = por %p30, %p31
    %p33 = scmp.ne.s32.totalorder %s22, %s23
    %p34 = scmp.eq.s32.totalorder %s14, 0
    %p35 = por %p33, %p34
    %p36 = scmp.ne.s32.totalorder %s22, %s23
    %p37 = scmp.eq.s32.totalorder %s15, 3
    %p38 = por %p36, %p37
    %p40 = scmp.ne.s32.totalorder %s23, %s39
    %p41 = scmp.eq.s32.totalorder %s15, 0
    %p42 = por %p40, %p41
    %s44 = sadd.s32 %s43, 1
    %p47 = scmp.eq.s32.totalorder %s9, 3
    %p48 = scmp.ne.s32.totalorder %s43, %s45
    %p49 = scmp.eq.s32.totalorder %s9, 0
    %p50 = por %p48, %p49
    %p51 = scmp.ne.s32.totalorder %s43, %s45
    %p52 = scmp.eq.s32.totalorder %s14, 3
    %p53 = por %p51, %p52
    %p54 = scmp.ne.s32.totalorder %s45, %s46
    %p55 = scmp.eq.s32.totalorder %s14, 0
    %p56 = por %p54, %p55
    %p57 = scmp.ne.s32.totalorder %s45, %s46
    %p58 = scmp.eq.s32.totalorder %s15, 3
    %p59 = por %p57, %p58
    %p61 = scmp.ne.s32.totalorder %s46, %s60
    %p62 = scmp.eq.s32.totalorder %s15, 0
    %p63 = por %p61, %p62
    %s65 = sadd.s32 %s64, 1
    %p68 = scmp.eq.s32.totalorder %s9, 3
    %p69 = scmp.ne.s32.totalorder %s64, %s66
    %p70 = scmp.eq.s32.totalorder %s9, 0
    %p71 = por %p69, %p70
    %p72 = scmp.ne.s32.totalorder %s64, %s66
    %p73 = scmp.eq.s32.totalorder %s14, 3
    %p74 = por %p72, %p73
    %p75 = scmp.ne.s32.totalorder %s66, %s67
    %p76 = scmp.eq.s32.totalorder %s14, 0
    %p77 = por %p75, %p76
    %p78 = scmp.ne.s32.totalorder %s66, %s67
    %p79 = scmp.eq.s32.totalorder %s15, 3
    %p80 = por %p78, %p79
    %p82 = scmp.ne.s32.totalorder %s67, %s81
    %p83 = scmp.eq.s32.totalorder %s15, 0
    %p84 = por %p82, %p83
    %s85 = ssub.s32 %s9, %s16
    %p86 = scmp.eq.s32.totalorder %s85, 0
    %s88 = sadd.s32 %s87, 1
    %s89 = scalar_select %p86, %s87, %s88
    %p92 = pneg %p86
    %p93 = scmp.eq.s32.totalorder %s9, 3
    %p94 = por %p92, %p93
    %p95 = scmp.ne.s32.totalorder %s87, %s90
    %p96 = scmp.eq.s32.totalorder %s9, 0
    %p97 = por %p95, %p96
    %p98 = scmp.ne.s32.totalorder %s87, %s90
    %p99 = scmp.eq.s32.totalorder %s14, 3
    %p100 = por %p98, %p99
    %p101 = scmp.ne.s32.totalorder %s90, %s91
    %p102 = scmp.eq.s32.totalorder %s14, 0
    %p103 = por %p101, %p102
    %p104 = scmp.ne.s32.totalorder %s90, %s91
    %p105 = scmp.eq.s32.totalorder %s15, 3
    %p106 = por %p104, %p105
    %p108 = scmp.ne.s32.totalorder %s91, %s107
    %p109 = scmp.eq.s32.totalorder %s15, 0
    %p110 = por %p108, %p109
    %p111 = scmp.le.s32.totalorder 1, %s9
    %p112 = scmp.lt.s32.totalorder %s9, 5
    %p113 = pnand %p111, %p112
    %p114 = pneg %p113
    // Predicated region
    $region9: #{_lambda_.17} parent=5 // pred_check
      _
    $region10: #{_lambda_.17} parent=5 // pred_check_branch
      %116 = sbr.rel (%p113) target = $region12
    $region11: #{_lambda_.17} parent=5 // pred_region
      %s117 = ssub.s32 %s9, 1
      // Predicated region
      $region13: #{_lambda_.17} parent=11 // pred_check
        %p118 = pneg %p56
      $region14: #{_lambda_.17} parent=11 // pred_check_branch
        %120 = sbr.rel (%p118) target = $region16
      $region15: #{_lambda_.17} parent=11 // pred_region
        _
      $region16: #{_lambda_.17} parent=11 // pred_fallthru
        _
      // Predicated region
      $region17: #{_lambda_.17} parent=11 // pred_check
        %p121 = pneg %p77
      $region18: #{_lambda_.17} parent=11 // pred_check_branch
        %123 = sbr.rel (%p121) target = $region20
      $region19: #{_lambda_.17} parent=11 // pred_region
        _
      $region20: #{_lambda_.17} parent=11 // pred_fallthru
        _
    $region12: #{_lambda_.17} parent=5 // pred_fallthru
      _
    %p124 = scmp.lt.s32.totalorder %s9, 4
    // Predicated region
    $region21: #{_lambda_.17} parent=5 // pred_check
      %p125 = pneg %p124
    $region22: #{_lambda_.17} parent=5 // pred_check_branch
      %127 = sbr.rel (%p125) target = $region24
    $region23: #{_lambda_.17} parent=5 // pred_region
      // Predicated region
      $region25: #{_lambda_.17} parent=23 // pred_check
        %p128 = pneg %p29
      $region26: #{_lambda_.17} parent=23 // pred_check_branch
        %130 = sbr.rel (%p128) target = $region28
      $region27: #{_lambda_.17} parent=23 // pred_region
        %s131 = smul.u32 64, %s9
        %p132 = scmp.lt.s32.totalorder %s131, 255
        %s133 = scalar_select %p132, %s131, 255
        %s134 = smul.addr %s133, 4
        %s135 = scalar_lea.vmem %s0, %s134
        %s136 = smul.u32 64, %s9
      $region28: #{_lambda_.17} parent=23 // pred_fallthru
        _
    $region24: #{_lambda_.17} parent=5 // pred_fallthru
      _
    %p137 = scmp.le.s32.totalorder 1, %s9
    %p138 = scmp.lt.s32.totalorder %s9, 5
    %p139 = pnand %p137, %p138
    %p140 = pneg %p139
    // Predicated region
    $region29: #{_lambda_.17} parent=5 // pred_check
      _
    $region30: #{_lambda_.17} parent=5 // pred_check_branch
      %142 = sbr.rel (%p139) target = $region32
    $region31: #{_lambda_.17} parent=5 // pred_region
      %s143 = ssub.s32 %s9, 1
      %s144 = smul.u32 64, %s14
      %p145 = scmp.lt.s32.totalorder %s144, 255
      %s146 = scalar_select %p145, %s144, 255
      %s147 = smul.addr %s146, 4
      %s148 = scalar_lea.vmem %s0, %s147
      %p149 = pneg %p35
      %p150 = pneg %p32
      %p151 = pneg %p56
      %p152 = pneg %p53
      %p153 = pneg %p77
      %p154 = pneg %p74
      %p155 = pneg %p103
      %p156 = pneg %p100
      %s157 = smul.u32 64, %s14
      %p158 = scmp.lt.s32.totalorder %s157, 255
      %s159 = scalar_select %p158, %s157, 255
      %s160 = smul.addr %s159, 8
      %s161 = scalar_lea.vmem %s3, %s160
      %s162 = smul.u32 64, %s14
      %p163 = scmp.lt.s32.totalorder %s162, 255
      %s164 = scalar_select %p163, %s162, 255
      %s165 = smul.addr %s164, 4
      %s166 = scalar_lea.vmem %s0, %s165
      %s167 = smul.u32 64, %s14
      %s168 = smul.u32 64, %s14
      %p169 = scmp.lt.s32.totalorder %s168, 255
      %s170 = scalar_select %p169, %s168, 255
      %s171 = smul.addr %s170, 8
      %s172 = scalar_lea.vmem %s3, %s171
      %s173 = smul.u32 64, %s14
      %v175 = vld [vmem:[%s166] sm:$0xf]
      %v176 = vld [vmem:[%s166 + $0x4] sm:$0xf]
      %v177 = vld [vmem:[%s166 + $0x8] sm:$0xf]
      %v178 = vld [vmem:[%s166 + $0xc] sm:$0xf]
      %v179 = vld [vmem:[%s166 + $0x10] sm:$0xf]
      %v180 = vld [vmem:[%s166 + $0x14] sm:$0xf]
      %v181 = vld [vmem:[%s166 + $0x18] sm:$0xf]
      %v182 = vld [vmem:[%s166 + $0x1c] sm:$0xf]
      %v183 = vld [vmem:[%s166 + $0x20] sm:$0xf]
      %v184 = vld [vmem:[%s166 + $0x24] sm:$0xf]
      %v185 = vld [vmem:[%s166 + $0x28] sm:$0xf]
      %v186 = vld [vmem:[%s166 + $0x2c] sm:$0xf]
      %v187 = vld [vmem:[%s166 + $0x30] sm:$0xf]
      %v188 = vld [vmem:[%s166 + $0x34] sm:$0xf]
      %v189 = vld [vmem:[%s166 + $0x38] sm:$0xf]
      %v190 = vld [vmem:[%s166 + $0x3c] sm:$0xf]
      %v191 = vld [vmem:[%s166 + $0x40] sm:$0xf]
      %v192 = vld [vmem:[%s166 + $0x44] sm:$0xf]
      %v193 = vld [vmem:[%s166 + $0x48] sm:$0xf]
      %v194 = vld [vmem:[%s166 + $0x4c] sm:$0xf]
      %v195 = vld [vmem:[%s166 + $0x50] sm:$0xf]
      %v196 = vld [vmem:[%s166 + $0x54] sm:$0xf]
      %v197 = vld [vmem:[%s166 + $0x58] sm:$0xf]
      %v198 = vld [vmem:[%s166 + $0x5c] sm:$0xf]
      %v199 = vld [vmem:[%s166 + $0x60] sm:$0xf]
      %v200 = vld [vmem:[%s166 + $0x64] sm:$0xf]
      %v201 = vld [vmem:[%s166 + $0x68] sm:$0xf]
      %v202 = vld [vmem:[%s166 + $0x6c] sm:$0xf]
      %v203 = vld [vmem:[%s166 + $0x70] sm:$0xf]
      %v204 = vld [vmem:[%s166 + $0x74] sm:$0xf]
      %v205 = vld [vmem:[%s166 + $0x78] sm:$0xf]
      %v206 = vld [vmem:[%s166 + $0x7c] sm:$0xf]
      %v207 = vld [vmem:[%s166 + $0x80] sm:$0xf]
      %v208 = vld [vmem:[%s166 + $0x84] sm:$0xf]
      %v209 = vld [vmem:[%s166 + $0x88] sm:$0xf]
      %v210 = vld [vmem:[%s166 + $0x8c] sm:$0xf]
      %v211 = vld [vmem:[%s166 + $0x90] sm:$0xf]
      %v212 = vld [vmem:[%s166 + $0x94] sm:$0xf]
      %v213 = vld [vmem:[%s166 + $0x98] sm:$0xf]
      %v214 = vld [vmem:[%s166 + $0x9c] sm:$0xf]
      %v215 = vld [vmem:[%s166 + $0xa0] sm:$0xf]
      %v216 = vld [vmem:[%s166 + $0xa4] sm:$0xf]
      %v217 = vld [vmem:[%s166 + $0xa8] sm:$0xf]
      %v218 = vld [vmem:[%s166 + $0xac] sm:$0xf]
      %v219 = vld [vmem:[%s166 + $0xb0] sm:$0xf]
      %v220 = vld [vmem:[%s166 + $0xb4] sm:$0xf]
      %v221 = vld [vmem:[%s166 + $0xb8] sm:$0xf]
      %v222 = vld [vmem:[%s166 + $0xbc] sm:$0xf]
      %v223 = vld [vmem:[%s166 + $0xc0] sm:$0xf]
      %v224 = vld [vmem:[%s166 + $0xc4] sm:$0xf]
      %v225 = vld [vmem:[%s166 + $0xc8] sm:$0xf]
      %v226 = vld [vmem:[%s166 + $0xcc] sm:$0xf]
      %v227 = vld [vmem:[%s166 + $0xd0] sm:$0xf]
      %v228 = vld [vmem:[%s166 + $0xd4] sm:$0xf]
      %v229 = vld [vmem:[%s166 + $0xd8] sm:$0xf]
      %v230 = vld [vmem:[%s166 + $0xdc] sm:$0xf]
      %v231 = vld [vmem:[%s166 + $0xe0] sm:$0xf]
      %v232 = vld [vmem:[%s166 + $0xe4] sm:$0xf]
      %v233 = vld [vmem:[%s166 + $0xe8] sm:$0xf]
      %v234 = vld [vmem:[%s166 + $0xec] sm:$0xf]
      %v235 = vld [vmem:[%s166 + $0xf0] sm:$0xf]
      %v236 = vld [vmem:[%s166 + $0xf4] sm:$0xf]
      %v237 = vld [vmem:[%s166 + $0xf8] sm:$0xf]
      %v238 = vld [vmem:[%s166 + $0xfc] sm:$0xf]
      %v239 = vld [vmem:[%s1] sm:$0xf]
      %v240 = vld [vmem:[%s1 + $0x4] sm:$0xf]
      %v241 = vld [vmem:[%s1 + $0x8] sm:$0xf]
      %v242 = vld [vmem:[%s1 + $0xc] sm:$0x3]
      %v243 = vld [vmem:[%s2] sm:$0x1]
      %v245 = vperm.slane %v243, 0
      %v311 = vunpack.c.l.b16 %v175
      %v312 = vunpack.c.l.b16 %v176
      %v313 = vunpack.c.l.b16 %v177
      %v314 = vunpack.c.l.b16 %v178
      %v315 = vunpack.c.l.b16 %v179
      %v316 = vunpack.c.l.b16 %v180
      %v317 = vunpack.c.l.b16 %v181
      %v318 = vunpack.c.l.b16 %v182
      %v319 = vunpack.c.l.b16 %v183
      %v320 = vunpack.c.l.b16 %v184
      %v321 = vunpack.c.l.b16 %v185
      %v322 = vunpack.c.l.b16 %v186
      %v323 = vunpack.c.l.b16 %v187
      %v324 = vunpack.c.l.b16 %v188
      %v325 = vunpack.c.l.b16 %v189
      %v326 = vunpack.c.l.b16 %v190
      %v327 = vunpack.c.l.b16 %v191
      %v328 = vunpack.c.l.b16 %v192
      %v329 = vunpack.c.l.b16 %v193
      %v330 = vunpack.c.l.b16 %v194
      %v331 = vunpack.c.l.b16 %v195
      %v332 = vunpack.c.l.b16 %v196
      %v333 = vunpack.c.l.b16 %v197
      %v334 = vunpack.c.l.b16 %v198
      %v335 = vunpack.c.l.b16 %v199
      %v336 = vunpack.c.l.b16 %v200
      %v337 = vunpack.c.l.b16 %v201
      %v338 = vunpack.c.l.b16 %v202
      %v339 = vunpack.c.l.b16 %v203
      %v340 = vunpack.c.l.b16 %v204
      %v341 = vunpack.c.l.b16 %v205
      %v342 = vunpack.c.l.b16 %v206
      %v343 = vunpack.c.l.b16 %v207
      %v344 = vunpack.c.l.b16 %v208
      %v345 = vunpack.c.l.b16 %v209
      %v346 = vunpack.c.l.b16 %v210
      %v347 = vunpack.c.l.b16 %v211
      %v348 = vunpack.c.l.b16 %v212
      %v349 = vunpack.c.l.b16 %v213
      %v350 = vunpack.c.l.b16 %v214
      %v351 = vunpack.c.l.b16 %v215
      %v352 = vunpack.c.l.b16 %v216
      %v353 = vunpack.c.l.b16 %v217
      %v354 = vunpack.c.l.b16 %v218
      %v355 = vunpack.c.l.b16 %v219
      %v356 = vunpack.c.l.b16 %v220
      %v357 = vunpack.c.l.b16 %v221
      %v358 = vunpack.c.l.b16 %v222
      %v359 = vunpack.c.l.b16 %v223
      %v360 = vunpack.c.l.b16 %v224
      %v361 = vunpack.c.l.b16 %v225
      %v362 = vunpack.c.l.b16 %v226
      %v363 = vunpack.c.l.b16 %v227
      %v364 = vunpack.c.l.b16 %v228
      %v365 = vunpack.c.l.b16 %v229
      %v366 = vunpack.c.l.b16 %v230
      %v367 = vunpack.c.l.b16 %v231
      %v368 = vunpack.c.l.b16 %v232
      %v369 = vunpack.c.l.b16 %v233
      %v370 = vunpack.c.l.b16 %v234
      %v371 = vunpack.c.l.b16 %v235
      %v372 = vunpack.c.l.b16 %v236
      %v373 = vunpack.c.l.b16 %v237
      %v374 = vunpack.c.l.b16 %v238
      %v375 = vpack.c.b16 %v312, %v311
      %v376 = vpack.c.b16 %v314, %v313
      %v377 = vpack.c.b16 %v316, %v315
      %v378 = vpack.c.b16 %v318, %v317
      %v379 = vpack.c.b16 %v320, %v319
      %v380 = vpack.c.b16 %v322, %v321
      %v381 = vpack.c.b16 %v324, %v323
      %v382 = vpack.c.b16 %v326, %v325
      %v383 = vpack.c.b16 %v328, %v327
      %v384 = vpack.c.b16 %v330, %v329
      %v385 = vpack.c.b16 %v332, %v331
      %v386 = vpack.c.b16 %v334, %v333
      %v387 = vpack.c.b16 %v336, %v335
      %v388 = vpack.c.b16 %v338, %v337
      %v389 = vpack.c.b16 %v340, %v339
      %v390 = vpack.c.b16 %v342, %v341
      %v391 = vpack.c.b16 %v344, %v343
      %v392 = vpack.c.b16 %v346, %v345
      %v393 = vpack.c.b16 %v348, %v347
      %v394 = vpack.c.b16 %v350, %v349
      %v395 = vpack.c.b16 %v352, %v351
      %v396 = vpack.c.b16 %v354, %v353
      %v397 = vpack.c.b16 %v356, %v355
      %v398 = vpack.c.b16 %v358, %v357
      %v399 = vpack.c.b16 %v360, %v359
      %v400 = vpack.c.b16 %v362, %v361
      %v401 = vpack.c.b16 %v364, %v363
      %v402 = vpack.c.b16 %v366, %v365
      %v403 = vpack.c.b16 %v368, %v367
      %v404 = vpack.c.b16 %v370, %v369
      %v405 = vpack.c.b16 %v372, %v371
      %v406 = vpack.c.b16 %v374, %v373
      %v411 = vunpack.c.l.b16 %v239
      %v412 = vunpack.c.l.b16 %v240
      %v413 = vunpack.c.l.b16 %v241
      %v414 = vunpack.c.l.b16 %v242
      %v415 = vpack.c.b16 %v412, %v411
      %v416 = vpack.c.b16 %v414, %v413
      %vm418 = vcmask 220160
      %v420 = vsel %vm418, %v375, 0
      %v423 = vsel %vm418, %v376, 0
      %v426 = vsel %vm418, %v377, 0
      %v429 = vsel %vm418, %v378, 0
      %v432 = vsel %vm418, %v379, 0
      %v435 = vsel %vm418, %v380, 0
      %v438 = vsel %vm418, %v381, 0
      %v441 = vsel %vm418, %v382, 0
      %v444 = vsel %vm418, %v383, 0
      %v447 = vsel %vm418, %v384, 0
      %v450 = vsel %vm418, %v385, 0
      %v453 = vsel %vm418, %v386, 0
      %v456 = vsel %vm418, %v387, 0
      %v459 = vsel %vm418, %v388, 0
      %v462 = vsel %vm418, %v389, 0
      %v465 = vsel %vm418, %v390, 0
      %v468 = vsel %vm418, %v391, 0
      %v471 = vsel %vm418, %v392, 0
      %v474 = vsel %vm418, %v393, 0
      %v477 = vsel %vm418, %v394, 0
      %v480 = vsel %vm418, %v395, 0
      %v483 = vsel %vm418, %v396, 0
      %v486 = vsel %vm418, %v397, 0
      %v489 = vsel %vm418, %v398, 0
      %v492 = vsel %vm418, %v399, 0
      %v495 = vsel %vm418, %v400, 0
      %v498 = vsel %vm418, %v401, 0
      %v501 = vsel %vm418, %v402, 0
      %v504 = vsel %vm418, %v403, 0
      %v507 = vsel %vm418, %v404, 0
      %v510 = vsel %vm418, %v405, 0
      %v513 = vsel %vm418, %v406, 0
      %vm515 = vcmask 1044480
      %vm516 = vcmask 1045504
      %v517 = vsel %vm515, 4294967295, 65535
      %v518 = vsel %vm516, %v517, 0
      %v520 = vand.u32 %v416, %v518
      %522 = vmatpush.bf16.msra.mxu0 0
      %523 = vmatpush.bf16.msra.mxu0 0
      %524 = vmatpush.bf16.msra.mxu0 0
      %525 = vmatpush.bf16.msra.mxu0 0
      %526 = vmatpush.bf16.msra.mxu0 0
      %527 = vmatpush.bf16.msra.mxu0 0
      %528 = vmatpush.bf16.msra.mxu0 %v520
      %529 = vmatpush.bf16.msra.mxu0 %v415
      %530 = vmatmul.bf16.gmra.mxu0 %v420
      %v531 = vpop.f32.mrf.mxu0
      %v532 = vadd.f32 %v245, %v531
      %v533 = vpop.f32.mrf.mxu0
      %v534 = vadd.f32 %v245, %v533
      %535 = vmatmul.bf16.gmra.mxu0 %v423
      %v536 = vpop.f32.mrf.mxu0
      %v537 = vadd.f32 %v245, %v536
      %v538 = vpop.f32.mrf.mxu0
      %v539 = vadd.f32 %v245, %v538
      %540 = vmatmul.bf16.gmra.mxu0 %v426
      %v541 = vpop.f32.mrf.mxu0
      %v542 = vadd.f32 %v245, %v541
      %v543 = vpop.f32.mrf.mxu0
      %v544 = vadd.f32 %v245, %v543
      %545 = vmatmul.bf16.gmra.mxu0 %v429
      %v546 = vpop.f32.mrf.mxu0
      %v547 = vadd.f32 %v245, %v546
      %v548 = vpop.f32.mrf.mxu0
      %v549 = vadd.f32 %v245, %v548
      %550 = vmatmul.bf16.gmra.mxu0 %v432
      %v551 = vpop.f32.mrf.mxu0
      %v552 = vadd.f32 %v245, %v551
      %v553 = vpop.f32.mrf.mxu0
      %v554 = vadd.f32 %v245, %v553
      %555 = vmatmul.bf16.gmra.mxu0 %v435
      %v556 = vpop.f32.mrf.mxu0
      %v557 = vadd.f32 %v245, %v556
      %v558 = vpop.f32.mrf.mxu0
      %v559 = vadd.f32 %v245, %v558
      %560 = vmatmul.bf16.gmra.mxu0 %v438
      %v561 = vpop.f32.mrf.mxu0
      %v562 = vadd.f32 %v245, %v561
      %v563 = vpop.f32.mrf.mxu0
      %v564 = vadd.f32 %v245, %v563
      %565 = vmatmul.bf16.gmra.mxu0 %v441
      %v566 = vpop.f32.mrf.mxu0
      %v567 = vadd.f32 %v245, %v566
      %v568 = vpop.f32.mrf.mxu0
      %v569 = vadd.f32 %v245, %v568
      %570 = vmatmul.bf16.gmra.mxu0 %v444
      %v571 = vpop.f32.mrf.mxu0
      %v572 = vadd.f32 %v245, %v571
      %v573 = vpop.f32.mrf.mxu0
      %v574 = vadd.f32 %v245, %v573
      %575 = vmatmul.bf16.gmra.mxu0 %v447
      %v576 = vpop.f32.mrf.mxu0
      %v577 = vadd.f32 %v245, %v576
      %v578 = vpop.f32.mrf.mxu0
      %v579 = vadd.f32 %v245, %v578
      %580 = vmatmul.bf16.gmra.mxu0 %v450
      %v581 = vpop.f32.mrf.mxu0
      %v582 = vadd.f32 %v245, %v581
      %v583 = vpop.f32.mrf.mxu0
      %v584 = vadd.f32 %v245, %v583
      %585 = vmatmul.bf16.gmra.mxu0 %v453
      %v586 = vpop.f32.mrf.mxu0
      %v587 = vadd.f32 %v245, %v586
      %v588 = vpop.f32.mrf.mxu0
      %v589 = vadd.f32 %v245, %v588
      %590 = vmatmul.bf16.gmra.mxu0 %v456
      %v591 = vpop.f32.mrf.mxu0
      %v592 = vadd.f32 %v245, %v591
      %v593 = vpop.f32.mrf.mxu0
      %v594 = vadd.f32 %v245, %v593
      %595 = vmatmul.bf16.gmra.mxu0 %v459
      %v596 = vpop.f32.mrf.mxu0
      %v597 = vadd.f32 %v245, %v596
      %v598 = vpop.f32.mrf.mxu0
      %v599 = vadd.f32 %v245, %v598
      %600 = vmatmul.bf16.gmra.mxu0 %v462
      %v601 = vpop.f32.mrf.mxu0
      %v602 = vadd.f32 %v245, %v601
      %v603 = vpop.f32.mrf.mxu0
      %v604 = vadd.f32 %v245, %v603
      %605 = vmatmul.bf16.gmra.mxu0 %v465
      %v606 = vpop.f32.mrf.mxu0
      %v607 = vadd.f32 %v245, %v606
      %v608 = vpop.f32.mrf.mxu0
      %v609 = vadd.f32 %v245, %v608
      %610 = vmatmul.bf16.gmra.mxu0 %v468
      %v611 = vpop.f32.mrf.mxu0
      %v612 = vadd.f32 %v245, %v611
      %v613 = vpop.f32.mrf.mxu0
      %v614 = vadd.f32 %v245, %v613
      %615 = vmatmul.bf16.gmra.mxu0 %v471
      %v616 = vpop.f32.mrf.mxu0
      %v617 = vadd.f32 %v245, %v616
      %v618 = vpop.f32.mrf.mxu0
      %v619 = vadd.f32 %v245, %v618
      %620 = vmatmul.bf16.gmra.mxu0 %v474
      %v621 = vpop.f32.mrf.mxu0
      %v622 = vadd.f32 %v245, %v621
      %v623 = vpop.f32.mrf.mxu0
      %v624 = vadd.f32 %v245, %v623
      %625 = vmatmul.bf16.gmra.mxu0 %v477
      %v626 = vpop.f32.mrf.mxu0
      %v627 = vadd.f32 %v245, %v626
      %v628 = vpop.f32.mrf.mxu0
      %v629 = vadd.f32 %v245, %v628
      %630 = vmatmul.bf16.gmra.mxu0 %v480
      %v631 = vpop.f32.mrf.mxu0
      %v632 = vadd.f32 %v245, %v631
      %v633 = vpop.f32.mrf.mxu0
      %v634 = vadd.f32 %v245, %v633
      %635 = vmatmul.bf16.gmra.mxu0 %v483
      %v636 = vpop.f32.mrf.mxu0
      %v637 = vadd.f32 %v245, %v636
      %v638 = vpop.f32.mrf.mxu0
      %v639 = vadd.f32 %v245, %v638
      %640 = vmatmul.bf16.gmra.mxu0 %v486
      %v641 = vpop.f32.mrf.mxu0
      %v642 = vadd.f32 %v245, %v641
      %v643 = vpop.f32.mrf.mxu0
      %v644 = vadd.f32 %v245, %v643
      %645 = vmatmul.bf16.gmra.mxu0 %v489
      %v646 = vpop.f32.mrf.mxu0
      %v647 = vadd.f32 %v245, %v646
      %v648 = vpop.f32.mrf.mxu0
      %v649 = vadd.f32 %v245, %v648
      %650 = vmatmul.bf16.gmra.mxu0 %v492
      %v651 = vpop.f32.mrf.mxu0
      %v652 = vadd.f32 %v245, %v651
      %v653 = vpop.f32.mrf.mxu0
      %v654 = vadd.f32 %v245, %v653
      %655 = vmatmul.bf16.gmra.mxu0 %v495
      %v656 = vpop.f32.mrf.mxu0
      %v657 = vadd.f32 %v245, %v656
      %v658 = vpop.f32.mrf.mxu0
      %v659 = vadd.f32 %v245, %v658
      %660 = vmatmul.bf16.gmra.mxu0 %v498
      %v661 = vpop.f32.mrf.mxu0
      %v662 = vadd.f32 %v245, %v661
      %v663 = vpop.f32.mrf.mxu0
      %v664 = vadd.f32 %v245, %v663
      %665 = vmatmul.bf16.gmra.mxu0 %v501
      %v666 = vpop.f32.mrf.mxu0
      %v667 = vadd.f32 %v245, %v666
      %v668 = vpop.f32.mrf.mxu0
      %v669 = vadd.f32 %v245, %v668
      %670 = vmatmul.bf16.gmra.mxu0 %v504
      %v671 = vpop.f32.mrf.mxu0
      %v672 = vadd.f32 %v245, %v671
      %v673 = vpop.f32.mrf.mxu0
      %v674 = vadd.f32 %v245, %v673
      %675 = vmatmul.bf16.gmra.mxu0 %v507
      %v676 = vpop.f32.mrf.mxu0
      %v677 = vadd.f32 %v245, %v676
      %v678 = vpop.f32.mrf.mxu0
      %v679 = vadd.f32 %v245, %v678
      %680 = vmatmul.bf16.gmra.mxu0 %v510
      %v681 = vpop.f32.mrf.mxu0
      %v682 = vadd.f32 %v245, %v681
      %v683 = vpop.f32.mrf.mxu0
      %v684 = vadd.f32 %v245, %v683
      %685 = vmatmul.bf16.gmra.mxu0 %v513
      %v686 = vpop.f32.mrf.mxu0
      %v687 = vadd.f32 %v245, %v686
      %v688 = vpop.f32.mrf.mxu0
      %v689 = vadd.f32 %v245, %v688
      %690 = vdwg.mxu0
      %691 = vst [vmem:[%s172] sm:$0xff] %v532
      %692 = vst [vmem:[%s172 + $0x8] sm:$0xff] %v534
      %693 = vst [vmem:[%s172 + $0x10] sm:$0xff] %v537
      %694 = vst [vmem:[%s172 + $0x18] sm:$0xff] %v539
      %695 = vst [vmem:[%s172 + $0x20] sm:$0xff] %v542
      %696 = vst [vmem:[%s172 + $0x28] sm:$0xff] %v544
      %697 = vst [vmem:[%s172 + $0x30] sm:$0xff] %v547
      %698 = vst [vmem:[%s172 + $0x38] sm:$0xff] %v549
      %699 = vst [vmem:[%s172 + $0x40] sm:$0xff] %v552
      %700 = vst [vmem:[%s172 + $0x48] sm:$0xff] %v554
      %701 = vst [vmem:[%s172 + $0x50] sm:$0xff] %v557
      %702 = vst [vmem:[%s172 + $0x58] sm:$0xff] %v559
      %703 = vst [vmem:[%s172 + $0x60] sm:$0xff] %v562
      %704 = vst [vmem:[%s172 + $0x68] sm:$0xff] %v564
      %705 = vst [vmem:[%s172 + $0x70] sm:$0xff] %v567
      %706 = vst [vmem:[%s172 + $0x78] sm:$0xff] %v569
      %707 = vst [vmem:[%s172 + $0x80] sm:$0xff] %v572
      %708 = vst [vmem:[%s172 + $0x88] sm:$0xff] %v574
      %709 = vst [vmem:[%s172 + $0x90] sm:$0xff] %v577
      %710 = vst [vmem:[%s172 + $0x98] sm:$0xff] %v579
      %711 = vst [vmem:[%s172 + $0xa0] sm:$0xff] %v582
      %712 = vst [vmem:[%s172 + $0xa8] sm:$0xff] %v584
      %713 = vst [vmem:[%s172 + $0xb0] sm:$0xff] %v587
      %714 = vst [vmem:[%s172 + $0xb8] sm:$0xff] %v589
      %715 = vst [vmem:[%s172 + $0xc0] sm:$0xff] %v592
      %716 = vst [vmem:[%s172 + $0xc8] sm:$0xff] %v594
      %717 = vst [vmem:[%s172 + $0xd0] sm:$0xff] %v597
      %718 = vst [vmem:[%s172 + $0xd8] sm:$0xff] %v599
      %719 = vst [vmem:[%s172 + $0xe0] sm:$0xff] %v602
      %720 = vst [vmem:[%s172 + $0xe8] sm:$0xff] %v604
      %721 = vst [vmem:[%s172 + $0xf0] sm:$0xff] %v607
      %722 = vst [vmem:[%s172 + $0xf8] sm:$0xff] %v609
      %723 = vst [vmem:[%s172 + $0x100] sm:$0xff] %v612
      %724 = vst [vmem:[%s172 + $0x108] sm:$0xff] %v614
      %725 = vst [vmem:[%s172 + $0x110] sm:$0xff] %v617
      %726 = vst [vmem:[%s172 + $0x118] sm:$0xff] %v619
      %727 = vst [vmem:[%s172 + $0x120] sm:$0xff] %v622
      %728 = vst [vmem:[%s172 + $0x128] sm:$0xff] %v624
      %729 = vst [vmem:[%s172 + $0x130] sm:$0xff] %v627
      %730 = vst [vmem:[%s172 + $0x138] sm:$0xff] %v629
      %731 = vst [vmem:[%s172 + $0x140] sm:$0xff] %v632
      %732 = vst [vmem:[%s172 + $0x148] sm:$0xff] %v634
      %733 = vst [vmem:[%s172 + $0x150] sm:$0xff] %v637
      %734 = vst [vmem:[%s172 + $0x158] sm:$0xff] %v639
      %735 = vst [vmem:[%s172 + $0x160] sm:$0xff] %v642
      %736 = vst [vmem:[%s172 + $0x168] sm:$0xff] %v644
      %737 = vst [vmem:[%s172 + $0x170] sm:$0xff] %v647
      %738 = vst [vmem:[%s172 + $0x178] sm:$0xff] %v649
      %739 = vst [vmem:[%s172 + $0x180] sm:$0xff] %v652
      %740 = vst [vmem:[%s172 + $0x188] sm:$0xff] %v654
      %741 = vst [vmem:[%s172 + $0x190] sm:$0xff] %v657
      %742 = vst [vmem:[%s172 + $0x198] sm:$0xff] %v659
      %743 = vst [vmem:[%s172 + $0x1a0] sm:$0xff] %v662
      %744 = vst [vmem:[%s172 + $0x1a8] sm:$0xff] %v664
      %745 = vst [vmem:[%s172 + $0x1b0] sm:$0xff] %v667
      %746 = vst [vmem:[%s172 + $0x1b8] sm:$0xff] %v669
      %747 = vst [vmem:[%s172 + $0x1c0] sm:$0xff] %v672
      %748 = vst [vmem:[%s172 + $0x1c8] sm:$0xff] %v674
      %749 = vst [vmem:[%s172 + $0x1d0] sm:$0xff] %v677
      %750 = vst [vmem:[%s172 + $0x1d8] sm:$0xff] %v679
      %751 = vst [vmem:[%s172 + $0x1e0] sm:$0xff] %v682
      %752 = vst [vmem:[%s172 + $0x1e8] sm:$0xff] %v684
      %753 = vst [vmem:[%s172 + $0x1f0] sm:$0xff] %v687
      %754 = vst [vmem:[%s172 + $0x1f8] sm:$0xff] %v689
      %s755 = smul.u32 64, %s14
      %p756 = scmp.lt.s32.totalorder %s755, 255
      %s757 = scalar_select %p756, %s755, 255
      %s758 = smul.addr %s757, 8
      %s759 = scalar_lea.vmem %s3, %s758
      // Predicated region
      $region33: #{_lambda_.17} parent=31 // pred_check
        %p760 = pneg %p100
      $region34: #{_lambda_.17} parent=31 // pred_check_branch
        %762 = sbr.rel (%p760) target = $region36
      $region35: #{_lambda_.17} parent=31 // pred_region
        %s763 = smul.u32 64, %s14
      $region36: #{_lambda_.17} parent=31 // pred_fallthru
        _
    $region32: #{_lambda_.17} parent=5 // pred_fallthru
      _
    %p764 = scmp.le.s32.totalorder 2, %s9
    // Predicated region
    $region37: #{_lambda_.17} parent=5 // pred_check
      %p765 = pneg %p764
    $region38: #{_lambda_.17} parent=5 // pred_check_branch
      %767 = sbr.rel (%p765) target = $region40
    $region39: #{_lambda_.17} parent=5 // pred_region
      %s768 = ssub.s32 %s9, 2
      // Predicated region
      $region41: #{_lambda_.17} parent=39 // pred_check
        %p769 = pneg %p106
      $region42: #{_lambda_.17} parent=39 // pred_check_branch
        %771 = sbr.rel (%p769) target = $region44
      $region43: #{_lambda_.17} parent=39 // pred_region
        %s772 = smul.u32 64, %s15
        %p773 = scmp.lt.s32.totalorder %s772, 255
        %s774 = scalar_select %p773, %s772, 255
        %s775 = smul.addr %s774, 8
        %s776 = scalar_lea.vmem %s3, %s775
      $region44: #{_lambda_.17} parent=39 // pred_fallthru
        _
    $region40: #{_lambda_.17} parent=5 // pred_fallthru
      _
  $region6: #{_lambda_.17} parent=0 // loop_footer
    %s13 = sadd.s32 1, %s9
  $region7: #{_lambda_.17} parent=0 // loop_footer_branch
    %8 = sbr.rel target = $region3
  $region8: #{_lambda_.17} parent=0 // loop_exit
    _

// kernel: _lambda_.18
$region0: #{_lambda_.18}
  #allocation0 [shape = 'u32[]', space=smem, size = 0x4, offset = 0x4, fixed_abs, tag = 'smem constant byte address 0x4 - core index']
  #allocation1 [shape = 'u32[72,128]{1,0:T(1,128)}', space=vmem, size = 0x9000, scoped, tag = 'internal scratch']
  %s0 = inlined_call_operand.vmem [shape: bf16[1024,144], index: 0, kind: input, shape index: {}]
  %s1 = inlined_call_operand.vmem [shape: bf16[144,128], index: 1, kind: input, shape index: {}]
  %s2 = inlined_call_operand.vmem [shape: f32[1,128], index: 2, kind: input, shape index: {}]
  %s3 = inlined_call_operand.vmem [shape: f32[1024,128], index: 3, kind: output, shape index: {}]
  %s4 = sld [smem:[#allocation0]]
  $region45: #{_lambda_.18} parent=0
    _
  %s6 = ssub.s32 1, %s4
  %s7 = scalar_select 0, %s6, %s4
  loop: start=0, step=1, limit=4
  $region2: #{_lambda_.18} parent=0 // loop_pre_header
    _
  $region3: #{_lambda_.18} parent=0 // loop_header
    %s9 = sphi 0, %s13
    %p10 = scmp.ge.s32.totalorder %s9, 4
    %s19 = sphi 0, %s21
    %s22 = sphi 0, %s19
    %s23 = sphi 0, %s22
    %s39 = sphi 0, %s23
    %s43 = sphi 0, %s43
    %s45 = sphi 0, %s43
    %s46 = sphi 0, %s45
    %s60 = sphi 0, %s46
    %s64 = sphi 0, %s64
    %s66 = sphi 0, %s64
    %s67 = sphi 0, %s66
    %s81 = sphi 0, %s67
    %s87 = sphi 0, %s89
    %s90 = sphi 0, %s87
    %s91 = sphi 0, %s90
    %s107 = sphi 0, %s91
  $region4: #{_lambda_.18} parent=0 // loop_header_branch
    %12 = sbr.rel (%p10) target = $region8
  $region5: #{_lambda_.18} parent=0 // loop_body
    %s14 = ssub.s32 %s9, 1
    %s15 = ssub.s32 %s9, 2
    %s16 = sadd.s32 %s9, 1
    %s17 = ssub.s32 %s9, %s16
    %p18 = scmp.eq.s32.totalorder %s17, 0
    %s20 = sadd.s32 %s19, 1
    %s21 = scalar_select %p18, %s19, %s20
    %p24 = pneg %p18
    %p25 = scmp.eq.s32.totalorder %s9, 1
    %p26 = por %p24, %p25
    %p27 = scmp.ne.s32.totalorder %s19, %s22
    %p28 = scmp.eq.s32.totalorder %s9, 0
    %p29 = por %p27, %p28
    %p30 = scmp.ne.s32.totalorder %s19, %s22
    %p31 = scmp.eq.s32.totalorder %s14, 1
    %p32 = por %p30, %p31
    %p33 = scmp.ne.s32.totalorder %s22, %s23
    %p34 = scmp.eq.s32.totalorder %s14, 0
    %p35 = por %p33, %p34
    %p36 = scmp.ne.s32.totalorder %s22, %s23
    %p37 = scmp.eq.s32.totalorder %s15, 1
    %p38 = por %p36, %p37
    %p40 = scmp.ne.s32.totalorder %s23, %s39
    %p41 = scmp.eq.s32.totalorder %s15, 0
    %p42 = por %p40, %p41
    %s44 = sadd.s32 %s43, 1
    %p47 = scmp.eq.s32.totalorder %s9, 1
    %p48 = scmp.ne.s32.totalorder %s43, %s45
    %p49 = scmp.eq.s32.totalorder %s9, 0
    %p50 = por %p48, %p49
    %p51 = scmp.ne.s32.totalorder %s43, %s45
    %p52 = scmp.eq.s32.totalorder %s14, 1
    %p53 = por %p51, %p52
    %p54 = scmp.ne.s32.totalorder %s45, %s46
    %p55 = scmp.eq.s32.totalorder %s14, 0
    %p56 = por %p54, %p55
    %p57 = scmp.ne.s32.totalorder %s45, %s46
    %p58 = scmp.eq.s32.totalorder %s15, 1
    %p59 = por %p57, %p58
    %p61 = scmp.ne.s32.totalorder %s46, %s60
    %p62 = scmp.eq.s32.totalorder %s15, 0
    %p63 = por %p61, %p62
    %s65 = sadd.s32 %s64, 1
    %p68 = scmp.eq.s32.totalorder %s9, 1
    %p69 = scmp.ne.s32.totalorder %s64, %s66
    %p70 = scmp.eq.s32.totalorder %s9, 0
    %p71 = por %p69, %p70
    %p72 = scmp.ne.s32.totalorder %s64, %s66
    %p73 = scmp.eq.s32.totalorder %s14, 1
    %p74 = por %p72, %p73
    %p75 = scmp.ne.s32.totalorder %s66, %s67
    %p76 = scmp.eq.s32.totalorder %s14, 0
    %p77 = por %p75, %p76
    %p78 = scmp.ne.s32.totalorder %s66, %s67
    %p79 = scmp.eq.s32.totalorder %s15, 1
    %p80 = por %p78, %p79
    %p82 = scmp.ne.s32.totalorder %s67, %s81
    %p83 = scmp.eq.s32.totalorder %s15, 0
    %p84 = por %p82, %p83
    %s85 = ssub.s32 %s9, %s16
    %p86 = scmp.eq.s32.totalorder %s85, 0
    %s88 = sadd.s32 %s87, 1
    %s89 = scalar_select %p86, %s87, %s88
    %p92 = pneg %p86
    %p93 = scmp.eq.s32.totalorder %s9, 1
    %p94 = por %p92, %p93
    %p95 = scmp.ne.s32.totalorder %s87, %s90
    %p96 = scmp.eq.s32.totalorder %s9, 0
    %p97 = por %p95, %p96
    %p98 = scmp.ne.s32.totalorder %s87, %s90
    %p99 = scmp.eq.s32.totalorder %s14, 1
    %p100 = por %p98, %p99
    %p101 = scmp.ne.s32.totalorder %s90, %s91
    %p102 = scmp.eq.s32.totalorder %s14, 0
    %p103 = por %p101, %p102
    %p104 = scmp.ne.s32.totalorder %s90, %s91
    %p105 = scmp.eq.s32.totalorder %s15, 1
    %p106 = por %p104, %p105
    %p108 = scmp.ne.s32.totalorder %s91, %s107
    %p109 = scmp.eq.s32.totalorder %s15, 0
    %p110 = por %p108, %p109
    %p111 = scmp.le.s32.totalorder 1, %s9
    %p112 = scmp.lt.s32.totalorder %s9, 3
    %p113 = pnand %p111, %p112
    %p114 = pneg %p113
    // Predicated region
    $region9: #{_lambda_.18} parent=5 // pred_check
      _
    $region10: #{_lambda_.18} parent=5 // pred_check_branch
      %116 = sbr.rel (%p113) target = $region12
    $region11: #{_lambda_.18} parent=5 // pred_region
      %s117 = ssub.s32 %s9, 1
      // Predicated region
      $region13: #{_lambda_.18} parent=11 // pred_check
        %p118 = pneg %p56
      $region14: #{_lambda_.18} parent=11 // pred_check_branch
        %120 = sbr.rel (%p118) target = $region16
      $region15: #{_lambda_.18} parent=11 // pred_region
        _
      $region16: #{_lambda_.18} parent=11 // pred_fallthru
        _
      // Predicated region
      $region17: #{_lambda_.18} parent=11 // pred_check
        %p121 = pneg %p77
      $region18: #{_lambda_.18} parent=11 // pred_check_branch
        %123 = sbr.rel (%p121) target = $region20
      $region19: #{_lambda_.18} parent=11 // pred_region
        _
      $region20: #{_lambda_.18} parent=11 // pred_fallthru
        _
    $region12: #{_lambda_.18} parent=5 // pred_fallthru
      _
    %p124 = scmp.lt.s32.totalorder %s9, 2
    // Predicated region
    $region21: #{_lambda_.18} parent=5 // pred_check
      %p125 = pneg %p124
    $region22: #{_lambda_.18} parent=5 // pred_check_branch
      %127 = sbr.rel (%p125) target = $region24
    $region23: #{_lambda_.18} parent=5 // pred_region
      // Predicated region
      $region25: #{_lambda_.18} parent=23 // pred_check
        %p128 = pneg %p29
      $region26: #{_lambda_.18} parent=23 // pred_check_branch
        %130 = sbr.rel (%p128) target = $region28
      $region27: #{_lambda_.18} parent=23 // pred_region
        %s131 = smul.u32 64, %s9
        %p132 = scmp.lt.s32.totalorder %s131, 127
        %s133 = scalar_select %p132, %s131, 127
        %s134 = smul.addr %s133, 2
        %s135 = smul.addr %s134, 4
        %s136 = scalar_lea.vmem %s0, %s135
        %s137 = smul.u32 64, %s9
      $region28: #{_lambda_.18} parent=23 // pred_fallthru
        _
    $region24: #{_lambda_.18} parent=5 // pred_fallthru
      _
    %p138 = scmp.le.s32.totalorder 1, %s9
    %p139 = scmp.lt.s32.totalorder %s9, 3
    %p140 = pnand %p138, %p139
    %p141 = pneg %p140
    // Predicated region
    $region29: #{_lambda_.18} parent=5 // pred_check
      _
    $region30: #{_lambda_.18} parent=5 // pred_check_branch
      %143 = sbr.rel (%p140) target = $region32
    $region31: #{_lambda_.18} parent=5 // pred_region
      %s144 = ssub.s32 %s9, 1
      %s145 = smul.u32 64, %s14
      %p146 = scmp.lt.s32.totalorder %s145, 127
      %s147 = scalar_select %p146, %s145, 127
      %s148 = smul.addr %s147, 2
      %s149 = smul.addr %s148, 4
      %s150 = scalar_lea.vmem %s0, %s149
      %p151 = pneg %p35
      %p152 = pneg %p32
      %p153 = pneg %p56
      %p154 = pneg %p53
      %p155 = pneg %p77
      %p156 = pneg %p74
      %p157 = pneg %p103
      %p158 = pneg %p100
      %s159 = smul.u32 64, %s14
      %p160 = scmp.lt.s32.totalorder %s159, 127
      %s161 = scalar_select %p160, %s159, 127
      %s162 = smul.addr %s161, 8
      %s163 = scalar_lea.vmem %s3, %s162
      %s164 = smul.u32 64, %s14
      %p165 = scmp.lt.s32.totalorder %s164, 127
      %s166 = scalar_select %p165, %s164, 127
      %s167 = smul.addr %s166, 2
      %s168 = smul.addr %s167, 4
      %s169 = scalar_lea.vmem %s0, %s168
      %s170 = smul.u32 64, %s14
      %s171 = smul.u32 64, %s14
      %p172 = scmp.lt.s32.totalorder %s171, 127
      %s173 = scalar_select %p172, %s171, 127
      %s174 = smul.addr %s173, 8
      %s175 = scalar_lea.vmem %s3, %s174
      %s176 = smul.u32 64, %s14
      %v178 = vld [vmem:[%s169] sm:$0xff]
      %v179 = vld [vmem:[%s169 + $0x8] sm:$0xff]
      %v180 = vld [vmem:[%s169 + $0x10] sm:$0xff]
      %v181 = vld [vmem:[%s169 + $0x18] sm:$0xff]
      %v182 = vld [vmem:[%s169 + $0x20] sm:$0xff]
      %v183 = vld [vmem:[%s169 + $0x28] sm:$0xff]
      %v184 = vld [vmem:[%s169 + $0x30] sm:$0xff]
      %v185 = vld [vmem:[%s169 + $0x38] sm:$0xff]
      %v186 = vld [vmem:[%s169 + $0x40] sm:$0xff]
      %v187 = vld [vmem:[%s169 + $0x48] sm:$0xff]
      %v188 = vld [vmem:[%s169 + $0x50] sm:$0xff]
      %v189 = vld [vmem:[%s169 + $0x58] sm:$0xff]
      %v190 = vld [vmem:[%s169 + $0x60] sm:$0xff]
      %v191 = vld [vmem:[%s169 + $0x68] sm:$0xff]
      %v192 = vld [vmem:[%s169 + $0x70] sm:$0xff]
      %v193 = vld [vmem:[%s169 + $0x78] sm:$0xff]
      %v194 = vld [vmem:[%s169 + $0x80] sm:$0xff]
      %v195 = vld [vmem:[%s169 + $0x88] sm:$0xff]
      %v196 = vld [vmem:[%s169 + $0x90] sm:$0xff]
      %v197 = vld [vmem:[%s169 + $0x98] sm:$0xff]
      %v198 = vld [vmem:[%s169 + $0xa0] sm:$0xff]
      %v199 = vld [vmem:[%s169 + $0xa8] sm:$0xff]
      %v200 = vld [vmem:[%s169 + $0xb0] sm:$0xff]
      %v201 = vld [vmem:[%s169 + $0xb8] sm:$0xff]
      %v202 = vld [vmem:[%s169 + $0xc0] sm:$0xff]
      %v203 = vld [vmem:[%s169 + $0xc8] sm:$0xff]
      %v204 = vld [vmem:[%s169 + $0xd0] sm:$0xff]
      %v205 = vld [vmem:[%s169 + $0xd8] sm:$0xff]
      %v206 = vld [vmem:[%s169 + $0xe0] sm:$0xff]
      %v207 = vld [vmem:[%s169 + $0xe8] sm:$0xff]
      %v208 = vld [vmem:[%s169 + $0xf0] sm:$0xff]
      %v209 = vld [vmem:[%s169 + $0xf8] sm:$0xff]
      %v210 = vld [vmem:[%s169 + $0x100] sm:$0xff]
      %v211 = vld [vmem:[%s169 + $0x108] sm:$0xff]
      %v212 = vld [vmem:[%s169 + $0x110] sm:$0xff]
      %v213 = vld [vmem:[%s169 + $0x118] sm:$0xff]
      %v214 = vld [vmem:[%s169 + $0x120] sm:$0xff]
      %v215 = vld [vmem:[%s169 + $0x128] sm:$0xff]
      %v216 = vld [vmem:[%s169 + $0x130] sm:$0xff]
      %v217 = vld [vmem:[%s169 + $0x138] sm:$0xff]
      %v218 = vld [vmem:[%s169 + $0x140] sm:$0xff]
      %v219 = vld [vmem:[%s169 + $0x148] sm:$0xff]
      %v220 = vld [vmem:[%s169 + $0x150] sm:$0xff]
      %v221 = vld [vmem:[%s169 + $0x158] sm:$0xff]
      %v222 = vld [vmem:[%s169 + $0x160] sm:$0xff]
      %v223 = vld [vmem:[%s169 + $0x168] sm:$0xff]
      %v224 = vld [vmem:[%s169 + $0x170] sm:$0xff]
      %v225 = vld [vmem:[%s169 + $0x178] sm:$0xff]
      %v226 = vld [vmem:[%s169 + $0x180] sm:$0xff]
      %v227 = vld [vmem:[%s169 + $0x188] sm:$0xff]
      %v228 = vld [vmem:[%s169 + $0x190] sm:$0xff]
      %v229 = vld [vmem:[%s169 + $0x198] sm:$0xff]
      %v230 = vld [vmem:[%s169 + $0x1a0] sm:$0xff]
      %v231 = vld [vmem:[%s169 + $0x1a8] sm:$0xff]
      %v232 = vld [vmem:[%s169 + $0x1b0] sm:$0xff]
      %v233 = vld [vmem:[%s169 + $0x1b8] sm:$0xff]
      %v234 = vld [vmem:[%s169 + $0x1c0] sm:$0xff]
      %v235 = vld [vmem:[%s169 + $0x1c8] sm:$0xff]
      %v236 = vld [vmem:[%s169 + $0x1d0] sm:$0xff]
      %v237 = vld [vmem:[%s169 + $0x1d8] sm:$0xff]
      %v238 = vld [vmem:[%s169 + $0x1e0] sm:$0xff]
      %v239 = vld [vmem:[%s169 + $0x1e8] sm:$0xff]
      %v240 = vld [vmem:[%s169 + $0x1f0] sm:$0xff]
      %v241 = vld [vmem:[%s169 + $0x1f8] sm:$0xff]
      %v242 = vld [vmem:[%s1] sm:$0xf]
      %v243 = vld [vmem:[%s1 + $0x4] sm:$0xf]
      %v244 = vld [vmem:[%s1 + $0x8] sm:$0xf]
      %v245 = vld [vmem:[%s1 + $0xc] sm:$0xf]
      %v246 = vld [vmem:[%s1 + $0x10] sm:$0xf]
      %v247 = vld [vmem:[%s1 + $0x14] sm:$0xf]
      %v248 = vld [vmem:[%s1 + $0x18] sm:$0xf]
      %v249 = vld [vmem:[%s1 + $0x1c] sm:$0xf]
      %v250 = vld [vmem:[%s1 + $0x20] sm:$0xf]
      %v251 = vld [vmem:[%s1 + $0x24] sm:$0xf]
      %v252 = vld [vmem:[%s1 + $0x28] sm:$0xf]
      %v253 = vld [vmem:[%s1 + $0x2c] sm:$0xf]
      %v254 = vld [vmem:[%s1 + $0x30] sm:$0xf]
      %v255 = vld [vmem:[%s1 + $0x34] sm:$0xf]
      %v256 = vld [vmem:[%s1 + $0x38] sm:$0xf]
      %v257 = vld [vmem:[%s1 + $0x3c] sm:$0xf]
      %v258 = vld [vmem:[%s1 + $0x40] sm:$0xf]
      %v259 = vld [vmem:[%s1 + $0x44] sm:$0xf]
      %v260 = vld [vmem:[%s2] sm:$0x1]
      %v262 = vperm.slane %v260, 0
      %v328 = vunpack.c.l.b16 %v178
      %v329 = vunpack.c.h.b16 %v178
      %v330 = vunpack.c.l.b16 %v179
      %v331 = vunpack.c.h.b16 %v179
      %v332 = vunpack.c.l.b16 %v180
      %v333 = vunpack.c.h.b16 %v180
      %v334 = vunpack.c.l.b16 %v181
      %v335 = vunpack.c.h.b16 %v181
      %v336 = vunpack.c.l.b16 %v182
      %v337 = vunpack.c.h.b16 %v182
      %v338 = vunpack.c.l.b16 %v183
      %v339 = vunpack.c.h.b16 %v183
      %v340 = vunpack.c.l.b16 %v184
      %v341 = vunpack.c.h.b16 %v184
      %v342 = vunpack.c.l.b16 %v185
      %v343 = vunpack.c.h.b16 %v185
      %v344 = vunpack.c.l.b16 %v186
      %v345 = vunpack.c.h.b16 %v186
      %v346 = vunpack.c.l.b16 %v187
      %v347 = vunpack.c.h.b16 %v187
      %v348 = vunpack.c.l.b16 %v188
      %v349 = vunpack.c.h.b16 %v188
      %v350 = vunpack.c.l.b16 %v189
      %v351 = vunpack.c.h.b16 %v189
      %v352 = vunpack.c.l.b16 %v190
      %v353 = vunpack.c.h.b16 %v190
      %v354 = vunpack.c.l.b16 %v191
      %v355 = vunpack.c.h.b16 %v191
      %v356 = vunpack.c.l.b16 %v192
      %v357 = vunpack.c.h.b16 %v192
      %v358 = vunpack.c.l.b16 %v193
      %v359 = vunpack.c.h.b16 %v193
      %v360 = vunpack.c.l.b16 %v194
      %v361 = vunpack.c.h.b16 %v194
      %v362 = vunpack.c.l.b16 %v195
      %v363 = vunpack.c.h.b16 %v195
      %v364 = vunpack.c.l.b16 %v196
      %v365 = vunpack.c.h.b16 %v196
      %v366 = vunpack.c.l.b16 %v197
      %v367 = vunpack.c.h.b16 %v197
      %v368 = vunpack.c.l.b16 %v198
      %v369 = vunpack.c.h.b16 %v198
      %v370 = vunpack.c.l.b16 %v199
      %v371 = vunpack.c.h.b16 %v199
      %v372 = vunpack.c.l.b16 %v200
      %v373 = vunpack.c.h.b16 %v200
      %v374 = vunpack.c.l.b16 %v201
      %v375 = vunpack.c.h.b16 %v201
      %v376 = vunpack.c.l.b16 %v202
      %v377 = vunpack.c.h.b16 %v202
      %v378 = vunpack.c.l.b16 %v203
      %v379 = vunpack.c.h.b16 %v203
      %v380 = vunpack.c.l.b16 %v204
      %v381 = vunpack.c.h.b16 %v204
      %v382 = vunpack.c.l.b16 %v205
      %v383 = vunpack.c.h.b16 %v205
      %v384 = vunpack.c.l.b16 %v206
      %v385 = vunpack.c.h.b16 %v206
      %v386 = vunpack.c.l.b16 %v207
      %v387 = vunpack.c.h.b16 %v207
      %v388 = vunpack.c.l.b16 %v208
      %v389 = vunpack.c.h.b16 %v208
      %v390 = vunpack.c.l.b16 %v209
      %v391 = vunpack.c.h.b16 %v209
      %v392 = vunpack.c.l.b16 %v210
      %v393 = vunpack.c.h.b16 %v210
      %v394 = vunpack.c.l.b16 %v211
      %v395 = vunpack.c.h.b16 %v211
      %v396 = vunpack.c.l.b16 %v212
      %v397 = vunpack.c.h.b16 %v212
      %v398 = vunpack.c.l.b16 %v213
      %v399 = vunpack.c.h.b16 %v213
      %v400 = vunpack.c.l.b16 %v214
      %v401 = vunpack.c.h.b16 %v214
      %v402 = vunpack.c.l.b16 %v215
      %v403 = vunpack.c.h.b16 %v215
      %v404 = vunpack.c.l.b16 %v216
      %v405 = vunpack.c.h.b16 %v216
      %v406 = vunpack.c.l.b16 %v217
      %v407 = vunpack.c.h.b16 %v217
      %v408 = vunpack.c.l.b16 %v218
      %v409 = vunpack.c.h.b16 %v218
      %v410 = vunpack.c.l.b16 %v219
      %v411 = vunpack.c.h.b16 %v219
      %v412 = vunpack.c.l.b16 %v220
      %v413 = vunpack.c.h.b16 %v220
      %v414 = vunpack.c.l.b16 %v221
      %v415 = vunpack.c.h.b16 %v221
      %v416 = vunpack.c.l.b16 %v222
      %v417 = vunpack.c.h.b16 %v222
      %v418 = vunpack.c.l.b16 %v223
      %v419 = vunpack.c.h.b16 %v223
      %v420 = vunpack.c.l.b16 %v224
      %v421 = vunpack.c.h.b16 %v224
      %v422 = vunpack.c.l.b16 %v225
      %v423 = vunpack.c.h.b16 %v225
      %v424 = vunpack.c.l.b16 %v226
      %v425 = vunpack.c.h.b16 %v226
      %v426 = vunpack.c.l.b16 %v227
      %v427 = vunpack.c.h.b16 %v227
      %v428 = vunpack.c.l.b16 %v228
      %v429 = vunpack.c.h.b16 %v228
      %v430 = vunpack.c.l.b16 %v229
      %v431 = vunpack.c.h.b16 %v229
      %v432 = vunpack.c.l.b16 %v230
      %v433 = vunpack.c.h.b16 %v230
      %v434 = vunpack.c.l.b16 %v231
      %v435 = vunpack.c.h.b16 %v231
      %v436 = vunpack.c.l.b16 %v232
      %v437 = vunpack.c.h.b16 %v232
      %v438 = vunpack.c.l.b16 %v233
      %v439 = vunpack.c.h.b16 %v233
      %v440 = vunpack.c.l.b16 %v234
      %v441 = vunpack.c.h.b16 %v234
      %v442 = vunpack.c.l.b16 %v235
      %v443 = vunpack.c.h.b16 %v235
      %v444 = vunpack.c.l.b16 %v236
      %v445 = vunpack.c.h.b16 %v236
      %v446 = vunpack.c.l.b16 %v237
      %v447 = vunpack.c.h.b16 %v237
      %v448 = vunpack.c.l.b16 %v238
      %v449 = vunpack.c.h.b16 %v238
      %v450 = vunpack.c.l.b16 %v239
      %v451 = vunpack.c.h.b16 %v239
      %v452 = vunpack.c.l.b16 %v240
      %v453 = vunpack.c.h.b16 %v240
      %v454 = vunpack.c.l.b16 %v241
      %v455 = vunpack.c.h.b16 %v241
      %v456 = vpack.c.b16 %v330, %v328
      %v457 = vpack.c.b16 %v331, %v329
      %v458 = vpack.c.b16 %v334, %v332
      %v459 = vpack.c.b16 %v335, %v333
      %v460 = vpack.c.b16 %v338, %v336
      %v461 = vpack.c.b16 %v339, %v337
      %v462 = vpack.c.b16 %v342, %v340
      %v463 = vpack.c.b16 %v343, %v341
      %v464 = vpack.c.b16 %v346, %v344
      %v465 = vpack.c.b16 %v347, %v345
      %v466 = vpack.c.b16 %v350, %v348
      %v467 = vpack.c.b16 %v351, %v349
      %v468 = vpack.c.b16 %v354, %v352
      %v469 = vpack.c.b16 %v355, %v353
      %v470 = vpack.c.b16 %v358, %v356
      %v471 = vpack.c.b16 %v359, %v357
      %v472 = vpack.c.b16 %v362, %v360
      %v473 = vpack.c.b16 %v363, %v361
      %v474 = vpack.c.b16 %v366, %v364
      %v475 = vpack.c.b16 %v367, %v365
      %v476 = vpack.c.b16 %v370, %v368
      %v477 = vpack.c.b16 %v371, %v369
      %v478 = vpack.c.b16 %v374, %v372
      %v479 = vpack.c.b16 %v375, %v373
      %v480 = vpack.c.b16 %v378, %v376
      %v481 = vpack.c.b16 %v379, %v377
      %v482 = vpack.c.b16 %v382, %v380
      %v483 = vpack.c.b16 %v383, %v381
      %v484 = vpack.c.b16 %v386, %v384
      %v485 = vpack.c.b16 %v387, %v385
      %v486 = vpack.c.b16 %v390, %v388
      %v487 = vpack.c.b16 %v391, %v389
      %v488 = vpack.c.b16 %v394, %v392
      %v489 = vpack.c.b16 %v395, %v393
      %v490 = vpack.c.b16 %v398, %v396
      %v491 = vpack.c.b16 %v399, %v397
      %v492 = vpack.c.b16 %v402, %v400
      %v493 = vpack.c.b16 %v403, %v401
      %v494 = vpack.c.b16 %v406, %v404
      %v495 = vpack.c.b16 %v407, %v405
      %v496 = vpack.c.b16 %v410, %v408
      %v497 = vpack.c.b16 %v411, %v409
      %v498 = vpack.c.b16 %v414, %v412
      %v499 = vpack.c.b16 %v415, %v413
      %v500 = vpack.c.b16 %v418, %v416
      %v501 = vpack.c.b16 %v419, %v417
      %v502 = vpack.c.b16 %v422, %v420
      %v503 = vpack.c.b16 %v423, %v421
      %v504 = vpack.c.b16 %v426, %v424
      %v505 = vpack.c.b16 %v427, %v425
      %v506 = vpack.c.b16 %v430, %v428
      %v507 = vpack.c.b16 %v431, %v429
      %v508 = vpack.c.b16 %v434, %v432
      %v509 = vpack.c.b16 %v435, %v433
      %v510 = vpack.c.b16 %v438, %v436
      %v511 = vpack.c.b16 %v439, %v437
      %v512 = vpack.c.b16 %v442, %v440
      %v513 = vpack.c.b16 %v443, %v441
      %v514 = vpack.c.b16 %v446, %v444
      %v515 = vpack.c.b16 %v447, %v445
      %v516 = vpack.c.b16 %v450, %v448
      %v517 = vpack.c.b16 %v451, %v449
      %v518 = vpack.c.b16 %v454, %v452
      %v519 = vpack.c.b16 %v455, %v453
      %v570 = vunpack.c.l.b16 %v242
      %v571 = vunpack.c.l.b16 %v243
      %v572 = vunpack.c.l.b16 %v244
      %v573 = vunpack.c.l.b16 %v245
      %v574 = vunpack.c.l.b16 %v246
      %v575 = vunpack.c.l.b16 %v247
      %v576 = vunpack.c.l.b16 %v248
      %v577 = vunpack.c.l.b16 %v249
      %v578 = vunpack.c.l.b16 %v250
      %v579 = vunpack.c.l.b16 %v251
      %v580 = vunpack.c.l.b16 %v252
      %v581 = vunpack.c.l.b16 %v253
      %v582 = vunpack.c.l.b16 %v254
      %v583 = vunpack.c.l.b16 %v255
      %v584 = vunpack.c.l.b16 %v256
      %v585 = vunpack.c.l.b16 %v257
      %v586 = vunpack.c.l.b16 %v258
      %v587 = vunpack.c.l.b16 %v259
      %v588 = vpack.c.b16 %v571, %v570
      %v589 = vpack.c.b16 %v573, %v572
      %v590 = vpack.c.b16 %v575, %v574
      %v591 = vpack.c.b16 %v577, %v576
      %v592 = vpack.c.b16 %v579, %v578
      %v593 = vpack.c.b16 %v581, %v580
      %v594 = vpack.c.b16 %v583, %v582
      %v595 = vpack.c.b16 %v585, %v584
      %v596 = vpack.c.b16 %v587, %v586
      %vm606 = vcmask 130048
      %v608 = vsel %vm606, %v457, 0
      %v611 = vsel %vm606, %v459, 0
      %v614 = vsel %vm606, %v461, 0
      %v617 = vsel %vm606, %v463, 0
      %v620 = vsel %vm606, %v465, 0
      %v623 = vsel %vm606, %v467, 0
      %v626 = vsel %vm606, %v469, 0
      %v629 = vsel %vm606, %v471, 0
      %v632 = vsel %vm606, %v473, 0
      %v635 = vsel %vm606, %v475, 0
      %v638 = vsel %vm606, %v477, 0
      %v641 = vsel %vm606, %v479, 0
      %v644 = vsel %vm606, %v481, 0
      %v647 = vsel %vm606, %v483, 0
      %v650 = vsel %vm606, %v485, 0
      %v653 = vsel %vm606, %v487, 0
      %v656 = vsel %vm606, %v489, 0
      %v659 = vsel %vm606, %v491, 0
      %v662 = vsel %vm606, %v493, 0
      %v665 = vsel %vm606, %v495, 0
      %v668 = vsel %vm606, %v497, 0
      %v671 = vsel %vm606, %v499, 0
      %v674 = vsel %vm606, %v501, 0
      %v677 = vsel %vm606, %v503, 0
      %v680 = vsel %vm606, %v505, 0
      %v683 = vsel %vm606, %v507, 0
      %v686 = vsel %vm606, %v509, 0
      %v689 = vsel %vm606, %v511, 0
      %v692 = vsel %vm606, %v513, 0
      %v695 = vsel %vm606, %v515, 0
      %v698 = vsel %vm606, %v517, 0
      %v701 = vsel %vm606, %v519, 0
      %703 = vmatpush.bf16.msra.mxu0 %v595
      %704 = vmatpush.bf16.msra.mxu0 %v594
      %705 = vmatpush.bf16.msra.mxu0 %v593
      %706 = vmatpush.bf16.msra.mxu0 %v592
      %707 = vmatpush.bf16.msra.mxu0 %v591
      %708 = vmatpush.bf16.msra.mxu0 %v590
      %709 = vmatpush.bf16.msra.mxu0 %v589
      %710 = vmatpush.bf16.msra.mxu0 %v588
      %711 = vmatmul.bf16.gmra.mxu0 %v456
      %v712 = vpop.f32.mrf.mxu0
      %v713 = vadd.f32 %v262, %v712
      %v714 = vpop.f32.mrf.mxu0
      %v715 = vadd.f32 %v262, %v714
      %716 = vmatmul.bf16.gmra.mxu0 %v458
      %v717 = vpop.f32.mrf.mxu0
      %v718 = vadd.f32 %v262, %v717
      %v719 = vpop.f32.mrf.mxu0
      %v720 = vadd.f32 %v262, %v719
      %721 = vmatmul.bf16.gmra.mxu0 %v460
      %v722 = vpop.f32.mrf.mxu0
      %v723 = vadd.f32 %v262, %v722
      %v724 = vpop.f32.mrf.mxu0
      %v725 = vadd.f32 %v262, %v724
      %726 = vmatmul.bf16.gmra.mxu0 %v462
      %v727 = vpop.f32.mrf.mxu0
      %v728 = vadd.f32 %v262, %v727
      %v729 = vpop.f32.mrf.mxu0
      %v730 = vadd.f32 %v262, %v729
      %731 = vmatmul.bf16.gmra.mxu0 %v464
      %v732 = vpop.f32.mrf.mxu0
      %v733 = vadd.f32 %v262, %v732
      %v734 = vpop.f32.mrf.mxu0
      %v735 = vadd.f32 %v262, %v734
      %736 = vmatmul.bf16.gmra.mxu0 %v466
      %v737 = vpop.f32.mrf.mxu0
      %v738 = vadd.f32 %v262, %v737
      %v739 = vpop.f32.mrf.mxu0
      %v740 = vadd.f32 %v262, %v739
      %741 = vmatmul.bf16.gmra.mxu0 %v468
      %v742 = vpop.f32.mrf.mxu0
      %v743 = vadd.f32 %v262, %v742
      %v744 = vpop.f32.mrf.mxu0
      %v745 = vadd.f32 %v262, %v744
      %746 = vmatmul.bf16.gmra.mxu0 %v470
      %v747 = vpop.f32.mrf.mxu0
      %v748 = vadd.f32 %v262, %v747
      %v749 = vpop.f32.mrf.mxu0
      %v750 = vadd.f32 %v262, %v749
      %751 = vmatmul.bf16.gmra.mxu0 %v472
      %v752 = vpop.f32.mrf.mxu0
      %v753 = vadd.f32 %v262, %v752
      %v754 = vpop.f32.mrf.mxu0
      %v755 = vadd.f32 %v262, %v754
      %756 = vmatmul.bf16.gmra.mxu0 %v474
      %v757 = vpop.f32.mrf.mxu0
      %v758 = vadd.f32 %v262, %v757
      %v759 = vpop.f32.mrf.mxu0
      %v760 = vadd.f32 %v262, %v759
      %761 = vmatmul.bf16.gmra.mxu0 %v476
      %v762 = vpop.f32.mrf.mxu0
      %v763 = vadd.f32 %v262, %v762
      %v764 = vpop.f32.mrf.mxu0
      %v765 = vadd.f32 %v262, %v764
      %766 = vmatmul.bf16.gmra.mxu0 %v478
      %v767 = vpop.f32.mrf.mxu0
      %v768 = vadd.f32 %v262, %v767
      %v769 = vpop.f32.mrf.mxu0
      %v770 = vadd.f32 %v262, %v769
      %771 = vmatmul.bf16.gmra.mxu0 %v480
      %v772 = vpop.f32.mrf.mxu0
      %v773 = vadd.f32 %v262, %v772
      %v774 = vpop.f32.mrf.mxu0
      %v775 = vadd.f32 %v262, %v774
      %776 = vmatmul.bf16.gmra.mxu0 %v482
      %v777 = vpop.f32.mrf.mxu0
      %v778 = vadd.f32 %v262, %v777
      %v779 = vpop.f32.mrf.mxu0
      %v780 = vadd.f32 %v262, %v779
      %781 = vmatmul.bf16.gmra.mxu0 %v484
      %v782 = vpop.f32.mrf.mxu0
      %v783 = vadd.f32 %v262, %v782
      %v784 = vpop.f32.mrf.mxu0
      %v785 = vadd.f32 %v262, %v784
      %786 = vmatmul.bf16.gmra.mxu0 %v486
      %v787 = vpop.f32.mrf.mxu0
      %v788 = vadd.f32 %v262, %v787
      %v789 = vpop.f32.mrf.mxu0
      %v790 = vadd.f32 %v262, %v789
      %791 = vmatmul.bf16.gmra.mxu0 %v488
      %v792 = vpop.f32.mrf.mxu0
      %v793 = vadd.f32 %v262, %v792
      %v794 = vpop.f32.mrf.mxu0
      %v795 = vadd.f32 %v262, %v794
      %796 = vmatmul.bf16.gmra.mxu0 %v490
      %v797 = vpop.f32.mrf.mxu0
      %v798 = vadd.f32 %v262, %v797
      %v799 = vpop.f32.mrf.mxu0
      %v800 = vadd.f32 %v262, %v799
      %801 = vmatmul.bf16.gmra.mxu0 %v492
      %v802 = vpop.f32.mrf.mxu0
      %v803 = vadd.f32 %v262, %v802
      %v804 = vpop.f32.mrf.mxu0
      %v805 = vadd.f32 %v262, %v804
      %806 = vmatmul.bf16.gmra.mxu0 %v494
      %v807 = vpop.f32.mrf.mxu0
      %v808 = vadd.f32 %v262, %v807
      %v809 = vpop.f32.mrf.mxu0
      %v810 = vadd.f32 %v262, %v809
      %811 = vmatmul.bf16.gmra.mxu0 %v496
      %v812 = vpop.f32.mrf.mxu0
      %v813 = vadd.f32 %v262, %v812
      %v814 = vpop.f32.mrf.mxu0
      %v815 = vadd.f32 %v262, %v814
      %816 = vmatmul.bf16.gmra.mxu0 %v498
      %v817 = vpop.f32.mrf.mxu0
      %v818 = vadd.f32 %v262, %v817
      %v819 = vpop.f32.mrf.mxu0
      %v820 = vadd.f32 %v262, %v819
      %821 = vmatmul.bf16.gmra.mxu0 %v500
      %v822 = vpop.f32.mrf.mxu0
      %v823 = vadd.f32 %v262, %v822
      %v824 = vpop.f32.mrf.mxu0
      %v825 = vadd.f32 %v262, %v824
      %826 = vmatmul.bf16.gmra.mxu0 %v502
      %v827 = vpop.f32.mrf.mxu0
      %v828 = vadd.f32 %v262, %v827
      %v829 = vpop.f32.mrf.mxu0
      %v830 = vadd.f32 %v262, %v829
      %831 = vmatmul.bf16.gmra.mxu0 %v504
      %v832 = vpop.f32.mrf.mxu0
      %v833 = vadd.f32 %v262, %v832
      %v834 = vpop.f32.mrf.mxu0
      %v835 = vadd.f32 %v262, %v834
      %836 = vmatmul.bf16.gmra.mxu0 %v506
      %v837 = vpop.f32.mrf.mxu0
      %v838 = vadd.f32 %v262, %v837
      %v839 = vpop.f32.mrf.mxu0
      %v840 = vadd.f32 %v262, %v839
      %841 = vmatmul.bf16.gmra.mxu0 %v508
      %v842 = vpop.f32.mrf.mxu0
      %v843 = vadd.f32 %v262, %v842
      %v844 = vpop.f32.mrf.mxu0
      %v845 = vadd.f32 %v262, %v844
      %846 = vmatmul.bf16.gmra.mxu0 %v510
      %v847 = vpop.f32.mrf.mxu0
      %v848 = vadd.f32 %v262, %v847
      %v849 = vpop.f32.mrf.mxu0
      %v850 = vadd.f32 %v262, %v849
      %851 = vmatmul.bf16.gmra.mxu0 %v512
      %v852 = vpop.f32.mrf.mxu0
      %v853 = vadd.f32 %v262, %v852
      %v854 = vpop.f32.mrf.mxu0
      %v855 = vadd.f32 %v262, %v854
      %856 = vmatmul.bf16.gmra.mxu0 %v514
      %v857 = vpop.f32.mrf.mxu0
      %v858 = vadd.f32 %v262, %v857
      %v859 = vpop.f32.mrf.mxu0
      %v860 = vadd.f32 %v262, %v859
      %861 = vmatmul.bf16.gmra.mxu0 %v516
      %v862 = vpop.f32.mrf.mxu0
      %v863 = vadd.f32 %v262, %v862
      %v864 = vpop.f32.mrf.mxu0
      %v865 = vadd.f32 %v262, %v864
      %866 = vmatmul.bf16.gmra.mxu0 %v518
      %v867 = vpop.f32.mrf.mxu0
      %v868 = vadd.f32 %v262, %v867
      %v869 = vpop.f32.mrf.mxu0
      %v870 = vadd.f32 %v262, %v869
      %871 = vdwg.mxu0
      %872 = vmatpush.bf16.msra.mxu0 0
      %873 = vmatpush.bf16.msra.mxu0 0
      %874 = vmatpush.bf16.msra.mxu0 0
      %875 = vmatpush.bf16.msra.mxu0 0
      %876 = vmatpush.bf16.msra.mxu0 0
      %877 = vmatpush.bf16.msra.mxu0 0
      %878 = vmatpush.bf16.msra.mxu0 0
      %879 = vmatpush.bf16.msra.mxu0 %v596
      %880 = vmatmul.bf16.gmra.mxu0 %v608
      %v881 = vpop.f32.mrf.mxu0
      %v882 = vadd.f32 %v713, %v881
      %v883 = vpop.f32.mrf.mxu0
      %v884 = vadd.f32 %v715, %v883
      %885 = vmatmul.bf16.gmra.mxu0 %v611
      %v886 = vpop.f32.mrf.mxu0
      %v887 = vadd.f32 %v718, %v886
      %v888 = vpop.f32.mrf.mxu0
      %v889 = vadd.f32 %v720, %v888
      %890 = vmatmul.bf16.gmra.mxu0 %v614
      %v891 = vpop.f32.mrf.mxu0
      %v892 = vadd.f32 %v723, %v891
      %v893 = vpop.f32.mrf.mxu0
      %v894 = vadd.f32 %v725, %v893
      %895 = vmatmul.bf16.gmra.mxu0 %v617
      %v896 = vpop.f32.mrf.mxu0
      %v897 = vadd.f32 %v728, %v896
      %v898 = vpop.f32.mrf.mxu0
      %v899 = vadd.f32 %v730, %v898
      %900 = vmatmul.bf16.gmra.mxu0 %v620
      %v901 = vpop.f32.mrf.mxu0
      %v902 = vadd.f32 %v733, %v901
      %v903 = vpop.f32.mrf.mxu0
      %v904 = vadd.f32 %v735, %v903
      %905 = vmatmul.bf16.gmra.mxu0 %v623
      %v906 = vpop.f32.mrf.mxu0
      %v907 = vadd.f32 %v738, %v906
      %v908 = vpop.f32.mrf.mxu0
      %v909 = vadd.f32 %v740, %v908
      %910 = vmatmul.bf16.gmra.mxu0 %v626
      %v911 = vpop.f32.mrf.mxu0
      %v912 = vadd.f32 %v743, %v911
      %v913 = vpop.f32.mrf.mxu0
      %v914 = vadd.f32 %v745, %v913
      %915 = vmatmul.bf16.gmra.mxu0 %v629
      %v916 = vpop.f32.mrf.mxu0
      %v917 = vadd.f32 %v748, %v916
      %v918 = vpop.f32.mrf.mxu0
      %v919 = vadd.f32 %v750, %v918
      %920 = vmatmul.bf16.gmra.mxu0 %v632
      %v921 = vpop.f32.mrf.mxu0
      %v922 = vadd.f32 %v753, %v921
      %v923 = vpop.f32.mrf.mxu0
      %v924 = vadd.f32 %v755, %v923
      %925 = vmatmul.bf16.gmra.mxu0 %v635
      %v926 = vpop.f32.mrf.mxu0
      %v927 = vadd.f32 %v758, %v926
      %v928 = vpop.f32.mrf.mxu0
      %v929 = vadd.f32 %v760, %v928
      %930 = vmatmul.bf16.gmra.mxu0 %v638
      %v931 = vpop.f32.mrf.mxu0
      %v932 = vadd.f32 %v763, %v931
      %v933 = vpop.f32.mrf.mxu0
      %v934 = vadd.f32 %v765, %v933
      %935 = vmatmul.bf16.gmra.mxu0 %v641
      %v936 = vpop.f32.mrf.mxu0
      %v937 = vadd.f32 %v768, %v936
      %v938 = vpop.f32.mrf.mxu0
      %v939 = vadd.f32 %v770, %v938
      %940 = vmatmul.bf16.gmra.mxu0 %v644
      %v941 = vpop.f32.mrf.mxu0
      %v942 = vadd.f32 %v773, %v941
      %v943 = vpop.f32.mrf.mxu0
      %v944 = vadd.f32 %v775, %v943
      %945 = vmatmul.bf16.gmra.mxu0 %v647
      %v946 = vpop.f32.mrf.mxu0
      %v947 = vadd.f32 %v778, %v946
      %v948 = vpop.f32.mrf.mxu0
      %v949 = vadd.f32 %v780, %v948
      %950 = vmatmul.bf16.gmra.mxu0 %v650
      %v951 = vpop.f32.mrf.mxu0
      %v952 = vadd.f32 %v783, %v951
      %v953 = vpop.f32.mrf.mxu0
      %v954 = vadd.f32 %v785, %v953
      %955 = vmatmul.bf16.gmra.mxu0 %v653
      %v956 = vpop.f32.mrf.mxu0
      %v957 = vadd.f32 %v788, %v956
      %v958 = vpop.f32.mrf.mxu0
      %v959 = vadd.f32 %v790, %v958
      %960 = vmatmul.bf16.gmra.mxu0 %v656
      %v961 = vpop.f32.mrf.mxu0
      %v962 = vadd.f32 %v793, %v961
      %v963 = vpop.f32.mrf.mxu0
      %v964 = vadd.f32 %v795, %v963
      %965 = vmatmul.bf16.gmra.mxu0 %v659
      %v966 = vpop.f32.mrf.mxu0
      %v967 = vadd.f32 %v798, %v966
      %v968 = vpop.f32.mrf.mxu0
      %v969 = vadd.f32 %v800, %v968
      %970 = vmatmul.bf16.gmra.mxu0 %v662
      %v971 = vpop.f32.mrf.mxu0
      %v972 = vadd.f32 %v803, %v971
      %v973 = vpop.f32.mrf.mxu0
      %v974 = vadd.f32 %v805, %v973
      %975 = vmatmul.bf16.gmra.mxu0 %v665
      %v976 = vpop.f32.mrf.mxu0
      %v977 = vadd.f32 %v808, %v976
      %v978 = vpop.f32.mrf.mxu0
      %v979 = vadd.f32 %v810, %v978
      %980 = vmatmul.bf16.gmra.mxu0 %v668
      %v981 = vpop.f32.mrf.mxu0
      %v982 = vadd.f32 %v813, %v981
      %v983 = vpop.f32.mrf.mxu0
      %v984 = vadd.f32 %v815, %v983
      %985 = vmatmul.bf16.gmra.mxu0 %v671
      %v986 = vpop.f32.mrf.mxu0
      %v987 = vadd.f32 %v818, %v986
      %v988 = vpop.f32.mrf.mxu0
      %v989 = vadd.f32 %v820, %v988
      %990 = vmatmul.bf16.gmra.mxu0 %v674
      %v991 = vpop.f32.mrf.mxu0
      %v992 = vadd.f32 %v823, %v991
      %v993 = vpop.f32.mrf.mxu0
      %v994 = vadd.f32 %v825, %v993
      %995 = vmatmul.bf16.gmra.mxu0 %v677
      %v996 = vpop.f32.mrf.mxu0
      %v997 = vadd.f32 %v828, %v996
      %v998 = vpop.f32.mrf.mxu0
      %v999 = vadd.f32 %v830, %v998
      %1000 = vmatmul.bf16.gmra.mxu0 %v680
      %v1001 = vpop.f32.mrf.mxu0
      %v1002 = vadd.f32 %v833, %v1001
      %v1003 = vpop.f32.mrf.mxu0
      %v1004 = vadd.f32 %v835, %v1003
      %1005 = vmatmul.bf16.gmra.mxu0 %v683
      %v1006 = vpop.f32.mrf.mxu0
      %v1007 = vadd.f32 %v838, %v1006
      %v1008 = vpop.f32.mrf.mxu0
      %v1009 = vadd.f32 %v840, %v1008
      %1010 = vmatmul.bf16.gmra.mxu0 %v686
      %v1011 = vpop.f32.mrf.mxu0
      %v1012 = vadd.f32 %v843, %v1011
      %v1013 = vpop.f32.mrf.mxu0
      %v1014 = vadd.f32 %v845, %v1013
      %1015 = vmatmul.bf16.gmra.mxu0 %v689
      %v1016 = vpop.f32.mrf.mxu0
      %v1017 = vadd.f32 %v848, %v1016
      %v1018 = vpop.f32.mrf.mxu0
      %v1019 = vadd.f32 %v850, %v1018
      %1020 = vmatmul.bf16.gmra.mxu0 %v692
      %v1021 = vpop.f32.mrf.mxu0
      %v1022 = vadd.f32 %v853, %v1021
      %v1023 = vpop.f32.mrf.mxu0
      %v1024 = vadd.f32 %v855, %v1023
      %1025 = vmatmul.bf16.gmra.mxu0 %v695
      %v1026 = vpop.f32.mrf.mxu0
      %v1027 = vadd.f32 %v858, %v1026
      %v1028 = vpop.f32.mrf.mxu0
      %v1029 = vadd.f32 %v860, %v1028
      %1030 = vmatmul.bf16.gmra.mxu0 %v698
      %v1031 = vpop.f32.mrf.mxu0
      %v1032 = vadd.f32 %v863, %v1031
      %v1033 = vpop.f32.mrf.mxu0
      %v1034 = vadd.f32 %v865, %v1033
      %1035 = vmatmul.bf16.gmra.mxu0 %v701
      %v1036 = vpop.f32.mrf.mxu0
      %v1037 = vadd.f32 %v868, %v1036
      %v1038 = vpop.f32.mrf.mxu0
      %v1039 = vadd.f32 %v870, %v1038
      %1040 = vdwg.mxu0
      %1041 = vst [vmem:[%s175] sm:$0xff] %v882
      %1042 = vst [vmem:[%s175 + $0x8] sm:$0xff] %v884
      %1043 = vst [vmem:[%s175 + $0x10] sm:$0xff] %v887
      %1044 = vst [vmem:[%s175 + $0x18] sm:$0xff] %v889
      %1045 = vst [vmem:[%s175 + $0x20] sm:$0xff] %v892
      %1046 = vst [vmem:[%s175 + $0x28] sm:$0xff] %v894
      %1047 = vst [vmem:[%s175 + $0x30] sm:$0xff] %v897
      %1048 = vst [vmem:[%s175 + $0x38] sm:$0xff] %v899
      %1049 = vst [vmem:[%s175 + $0x40] sm:$0xff] %v902
      %1050 = vst [vmem:[%s175 + $0x48] sm:$0xff] %v904
      %1051 = vst [vmem:[%s175 + $0x50] sm:$0xff] %v907
      %1052 = vst [vmem:[%s175 + $0x58] sm:$0xff] %v909
      %1053 = vst [vmem:[%s175 + $0x60] sm:$0xff] %v912
      %1054 = vst [vmem:[%s175 + $0x68] sm:$0xff] %v914
      %1055 = vst [vmem:[%s175 + $0x70] sm:$0xff] %v917
      %1056 = vst [vmem:[%s175 + $0x78] sm:$0xff] %v919
      %1057 = vst [vmem:[%s175 + $0x80] sm:$0xff] %v922
      %1058 = vst [vmem:[%s175 + $0x88] sm:$0xff] %v924
      %1059 = vst [vmem:[%s175 + $0x90] sm:$0xff] %v927
      %1060 = vst [vmem:[%s175 + $0x98] sm:$0xff] %v929
      %1061 = vst [vmem:[%s175 + $0xa0] sm:$0xff] %v932
      %1062 = vst [vmem:[%s175 + $0xa8] sm:$0xff] %v934
      %1063 = vst [vmem:[%s175 + $0xb0] sm:$0xff] %v937
      %1064 = vst [vmem:[%s175 + $0xb8] sm:$0xff] %v939
      %1065 = vst [vmem:[%s175 + $0xc0] sm:$0xff] %v942
      %1066 = vst [vmem:[%s175 + $0xc8] sm:$0xff] %v944
      %1067 = vst [vmem:[%s175 + $0xd0] sm:$0xff] %v947
      %1068 = vst [vmem:[%s175 + $0xd8] sm:$0xff] %v949
      %1069 = vst [vmem:[%s175 + $0xe0] sm:$0xff] %v952
      %1070 = vst [vmem:[%s175 + $0xe8] sm:$0xff] %v954
      %1071 = vst [vmem:[%s175 + $0xf0] sm:$0xff] %v957
      %1072 = vst [vmem:[%s175 + $0xf8] sm:$0xff] %v959
      %1073 = vst [vmem:[%s175 + $0x100] sm:$0xff] %v962
      %1074 = vst [vmem:[%s175 + $0x108] sm:$0xff] %v964
      %1075 = vst [vmem:[%s175 + $0x110] sm:$0xff] %v967
      %1076 = vst [vmem:[%s175 + $0x118] sm:$0xff] %v969
      %1077 = vst [vmem:[%s175 + $0x120] sm:$0xff] %v972
      %1078 = vst [vmem:[%s175 + $0x128] sm:$0xff] %v974
      %1079 = vst [vmem:[%s175 + $0x130] sm:$0xff] %v977
      %1080 = vst [vmem:[%s175 + $0x138] sm:$0xff] %v979
      %1081 = vst [vmem:[%s175 + $0x140] sm:$0xff] %v982
      %1082 = vst [vmem:[%s175 + $0x148] sm:$0xff] %v984
      %1083 = vst [vmem:[%s175 + $0x150] sm:$0xff] %v987
      %1084 = vst [vmem:[%s175 + $0x158] sm:$0xff] %v989
      %1085 = vst [vmem:[%s175 + $0x160] sm:$0xff] %v992
      %1086 = vst [vmem:[%s175 + $0x168] sm:$0xff] %v994
      %1087 = vst [vmem:[%s175 + $0x170] sm:$0xff] %v997
      %1088 = vst [vmem:[%s175 + $0x178] sm:$0xff] %v999
      %1089 = vst [vmem:[%s175 + $0x180] sm:$0xff] %v1002
      %1090 = vst [vmem:[%s175 + $0x188] sm:$0xff] %v1004
      %1091 = vst [vmem:[%s175 + $0x190] sm:$0xff] %v1007
      %1092 = vst [vmem:[%s175 + $0x198] sm:$0xff] %v1009
      %1093 = vst [vmem:[%s175 + $0x1a0] sm:$0xff] %v1012
      %1094 = vst [vmem:[%s175 + $0x1a8] sm:$0xff] %v1014
      %1095 = vst [vmem:[%s175 + $0x1b0] sm:$0xff] %v1017
      %1096 = vst [vmem:[%s175 + $0x1b8] sm:$0xff] %v1019
      %1097 = vst [vmem:[%s175 + $0x1c0] sm:$0xff] %v1022
      %1098 = vst [vmem:[%s175 + $0x1c8] sm:$0xff] %v1024
      %1099 = vst [vmem:[%s175 + $0x1d0] sm:$0xff] %v1027
      %1100 = vst [vmem:[%s175 + $0x1d8] sm:$0xff] %v1029
      %1101 = vst [vmem:[%s175 + $0x1e0] sm:$0xff] %v1032
      %1102 = vst [vmem:[%s175 + $0x1e8] sm:$0xff] %v1034
      %1103 = vst [vmem:[%s175 + $0x1f0] sm:$0xff] %v1037
      %1104 = vst [vmem:[%s175 + $0x1f8] sm:$0xff] %v1039
      %s1105 = smul.u32 64, %s14
      %p1106 = scmp.lt.s32.totalorder %s1105, 127
      %s1107 = scalar_select %p1106, %s1105, 127
      %s1108 = smul.addr %s1107, 8
      %s1109 = scalar_lea.vmem %s3, %s1108
      // Predicated region
      $region33: #{_lambda_.18} parent=31 // pred_check
        %p1110 = pneg %p100
      $region34: #{_lambda_.18} parent=31 // pred_check_branch
        %1112 = sbr.rel (%p1110) target = $region36
      $region35: #{_lambda_.18} parent=31 // pred_region
        %s1113 = smul.u32 64, %s14
      $region36: #{_lambda_.18} parent=31 // pred_fallthru
        _
    $region32: #{_lambda_.18} parent=5 // pred_fallthru
      _
    %p1114 = scmp.le.s32.totalorder 2, %s9
    // Predicated region
    $region37: #{_lambda_.18} parent=5 // pred_check
      %p1115 = pneg %p1114
    $region38: #{_lambda_.18} parent=5 // pred_check_branch
      %1117 = sbr.rel (%p1115) target = $region40
    $region39: #{_lambda_.18} parent=5 // pred_region
      %s1118 = ssub.s32 %s9, 2
      // Predicated region
      $region41: #{_lambda_.18} parent=39 // pred_check
        %p1119 = pneg %p106
      $region42: #{_lambda_.18} parent=39 // pred_check_branch
        %1121 = sbr.rel (%p1119) target = $region44
      $region43: #{_lambda_.18} parent=39 // pred_region
        %s1122 = smul.u32 64, %s15
        %p1123 = scmp.lt.s32.totalorder %s1122, 127
        %s1124 = scalar_select %p1123, %s1122, 127
        %s1125 = smul.addr %s1124, 8
        %s1126 = scalar_lea.vmem %s3, %s1125
      $region44: #{_lambda_.18} parent=39 // pred_fallthru
        _
    $region40: #{_lambda_.18} parent=5 // pred_fallthru
      _
  $region6: #{_lambda_.18} parent=0 // loop_footer
    %s13 = sadd.s32 1, %s9
  $region7: #{_lambda_.18} parent=0 // loop_footer_branch
    %8 = sbr.rel target = $region3
  $region8: #{_lambda_.18} parent=0 // loop_exit
    _

// kernel: _lambda_.19
$region0: #{_lambda_.19}
  #allocation0 [shape = 'u32[]', space=smem, size = 0x4, offset = 0x4, fixed_abs, tag = 'smem constant byte address 0x4 - core index']
  #allocation1 [shape = 'u32[72,128]{1,0:T(1,128)}', space=vmem, size = 0x9000, scoped, tag = 'internal scratch']
  %s0 = inlined_call_operand.vmem [shape: bf16[512,144], index: 0, kind: input, shape index: {}]
  %s1 = inlined_call_operand.vmem [shape: bf16[144,128], index: 1, kind: input, shape index: {}]
  %s2 = inlined_call_operand.vmem [shape: f32[1,128], index: 2, kind: input, shape index: {}]
  %s3 = inlined_call_operand.vmem [shape: f32[512,128], index: 3, kind: output, shape index: {}]
  %s4 = sld [smem:[#allocation0]]
  $region22: #{_lambda_.19} parent=0
    _
  %s6 = ssub.s32 1, %s4
  %s7 = scalar_select 0, %s6, %s4
  // Predicated region
  $region2: #{_lambda_.19} parent=0 // pred_check
    _
  $region3: #{_lambda_.19} parent=0 // pred_check_branch
    %9 = sbr.rel (0) target = $region5
  $region4: #{_lambda_.19} parent=0 // pred_region
    _
  $region5: #{_lambda_.19} parent=0 // pred_fallthru
    _
  // Predicated region
  $region6: #{_lambda_.19} parent=0 // pred_check
    _
  $region7: #{_lambda_.19} parent=0 // pred_check_branch
    %11 = sbr.rel (0) target = $region9
  $region8: #{_lambda_.19} parent=0 // pred_region
    _
  $region9: #{_lambda_.19} parent=0 // pred_fallthru
    _
  // Predicated region
  $region10: #{_lambda_.19} parent=0 // pred_check
    _
  $region11: #{_lambda_.19} parent=0 // pred_check_branch
    %13 = sbr.rel (0) target = $region13
  $region12: #{_lambda_.19} parent=0 // pred_region
    _
  $region13: #{_lambda_.19} parent=0 // pred_fallthru
    _
  %v15 = vld [vmem:[%s0] sm:$0xff]
  %v16 = vld [vmem:[%s0 + $0x8] sm:$0xff]
  %v17 = vld [vmem:[%s0 + $0x10] sm:$0xff]
  %v18 = vld [vmem:[%s0 + $0x18] sm:$0xff]
  %v19 = vld [vmem:[%s0 + $0x20] sm:$0xff]
  %v20 = vld [vmem:[%s0 + $0x28] sm:$0xff]
  %v21 = vld [vmem:[%s0 + $0x30] sm:$0xff]
  %v22 = vld [vmem:[%s0 + $0x38] sm:$0xff]
  %v23 = vld [vmem:[%s0 + $0x40] sm:$0xff]
  %v24 = vld [vmem:[%s0 + $0x48] sm:$0xff]
  %v25 = vld [vmem:[%s0 + $0x50] sm:$0xff]
  %v26 = vld [vmem:[%s0 + $0x58] sm:$0xff]
  %v27 = vld [vmem:[%s0 + $0x60] sm:$0xff]
  %v28 = vld [vmem:[%s0 + $0x68] sm:$0xff]
  %v29 = vld [vmem:[%s0 + $0x70] sm:$0xff]
  %v30 = vld [vmem:[%s0 + $0x78] sm:$0xff]
  %v31 = vld [vmem:[%s0 + $0x80] sm:$0xff]
  %v32 = vld [vmem:[%s0 + $0x88] sm:$0xff]
  %v33 = vld [vmem:[%s0 + $0x90] sm:$0xff]
  %v34 = vld [vmem:[%s0 + $0x98] sm:$0xff]
  %v35 = vld [vmem:[%s0 + $0xa0] sm:$0xff]
  %v36 = vld [vmem:[%s0 + $0xa8] sm:$0xff]
  %v37 = vld [vmem:[%s0 + $0xb0] sm:$0xff]
  %v38 = vld [vmem:[%s0 + $0xb8] sm:$0xff]
  %v39 = vld [vmem:[%s0 + $0xc0] sm:$0xff]
  %v40 = vld [vmem:[%s0 + $0xc8] sm:$0xff]
  %v41 = vld [vmem:[%s0 + $0xd0] sm:$0xff]
  %v42 = vld [vmem:[%s0 + $0xd8] sm:$0xff]
  %v43 = vld [vmem:[%s0 + $0xe0] sm:$0xff]
  %v44 = vld [vmem:[%s0 + $0xe8] sm:$0xff]
  %v45 = vld [vmem:[%s0 + $0xf0] sm:$0xff]
  %v46 = vld [vmem:[%s0 + $0xf8] sm:$0xff]
  %v47 = vld [vmem:[%s0 + $0x100] sm:$0xff]
  %v48 = vld [vmem:[%s0 + $0x108] sm:$0xff]
  %v49 = vld [vmem:[%s0 + $0x110] sm:$0xff]
  %v50 = vld [vmem:[%s0 + $0x118] sm:$0xff]
  %v51 = vld [vmem:[%s0 + $0x120] sm:$0xff]
  %v52 = vld [vmem:[%s0 + $0x128] sm:$0xff]
  %v53 = vld [vmem:[%s0 + $0x130] sm:$0xff]
  %v54 = vld [vmem:[%s0 + $0x138] sm:$0xff]
  %v55 = vld [vmem:[%s0 + $0x140] sm:$0xff]
  %v56 = vld [vmem:[%s0 + $0x148] sm:$0xff]
  %v57 = vld [vmem:[%s0 + $0x150] sm:$0xff]
  %v58 = vld [vmem:[%s0 + $0x158] sm:$0xff]
  %v59 = vld [vmem:[%s0 + $0x160] sm:$0xff]
  %v60 = vld [vmem:[%s0 + $0x168] sm:$0xff]
  %v61 = vld [vmem:[%s0 + $0x170] sm:$0xff]
  %v62 = vld [vmem:[%s0 + $0x178] sm:$0xff]
  %v63 = vld [vmem:[%s0 + $0x180] sm:$0xff]
  %v64 = vld [vmem:[%s0 + $0x188] sm:$0xff]
  %v65 = vld [vmem:[%s0 + $0x190] sm:$0xff]
  %v66 = vld [vmem:[%s0 + $0x198] sm:$0xff]
  %v67 = vld [vmem:[%s0 + $0x1a0] sm:$0xff]
  %v68 = vld [vmem:[%s0 + $0x1a8] sm:$0xff]
  %v69 = vld [vmem:[%s0 + $0x1b0] sm:$0xff]
  %v70 = vld [vmem:[%s0 + $0x1b8] sm:$0xff]
  %v71 = vld [vmem:[%s0 + $0x1c0] sm:$0xff]
  %v72 = vld [vmem:[%s0 + $0x1c8] sm:$0xff]
  %v73 = vld [vmem:[%s0 + $0x1d0] sm:$0xff]
  %v74 = vld [vmem:[%s0 + $0x1d8] sm:$0xff]
  %v75 = vld [vmem:[%s0 + $0x1e0] sm:$0xff]
  %v76 = vld [vmem:[%s0 + $0x1e8] sm:$0xff]
  %v77 = vld [vmem:[%s0 + $0x1f0] sm:$0xff]
  %v78 = vld [vmem:[%s0 + $0x1f8] sm:$0xff]
  %v79 = vld [vmem:[%s1] sm:$0xf]
  %v80 = vld [vmem:[%s1 + $0x4] sm:$0xf]
  %v81 = vld [vmem:[%s1 + $0x8] sm:$0xf]
  %v82 = vld [vmem:[%s1 + $0xc] sm:$0xf]
  %v83 = vld [vmem:[%s1 + $0x10] sm:$0xf]
  %v84 = vld [vmem:[%s1 + $0x14] sm:$0xf]
  %v85 = vld [vmem:[%s1 + $0x18] sm:$0xf]
  %v86 = vld [vmem:[%s1 + $0x1c] sm:$0xf]
  %v87 = vld [vmem:[%s1 + $0x20] sm:$0xf]
  %v88 = vld [vmem:[%s1 + $0x24] sm:$0xf]
  %v89 = vld [vmem:[%s1 + $0x28] sm:$0xf]
  %v90 = vld [vmem:[%s1 + $0x2c] sm:$0xf]
  %v91 = vld [vmem:[%s1 + $0x30] sm:$0xf]
  %v92 = vld [vmem:[%s1 + $0x34] sm:$0xf]
  %v93 = vld [vmem:[%s1 + $0x38] sm:$0xf]
  %v94 = vld [vmem:[%s1 + $0x3c] sm:$0xf]
  %v95 = vld [vmem:[%s1 + $0x40] sm:$0xf]
  %v96 = vld [vmem:[%s1 + $0x44] sm:$0xf]
  %v97 = vld [vmem:[%s2] sm:$0x1]
  %v99 = vperm.slane %v97, 0
  %v165 = vunpack.c.l.b16 %v15
  %v166 = vunpack.c.h.b16 %v15
  %v167 = vunpack.c.l.b16 %v16
  %v168 = vunpack.c.h.b16 %v16
  %v169 = vunpack.c.l.b16 %v17
  %v170 = vunpack.c.h.b16 %v17
  %v171 = vunpack.c.l.b16 %v18
  %v172 = vunpack.c.h.b16 %v18
  %v173 = vunpack.c.l.b16 %v19
  %v174 = vunpack.c.h.b16 %v19
  %v175 = vunpack.c.l.b16 %v20
  %v176 = vunpack.c.h.b16 %v20
  %v177 = vunpack.c.l.b16 %v21
  %v178 = vunpack.c.h.b16 %v21
  %v179 = vunpack.c.l.b16 %v22
  %v180 = vunpack.c.h.b16 %v22
  %v181 = vunpack.c.l.b16 %v23
  %v182 = vunpack.c.h.b16 %v23
  %v183 = vunpack.c.l.b16 %v24
  %v184 = vunpack.c.h.b16 %v24
  %v185 = vunpack.c.l.b16 %v25
  %v186 = vunpack.c.h.b16 %v25
  %v187 = vunpack.c.l.b16 %v26
  %v188 = vunpack.c.h.b16 %v26
  %v189 = vunpack.c.l.b16 %v27
  %v190 = vunpack.c.h.b16 %v27
  %v191 = vunpack.c.l.b16 %v28
  %v192 = vunpack.c.h.b16 %v28
  %v193 = vunpack.c.l.b16 %v29
  %v194 = vunpack.c.h.b16 %v29
  %v195 = vunpack.c.l.b16 %v30
  %v196 = vunpack.c.h.b16 %v30
  %v197 = vunpack.c.l.b16 %v31
  %v198 = vunpack.c.h.b16 %v31
  %v199 = vunpack.c.l.b16 %v32
  %v200 = vunpack.c.h.b16 %v32
  %v201 = vunpack.c.l.b16 %v33
  %v202 = vunpack.c.h.b16 %v33
  %v203 = vunpack.c.l.b16 %v34
  %v204 = vunpack.c.h.b16 %v34
  %v205 = vunpack.c.l.b16 %v35
  %v206 = vunpack.c.h.b16 %v35
  %v207 = vunpack.c.l.b16 %v36
  %v208 = vunpack.c.h.b16 %v36
  %v209 = vunpack.c.l.b16 %v37
  %v210 = vunpack.c.h.b16 %v37
  %v211 = vunpack.c.l.b16 %v38
  %v212 = vunpack.c.h.b16 %v38
  %v213 = vunpack.c.l.b16 %v39
  %v214 = vunpack.c.h.b16 %v39
  %v215 = vunpack.c.l.b16 %v40
  %v216 = vunpack.c.h.b16 %v40
  %v217 = vunpack.c.l.b16 %v41
  %v218 = vunpack.c.h.b16 %v41
  %v219 = vunpack.c.l.b16 %v42
  %v220 = vunpack.c.h.b16 %v42
  %v221 = vunpack.c.l.b16 %v43
  %v222 = vunpack.c.h.b16 %v43
  %v223 = vunpack.c.l.b16 %v44
  %v224 = vunpack.c.h.b16 %v44
  %v225 = vunpack.c.l.b16 %v45
  %v226 = vunpack.c.h.b16 %v45
  %v227 = vunpack.c.l.b16 %v46
  %v228 = vunpack.c.h.b16 %v46
  %v229 = vunpack.c.l.b16 %v47
  %v230 = vunpack.c.h.b16 %v47
  %v231 = vunpack.c.l.b16 %v48
  %v232 = vunpack.c.h.b16 %v48
  %v233 = vunpack.c.l.b16 %v49
  %v234 = vunpack.c.h.b16 %v49
  %v235 = vunpack.c.l.b16 %v50
  %v236 = vunpack.c.h.b16 %v50
  %v237 = vunpack.c.l.b16 %v51
  %v238 = vunpack.c.h.b16 %v51
  %v239 = vunpack.c.l.b16 %v52
  %v240 = vunpack.c.h.b16 %v52
  %v241 = vunpack.c.l.b16 %v53
  %v242 = vunpack.c.h.b16 %v53
  %v243 = vunpack.c.l.b16 %v54
  %v244 = vunpack.c.h.b16 %v54
  %v245 = vunpack.c.l.b16 %v55
  %v246 = vunpack.c.h.b16 %v55
  %v247 = vunpack.c.l.b16 %v56
  %v248 = vunpack.c.h.b16 %v56
  %v249 = vunpack.c.l.b16 %v57
  %v250 = vunpack.c.h.b16 %v57
  %v251 = vunpack.c.l.b16 %v58
  %v252 = vunpack.c.h.b16 %v58
  %v253 = vunpack.c.l.b16 %v59
  %v254 = vunpack.c.h.b16 %v59
  %v255 = vunpack.c.l.b16 %v60
  %v256 = vunpack.c.h.b16 %v60
  %v257 = vunpack.c.l.b16 %v61
  %v258 = vunpack.c.h.b16 %v61
  %v259 = vunpack.c.l.b16 %v62
  %v260 = vunpack.c.h.b16 %v62
  %v261 = vunpack.c.l.b16 %v63
  %v262 = vunpack.c.h.b16 %v63
  %v263 = vunpack.c.l.b16 %v64
  %v264 = vunpack.c.h.b16 %v64
  %v265 = vunpack.c.l.b16 %v65
  %v266 = vunpack.c.h.b16 %v65
  %v267 = vunpack.c.l.b16 %v66
  %v268 = vunpack.c.h.b16 %v66
  %v269 = vunpack.c.l.b16 %v67
  %v270 = vunpack.c.h.b16 %v67
  %v271 = vunpack.c.l.b16 %v68
  %v272 = vunpack.c.h.b16 %v68
  %v273 = vunpack.c.l.b16 %v69
  %v274 = vunpack.c.h.b16 %v69
  %v275 = vunpack.c.l.b16 %v70
  %v276 = vunpack.c.h.b16 %v70
  %v277 = vunpack.c.l.b16 %v71
  %v278 = vunpack.c.h.b16 %v71
  %v279 = vunpack.c.l.b16 %v72
  %v280 = vunpack.c.h.b16 %v72
  %v281 = vunpack.c.l.b16 %v73
  %v282 = vunpack.c.h.b16 %v73
  %v283 = vunpack.c.l.b16 %v74
  %v284 = vunpack.c.h.b16 %v74
  %v285 = vunpack.c.l.b16 %v75
  %v286 = vunpack.c.h.b16 %v75
  %v287 = vunpack.c.l.b16 %v76
  %v288 = vunpack.c.h.b16 %v76
  %v289 = vunpack.c.l.b16 %v77
  %v290 = vunpack.c.h.b16 %v77
  %v291 = vunpack.c.l.b16 %v78
  %v292 = vunpack.c.h.b16 %v78
  %v293 = vpack.c.b16 %v167, %v165
  %v294 = vpack.c.b16 %v168, %v166
  %v295 = vpack.c.b16 %v171, %v169
  %v296 = vpack.c.b16 %v172, %v170
  %v297 = vpack.c.b16 %v175, %v173
  %v298 = vpack.c.b16 %v176, %v174
  %v299 = vpack.c.b16 %v179, %v177
  %v300 = vpack.c.b16 %v180, %v178
  %v301 = vpack.c.b16 %v183, %v181
  %v302 = vpack.c.b16 %v184, %v182
  %v303 = vpack.c.b16 %v187, %v185
  %v304 = vpack.c.b16 %v188, %v186
  %v305 = vpack.c.b16 %v191, %v189
  %v306 = vpack.c.b16 %v192, %v190
  %v307 = vpack.c.b16 %v195, %v193
  %v308 = vpack.c.b16 %v196, %v194
  %v309 = vpack.c.b16 %v199, %v197
  %v310 = vpack.c.b16 %v200, %v198
  %v311 = vpack.c.b16 %v203, %v201
  %v312 = vpack.c.b16 %v204, %v202
  %v313 = vpack.c.b16 %v207, %v205
  %v314 = vpack.c.b16 %v208, %v206
  %v315 = vpack.c.b16 %v211, %v209
  %v316 = vpack.c.b16 %v212, %v210
  %v317 = vpack.c.b16 %v215, %v213
  %v318 = vpack.c.b16 %v216, %v214
  %v319 = vpack.c.b16 %v219, %v217
  %v320 = vpack.c.b16 %v220, %v218
  %v321 = vpack.c.b16 %v223, %v221
  %v322 = vpack.c.b16 %v224, %v222
  %v323 = vpack.c.b16 %v227, %v225
  %v324 = vpack.c.b16 %v228, %v226
  %v325 = vpack.c.b16 %v231, %v229
  %v326 = vpack.c.b16 %v232, %v230
  %v327 = vpack.c.b16 %v235, %v233
  %v328 = vpack.c.b16 %v236, %v234
  %v329 = vpack.c.b16 %v239, %v237
  %v330 = vpack.c.b16 %v240, %v238
  %v331 = vpack.c.b16 %v243, %v241
  %v332 = vpack.c.b16 %v244, %v242
  %v333 = vpack.c.b16 %v247, %v245
  %v334 = vpack.c.b16 %v248, %v246
  %v335 = vpack.c.b16 %v251, %v249
  %v336 = vpack.c.b16 %v252, %v250
  %v337 = vpack.c.b16 %v255, %v253
  %v338 = vpack.c.b16 %v256, %v254
  %v339 = vpack.c.b16 %v259, %v257
  %v340 = vpack.c.b16 %v260, %v258
  %v341 = vpack.c.b16 %v263, %v261
  %v342 = vpack.c.b16 %v264, %v262
  %v343 = vpack.c.b16 %v267, %v265
  %v344 = vpack.c.b16 %v268, %v266
  %v345 = vpack.c.b16 %v271, %v269
  %v346 = vpack.c.b16 %v272, %v270
  %v347 = vpack.c.b16 %v275, %v273
  %v348 = vpack.c.b16 %v276, %v274
  %v349 = vpack.c.b16 %v279, %v277
  %v350 = vpack.c.b16 %v280, %v278
  %v351 = vpack.c.b16 %v283, %v281
  %v352 = vpack.c.b16 %v284, %v282
  %v353 = vpack.c.b16 %v287, %v285
  %v354 = vpack.c.b16 %v288, %v286
  %v355 = vpack.c.b16 %v291, %v289
  %v356 = vpack.c.b16 %v292, %v290
  %v407 = vunpack.c.l.b16 %v79
  %v408 = vunpack.c.l.b16 %v80
  %v409 = vunpack.c.l.b16 %v81
  %v410 = vunpack.c.l.b16 %v82
  %v411 = vunpack.c.l.b16 %v83
  %v412 = vunpack.c.l.b16 %v84
  %v413 = vunpack.c.l.b16 %v85
  %v414 = vunpack.c.l.b16 %v86
  %v415 = vunpack.c.l.b16 %v87
  %v416 = vunpack.c.l.b16 %v88
  %v417 = vunpack.c.l.b16 %v89
  %v418 = vunpack.c.l.b16 %v90
  %v419 = vunpack.c.l.b16 %v91
  %v420 = vunpack.c.l.b16 %v92
  %v421 = vunpack.c.l.b16 %v93
  %v422 = vunpack.c.l.b16 %v94
  %v423 = vunpack.c.l.b16 %v95
  %v424 = vunpack.c.l.b16 %v96
  %v425 = vpack.c.b16 %v408, %v407
  %v426 = vpack.c.b16 %v410, %v409
  %v427 = vpack.c.b16 %v412, %v411
  %v428 = vpack.c.b16 %v414, %v413
  %v429 = vpack.c.b16 %v416, %v415
  %v430 = vpack.c.b16 %v418, %v417
  %v431 = vpack.c.b16 %v420, %v419
  %v432 = vpack.c.b16 %v422, %v421
  %v433 = vpack.c.b16 %v424, %v423
  %vm443 = vcmask 130048
  %v445 = vsel %vm443, %v294, 0
  %v448 = vsel %vm443, %v296, 0
  %v451 = vsel %vm443, %v298, 0
  %v454 = vsel %vm443, %v300, 0
  %v457 = vsel %vm443, %v302, 0
  %v460 = vsel %vm443, %v304, 0
  %v463 = vsel %vm443, %v306, 0
  %v466 = vsel %vm443, %v308, 0
  %v469 = vsel %vm443, %v310, 0
  %v472 = vsel %vm443, %v312, 0
  %v475 = vsel %vm443, %v314, 0
  %v478 = vsel %vm443, %v316, 0
  %v481 = vsel %vm443, %v318, 0
  %v484 = vsel %vm443, %v320, 0
  %v487 = vsel %vm443, %v322, 0
  %v490 = vsel %vm443, %v324, 0
  %v493 = vsel %vm443, %v326, 0
  %v496 = vsel %vm443, %v328, 0
  %v499 = vsel %vm443, %v330, 0
  %v502 = vsel %vm443, %v332, 0
  %v505 = vsel %vm443, %v334, 0
  %v508 = vsel %vm443, %v336, 0
  %v511 = vsel %vm443, %v338, 0
  %v514 = vsel %vm443, %v340, 0
  %v517 = vsel %vm443, %v342, 0
  %v520 = vsel %vm443, %v344, 0
  %v523 = vsel %vm443, %v346, 0
  %v526 = vsel %vm443, %v348, 0
  %v529 = vsel %vm443, %v350, 0
  %v532 = vsel %vm443, %v352, 0
  %v535 = vsel %vm443, %v354, 0
  %v538 = vsel %vm443, %v356, 0
  %540 = vmatpush.bf16.msra.mxu0 %v432
  %541 = vmatpush.bf16.msra.mxu0 %v431
  %542 = vmatpush.bf16.msra.mxu0 %v430
  %543 = vmatpush.bf16.msra.mxu0 %v429
  %544 = vmatpush.bf16.msra.mxu0 %v428
  %545 = vmatpush.bf16.msra.mxu0 %v427
  %546 = vmatpush.bf16.msra.mxu0 %v426
  %547 = vmatpush.bf16.msra.mxu0 %v425
  %548 = vmatmul.bf16.gmra.mxu0 %v293
  %v549 = vpop.f32.mrf.mxu0
  %v550 = vadd.f32 %v99, %v549
  %v551 = vpop.f32.mrf.mxu0
  %v552 = vadd.f32 %v99, %v551
  %553 = vmatmul.bf16.gmra.mxu0 %v295
  %v554 = vpop.f32.mrf.mxu0
  %v555 = vadd.f32 %v99, %v554
  %v556 = vpop.f32.mrf.mxu0
  %v557 = vadd.f32 %v99, %v556
  %558 = vmatmul.bf16.gmra.mxu0 %v297
  %v559 = vpop.f32.mrf.mxu0
  %v560 = vadd.f32 %v99, %v559
  %v561 = vpop.f32.mrf.mxu0
  %v562 = vadd.f32 %v99, %v561
  %563 = vmatmul.bf16.gmra.mxu0 %v299
  %v564 = vpop.f32.mrf.mxu0
  %v565 = vadd.f32 %v99, %v564
  %v566 = vpop.f32.mrf.mxu0
  %v567 = vadd.f32 %v99, %v566
  %568 = vmatmul.bf16.gmra.mxu0 %v301
  %v569 = vpop.f32.mrf.mxu0
  %v570 = vadd.f32 %v99, %v569
  %v571 = vpop.f32.mrf.mxu0
  %v572 = vadd.f32 %v99, %v571
  %573 = vmatmul.bf16.gmra.mxu0 %v303
  %v574 = vpop.f32.mrf.mxu0
  %v575 = vadd.f32 %v99, %v574
  %v576 = vpop.f32.mrf.mxu0
  %v577 = vadd.f32 %v99, %v576
  %578 = vmatmul.bf16.gmra.mxu0 %v305
  %v579 = vpop.f32.mrf.mxu0
  %v580 = vadd.f32 %v99, %v579
  %v581 = vpop.f32.mrf.mxu0
  %v582 = vadd.f32 %v99, %v581
  %583 = vmatmul.bf16.gmra.mxu0 %v307
  %v584 = vpop.f32.mrf.mxu0
  %v585 = vadd.f32 %v99, %v584
  %v586 = vpop.f32.mrf.mxu0
  %v587 = vadd.f32 %v99, %v586
  %588 = vmatmul.bf16.gmra.mxu0 %v309
  %v589 = vpop.f32.mrf.mxu0
  %v590 = vadd.f32 %v99, %v589
  %v591 = vpop.f32.mrf.mxu0
  %v592 = vadd.f32 %v99, %v591
  %593 = vmatmul.bf16.gmra.mxu0 %v311
  %v594 = vpop.f32.mrf.mxu0
  %v595 = vadd.f32 %v99, %v594
  %v596 = vpop.f32.mrf.mxu0
  %v597 = vadd.f32 %v99, %v596
  %598 = vmatmul.bf16.gmra.mxu0 %v313
  %v599 = vpop.f32.mrf.mxu0
  %v600 = vadd.f32 %v99, %v599
  %v601 = vpop.f32.mrf.mxu0
  %v602 = vadd.f32 %v99, %v601
  %603 = vmatmul.bf16.gmra.mxu0 %v315
  %v604 = vpop.f32.mrf.mxu0
  %v605 = vadd.f32 %v99, %v604
  %v606 = vpop.f32.mrf.mxu0
  %v607 = vadd.f32 %v99, %v606
  %608 = vmatmul.bf16.gmra.mxu0 %v317
  %v609 = vpop.f32.mrf.mxu0
  %v610 = vadd.f32 %v99, %v609
  %v611 = vpop.f32.mrf.mxu0
  %v612 = vadd.f32 %v99, %v611
  %613 = vmatmul.bf16.gmra.mxu0 %v319
  %v614 = vpop.f32.mrf.mxu0
  %v615 = vadd.f32 %v99, %v614
  %v616 = vpop.f32.mrf.mxu0
  %v617 = vadd.f32 %v99, %v616
  %618 = vmatmul.bf16.gmra.mxu0 %v321
  %v619 = vpop.f32.mrf.mxu0
  %v620 = vadd.f32 %v99, %v619
  %v621 = vpop.f32.mrf.mxu0
  %v622 = vadd.f32 %v99, %v621
  %623 = vmatmul.bf16.gmra.mxu0 %v323
  %v624 = vpop.f32.mrf.mxu0
  %v625 = vadd.f32 %v99, %v624
  %v626 = vpop.f32.mrf.mxu0
  %v627 = vadd.f32 %v99, %v626
  %628 = vmatmul.bf16.gmra.mxu0 %v325
  %v629 = vpop.f32.mrf.mxu0
  %v630 = vadd.f32 %v99, %v629
  %v631 = vpop.f32.mrf.mxu0
  %v632 = vadd.f32 %v99, %v631
  %633 = vmatmul.bf16.gmra.mxu0 %v327
  %v634 = vpop.f32.mrf.mxu0
  %v635 = vadd.f32 %v99, %v634
  %v636 = vpop.f32.mrf.mxu0
  %v637 = vadd.f32 %v99, %v636
  %638 = vmatmul.bf16.gmra.mxu0 %v329
  %v639 = vpop.f32.mrf.mxu0
  %v640 = vadd.f32 %v99, %v639
  %v641 = vpop.f32.mrf.mxu0
  %v642 = vadd.f32 %v99, %v641
  %643 = vmatmul.bf16.gmra.mxu0 %v331
  %v644 = vpop.f32.mrf.mxu0
  %v645 = vadd.f32 %v99, %v644
  %v646 = vpop.f32.mrf.mxu0
  %v647 = vadd.f32 %v99, %v646
  %648 = vmatmul.bf16.gmra.mxu0 %v333
  %v649 = vpop.f32.mrf.mxu0
  %v650 = vadd.f32 %v99, %v649
  %v651 = vpop.f32.mrf.mxu0
  %v652 = vadd.f32 %v99, %v651
  %653 = vmatmul.bf16.gmra.mxu0 %v335
  %v654 = vpop.f32.mrf.mxu0
  %v655 = vadd.f32 %v99, %v654
  %v656 = vpop.f32.mrf.mxu0
  %v657 = vadd.f32 %v99, %v656
  %658 = vmatmul.bf16.gmra.mxu0 %v337
  %v659 = vpop.f32.mrf.mxu0
  %v660 = vadd.f32 %v99, %v659
  %v661 = vpop.f32.mrf.mxu0
  %v662 = vadd.f32 %v99, %v661
  %663 = vmatmul.bf16.gmra.mxu0 %v339
  %v664 = vpop.f32.mrf.mxu0
  %v665 = vadd.f32 %v99, %v664
  %v666 = vpop.f32.mrf.mxu0
  %v667 = vadd.f32 %v99, %v666
  %668 = vmatmul.bf16.gmra.mxu0 %v341
  %v669 = vpop.f32.mrf.mxu0
  %v670 = vadd.f32 %v99, %v669
  %v671 = vpop.f32.mrf.mxu0
  %v672 = vadd.f32 %v99, %v671
  %673 = vmatmul.bf16.gmra.mxu0 %v343
  %v674 = vpop.f32.mrf.mxu0
  %v675 = vadd.f32 %v99, %v674
  %v676 = vpop.f32.mrf.mxu0
  %v677 = vadd.f32 %v99, %v676
  %678 = vmatmul.bf16.gmra.mxu0 %v345
  %v679 = vpop.f32.mrf.mxu0
  %v680 = vadd.f32 %v99, %v679
  %v681 = vpop.f32.mrf.mxu0
  %v682 = vadd.f32 %v99, %v681
  %683 = vmatmul.bf16.gmra.mxu0 %v347
  %v684 = vpop.f32.mrf.mxu0
  %v685 = vadd.f32 %v99, %v684
  %v686 = vpop.f32.mrf.mxu0
  %v687 = vadd.f32 %v99, %v686
  %688 = vmatmul.bf16.gmra.mxu0 %v349
  %v689 = vpop.f32.mrf.mxu0
  %v690 = vadd.f32 %v99, %v689
  %v691 = vpop.f32.mrf.mxu0
  %v692 = vadd.f32 %v99, %v691
  %693 = vmatmul.bf16.gmra.mxu0 %v351
  %v694 = vpop.f32.mrf.mxu0
  %v695 = vadd.f32 %v99, %v694
  %v696 = vpop.f32.mrf.mxu0
  %v697 = vadd.f32 %v99, %v696
  %698 = vmatmul.bf16.gmra.mxu0 %v353
  %v699 = vpop.f32.mrf.mxu0
  %v700 = vadd.f32 %v99, %v699
  %v701 = vpop.f32.mrf.mxu0
  %v702 = vadd.f32 %v99, %v701
  %703 = vmatmul.bf16.gmra.mxu0 %v355
  %v704 = vpop.f32.mrf.mxu0
  %v705 = vadd.f32 %v99, %v704
  %v706 = vpop.f32.mrf.mxu0
  %v707 = vadd.f32 %v99, %v706
  %708 = vdwg.mxu0
  %709 = vmatpush.bf16.msra.mxu0 0
  %710 = vmatpush.bf16.msra.mxu0 0
  %711 = vmatpush.bf16.msra.mxu0 0
  %712 = vmatpush.bf16.msra.mxu0 0
  %713 = vmatpush.bf16.msra.mxu0 0
  %714 = vmatpush.bf16.msra.mxu0 0
  %715 = vmatpush.bf16.msra.mxu0 0
  %716 = vmatpush.bf16.msra.mxu0 %v433
  %717 = vmatmul.bf16.gmra.mxu0 %v445
  %v718 = vpop.f32.mrf.mxu0
  %v719 = vadd.f32 %v550, %v718
  %v720 = vpop.f32.mrf.mxu0
  %v721 = vadd.f32 %v552, %v720
  %722 = vmatmul.bf16.gmra.mxu0 %v448
  %v723 = vpop.f32.mrf.mxu0
  %v724 = vadd.f32 %v555, %v723
  %v725 = vpop.f32.mrf.mxu0
  %v726 = vadd.f32 %v557, %v725
  %727 = vmatmul.bf16.gmra.mxu0 %v451
  %v728 = vpop.f32.mrf.mxu0
  %v729 = vadd.f32 %v560, %v728
  %v730 = vpop.f32.mrf.mxu0
  %v731 = vadd.f32 %v562, %v730
  %732 = vmatmul.bf16.gmra.mxu0 %v454
  %v733 = vpop.f32.mrf.mxu0
  %v734 = vadd.f32 %v565, %v733
  %v735 = vpop.f32.mrf.mxu0
  %v736 = vadd.f32 %v567, %v735
  %737 = vmatmul.bf16.gmra.mxu0 %v457
  %v738 = vpop.f32.mrf.mxu0
  %v739 = vadd.f32 %v570, %v738
  %v740 = vpop.f32.mrf.mxu0
  %v741 = vadd.f32 %v572, %v740
  %742 = vmatmul.bf16.gmra.mxu0 %v460
  %v743 = vpop.f32.mrf.mxu0
  %v744 = vadd.f32 %v575, %v743
  %v745 = vpop.f32.mrf.mxu0
  %v746 = vadd.f32 %v577, %v745
  %747 = vmatmul.bf16.gmra.mxu0 %v463
  %v748 = vpop.f32.mrf.mxu0
  %v749 = vadd.f32 %v580, %v748
  %v750 = vpop.f32.mrf.mxu0
  %v751 = vadd.f32 %v582, %v750
  %752 = vmatmul.bf16.gmra.mxu0 %v466
  %v753 = vpop.f32.mrf.mxu0
  %v754 = vadd.f32 %v585, %v753
  %v755 = vpop.f32.mrf.mxu0
  %v756 = vadd.f32 %v587, %v755
  %757 = vmatmul.bf16.gmra.mxu0 %v469
  %v758 = vpop.f32.mrf.mxu0
  %v759 = vadd.f32 %v590, %v758
  %v760 = vpop.f32.mrf.mxu0
  %v761 = vadd.f32 %v592, %v760
  %762 = vmatmul.bf16.gmra.mxu0 %v472
  %v763 = vpop.f32.mrf.mxu0
  %v764 = vadd.f32 %v595, %v763
  %v765 = vpop.f32.mrf.mxu0
  %v766 = vadd.f32 %v597, %v765
  %767 = vmatmul.bf16.gmra.mxu0 %v475
  %v768 = vpop.f32.mrf.mxu0
  %v769 = vadd.f32 %v600, %v768
  %v770 = vpop.f32.mrf.mxu0
  %v771 = vadd.f32 %v602, %v770
  %772 = vmatmul.bf16.gmra.mxu0 %v478
  %v773 = vpop.f32.mrf.mxu0
  %v774 = vadd.f32 %v605, %v773
  %v775 = vpop.f32.mrf.mxu0
  %v776 = vadd.f32 %v607, %v775
  %777 = vmatmul.bf16.gmra.mxu0 %v481
  %v778 = vpop.f32.mrf.mxu0
  %v779 = vadd.f32 %v610, %v778
  %v780 = vpop.f32.mrf.mxu0
  %v781 = vadd.f32 %v612, %v780
  %782 = vmatmul.bf16.gmra.mxu0 %v484
  %v783 = vpop.f32.mrf.mxu0
  %v784 = vadd.f32 %v615, %v783
  %v785 = vpop.f32.mrf.mxu0
  %v786 = vadd.f32 %v617, %v785
  %787 = vmatmul.bf16.gmra.mxu0 %v487
  %v788 = vpop.f32.mrf.mxu0
  %v789 = vadd.f32 %v620, %v788
  %v790 = vpop.f32.mrf.mxu0
  %v791 = vadd.f32 %v622, %v790
  %792 = vmatmul.bf16.gmra.mxu0 %v490
  %v793 = vpop.f32.mrf.mxu0
  %v794 = vadd.f32 %v625, %v793
  %v795 = vpop.f32.mrf.mxu0
  %v796 = vadd.f32 %v627, %v795
  %797 = vmatmul.bf16.gmra.mxu0 %v493
  %v798 = vpop.f32.mrf.mxu0
  %v799 = vadd.f32 %v630, %v798
  %v800 = vpop.f32.mrf.mxu0
  %v801 = vadd.f32 %v632, %v800
  %802 = vmatmul.bf16.gmra.mxu0 %v496
  %v803 = vpop.f32.mrf.mxu0
  %v804 = vadd.f32 %v635, %v803
  %v805 = vpop.f32.mrf.mxu0
  %v806 = vadd.f32 %v637, %v805
  %807 = vmatmul.bf16.gmra.mxu0 %v499
  %v808 = vpop.f32.mrf.mxu0
  %v809 = vadd.f32 %v640, %v808
  %v810 = vpop.f32.mrf.mxu0
  %v811 = vadd.f32 %v642, %v810
  %812 = vmatmul.bf16.gmra.mxu0 %v502
  %v813 = vpop.f32.mrf.mxu0
  %v814 = vadd.f32 %v645, %v813
  %v815 = vpop.f32.mrf.mxu0
  %v816 = vadd.f32 %v647, %v815
  %817 = vmatmul.bf16.gmra.mxu0 %v505
  %v818 = vpop.f32.mrf.mxu0
  %v819 = vadd.f32 %v650, %v818
  %v820 = vpop.f32.mrf.mxu0
  %v821 = vadd.f32 %v652, %v820
  %822 = vmatmul.bf16.gmra.mxu0 %v508
  %v823 = vpop.f32.mrf.mxu0
  %v824 = vadd.f32 %v655, %v823
  %v825 = vpop.f32.mrf.mxu0
  %v826 = vadd.f32 %v657, %v825
  %827 = vmatmul.bf16.gmra.mxu0 %v511
  %v828 = vpop.f32.mrf.mxu0
  %v829 = vadd.f32 %v660, %v828
  %v830 = vpop.f32.mrf.mxu0
  %v831 = vadd.f32 %v662, %v830
  %832 = vmatmul.bf16.gmra.mxu0 %v514
  %v833 = vpop.f32.mrf.mxu0
  %v834 = vadd.f32 %v665, %v833
  %v835 = vpop.f32.mrf.mxu0
  %v836 = vadd.f32 %v667, %v835
  %837 = vmatmul.bf16.gmra.mxu0 %v517
  %v838 = vpop.f32.mrf.mxu0
  %v839 = vadd.f32 %v670, %v838
  %v840 = vpop.f32.mrf.mxu0
  %v841 = vadd.f32 %v672, %v840
  %842 = vmatmul.bf16.gmra.mxu0 %v520
  %v843 = vpop.f32.mrf.mxu0
  %v844 = vadd.f32 %v675, %v843
  %v845 = vpop.f32.mrf.mxu0
  %v846 = vadd.f32 %v677, %v845
  %847 = vmatmul.bf16.gmra.mxu0 %v523
  %v848 = vpop.f32.mrf.mxu0
  %v849 = vadd.f32 %v680, %v848
  %v850 = vpop.f32.mrf.mxu0
  %v851 = vadd.f32 %v682, %v850
  %852 = vmatmul.bf16.gmra.mxu0 %v526
  %v853 = vpop.f32.mrf.mxu0
  %v854 = vadd.f32 %v685, %v853
  %v855 = vpop.f32.mrf.mxu0
  %v856 = vadd.f32 %v687, %v855
  %857 = vmatmul.bf16.gmra.mxu0 %v529
  %v858 = vpop.f32.mrf.mxu0
  %v859 = vadd.f32 %v690, %v858
  %v860 = vpop.f32.mrf.mxu0
  %v861 = vadd.f32 %v692, %v860
  %862 = vmatmul.bf16.gmra.mxu0 %v532
  %v863 = vpop.f32.mrf.mxu0
  %v864 = vadd.f32 %v695, %v863
  %v865 = vpop.f32.mrf.mxu0
  %v866 = vadd.f32 %v697, %v865
  %867 = vmatmul.bf16.gmra.mxu0 %v535
  %v868 = vpop.f32.mrf.mxu0
  %v869 = vadd.f32 %v700, %v868
  %v870 = vpop.f32.mrf.mxu0
  %v871 = vadd.f32 %v702, %v870
  %872 = vmatmul.bf16.gmra.mxu0 %v538
  %v873 = vpop.f32.mrf.mxu0
  %v874 = vadd.f32 %v705, %v873
  %v875 = vpop.f32.mrf.mxu0
  %v876 = vadd.f32 %v707, %v875
  %877 = vdwg.mxu0
  %878 = vst [vmem:[%s3] sm:$0xff] %v719
  %879 = vst [vmem:[%s3 + $0x8] sm:$0xff] %v721
  %880 = vst [vmem:[%s3 + $0x10] sm:$0xff] %v724
  %881 = vst [vmem:[%s3 + $0x18] sm:$0xff] %v726
  %882 = vst [vmem:[%s3 + $0x20] sm:$0xff] %v729
  %883 = vst [vmem:[%s3 + $0x28] sm:$0xff] %v731
  %884 = vst [vmem:[%s3 + $0x30] sm:$0xff] %v734
  %885 = vst [vmem:[%s3 + $0x38] sm:$0xff] %v736
  %886 = vst [vmem:[%s3 + $0x40] sm:$0xff] %v739
  %887 = vst [vmem:[%s3 + $0x48] sm:$0xff] %v741
  %888 = vst [vmem:[%s3 + $0x50] sm:$0xff] %v744
  %889 = vst [vmem:[%s3 + $0x58] sm:$0xff] %v746
  %890 = vst [vmem:[%s3 + $0x60] sm:$0xff] %v749
  %891 = vst [vmem:[%s3 + $0x68] sm:$0xff] %v751
  %892 = vst [vmem:[%s3 + $0x70] sm:$0xff] %v754
  %893 = vst [vmem:[%s3 + $0x78] sm:$0xff] %v756
  %894 = vst [vmem:[%s3 + $0x80] sm:$0xff] %v759
  %895 = vst [vmem:[%s3 + $0x88] sm:$0xff] %v761
  %896 = vst [vmem:[%s3 + $0x90] sm:$0xff] %v764
  %897 = vst [vmem:[%s3 + $0x98] sm:$0xff] %v766
  %898 = vst [vmem:[%s3 + $0xa0] sm:$0xff] %v769
  %899 = vst [vmem:[%s3 + $0xa8] sm:$0xff] %v771
  %900 = vst [vmem:[%s3 + $0xb0] sm:$0xff] %v774
  %901 = vst [vmem:[%s3 + $0xb8] sm:$0xff] %v776
  %902 = vst [vmem:[%s3 + $0xc0] sm:$0xff] %v779
  %903 = vst [vmem:[%s3 + $0xc8] sm:$0xff] %v781
  %904 = vst [vmem:[%s3 + $0xd0] sm:$0xff] %v784
  %905 = vst [vmem:[%s3 + $0xd8] sm:$0xff] %v786
  %906 = vst [vmem:[%s3 + $0xe0] sm:$0xff] %v789
  %907 = vst [vmem:[%s3 + $0xe8] sm:$0xff] %v791
  %908 = vst [vmem:[%s3 + $0xf0] sm:$0xff] %v794
  %909 = vst [vmem:[%s3 + $0xf8] sm:$0xff] %v796
  %910 = vst [vmem:[%s3 + $0x100] sm:$0xff] %v799
  %911 = vst [vmem:[%s3 + $0x108] sm:$0xff] %v801
  %912 = vst [vmem:[%s3 + $0x110] sm:$0xff] %v804
  %913 = vst [vmem:[%s3 + $0x118] sm:$0xff] %v806
  %914 = vst [vmem:[%s3 + $0x120] sm:$0xff] %v809
  %915 = vst [vmem:[%s3 + $0x128] sm:$0xff] %v811
  %916 = vst [vmem:[%s3 + $0x130] sm:$0xff] %v814
  %917 = vst [vmem:[%s3 + $0x138] sm:$0xff] %v816
  %918 = vst [vmem:[%s3 + $0x140] sm:$0xff] %v819
  %919 = vst [vmem:[%s3 + $0x148] sm:$0xff] %v821
  %920 = vst [vmem:[%s3 + $0x150] sm:$0xff] %v824
  %921 = vst [vmem:[%s3 + $0x158] sm:$0xff] %v826
  %922 = vst [vmem:[%s3 + $0x160] sm:$0xff] %v829
  %923 = vst [vmem:[%s3 + $0x168] sm:$0xff] %v831
  %924 = vst [vmem:[%s3 + $0x170] sm:$0xff] %v834
  %925 = vst [vmem:[%s3 + $0x178] sm:$0xff] %v836
  %926 = vst [vmem:[%s3 + $0x180] sm:$0xff] %v839
  %927 = vst [vmem:[%s3 + $0x188] sm:$0xff] %v841
  %928 = vst [vmem:[%s3 + $0x190] sm:$0xff] %v844
  %929 = vst [vmem:[%s3 + $0x198] sm:$0xff] %v846
  %930 = vst [vmem:[%s3 + $0x1a0] sm:$0xff] %v849
  %931 = vst [vmem:[%s3 + $0x1a8] sm:$0xff] %v851
  %932 = vst [vmem:[%s3 + $0x1b0] sm:$0xff] %v854
  %933 = vst [vmem:[%s3 + $0x1b8] sm:$0xff] %v856
  %934 = vst [vmem:[%s3 + $0x1c0] sm:$0xff] %v859
  %935 = vst [vmem:[%s3 + $0x1c8] sm:$0xff] %v861
  %936 = vst [vmem:[%s3 + $0x1d0] sm:$0xff] %v864
  %937 = vst [vmem:[%s3 + $0x1d8] sm:$0xff] %v866
  %938 = vst [vmem:[%s3 + $0x1e0] sm:$0xff] %v869
  %939 = vst [vmem:[%s3 + $0x1e8] sm:$0xff] %v871
  %940 = vst [vmem:[%s3 + $0x1f0] sm:$0xff] %v874
  %941 = vst [vmem:[%s3 + $0x1f8] sm:$0xff] %v876
  // Predicated region
  $region14: #{_lambda_.19} parent=0 // pred_check
    _
  $region15: #{_lambda_.19} parent=0 // pred_check_branch
    %943 = sbr.rel (0) target = $region17
  $region16: #{_lambda_.19} parent=0 // pred_region
    _
  $region17: #{_lambda_.19} parent=0 // pred_fallthru
    _
  // Predicated region
  $region18: #{_lambda_.19} parent=0 // pred_check
    _
  $region19: #{_lambda_.19} parent=0 // pred_check_branch
    %945 = sbr.rel (0) target = $region21
  $region20: #{_lambda_.19} parent=0 // pred_region
    _
  $region21: #{_lambda_.19} parent=0 // pred_fallthru
    _

// kernel: _lambda_.20
$region0: #{_lambda_.20}
  #allocation0 [shape = 'u32[]', space=smem, size = 0x4, offset = 0x4, fixed_abs, tag = 'smem constant byte address 0x4 - core index']
  #allocation1 [shape = 'u32[72,128]{1,0:T(1,128)}', space=vmem, size = 0x9000, scoped, tag = 'internal scratch']
  %s0 = inlined_call_operand.vmem [shape: bf16[128,64], index: 0, kind: input, shape index: {}]
  %s1 = inlined_call_operand.vmem [shape: bf16[64,128], index: 1, kind: input, shape index: {}]
  %s2 = inlined_call_operand.vmem [shape: f32[1,128], index: 2, kind: input, shape index: {}]
  %s3 = inlined_call_operand.vmem [shape: f32[128,128], index: 3, kind: output, shape index: {}]
  %s4 = sld [smem:[#allocation0]]
  $region22: #{_lambda_.20} parent=0
    _
  %s6 = ssub.s32 1, %s4
  %s7 = scalar_select 0, %s6, %s4
  // Predicated region
  $region2: #{_lambda_.20} parent=0 // pred_check
    _
  $region3: #{_lambda_.20} parent=0 // pred_check_branch
    %9 = sbr.rel (0) target = $region5
  $region4: #{_lambda_.20} parent=0 // pred_region
    _
  $region5: #{_lambda_.20} parent=0 // pred_fallthru
    _
  // Predicated region
  $region6: #{_lambda_.20} parent=0 // pred_check
    _
  $region7: #{_lambda_.20} parent=0 // pred_check_branch
    %11 = sbr.rel (0) target = $region9
  $region8: #{_lambda_.20} parent=0 // pred_region
    _
  $region9: #{_lambda_.20} parent=0 // pred_fallthru
    _
  // Predicated region
  $region10: #{_lambda_.20} parent=0 // pred_check
    _
  $region11: #{_lambda_.20} parent=0 // pred_check_branch
    %13 = sbr.rel (0) target = $region13
  $region12: #{_lambda_.20} parent=0 // pred_region
    _
  $region13: #{_lambda_.20} parent=0 // pred_fallthru
    _
  %v15 = vld [vmem:[%s0] sm:$0xf]
  %v16 = vld [vmem:[%s0 + $0x4] sm:$0xf]
  %v17 = vld [vmem:[%s0 + $0x8] sm:$0xf]
  %v18 = vld [vmem:[%s0 + $0xc] sm:$0xf]
  %v19 = vld [vmem:[%s0 + $0x10] sm:$0xf]
  %v20 = vld [vmem:[%s0 + $0x14] sm:$0xf]
  %v21 = vld [vmem:[%s0 + $0x18] sm:$0xf]
  %v22 = vld [vmem:[%s0 + $0x1c] sm:$0xf]
  %v23 = vld [vmem:[%s0 + $0x20] sm:$0xf]
  %v24 = vld [vmem:[%s0 + $0x24] sm:$0xf]
  %v25 = vld [vmem:[%s0 + $0x28] sm:$0xf]
  %v26 = vld [vmem:[%s0 + $0x2c] sm:$0xf]
  %v27 = vld [vmem:[%s0 + $0x30] sm:$0xf]
  %v28 = vld [vmem:[%s0 + $0x34] sm:$0xf]
  %v29 = vld [vmem:[%s0 + $0x38] sm:$0xf]
  %v30 = vld [vmem:[%s0 + $0x3c] sm:$0xf]
  %v31 = vld [vmem:[%s1] sm:$0xf]
  %v32 = vld [vmem:[%s1 + $0x4] sm:$0xf]
  %v33 = vld [vmem:[%s1 + $0x8] sm:$0xf]
  %v34 = vld [vmem:[%s1 + $0xc] sm:$0xf]
  %v35 = vld [vmem:[%s1 + $0x10] sm:$0xf]
  %v36 = vld [vmem:[%s1 + $0x14] sm:$0xf]
  %v37 = vld [vmem:[%s1 + $0x18] sm:$0xf]
  %v38 = vld [vmem:[%s1 + $0x1c] sm:$0xf]
  %v39 = vld [vmem:[%s2] sm:$0x1]
  %v41 = vperm.slane %v39, 0
  %v59 = vunpack.c.l.b16 %v15
  %v60 = vunpack.c.l.b16 %v16
  %v61 = vunpack.c.l.b16 %v17
  %v62 = vunpack.c.l.b16 %v18
  %v63 = vunpack.c.l.b16 %v19
  %v64 = vunpack.c.l.b16 %v20
  %v65 = vunpack.c.l.b16 %v21
  %v66 = vunpack.c.l.b16 %v22
  %v67 = vunpack.c.l.b16 %v23
  %v68 = vunpack.c.l.b16 %v24
  %v69 = vunpack.c.l.b16 %v25
  %v70 = vunpack.c.l.b16 %v26
  %v71 = vunpack.c.l.b16 %v27
  %v72 = vunpack.c.l.b16 %v28
  %v73 = vunpack.c.l.b16 %v29
  %v74 = vunpack.c.l.b16 %v30
  %v75 = vpack.c.b16 %v60, %v59
  %v76 = vpack.c.b16 %v62, %v61
  %v77 = vpack.c.b16 %v64, %v63
  %v78 = vpack.c.b16 %v66, %v65
  %v79 = vpack.c.b16 %v68, %v67
  %v80 = vpack.c.b16 %v70, %v69
  %v81 = vpack.c.b16 %v72, %v71
  %v82 = vpack.c.b16 %v74, %v73
  %v91 = vunpack.c.l.b16 %v31
  %v92 = vunpack.c.l.b16 %v32
  %v93 = vunpack.c.l.b16 %v33
  %v94 = vunpack.c.l.b16 %v34
  %v95 = vunpack.c.l.b16 %v35
  %v96 = vunpack.c.l.b16 %v36
  %v97 = vunpack.c.l.b16 %v37
  %v98 = vunpack.c.l.b16 %v38
  %v99 = vpack.c.b16 %v92, %v91
  %v100 = vpack.c.b16 %v94, %v93
  %v101 = vpack.c.b16 %v96, %v95
  %v102 = vpack.c.b16 %v98, %v97
  %vm107 = vcmask 523264
  %v109 = vsel %vm107, %v75, 0
  %v112 = vsel %vm107, %v76, 0
  %v115 = vsel %vm107, %v77, 0
  %v118 = vsel %vm107, %v78, 0
  %v121 = vsel %vm107, %v79, 0
  %v124 = vsel %vm107, %v80, 0
  %v127 = vsel %vm107, %v81, 0
  %v130 = vsel %vm107, %v82, 0
  %132 = vmatpush.bf16.msra.mxu0 0
  %133 = vmatpush.bf16.msra.mxu0 0
  %134 = vmatpush.bf16.msra.mxu0 0
  %135 = vmatpush.bf16.msra.mxu0 0
  %136 = vmatpush.bf16.msra.mxu0 %v102
  %137 = vmatpush.bf16.msra.mxu0 %v101
  %138 = vmatpush.bf16.msra.mxu0 %v100
  %139 = vmatpush.bf16.msra.mxu0 %v99
  %140 = vmatmul.bf16.gmra.mxu0 %v109
  %v141 = vpop.f32.mrf.mxu0
  %v142 = vadd.f32 %v41, %v141
  %v143 = vpop.f32.mrf.mxu0
  %v144 = vadd.f32 %v41, %v143
  %145 = vmatmul.bf16.gmra.mxu0 %v112
  %v146 = vpop.f32.mrf.mxu0
  %v147 = vadd.f32 %v41, %v146
  %v148 = vpop.f32.mrf.mxu0
  %v149 = vadd.f32 %v41, %v148
  %150 = vmatmul.bf16.gmra.mxu0 %v115
  %v151 = vpop.f32.mrf.mxu0
  %v152 = vadd.f32 %v41, %v151
  %v153 = vpop.f32.mrf.mxu0
  %v154 = vadd.f32 %v41, %v153
  %155 = vmatmul.bf16.gmra.mxu0 %v118
  %v156 = vpop.f32.mrf.mxu0
  %v157 = vadd.f32 %v41, %v156
  %v158 = vpop.f32.mrf.mxu0
  %v159 = vadd.f32 %v41, %v158
  %160 = vmatmul.bf16.gmra.mxu0 %v121
  %v161 = vpop.f32.mrf.mxu0
  %v162 = vadd.f32 %v41, %v161
  %v163 = vpop.f32.mrf.mxu0
  %v164 = vadd.f32 %v41, %v163
  %165 = vmatmul.bf16.gmra.mxu0 %v124
  %v166 = vpop.f32.mrf.mxu0
  %v167 = vadd.f32 %v41, %v166
  %v168 = vpop.f32.mrf.mxu0
  %v169 = vadd.f32 %v41, %v168
  %170 = vmatmul.bf16.gmra.mxu0 %v127
  %v171 = vpop.f32.mrf.mxu0
  %v172 = vadd.f32 %v41, %v171
  %v173 = vpop.f32.mrf.mxu0
  %v174 = vadd.f32 %v41, %v173
  %175 = vmatmul.bf16.gmra.mxu0 %v130
  %v176 = vpop.f32.mrf.mxu0
  %v177 = vadd.f32 %v41, %v176
  %v178 = vpop.f32.mrf.mxu0
  %v179 = vadd.f32 %v41, %v178
  %180 = vdwg.mxu0
  %181 = vst [vmem:[%s3] sm:$0xff] %v142
  %182 = vst [vmem:[%s3 + $0x8] sm:$0xff] %v144
  %183 = vst [vmem:[%s3 + $0x10] sm:$0xff] %v147
  %184 = vst [vmem:[%s3 + $0x18] sm:$0xff] %v149
  %185 = vst [vmem:[%s3 + $0x20] sm:$0xff] %v152
  %186 = vst [vmem:[%s3 + $0x28] sm:$0xff] %v154
  %187 = vst [vmem:[%s3 + $0x30] sm:$0xff] %v157
  %188 = vst [vmem:[%s3 + $0x38] sm:$0xff] %v159
  %189 = vst [vmem:[%s3 + $0x40] sm:$0xff] %v162
  %190 = vst [vmem:[%s3 + $0x48] sm:$0xff] %v164
  %191 = vst [vmem:[%s3 + $0x50] sm:$0xff] %v167
  %192 = vst [vmem:[%s3 + $0x58] sm:$0xff] %v169
  %193 = vst [vmem:[%s3 + $0x60] sm:$0xff] %v172
  %194 = vst [vmem:[%s3 + $0x68] sm:$0xff] %v174
  %195 = vst [vmem:[%s3 + $0x70] sm:$0xff] %v177
  %196 = vst [vmem:[%s3 + $0x78] sm:$0xff] %v179
  // Predicated region
  $region14: #{_lambda_.20} parent=0 // pred_check
    _
  $region15: #{_lambda_.20} parent=0 // pred_check_branch
    %198 = sbr.rel (0) target = $region17
  $region16: #{_lambda_.20} parent=0 // pred_region
    _
  $region17: #{_lambda_.20} parent=0 // pred_fallthru
    _
  // Predicated region
  $region18: #{_lambda_.20} parent=0 // pred_check
    _
  $region19: #{_lambda_.20} parent=0 // pred_check_branch
    %200 = sbr.rel (0) target = $region21
  $region20: #{_lambda_.20} parent=0 // pred_region
    _
  $region21: #{_lambda_.20} parent=0 // pred_fallthru
    _

// kernel: _lambda_.21
$region0: #{_lambda_.21}
  #allocation0 [shape = 'u32[]', space=smem, size = 0x4, offset = 0x4, fixed_abs, tag = 'smem constant byte address 0x4 - core index']
  #allocation1 [shape = 'u32[72,128]{1,0:T(1,128)}', space=vmem, size = 0x9000, scoped, tag = 'internal scratch']
  %s0 = inlined_call_operand.vmem [shape: f32[128,32], index: 0, kind: input, shape index: {}]
  %s1 = inlined_call_operand.vmem [shape: f32[1,32], index: 1, kind: input, shape index: {}]
  %s2 = inlined_call_operand.vmem [shape: f32[1,32], index: 2, kind: input, shape index: {}]
  %s3 = inlined_call_operand.vmem [shape: bf16[32,128], index: 3, kind: input, shape index: {}]
  %s4 = inlined_call_operand.vmem [shape: f32[1,128], index: 4, kind: input, shape index: {}]
  %s5 = inlined_call_operand.vmem [shape: f32[128,32], index: 5, kind: output, shape index: {0}]
  %s6 = inlined_call_operand.vmem [shape: f32[128,128], index: 6, kind: output, shape index: {1}]
  %7 = xla_tuple %s5, %s6
  %s8 = sld [smem:[#allocation0]]
  $region38: #{_lambda_.21} parent=0
    _
  %s10 = ssub.s32 1, %s8
  %s11 = scalar_select 0, %s10, %s8
  // Predicated region
  $region2: #{_lambda_.21} parent=0 // pred_check
    _
  $region3: #{_lambda_.21} parent=0 // pred_check_branch
    %13 = sbr.rel (0) target = $region5
  $region4: #{_lambda_.21} parent=0 // pred_region
    _
  $region5: #{_lambda_.21} parent=0 // pred_fallthru
    _
  // Predicated region
  $region6: #{_lambda_.21} parent=0 // pred_check
    _
  $region7: #{_lambda_.21} parent=0 // pred_check_branch
    %15 = sbr.rel (0) target = $region9
  $region8: #{_lambda_.21} parent=0 // pred_region
    _
  $region9: #{_lambda_.21} parent=0 // pred_fallthru
    _
  // Predicated region
  $region10: #{_lambda_.21} parent=0 // pred_check
    _
  $region11: #{_lambda_.21} parent=0 // pred_check_branch
    %17 = sbr.rel (0) target = $region13
  $region12: #{_lambda_.21} parent=0 // pred_region
    _
  $region13: #{_lambda_.21} parent=0 // pred_fallthru
    _
  // Predicated region
  $region14: #{_lambda_.21} parent=0 // pred_check
    _
  $region15: #{_lambda_.21} parent=0 // pred_check_branch
    %19 = sbr.rel (0) target = $region17
  $region16: #{_lambda_.21} parent=0 // pred_region
    _
  $region17: #{_lambda_.21} parent=0 // pred_fallthru
    _
  // Predicated region
  $region18: #{_lambda_.21} parent=0 // pred_check
    _
  $region19: #{_lambda_.21} parent=0 // pred_check_branch
    %21 = sbr.rel (0) target = $region21
  $region20: #{_lambda_.21} parent=0 // pred_region
    _
  $region21: #{_lambda_.21} parent=0 // pred_fallthru
    _
  %v23 = vld [vmem:[%s0] sm:$0xff]
  %v24 = vld [vmem:[%s0 + $0x8] sm:$0xff]
  %v25 = vld [vmem:[%s0 + $0x10] sm:$0xff]
  %v26 = vld [vmem:[%s0 + $0x18] sm:$0xff]
  %v27 = vld [vmem:[%s0 + $0x20] sm:$0xff]
  %v28 = vld [vmem:[%s0 + $0x28] sm:$0xff]
  %v29 = vld [vmem:[%s0 + $0x30] sm:$0xff]
  %v30 = vld [vmem:[%s0 + $0x38] sm:$0xff]
  %v31 = vld [vmem:[%s0 + $0x40] sm:$0xff]
  %v32 = vld [vmem:[%s0 + $0x48] sm:$0xff]
  %v33 = vld [vmem:[%s0 + $0x50] sm:$0xff]
  %v34 = vld [vmem:[%s0 + $0x58] sm:$0xff]
  %v35 = vld [vmem:[%s0 + $0x60] sm:$0xff]
  %v36 = vld [vmem:[%s0 + $0x68] sm:$0xff]
  %v37 = vld [vmem:[%s0 + $0x70] sm:$0xff]
  %v38 = vld [vmem:[%s0 + $0x78] sm:$0xff]
  %vm39 = vcmask 261120
  %v40 = vsel %vm39, %v23, 0.0
  %41 = vadd.xlane.f32.xlu0 %v40
  %v42 = vpop.xlane.xlu0 %41
  %v43 = vsel %vm39, %v24, 0.0
  %44 = vadd.xlane.f32.xlu0 %v43
  %v45 = vpop.xlane.xlu0 %44
  %v46 = vsel %vm39, %v25, 0.0
  %47 = vadd.xlane.f32.xlu0 %v46
  %v48 = vpop.xlane.xlu0 %47
  %v49 = vsel %vm39, %v26, 0.0
  %50 = vadd.xlane.f32.xlu0 %v49
  %v51 = vpop.xlane.xlu0 %50
  %v52 = vsel %vm39, %v27, 0.0
  %53 = vadd.xlane.f32.xlu0 %v52
  %v54 = vpop.xlane.xlu0 %53
  %v55 = vsel %vm39, %v28, 0.0
  %56 = vadd.xlane.f32.xlu0 %v55
  %v57 = vpop.xlane.xlu0 %56
  %v58 = vsel %vm39, %v29, 0.0
  %59 = vadd.xlane.f32.xlu0 %v58
  %v60 = vpop.xlane.xlu0 %59
  %v61 = vsel %vm39, %v30, 0.0
  %62 = vadd.xlane.f32.xlu0 %v61
  %v63 = vpop.xlane.xlu0 %62
  %v64 = vsel %vm39, %v31, 0.0
  %65 = vadd.xlane.f32.xlu0 %v64
  %v66 = vpop.xlane.xlu0 %65
  %v67 = vsel %vm39, %v32, 0.0
  %68 = vadd.xlane.f32.xlu0 %v67
  %v69 = vpop.xlane.xlu0 %68
  %v70 = vsel %vm39, %v33, 0.0
  %71 = vadd.xlane.f32.xlu0 %v70
  %v72 = vpop.xlane.xlu0 %71
  %v73 = vsel %vm39, %v34, 0.0
  %74 = vadd.xlane.f32.xlu0 %v73
  %v75 = vpop.xlane.xlu0 %74
  %v76 = vsel %vm39, %v35, 0.0
  %77 = vadd.xlane.f32.xlu0 %v76
  %v78 = vpop.xlane.xlu0 %77
  %v79 = vsel %vm39, %v36, 0.0
  %80 = vadd.xlane.f32.xlu0 %v79
  %v81 = vpop.xlane.xlu0 %80
  %v82 = vsel %vm39, %v37, 0.0
  %83 = vadd.xlane.f32.xlu0 %v82
  %v84 = vpop.xlane.xlu0 %83
  %v85 = vsel %vm39, %v38, 0.0
  %86 = vadd.xlane.f32.xlu0 %v85
  %v87 = vpop.xlane.xlu0 %86
  %v88 = vrcp.pop 32.0
  %v89 = vmul.f32 32.0, %v88
  %v90 = vsub.f32 1.0, %v89
  %v91 = vmul.f32 %v88, %v90
  %v92 = vadd.f32 %v88, %v91
  %vm93 = vweird.f32 %v88
  %v94 = vsel %vm93, %v88, %v92
  %v95 = vmul.f32 %v42, %v94
  %v96 = vmul.f32 %v45, %v94
  %v97 = vmul.f32 %v48, %v94
  %v98 = vmul.f32 %v51, %v94
  %v99 = vmul.f32 %v54, %v94
  %v100 = vmul.f32 %v57, %v94
  %v101 = vmul.f32 %v60, %v94
  %v102 = vmul.f32 %v63, %v94
  %v103 = vmul.f32 %v66, %v94
  %v104 = vmul.f32 %v69, %v94
  %v105 = vmul.f32 %v72, %v94
  %v106 = vmul.f32 %v75, %v94
  %v107 = vmul.f32 %v78, %v94
  %v108 = vmul.f32 %v81, %v94
  %v109 = vmul.f32 %v84, %v94
  %v110 = vmul.f32 %v87, %v94
  %v111 = vsub.f32 %v23, %v95
  %v112 = vsub.f32 %v24, %v96
  %v113 = vsub.f32 %v25, %v97
  %v114 = vsub.f32 %v26, %v98
  %v115 = vsub.f32 %v27, %v99
  %v116 = vsub.f32 %v28, %v100
  %v117 = vsub.f32 %v29, %v101
  %v118 = vsub.f32 %v30, %v102
  %v119 = vsub.f32 %v31, %v103
  %v120 = vsub.f32 %v32, %v104
  %v121 = vsub.f32 %v33, %v105
  %v122 = vsub.f32 %v34, %v106
  %v123 = vsub.f32 %v35, %v107
  %v124 = vsub.f32 %v36, %v108
  %v125 = vsub.f32 %v37, %v109
  %v126 = vsub.f32 %v38, %v110
  %v127 = vmul.f32 %v111, %v111
  %v128 = vmul.f32 %v112, %v112
  %v129 = vmul.f32 %v113, %v113
  %v130 = vmul.f32 %v114, %v114
  %v131 = vmul.f32 %v115, %v115
  %v132 = vmul.f32 %v116, %v116
  %v133 = vmul.f32 %v117, %v117
  %v134 = vmul.f32 %v118, %v118
  %v135 = vmul.f32 %v119, %v119
  %v136 = vmul.f32 %v120, %v120
  %v137 = vmul.f32 %v121, %v121
  %v138 = vmul.f32 %v122, %v122
  %v139 = vmul.f32 %v123, %v123
  %v140 = vmul.f32 %v124, %v124
  %v141 = vmul.f32 %v125, %v125
  %v142 = vmul.f32 %v126, %v126
  %v143 = vsel %vm39, %v127, 0.0
  %144 = vadd.xlane.f32.xlu0 %v143
  %v145 = vpop.xlane.xlu0 %144
  %v146 = vsel %vm39, %v128, 0.0
  %147 = vadd.xlane.f32.xlu0 %v146
  %v148 = vpop.xlane.xlu0 %147
  %v149 = vsel %vm39, %v129, 0.0
  %150 = vadd.xlane.f32.xlu0 %v149
  %v151 = vpop.xlane.xlu0 %150
  %v152 = vsel %vm39, %v130, 0.0
  %153 = vadd.xlane.f32.xlu0 %v152
  %v154 = vpop.xlane.xlu0 %153
  %v155 = vsel %vm39, %v131, 0.0
  %156 = vadd.xlane.f32.xlu0 %v155
  %v157 = vpop.xlane.xlu0 %156
  %v158 = vsel %vm39, %v132, 0.0
  %159 = vadd.xlane.f32.xlu0 %v158
  %v160 = vpop.xlane.xlu0 %159
  %v161 = vsel %vm39, %v133, 0.0
  %162 = vadd.xlane.f32.xlu0 %v161
  %v163 = vpop.xlane.xlu0 %162
  %v164 = vsel %vm39, %v134, 0.0
  %165 = vadd.xlane.f32.xlu0 %v164
  %v166 = vpop.xlane.xlu0 %165
  %v167 = vsel %vm39, %v135, 0.0
  %168 = vadd.xlane.f32.xlu0 %v167
  %v169 = vpop.xlane.xlu0 %168
  %v170 = vsel %vm39, %v136, 0.0
  %171 = vadd.xlane.f32.xlu0 %v170
  %v172 = vpop.xlane.xlu0 %171
  %v173 = vsel %vm39, %v137, 0.0
  %174 = vadd.xlane.f32.xlu0 %v173
  %v175 = vpop.xlane.xlu0 %174
  %v176 = vsel %vm39, %v138, 0.0
  %177 = vadd.xlane.f32.xlu0 %v176
  %v178 = vpop.xlane.xlu0 %177
  %v179 = vsel %vm39, %v139, 0.0
  %180 = vadd.xlane.f32.xlu0 %v179
  %v181 = vpop.xlane.xlu0 %180
  %v182 = vsel %vm39, %v140, 0.0
  %183 = vadd.xlane.f32.xlu0 %v182
  %v184 = vpop.xlane.xlu0 %183
  %v185 = vsel %vm39, %v141, 0.0
  %186 = vadd.xlane.f32.xlu0 %v185
  %v187 = vpop.xlane.xlu0 %186
  %v188 = vsel %vm39, %v142, 0.0
  %189 = vadd.xlane.f32.xlu0 %v188
  %v190 = vpop.xlane.xlu0 %189
  %v191 = vmul.f32 %v145, %v94
  %v192 = vmul.f32 %v148, %v94
  %v193 = vmul.f32 %v151, %v94
  %v194 = vmul.f32 %v154, %v94
  %v195 = vmul.f32 %v157, %v94
  %v196 = vmul.f32 %v160, %v94
  %v197 = vmul.f32 %v163, %v94
  %v198 = vmul.f32 %v166, %v94
  %v199 = vmul.f32 %v169, %v94
  %v200 = vmul.f32 %v172, %v94
  %v201 = vmul.f32 %v175, %v94
  %v202 = vmul.f32 %v178, %v94
  %v203 = vmul.f32 %v181, %v94
  %v204 = vmul.f32 %v184, %v94
  %v205 = vmul.f32 %v187, %v94
  %v206 = vmul.f32 %v190, %v94
  %v207 = vadd.f32 %v191, 1e-05
  %v208 = vadd.f32 %v192, 1e-05
  %v209 = vadd.f32 %v193, 1e-05
  %v210 = vadd.f32 %v194, 1e-05
  %v211 = vadd.f32 %v195, 1e-05
  %v212 = vadd.f32 %v196, 1e-05
  %v213 = vadd.f32 %v197, 1e-05
  %v214 = vadd.f32 %v198, 1e-05
  %v215 = vadd.f32 %v199, 1e-05
  %v216 = vadd.f32 %v200, 1e-05
  %v217 = vadd.f32 %v201, 1e-05
  %v218 = vadd.f32 %v202, 1e-05
  %v219 = vadd.f32 %v203, 1e-05
  %v220 = vadd.f32 %v204, 1e-05
  %v221 = vadd.f32 %v205, 1e-05
  %v222 = vadd.f32 %v206, 1e-05
  %v223 = vrsqrt.pop %v207
  %v224 = vmul.f32 %v223, %v207
  %v225 = vmul.f32 %v224, %v223
  %v226 = vmul.f32 0.5, %v225
  %v227 = vsub.f32 1.5, %v226
  %v228 = vmul.f32 %v223, %v227
  %vm229 = vweird.f32 %v207
  %vm230 = vweird.f32 %v223
  %vm231 = vmor %vm229, %vm230
  %v232 = vsel %vm231, %v223, %v228
  %v233 = vrsqrt.pop %v208
  %v234 = vmul.f32 %v233, %v208
  %v235 = vmul.f32 %v234, %v233
  %v236 = vmul.f32 0.5, %v235
  %v237 = vsub.f32 1.5, %v236
  %v238 = vmul.f32 %v233, %v237
  %vm239 = vweird.f32 %v208
  %vm240 = vweird.f32 %v233
  %vm241 = vmor %vm239, %vm240
  %v242 = vsel %vm241, %v233, %v238
  %v243 = vrsqrt.pop %v209
  %v244 = vmul.f32 %v243, %v209
  %v245 = vmul.f32 %v244, %v243
  %v246 = vmul.f32 0.5, %v245
  %v247 = vsub.f32 1.5, %v246
  %v248 = vmul.f32 %v243, %v247
  %vm249 = vweird.f32 %v209
  %vm250 = vweird.f32 %v243
  %vm251 = vmor %vm249, %vm250
  %v252 = vsel %vm251, %v243, %v248
  %v253 = vrsqrt.pop %v210
  %v254 = vmul.f32 %v253, %v210
  %v255 = vmul.f32 %v254, %v253
  %v256 = vmul.f32 0.5, %v255
  %v257 = vsub.f32 1.5, %v256
  %v258 = vmul.f32 %v253, %v257
  %vm259 = vweird.f32 %v210
  %vm260 = vweird.f32 %v253
  %vm261 = vmor %vm259, %vm260
  %v262 = vsel %vm261, %v253, %v258
  %v263 = vrsqrt.pop %v211
  %v264 = vmul.f32 %v263, %v211
  %v265 = vmul.f32 %v264, %v263
  %v266 = vmul.f32 0.5, %v265
  %v267 = vsub.f32 1.5, %v266
  %v268 = vmul.f32 %v263, %v267
  %vm269 = vweird.f32 %v211
  %vm270 = vweird.f32 %v263
  %vm271 = vmor %vm269, %vm270
  %v272 = vsel %vm271, %v263, %v268
  %v273 = vrsqrt.pop %v212
  %v274 = vmul.f32 %v273, %v212
  %v275 = vmul.f32 %v274, %v273
  %v276 = vmul.f32 0.5, %v275
  %v277 = vsub.f32 1.5, %v276
  %v278 = vmul.f32 %v273, %v277
  %vm279 = vweird.f32 %v212
  %vm280 = vweird.f32 %v273
  %vm281 = vmor %vm279, %vm280
  %v282 = vsel %vm281, %v273, %v278
  %v283 = vrsqrt.pop %v213
  %v284 = vmul.f32 %v283, %v213
  %v285 = vmul.f32 %v284, %v283
  %v286 = vmul.f32 0.5, %v285
  %v287 = vsub.f32 1.5, %v286
  %v288 = vmul.f32 %v283, %v287
  %vm289 = vweird.f32 %v213
  %vm290 = vweird.f32 %v283
  %vm291 = vmor %vm289, %vm290
  %v292 = vsel %vm291, %v283, %v288
  %v293 = vrsqrt.pop %v214
  %v294 = vmul.f32 %v293, %v214
  %v295 = vmul.f32 %v294, %v293
  %v296 = vmul.f32 0.5, %v295
  %v297 = vsub.f32 1.5, %v296
  %v298 = vmul.f32 %v293, %v297
  %vm299 = vweird.f32 %v214
  %vm300 = vweird.f32 %v293
  %vm301 = vmor %vm299, %vm300
  %v302 = vsel %vm301, %v293, %v298
  %v303 = vrsqrt.pop %v215
  %v304 = vmul.f32 %v303, %v215
  %v305 = vmul.f32 %v304, %v303
  %v306 = vmul.f32 0.5, %v305
  %v307 = vsub.f32 1.5, %v306
  %v308 = vmul.f32 %v303, %v307
  %vm309 = vweird.f32 %v215
  %vm310 = vweird.f32 %v303
  %vm311 = vmor %vm309, %vm310
  %v312 = vsel %vm311, %v303, %v308
  %v313 = vrsqrt.pop %v216
  %v314 = vmul.f32 %v313, %v216
  %v315 = vmul.f32 %v314, %v313
  %v316 = vmul.f32 0.5, %v315
  %v317 = vsub.f32 1.5, %v316
  %v318 = vmul.f32 %v313, %v317
  %vm319 = vweird.f32 %v216
  %vm320 = vweird.f32 %v313
  %vm321 = vmor %vm319, %vm320
  %v322 = vsel %vm321, %v313, %v318
  %v323 = vrsqrt.pop %v217
  %v324 = vmul.f32 %v323, %v217
  %v325 = vmul.f32 %v324, %v323
  %v326 = vmul.f32 0.5, %v325
  %v327 = vsub.f32 1.5, %v326
  %v328 = vmul.f32 %v323, %v327
  %vm329 = vweird.f32 %v217
  %vm330 = vweird.f32 %v323
  %vm331 = vmor %vm329, %vm330
  %v332 = vsel %vm331, %v323, %v328
  %v333 = vrsqrt.pop %v218
  %v334 = vmul.f32 %v333, %v218
  %v335 = vmul.f32 %v334, %v333
  %v336 = vmul.f32 0.5, %v335
  %v337 = vsub.f32 1.5, %v336
  %v338 = vmul.f32 %v333, %v337
  %vm339 = vweird.f32 %v218
  %vm340 = vweird.f32 %v333
  %vm341 = vmor %vm339, %vm340
  %v342 = vsel %vm341, %v333, %v338
  %v343 = vrsqrt.pop %v219
  %v344 = vmul.f32 %v343, %v219
  %v345 = vmul.f32 %v344, %v343
  %v346 = vmul.f32 0.5, %v345
  %v347 = vsub.f32 1.5, %v346
  %v348 = vmul.f32 %v343, %v347
  %vm349 = vweird.f32 %v219
  %vm350 = vweird.f32 %v343
  %vm351 = vmor %vm349, %vm350
  %v352 = vsel %vm351, %v343, %v348
  %v353 = vrsqrt.pop %v220
  %v354 = vmul.f32 %v353, %v220
  %v355 = vmul.f32 %v354, %v353
  %v356 = vmul.f32 0.5, %v355
  %v357 = vsub.f32 1.5, %v356
  %v358 = vmul.f32 %v353, %v357
  %vm359 = vweird.f32 %v220
  %vm360 = vweird.f32 %v353
  %vm361 = vmor %vm359, %vm360
  %v362 = vsel %vm361, %v353, %v358
  %v363 = vrsqrt.pop %v221
  %v364 = vmul.f32 %v363, %v221
  %v365 = vmul.f32 %v364, %v363
  %v366 = vmul.f32 0.5, %v365
  %v367 = vsub.f32 1.5, %v366
  %v368 = vmul.f32 %v363, %v367
  %vm369 = vweird.f32 %v221
  %vm370 = vweird.f32 %v363
  %vm371 = vmor %vm369, %vm370
  %v372 = vsel %vm371, %v363, %v368
  %v373 = vrsqrt.pop %v222
  %v374 = vmul.f32 %v373, %v222
  %v375 = vmul.f32 %v374, %v373
  %v376 = vmul.f32 0.5, %v375
  %v377 = vsub.f32 1.5, %v376
  %v378 = vmul.f32 %v373, %v377
  %vm379 = vweird.f32 %v222
  %vm380 = vweird.f32 %v373
  %vm381 = vmor %vm379, %vm380
  %v382 = vsel %vm381, %v373, %v378
  %v383 = vmul.f32 %v111, %v232
  %v384 = vmul.f32 %v112, %v242
  %v385 = vmul.f32 %v113, %v252
  %v386 = vmul.f32 %v114, %v262
  %v387 = vmul.f32 %v115, %v272
  %v388 = vmul.f32 %v116, %v282
  %v389 = vmul.f32 %v117, %v292
  %v390 = vmul.f32 %v118, %v302
  %v391 = vmul.f32 %v119, %v312
  %v392 = vmul.f32 %v120, %v322
  %v393 = vmul.f32 %v121, %v332
  %v394 = vmul.f32 %v122, %v342
  %v395 = vmul.f32 %v123, %v352
  %v396 = vmul.f32 %v124, %v362
  %v397 = vmul.f32 %v125, %v372
  %v398 = vmul.f32 %v126, %v382
  %v399 = vld [vmem:[%s1] sm:$0x1]
  %v401 = vperm.slane %v399, 0
  %v403 = vmul.f32 %v383, %v401
  %v404 = vmul.f32 %v384, %v401
  %v405 = vmul.f32 %v385, %v401
  %v406 = vmul.f32 %v386, %v401
  %v407 = vmul.f32 %v387, %v401
  %v408 = vmul.f32 %v388, %v401
  %v409 = vmul.f32 %v389, %v401
  %v410 = vmul.f32 %v390, %v401
  %v411 = vmul.f32 %v391, %v401
  %v412 = vmul.f32 %v392, %v401
  %v413 = vmul.f32 %v393, %v401
  %v414 = vmul.f32 %v394, %v401
  %v415 = vmul.f32 %v395, %v401
  %v416 = vmul.f32 %v396, %v401
  %v417 = vmul.f32 %v397, %v401
  %v418 = vmul.f32 %v398, %v401
  %v419 = vld [vmem:[%s2] sm:$0x1]
  %v421 = vperm.slane %v419, 0
  %v423 = vadd.f32 %v403, %v421
  %v424 = vadd.f32 %v404, %v421
  %v425 = vadd.f32 %v405, %v421
  %v426 = vadd.f32 %v406, %v421
  %v427 = vadd.f32 %v407, %v421
  %v428 = vadd.f32 %v408, %v421
  %v429 = vadd.f32 %v409, %v421
  %v430 = vadd.f32 %v410, %v421
  %v431 = vadd.f32 %v411, %v421
  %v432 = vadd.f32 %v412, %v421
  %v433 = vadd.f32 %v413, %v421
  %v434 = vadd.f32 %v414, %v421
  %v435 = vadd.f32 %v415, %v421
  %v436 = vadd.f32 %v416, %v421
  %v437 = vadd.f32 %v417, %v421
  %v438 = vadd.f32 %v418, %v421
  %439 = vst.msk [vmem:[%s5] sm:$0xff] %vm39, %v423
  %440 = vst.msk [vmem:[%s5 + $0x8] sm:$0xff] %vm39, %v424
  %441 = vst.msk [vmem:[%s5 + $0x10] sm:$0xff] %vm39, %v425
  %442 = vst.msk [vmem:[%s5 + $0x18] sm:$0xff] %vm39, %v426
  %443 = vst.msk [vmem:[%s5 + $0x20] sm:$0xff] %vm39, %v427
  %444 = vst.msk [vmem:[%s5 + $0x28] sm:$0xff] %vm39, %v428
  %445 = vst.msk [vmem:[%s5 + $0x30] sm:$0xff] %vm39, %v429
  %446 = vst.msk [vmem:[%s5 + $0x38] sm:$0xff] %vm39, %v430
  %447 = vst.msk [vmem:[%s5 + $0x40] sm:$0xff] %vm39, %v431
  %448 = vst.msk [vmem:[%s5 + $0x48] sm:$0xff] %vm39, %v432
  %449 = vst.msk [vmem:[%s5 + $0x50] sm:$0xff] %vm39, %v433
  %450 = vst.msk [vmem:[%s5 + $0x58] sm:$0xff] %vm39, %v434
  %451 = vst.msk [vmem:[%s5 + $0x60] sm:$0xff] %vm39, %v435
  %452 = vst.msk [vmem:[%s5 + $0x68] sm:$0xff] %vm39, %v436
  %453 = vst.msk [vmem:[%s5 + $0x70] sm:$0xff] %vm39, %v437
  %454 = vst.msk [vmem:[%s5 + $0x78] sm:$0xff] %vm39, %v438
  %v455 = vpack.c.bf16 %v424, %v423
  %v456 = vpack.c.bf16 %v426, %v425
  %v457 = vpack.c.bf16 %v428, %v427
  %v458 = vpack.c.bf16 %v430, %v429
  %v459 = vpack.c.bf16 %v432, %v431
  %v460 = vpack.c.bf16 %v434, %v433
  %v461 = vpack.c.bf16 %v436, %v435
  %v462 = vpack.c.bf16 %v438, %v437
  %v463 = vld [vmem:[%s3] sm:$0xf]
  %v464 = vld [vmem:[%s3 + $0x4] sm:$0xf]
  %v465 = vld [vmem:[%s3 + $0x8] sm:$0xf]
  %v466 = vld [vmem:[%s3 + $0xc] sm:$0xf]
  %v467 = vld [vmem:[%s4] sm:$0x1]
  %v469 = vperm.slane %v467, 0
  %v475 = vunpack.c.l.b16 %v463
  %v476 = vunpack.c.l.b16 %v464
  %v477 = vunpack.c.l.b16 %v465
  %v478 = vunpack.c.l.b16 %v466
  %v479 = vpack.c.b16 %v476, %v475
  %v480 = vpack.c.b16 %v478, %v477
  %v484 = vsel %vm39, %v455, 0
  %v487 = vsel %vm39, %v456, 0
  %v490 = vsel %vm39, %v457, 0
  %v493 = vsel %vm39, %v458, 0
  %v496 = vsel %vm39, %v459, 0
  %v499 = vsel %vm39, %v460, 0
  %v502 = vsel %vm39, %v461, 0
  %v505 = vsel %vm39, %v462, 0
  %507 = vmatpush.bf16.msra.mxu0 0
  %508 = vmatpush.bf16.msra.mxu0 0
  %509 = vmatpush.bf16.msra.mxu0 0
  %510 = vmatpush.bf16.msra.mxu0 0
  %511 = vmatpush.bf16.msra.mxu0 0
  %512 = vmatpush.bf16.msra.mxu0 0
  %513 = vmatpush.bf16.msra.mxu0 %v480
  %514 = vmatpush.bf16.msra.mxu0 %v479
  %515 = vmatmul.bf16.gmra.mxu0 %v484
  %v516 = vpop.f32.mrf.mxu0
  %v517 = vadd.f32 %v469, %v516
  %v518 = vpop.f32.mrf.mxu0
  %v519 = vadd.f32 %v469, %v518
  %520 = vmatmul.bf16.gmra.mxu0 %v487
  %v521 = vpop.f32.mrf.mxu0
  %v522 = vadd.f32 %v469, %v521
  %v523 = vpop.f32.mrf.mxu0
  %v524 = vadd.f32 %v469, %v523
  %525 = vmatmul.bf16.gmra.mxu0 %v490
  %v526 = vpop.f32.mrf.mxu0
  %v527 = vadd.f32 %v469, %v526
  %v528 = vpop.f32.mrf.mxu0
  %v529 = vadd.f32 %v469, %v528
  %530 = vmatmul.bf16.gmra.mxu0 %v493
  %v531 = vpop.f32.mrf.mxu0
  %v532 = vadd.f32 %v469, %v531
  %v533 = vpop.f32.mrf.mxu0
  %v534 = vadd.f32 %v469, %v533
  %535 = vmatmul.bf16.gmra.mxu0 %v496
  %v536 = vpop.f32.mrf.mxu0
  %v537 = vadd.f32 %v469, %v536
  %v538 = vpop.f32.mrf.mxu0
  %v539 = vadd.f32 %v469, %v538
  %540 = vmatmul.bf16.gmra.mxu0 %v499
  %v541 = vpop.f32.mrf.mxu0
  %v542 = vadd.f32 %v469, %v541
  %v543 = vpop.f32.mrf.mxu0
  %v544 = vadd.f32 %v469, %v543
  %545 = vmatmul.bf16.gmra.mxu0 %v502
  %v546 = vpop.f32.mrf.mxu0
  %v547 = vadd.f32 %v469, %v546
  %v548 = vpop.f32.mrf.mxu0
  %v549 = vadd.f32 %v469, %v548
  %550 = vmatmul.bf16.gmra.mxu0 %v505
  %v551 = vpop.f32.mrf.mxu0
  %v552 = vadd.f32 %v469, %v551
  %v553 = vpop.f32.mrf.mxu0
  %v554 = vadd.f32 %v469, %v553
  %555 = vdwg.mxu0
  %556 = vst [vmem:[%s6] sm:$0xff] %v517
  %557 = vst [vmem:[%s6 + $0x8] sm:$0xff] %v519
  %558 = vst [vmem:[%s6 + $0x10] sm:$0xff] %v522
  %559 = vst [vmem:[%s6 + $0x18] sm:$0xff] %v524
  %560 = vst [vmem:[%s6 + $0x20] sm:$0xff] %v527
  %561 = vst [vmem:[%s6 + $0x28] sm:$0xff] %v529
  %562 = vst [vmem:[%s6 + $0x30] sm:$0xff] %v532
  %563 = vst [vmem:[%s6 + $0x38] sm:$0xff] %v534
  %564 = vst [vmem:[%s6 + $0x40] sm:$0xff] %v537
  %565 = vst [vmem:[%s6 + $0x48] sm:$0xff] %v539
  %566 = vst [vmem:[%s6 + $0x50] sm:$0xff] %v542
  %567 = vst [vmem:[%s6 + $0x58] sm:$0xff] %v544
  %568 = vst [vmem:[%s6 + $0x60] sm:$0xff] %v547
  %569 = vst [vmem:[%s6 + $0x68] sm:$0xff] %v549
  %570 = vst [vmem:[%s6 + $0x70] sm:$0xff] %v552
  %571 = vst [vmem:[%s6 + $0x78] sm:$0xff] %v554
  // Predicated region
  $region22: #{_lambda_.21} parent=0 // pred_check
    _
  $region23: #{_lambda_.21} parent=0 // pred_check_branch
    %573 = sbr.rel (0) target = $region25
  $region24: #{_lambda_.21} parent=0 // pred_region
    _
  $region25: #{_lambda_.21} parent=0 // pred_fallthru
    _
  // Predicated region
  $region26: #{_lambda_.21} parent=0 // pred_check
    _
  $region27: #{_lambda_.21} parent=0 // pred_check_branch
    %575 = sbr.rel (0) target = $region29
  $region28: #{_lambda_.21} parent=0 // pred_region
    _
  $region29: #{_lambda_.21} parent=0 // pred_fallthru
    _
  // Predicated region
  $region30: #{_lambda_.21} parent=0 // pred_check
    _
  $region31: #{_lambda_.21} parent=0 // pred_check_branch
    %577 = sbr.rel (0) target = $region33
  $region32: #{_lambda_.21} parent=0 // pred_region
    _
  $region33: #{_lambda_.21} parent=0 // pred_fallthru
    _
  // Predicated region
  $region34: #{_lambda_.21} parent=0 // pred_check
    _
  $region35: #{_lambda_.21} parent=0 // pred_check_branch
    %579 = sbr.rel (0) target = $region37
  $region36: #{_lambda_.21} parent=0 // pred_region
    _
  $region37: #{_lambda_.21} parent=0 // pred_fallthru
    _

// kernel: _lambda_.22
$region0: #{_lambda_.22}
  #allocation0 [shape = 'u32[]', space=smem, size = 0x4, offset = 0x4, fixed_abs, tag = 'smem constant byte address 0x4 - core index']
  #allocation1 [shape = 'u32[72,128]{1,0:T(1,128)}', space=vmem, size = 0x9000, scoped, tag = 'internal scratch']
  %s0 = inlined_call_operand.vmem [shape: bf16[32,32], index: 0, kind: input, shape index: {}]
  %s1 = inlined_call_operand.vmem [shape: bf16[32,128], index: 1, kind: input, shape index: {}]
  %s2 = inlined_call_operand.vmem [shape: f32[1,128], index: 2, kind: input, shape index: {}]
  %s3 = inlined_call_operand.vmem [shape: f32[32,128], index: 3, kind: output, shape index: {}]
  %s4 = sld [smem:[#allocation0]]
  $region22: #{_lambda_.22} parent=0
    _
  %s6 = ssub.s32 1, %s4
  %s7 = scalar_select 0, %s6, %s4
  // Predicated region
  $region2: #{_lambda_.22} parent=0 // pred_check
    _
  $region3: #{_lambda_.22} parent=0 // pred_check_branch
    %9 = sbr.rel (0) target = $region5
  $region4: #{_lambda_.22} parent=0 // pred_region
    _
  $region5: #{_lambda_.22} parent=0 // pred_fallthru
    _
  // Predicated region
  $region6: #{_lambda_.22} parent=0 // pred_check
    _
  $region7: #{_lambda_.22} parent=0 // pred_check_branch
    %11 = sbr.rel (0) target = $region9
  $region8: #{_lambda_.22} parent=0 // pred_region
    _
  $region9: #{_lambda_.22} parent=0 // pred_fallthru
    _
  // Predicated region
  $region10: #{_lambda_.22} parent=0 // pred_check
    _
  $region11: #{_lambda_.22} parent=0 // pred_check_branch
    %13 = sbr.rel (0) target = $region13
  $region12: #{_lambda_.22} parent=0 // pred_region
    _
  $region13: #{_lambda_.22} parent=0 // pred_fallthru
    _
  %v15 = vld [vmem:[%s0] sm:$0xf]
  %v16 = vld [vmem:[%s0 + $0x4] sm:$0xf]
  %v17 = vld [vmem:[%s0 + $0x8] sm:$0xf]
  %v18 = vld [vmem:[%s0 + $0xc] sm:$0xf]
  %v19 = vld [vmem:[%s1] sm:$0xf]
  %v20 = vld [vmem:[%s1 + $0x4] sm:$0xf]
  %v21 = vld [vmem:[%s1 + $0x8] sm:$0xf]
  %v22 = vld [vmem:[%s1 + $0xc] sm:$0xf]
  %v23 = vld [vmem:[%s2] sm:$0x1]
  %v25 = vperm.slane %v23, 0
  %v31 = vunpack.c.l.b16 %v15
  %v32 = vunpack.c.l.b16 %v16
  %v33 = vunpack.c.l.b16 %v17
  %v34 = vunpack.c.l.b16 %v18
  %v35 = vpack.c.b16 %v32, %v31
  %v36 = vpack.c.b16 %v34, %v33
  %v41 = vunpack.c.l.b16 %v19
  %v42 = vunpack.c.l.b16 %v20
  %v43 = vunpack.c.l.b16 %v21
  %v44 = vunpack.c.l.b16 %v22
  %v45 = vpack.c.b16 %v42, %v41
  %v46 = vpack.c.b16 %v44, %v43
  %vm49 = vcmask 261120
  %v51 = vsel %vm49, %v35, 0
  %v54 = vsel %vm49, %v36, 0
  %56 = vmatpush.bf16.msra.mxu0 0
  %57 = vmatpush.bf16.msra.mxu0 0
  %58 = vmatpush.bf16.msra.mxu0 0
  %59 = vmatpush.bf16.msra.mxu0 0
  %60 = vmatpush.bf16.msra.mxu0 0
  %61 = vmatpush.bf16.msra.mxu0 0
  %62 = vmatpush.bf16.msra.mxu0 %v46
  %63 = vmatpush.bf16.msra.mxu0 %v45
  %64 = vmatmul.bf16.gmra.mxu0 %v51
  %v65 = vpop.f32.mrf.mxu0
  %v66 = vadd.f32 %v25, %v65
  %v67 = vpop.f32.mrf.mxu0
  %v68 = vadd.f32 %v25, %v67
  %69 = vmatmul.bf16.gmra.mxu0 %v54
  %v70 = vpop.f32.mrf.mxu0
  %v71 = vadd.f32 %v25, %v70
  %v72 = vpop.f32.mrf.mxu0
  %v73 = vadd.f32 %v25, %v72
  %74 = vdwg.mxu0
  %75 = vst [vmem:[%s3] sm:$0xff] %v66
  %76 = vst [vmem:[%s3 + $0x8] sm:$0xff] %v68
  %77 = vst [vmem:[%s3 + $0x10] sm:$0xff] %v71
  %78 = vst [vmem:[%s3 + $0x18] sm:$0xff] %v73
  // Predicated region
  $region14: #{_lambda_.22} parent=0 // pred_check
    _
  $region15: #{_lambda_.22} parent=0 // pred_check_branch
    %80 = sbr.rel (0) target = $region17
  $region16: #{_lambda_.22} parent=0 // pred_region
    _
  $region17: #{_lambda_.22} parent=0 // pred_fallthru
    _
  // Predicated region
  $region18: #{_lambda_.22} parent=0 // pred_check
    _
  $region19: #{_lambda_.22} parent=0 // pred_check_branch
    %82 = sbr.rel (0) target = $region21
  $region20: #{_lambda_.22} parent=0 // pred_region
    _
  $region21: #{_lambda_.22} parent=0 // pred_fallthru
    _

// kernel: _lambda_.23
$region0: #{_lambda_.23}
  #allocation0 [shape = 'u32[]', space=smem, size = 0x4, offset = 0x4, fixed_abs, tag = 'smem constant byte address 0x4 - core index']
  #allocation1 [shape = 'u32[72,128]{1,0:T(1,128)}', space=vmem, size = 0x9000, scoped, tag = 'internal scratch']
  %s0 = inlined_call_operand.vmem [shape: f32[2,16,9,9], index: 0, kind: input, shape index: {}]
  %s1 = inlined_call_operand.vmem [shape: bf16[2,16,9,32], index: 1, kind: input, shape index: {}]
  %s2 = inlined_call_operand.vmem [shape: f32[2,16,9,32], index: 2, kind: output, shape index: {}]
  %s3 = sld [smem:[#allocation0]]
  $region18: #{_lambda_.23} parent=0
    _
  %s5 = ssub.s32 1, %s3
  %s6 = scalar_select 0, %s5, %s3
  // Predicated region
  $region2: #{_lambda_.23} parent=0 // pred_check
    _
  $region3: #{_lambda_.23} parent=0 // pred_check_branch
    %8 = sbr.rel (0) target = $region5
  $region4: #{_lambda_.23} parent=0 // pred_region
    _
  $region5: #{_lambda_.23} parent=0 // pred_fallthru
    _
  // Predicated region
  $region6: #{_lambda_.23} parent=0 // pred_check
    _
  $region7: #{_lambda_.23} parent=0 // pred_check_branch
    %10 = sbr.rel (0) target = $region9
  $region8: #{_lambda_.23} parent=0 // pred_region
    _
  $region9: #{_lambda_.23} parent=0 // pred_fallthru
    _
  %v12 = vld [vmem:[%s0] sm:$0xff]
  %v13 = vld [vmem:[%s0 + $0x8] sm:$0x1]
  %v14 = vld [vmem:[%s0 + $0x10] sm:$0xff]
  %v15 = vld [vmem:[%s0 + $0x18] sm:$0x1]
  %v16 = vld [vmem:[%s0 + $0x20] sm:$0xff]
  %v17 = vld [vmem:[%s0 + $0x28] sm:$0x1]
  %v18 = vld [vmem:[%s0 + $0x30] sm:$0xff]
  %v19 = vld [vmem:[%s0 + $0x38] sm:$0x1]
  %v20 = vld [vmem:[%s0 + $0x40] sm:$0xff]
  %v21 = vld [vmem:[%s0 + $0x48] sm:$0x1]
  %v22 = vld [vmem:[%s0 + $0x50] sm:$0xff]
  %v23 = vld [vmem:[%s0 + $0x58] sm:$0x1]
  %v24 = vld [vmem:[%s0 + $0x60] sm:$0xff]
  %v25 = vld [vmem:[%s0 + $0x68] sm:$0x1]
  %v26 = vld [vmem:[%s0 + $0x70] sm:$0xff]
  %v27 = vld [vmem:[%s0 + $0x78] sm:$0x1]
  %v28 = vld [vmem:[%s0 + $0x80] sm:$0xff]
  %v29 = vld [vmem:[%s0 + $0x88] sm:$0x1]
  %v30 = vld [vmem:[%s0 + $0x90] sm:$0xff]
  %v31 = vld [vmem:[%s0 + $0x98] sm:$0x1]
  %v32 = vld [vmem:[%s0 + $0xa0] sm:$0xff]
  %v33 = vld [vmem:[%s0 + $0xa8] sm:$0x1]
  %v34 = vld [vmem:[%s0 + $0xb0] sm:$0xff]
  %v35 = vld [vmem:[%s0 + $0xb8] sm:$0x1]
  %v36 = vld [vmem:[%s0 + $0xc0] sm:$0xff]
  %v37 = vld [vmem:[%s0 + $0xc8] sm:$0x1]
  %v38 = vld [vmem:[%s0 + $0xd0] sm:$0xff]
  %v39 = vld [vmem:[%s0 + $0xd8] sm:$0x1]
  %v40 = vld [vmem:[%s0 + $0xe0] sm:$0xff]
  %v41 = vld [vmem:[%s0 + $0xe8] sm:$0x1]
  %v42 = vld [vmem:[%s0 + $0xf0] sm:$0xff]
  %v43 = vld [vmem:[%s0 + $0xf8] sm:$0x1]
  %v44 = vld [vmem:[%s0 + $0x100] sm:$0xff]
  %v45 = vld [vmem:[%s0 + $0x108] sm:$0x1]
  %v46 = vld [vmem:[%s0 + $0x110] sm:$0xff]
  %v47 = vld [vmem:[%s0 + $0x118] sm:$0x1]
  %v48 = vld [vmem:[%s0 + $0x120] sm:$0xff]
  %v49 = vld [vmem:[%s0 + $0x128] sm:$0x1]
  %v50 = vld [vmem:[%s0 + $0x130] sm:$0xff]
  %v51 = vld [vmem:[%s0 + $0x138] sm:$0x1]
  %v52 = vld [vmem:[%s0 + $0x140] sm:$0xff]
  %v53 = vld [vmem:[%s0 + $0x148] sm:$0x1]
  %v54 = vld [vmem:[%s0 + $0x150] sm:$0xff]
  %v55 = vld [vmem:[%s0 + $0x158] sm:$0x1]
  %v56 = vld [vmem:[%s0 + $0x160] sm:$0xff]
  %v57 = vld [vmem:[%s0 + $0x168] sm:$0x1]
  %v58 = vld [vmem:[%s0 + $0x170] sm:$0xff]
  %v59 = vld [vmem:[%s0 + $0x178] sm:$0x1]
  %v60 = vld [vmem:[%s0 + $0x180] sm:$0xff]
  %v61 = vld [vmem:[%s0 + $0x188] sm:$0x1]
  %v62 = vld [vmem:[%s0 + $0x190] sm:$0xff]
  %v63 = vld [vmem:[%s0 + $0x198] sm:$0x1]
  %v64 = vld [vmem:[%s0 + $0x1a0] sm:$0xff]
  %v65 = vld [vmem:[%s0 + $0x1a8] sm:$0x1]
  %v66 = vld [vmem:[%s0 + $0x1b0] sm:$0xff]
  %v67 = vld [vmem:[%s0 + $0x1b8] sm:$0x1]
  %v68 = vld [vmem:[%s0 + $0x1c0] sm:$0xff]
  %v69 = vld [vmem:[%s0 + $0x1c8] sm:$0x1]
  %v70 = vld [vmem:[%s0 + $0x1d0] sm:$0xff]
  %v71 = vld [vmem:[%s0 + $0x1d8] sm:$0x1]
  %v72 = vld [vmem:[%s0 + $0x1e0] sm:$0xff]
  %v73 = vld [vmem:[%s0 + $0x1e8] sm:$0x1]
  %v74 = vld [vmem:[%s0 + $0x1f0] sm:$0xff]
  %v75 = vld [vmem:[%s0 + $0x1f8] sm:$0x1]
  %v76 = vmul.f32 %v12, 0.17677669
  %v77 = vmul.f32 %v13, 0.17677669
  %v78 = vmul.f32 %v14, 0.17677669
  %v79 = vmul.f32 %v15, 0.17677669
  %v80 = vmul.f32 %v16, 0.17677669
  %v81 = vmul.f32 %v17, 0.17677669
  %v82 = vmul.f32 %v18, 0.17677669
  %v83 = vmul.f32 %v19, 0.17677669
  %v84 = vmul.f32 %v20, 0.17677669
  %v85 = vmul.f32 %v21, 0.17677669
  %v86 = vmul.f32 %v22, 0.17677669
  %v87 = vmul.f32 %v23, 0.17677669
  %v88 = vmul.f32 %v24, 0.17677669
  %v89 = vmul.f32 %v25, 0.17677669
  %v90 = vmul.f32 %v26, 0.17677669
  %v91 = vmul.f32 %v27, 0.17677669
  %v92 = vmul.f32 %v28, 0.17677669
  %v93 = vmul.f32 %v29, 0.17677669
  %v94 = vmul.f32 %v30, 0.17677669
  %v95 = vmul.f32 %v31, 0.17677669
  %v96 = vmul.f32 %v32, 0.17677669
  %v97 = vmul.f32 %v33, 0.17677669
  %v98 = vmul.f32 %v34, 0.17677669
  %v99 = vmul.f32 %v35, 0.17677669
  %v100 = vmul.f32 %v36, 0.17677669
  %v101 = vmul.f32 %v37, 0.17677669
  %v102 = vmul.f32 %v38, 0.17677669
  %v103 = vmul.f32 %v39, 0.17677669
  %v104 = vmul.f32 %v40, 0.17677669
  %v105 = vmul.f32 %v41, 0.17677669
  %v106 = vmul.f32 %v42, 0.17677669
  %v107 = vmul.f32 %v43, 0.17677669
  %v108 = vmul.f32 %v44, 0.17677669
  %v109 = vmul.f32 %v45, 0.17677669
  %v110 = vmul.f32 %v46, 0.17677669
  %v111 = vmul.f32 %v47, 0.17677669
  %v112 = vmul.f32 %v48, 0.17677669
  %v113 = vmul.f32 %v49, 0.17677669
  %v114 = vmul.f32 %v50, 0.17677669
  %v115 = vmul.f32 %v51, 0.17677669
  %v116 = vmul.f32 %v52, 0.17677669
  %v117 = vmul.f32 %v53, 0.17677669
  %v118 = vmul.f32 %v54, 0.17677669
  %v119 = vmul.f32 %v55, 0.17677669
  %v120 = vmul.f32 %v56, 0.17677669
  %v121 = vmul.f32 %v57, 0.17677669
  %v122 = vmul.f32 %v58, 0.17677669
  %v123 = vmul.f32 %v59, 0.17677669
  %v124 = vmul.f32 %v60, 0.17677669
  %v125 = vmul.f32 %v61, 0.17677669
  %v126 = vmul.f32 %v62, 0.17677669
  %v127 = vmul.f32 %v63, 0.17677669
  %v128 = vmul.f32 %v64, 0.17677669
  %v129 = vmul.f32 %v65, 0.17677669
  %v130 = vmul.f32 %v66, 0.17677669
  %v131 = vmul.f32 %v67, 0.17677669
  %v132 = vmul.f32 %v68, 0.17677669
  %v133 = vmul.f32 %v69, 0.17677669
  %v134 = vmul.f32 %v70, 0.17677669
  %v135 = vmul.f32 %v71, 0.17677669
  %v136 = vmul.f32 %v72, 0.17677669
  %v137 = vmul.f32 %v73, 0.17677669
  %v138 = vmul.f32 %v74, 0.17677669
  %v139 = vmul.f32 %v75, 0.17677669
  %vm140 = vcmask 72704
  %v141 = vsel %vm140, %v76, -inf
  %142 = vmax.xlane.f32.xlu0 %v141
  %v143 = vpop.xlane.xlu0 %142
  %vm144 = vcmask 65536
  %v145 = vsel %vm144, %v77, -inf
  %146 = vmax.xlane.f32.xlu0 %v145
  %v147 = vpop.xlane.xlu0 %146
  %v148 = vsel %vm140, %v78, -inf
  %149 = vmax.xlane.f32.xlu0 %v148
  %v150 = vpop.xlane.xlu0 %149
  %v151 = vsel %vm144, %v79, -inf
  %152 = vmax.xlane.f32.xlu0 %v151
  %v153 = vpop.xlane.xlu0 %152
  %v154 = vsel %vm140, %v80, -inf
  %155 = vmax.xlane.f32.xlu0 %v154
  %v156 = vpop.xlane.xlu0 %155
  %v157 = vsel %vm144, %v81, -inf
  %158 = vmax.xlane.f32.xlu0 %v157
  %v159 = vpop.xlane.xlu0 %158
  %v160 = vsel %vm140, %v82, -inf
  %161 = vmax.xlane.f32.xlu0 %v160
  %v162 = vpop.xlane.xlu0 %161
  %v163 = vsel %vm144, %v83, -inf
  %164 = vmax.xlane.f32.xlu0 %v163
  %v165 = vpop.xlane.xlu0 %164
  %v166 = vsel %vm140, %v84, -inf
  %167 = vmax.xlane.f32.xlu0 %v166
  %v168 = vpop.xlane.xlu0 %167
  %v169 = vsel %vm144, %v85, -inf
  %170 = vmax.xlane.f32.xlu0 %v169
  %v171 = vpop.xlane.xlu0 %170
  %v172 = vsel %vm140, %v86, -inf
  %173 = vmax.xlane.f32.xlu0 %v172
  %v174 = vpop.xlane.xlu0 %173
  %v175 = vsel %vm144, %v87, -inf
  %176 = vmax.xlane.f32.xlu0 %v175
  %v177 = vpop.xlane.xlu0 %176
  %v178 = vsel %vm140, %v88, -inf
  %179 = vmax.xlane.f32.xlu0 %v178
  %v180 = vpop.xlane.xlu0 %179
  %v181 = vsel %vm144, %v89, -inf
  %182 = vmax.xlane.f32.xlu0 %v181
  %v183 = vpop.xlane.xlu0 %182
  %v184 = vsel %vm140, %v90, -inf
  %185 = vmax.xlane.f32.xlu0 %v184
  %v186 = vpop.xlane.xlu0 %185
  %v187 = vsel %vm144, %v91, -inf
  %188 = vmax.xlane.f32.xlu0 %v187
  %v189 = vpop.xlane.xlu0 %188
  %v190 = vsel %vm140, %v92, -inf
  %191 = vmax.xlane.f32.xlu0 %v190
  %v192 = vpop.xlane.xlu0 %191
  %v193 = vsel %vm144, %v93, -inf
  %194 = vmax.xlane.f32.xlu0 %v193
  %v195 = vpop.xlane.xlu0 %194
  %v196 = vsel %vm140, %v94, -inf
  %197 = vmax.xlane.f32.xlu0 %v196
  %v198 = vpop.xlane.xlu0 %197
  %v199 = vsel %vm144, %v95, -inf
  %200 = vmax.xlane.f32.xlu0 %v199
  %v201 = vpop.xlane.xlu0 %200
  %v202 = vsel %vm140, %v96, -inf
  %203 = vmax.xlane.f32.xlu0 %v202
  %v204 = vpop.xlane.xlu0 %203
  %v205 = vsel %vm144, %v97, -inf
  %206 = vmax.xlane.f32.xlu0 %v205
  %v207 = vpop.xlane.xlu0 %206
  %v208 = vsel %vm140, %v98, -inf
  %209 = vmax.xlane.f32.xlu0 %v208
  %v210 = vpop.xlane.xlu0 %209
  %v211 = vsel %vm144, %v99, -inf
  %212 = vmax.xlane.f32.xlu0 %v211
  %v213 = vpop.xlane.xlu0 %212
  %v214 = vsel %vm140, %v100, -inf
  %215 = vmax.xlane.f32.xlu0 %v214
  %v216 = vpop.xlane.xlu0 %215
  %v217 = vsel %vm144, %v101, -inf
  %218 = vmax.xlane.f32.xlu0 %v217
  %v219 = vpop.xlane.xlu0 %218
  %v220 = vsel %vm140, %v102, -inf
  %221 = vmax.xlane.f32.xlu0 %v220
  %v222 = vpop.xlane.xlu0 %221
  %v223 = vsel %vm144, %v103, -inf
  %224 = vmax.xlane.f32.xlu0 %v223
  %v225 = vpop.xlane.xlu0 %224
  %v226 = vsel %vm140, %v104, -inf
  %227 = vmax.xlane.f32.xlu0 %v226
  %v228 = vpop.xlane.xlu0 %227
  %v229 = vsel %vm144, %v105, -inf
  %230 = vmax.xlane.f32.xlu0 %v229
  %v231 = vpop.xlane.xlu0 %230
  %v232 = vsel %vm140, %v106, -inf
  %233 = vmax.xlane.f32.xlu0 %v232
  %v234 = vpop.xlane.xlu0 %233
  %v235 = vsel %vm144, %v107, -inf
  %236 = vmax.xlane.f32.xlu0 %v235
  %v237 = vpop.xlane.xlu0 %236
  %v238 = vsel %vm140, %v108, -inf
  %239 = vmax.xlane.f32.xlu0 %v238
  %v240 = vpop.xlane.xlu0 %239
  %v241 = vsel %vm144, %v109, -inf
  %242 = vmax.xlane.f32.xlu0 %v241
  %v243 = vpop.xlane.xlu0 %242
  %v244 = vsel %vm140, %v110, -inf
  %245 = vmax.xlane.f32.xlu0 %v244
  %v246 = vpop.xlane.xlu0 %245
  %v247 = vsel %vm144, %v111, -inf
  %248 = vmax.xlane.f32.xlu0 %v247
  %v249 = vpop.xlane.xlu0 %248
  %v250 = vsel %vm140, %v112, -inf
  %251 = vmax.xlane.f32.xlu0 %v250
  %v252 = vpop.xlane.xlu0 %251
  %v253 = vsel %vm144, %v113, -inf
  %254 = vmax.xlane.f32.xlu0 %v253
  %v255 = vpop.xlane.xlu0 %254
  %v256 = vsel %vm140, %v114, -inf
  %257 = vmax.xlane.f32.xlu0 %v256
  %v258 = vpop.xlane.xlu0 %257
  %v259 = vsel %vm144, %v115, -inf
  %260 = vmax.xlane.f32.xlu0 %v259
  %v261 = vpop.xlane.xlu0 %260
  %v262 = vsel %vm140, %v116, -inf
  %263 = vmax.xlane.f32.xlu0 %v262
  %v264 = vpop.xlane.xlu0 %263
  %v265 = vsel %vm144, %v117, -inf
  %266 = vmax.xlane.f32.xlu0 %v265
  %v267 = vpop.xlane.xlu0 %266
  %v268 = vsel %vm140, %v118, -inf
  %269 = vmax.xlane.f32.xlu0 %v268
  %v270 = vpop.xlane.xlu0 %269
  %v271 = vsel %vm144, %v119, -inf
  %272 = vmax.xlane.f32.xlu0 %v271
  %v273 = vpop.xlane.xlu0 %272
  %v274 = vsel %vm140, %v120, -inf
  %275 = vmax.xlane.f32.xlu0 %v274
  %v276 = vpop.xlane.xlu0 %275
  %v277 = vsel %vm144, %v121, -inf
  %278 = vmax.xlane.f32.xlu0 %v277
  %v279 = vpop.xlane.xlu0 %278
  %v280 = vsel %vm140, %v122, -inf
  %281 = vmax.xlane.f32.xlu0 %v280
  %v282 = vpop.xlane.xlu0 %281
  %v283 = vsel %vm144, %v123, -inf
  %284 = vmax.xlane.f32.xlu0 %v283
  %v285 = vpop.xlane.xlu0 %284
  %v286 = vsel %vm140, %v124, -inf
  %287 = vmax.xlane.f32.xlu0 %v286
  %v288 = vpop.xlane.xlu0 %287
  %v289 = vsel %vm144, %v125, -inf
  %290 = vmax.xlane.f32.xlu0 %v289
  %v291 = vpop.xlane.xlu0 %290
  %v292 = vsel %vm140, %v126, -inf
  %293 = vmax.xlane.f32.xlu0 %v292
  %v294 = vpop.xlane.xlu0 %293
  %v295 = vsel %vm144, %v127, -inf
  %296 = vmax.xlane.f32.xlu0 %v295
  %v297 = vpop.xlane.xlu0 %296
  %v298 = vsel %vm140, %v128, -inf
  %299 = vmax.xlane.f32.xlu0 %v298
  %v300 = vpop.xlane.xlu0 %299
  %v301 = vsel %vm144, %v129, -inf
  %302 = vmax.xlane.f32.xlu0 %v301
  %v303 = vpop.xlane.xlu0 %302
  %v304 = vsel %vm140, %v130, -inf
  %305 = vmax.xlane.f32.xlu0 %v304
  %v306 = vpop.xlane.xlu0 %305
  %v307 = vsel %vm144, %v131, -inf
  %308 = vmax.xlane.f32.xlu0 %v307
  %v309 = vpop.xlane.xlu0 %308
  %v310 = vsel %vm140, %v132, -inf
  %311 = vmax.xlane.f32.xlu0 %v310
  %v312 = vpop.xlane.xlu0 %311
  %v313 = vsel %vm144, %v133, -inf
  %314 = vmax.xlane.f32.xlu0 %v313
  %v315 = vpop.xlane.xlu0 %314
  %v316 = vsel %vm140, %v134, -inf
  %317 = vmax.xlane.f32.xlu0 %v316
  %v318 = vpop.xlane.xlu0 %317
  %v319 = vsel %vm144, %v135, -inf
  %320 = vmax.xlane.f32.xlu0 %v319
  %v321 = vpop.xlane.xlu0 %320
  %v322 = vsel %vm140, %v136, -inf
  %323 = vmax.xlane.f32.xlu0 %v322
  %v324 = vpop.xlane.xlu0 %323
  %v325 = vsel %vm144, %v137, -inf
  %326 = vmax.xlane.f32.xlu0 %v325
  %v327 = vpop.xlane.xlu0 %326
  %v328 = vsel %vm140, %v138, -inf
  %329 = vmax.xlane.f32.xlu0 %v328
  %v330 = vpop.xlane.xlu0 %329
  %v331 = vsel %vm144, %v139, -inf
  %332 = vmax.xlane.f32.xlu0 %v331
  %v333 = vpop.xlane.xlu0 %332
  %v334 = vsub.f32 %v76, %v143
  %v335 = vsub.f32 %v77, %v147
  %v336 = vsub.f32 %v78, %v150
  %v337 = vsub.f32 %v79, %v153
  %v338 = vsub.f32 %v80, %v156
  %v339 = vsub.f32 %v81, %v159
  %v340 = vsub.f32 %v82, %v162
  %v341 = vsub.f32 %v83, %v165
  %v342 = vsub.f32 %v84, %v168
  %v343 = vsub.f32 %v85, %v171
  %v344 = vsub.f32 %v86, %v174
  %v345 = vsub.f32 %v87, %v177
  %v346 = vsub.f32 %v88, %v180
  %v347 = vsub.f32 %v89, %v183
  %v348 = vsub.f32 %v90, %v186
  %v349 = vsub.f32 %v91, %v189
  %v350 = vsub.f32 %v92, %v192
  %v351 = vsub.f32 %v93, %v195
  %v352 = vsub.f32 %v94, %v198
  %v353 = vsub.f32 %v95, %v201
  %v354 = vsub.f32 %v96, %v204
  %v355 = vsub.f32 %v97, %v207
  %v356 = vsub.f32 %v98, %v210
  %v357 = vsub.f32 %v99, %v213
  %v358 = vsub.f32 %v100, %v216
  %v359 = vsub.f32 %v101, %v219
  %v360 = vsub.f32 %v102, %v222
  %v361 = vsub.f32 %v103, %v225
  %v362 = vsub.f32 %v104, %v228
  %v363 = vsub.f32 %v105, %v231
  %v364 = vsub.f32 %v106, %v234
  %v365 = vsub.f32 %v107, %v237
  %v366 = vsub.f32 %v108, %v240
  %v367 = vsub.f32 %v109, %v243
  %v368 = vsub.f32 %v110, %v246
  %v369 = vsub.f32 %v111, %v249
  %v370 = vsub.f32 %v112, %v252
  %v371 = vsub.f32 %v113, %v255
  %v372 = vsub.f32 %v114, %v258
  %v373 = vsub.f32 %v115, %v261
  %v374 = vsub.f32 %v116, %v264
  %v375 = vsub.f32 %v117, %v267
  %v376 = vsub.f32 %v118, %v270
  %v377 = vsub.f32 %v119, %v273
  %v378 = vsub.f32 %v120, %v276
  %v379 = vsub.f32 %v121, %v279
  %v380 = vsub.f32 %v122, %v282
  %v381 = vsub.f32 %v123, %v285
  %v382 = vsub.f32 %v124, %v288
  %v383 = vsub.f32 %v125, %v291
  %v384 = vsub.f32 %v126, %v294
  %v385 = vsub.f32 %v127, %v297
  %v386 = vsub.f32 %v128, %v300
  %v387 = vsub.f32 %v129, %v303
  %v388 = vsub.f32 %v130, %v306
  %v389 = vsub.f32 %v131, %v309
  %v390 = vsub.f32 %v132, %v312
  %v391 = vsub.f32 %v133, %v315
  %v392 = vsub.f32 %v134, %v318
  %v393 = vsub.f32 %v135, %v321
  %v394 = vsub.f32 %v136, %v324
  %v395 = vsub.f32 %v137, %v327
  %v396 = vsub.f32 %v138, %v330
  %v397 = vsub.f32 %v139, %v333
  %v398 = vmul.f32 %v334, 1.442695
  %v399 = vpow.pop %v398
  %v400 = vmul.f32 %v335, 1.442695
  %v401 = vpow.pop %v400
  %v402 = vmul.f32 %v336, 1.442695
  %v403 = vpow.pop %v402
  %v404 = vmul.f32 %v337, 1.442695
  %v405 = vpow.pop %v404
  %v406 = vmul.f32 %v338, 1.442695
  %v407 = vpow.pop %v406
  %v408 = vmul.f32 %v339, 1.442695
  %v409 = vpow.pop %v408
  %v410 = vmul.f32 %v340, 1.442695
  %v411 = vpow.pop %v410
  %v412 = vmul.f32 %v341, 1.442695
  %v413 = vpow.pop %v412
  %v414 = vmul.f32 %v342, 1.442695
  %v415 = vpow.pop %v414
  %v416 = vmul.f32 %v343, 1.442695
  %v417 = vpow.pop %v416
  %v418 = vmul.f32 %v344, 1.442695
  %v419 = vpow.pop %v418
  %v420 = vmul.f32 %v345, 1.442695
  %v421 = vpow.pop %v420
  %v422 = vmul.f32 %v346, 1.442695
  %v423 = vpow.pop %v422
  %v424 = vmul.f32 %v347, 1.442695
  %v425 = vpow.pop %v424
  %v426 = vmul.f32 %v348, 1.442695
  %v427 = vpow.pop %v426
  %v428 = vmul.f32 %v349, 1.442695
  %v429 = vpow.pop %v428
  %v430 = vmul.f32 %v350, 1.442695
  %v431 = vpow.pop %v430
  %v432 = vmul.f32 %v351, 1.442695
  %v433 = vpow.pop %v432
  %v434 = vmul.f32 %v352, 1.442695
  %v435 = vpow.pop %v434
  %v436 = vmul.f32 %v353, 1.442695
  %v437 = vpow.pop %v436
  %v438 = vmul.f32 %v354, 1.442695
  %v439 = vpow.pop %v438
  %v440 = vmul.f32 %v355, 1.442695
  %v441 = vpow.pop %v440
  %v442 = vmul.f32 %v356, 1.442695
  %v443 = vpow.pop %v442
  %v444 = vmul.f32 %v357, 1.442695
  %v445 = vpow.pop %v444
  %v446 = vmul.f32 %v358, 1.442695
  %v447 = vpow.pop %v446
  %v448 = vmul.f32 %v359, 1.442695
  %v449 = vpow.pop %v448
  %v450 = vmul.f32 %v360, 1.442695
  %v451 = vpow.pop %v450
  %v452 = vmul.f32 %v361, 1.442695
  %v453 = vpow.pop %v452
  %v454 = vmul.f32 %v362, 1.442695
  %v455 = vpow.pop %v454
  %v456 = vmul.f32 %v363, 1.442695
  %v457 = vpow.pop %v456
  %v458 = vmul.f32 %v364, 1.442695
  %v459 = vpow.pop %v458
  %v460 = vmul.f32 %v365, 1.442695
  %v461 = vpow.pop %v460
  %v462 = vmul.f32 %v366, 1.442695
  %v463 = vpow.pop %v462
  %v464 = vmul.f32 %v367, 1.442695
  %v465 = vpow.pop %v464
  %v466 = vmul.f32 %v368, 1.442695
  %v467 = vpow.pop %v466
  %v468 = vmul.f32 %v369, 1.442695
  %v469 = vpow.pop %v468
  %v470 = vmul.f32 %v370, 1.442695
  %v471 = vpow.pop %v470
  %v472 = vmul.f32 %v371, 1.442695
  %v473 = vpow.pop %v472
  %v474 = vmul.f32 %v372, 1.442695
  %v475 = vpow.pop %v474
  %v476 = vmul.f32 %v373, 1.442695
  %v477 = vpow.pop %v476
  %v478 = vmul.f32 %v374, 1.442695
  %v479 = vpow.pop %v478
  %v480 = vmul.f32 %v375, 1.442695
  %v481 = vpow.pop %v480
  %v482 = vmul.f32 %v376, 1.442695
  %v483 = vpow.pop %v482
  %v484 = vmul.f32 %v377, 1.442695
  %v485 = vpow.pop %v484
  %v486 = vmul.f32 %v378, 1.442695
  %v487 = vpow.pop %v486
  %v488 = vmul.f32 %v379, 1.442695
  %v489 = vpow.pop %v488
  %v490 = vmul.f32 %v380, 1.442695
  %v491 = vpow.pop %v490
  %v492 = vmul.f32 %v381, 1.442695
  %v493 = vpow.pop %v492
  %v494 = vmul.f32 %v382, 1.442695
  %v495 = vpow.pop %v494
  %v496 = vmul.f32 %v383, 1.442695
  %v497 = vpow.pop %v496
  %v498 = vmul.f32 %v384, 1.442695
  %v499 = vpow.pop %v498
  %v500 = vmul.f32 %v385, 1.442695
  %v501 = vpow.pop %v500
  %v502 = vmul.f32 %v386, 1.442695
  %v503 = vpow.pop %v502
  %v504 = vmul.f32 %v387, 1.442695
  %v505 = vpow.pop %v504
  %v506 = vmul.f32 %v388, 1.442695
  %v507 = vpow.pop %v506
  %v508 = vmul.f32 %v389, 1.442695
  %v509 = vpow.pop %v508
  %v510 = vmul.f32 %v390, 1.442695
  %v511 = vpow.pop %v510
  %v512 = vmul.f32 %v391, 1.442695
  %v513 = vpow.pop %v512
  %v514 = vmul.f32 %v392, 1.442695
  %v515 = vpow.pop %v514
  %v516 = vmul.f32 %v393, 1.442695
  %v517 = vpow.pop %v516
  %v518 = vmul.f32 %v394, 1.442695
  %v519 = vpow.pop %v518
  %v520 = vmul.f32 %v395, 1.442695
  %v521 = vpow.pop %v520
  %v522 = vmul.f32 %v396, 1.442695
  %v523 = vpow.pop %v522
  %v524 = vmul.f32 %v397, 1.442695
  %v525 = vpow.pop %v524
  %v526 = vsel %vm140, %v399, 0.0
  %527 = vadd.xlane.f32.xlu0 %v526
  %v528 = vpop.xlane.xlu0 %527
  %v529 = vsel %vm144, %v401, 0.0
  %530 = vadd.xlane.f32.xlu0 %v529
  %v531 = vpop.xlane.xlu0 %530
  %v532 = vsel %vm140, %v403, 0.0
  %533 = vadd.xlane.f32.xlu0 %v532
  %v534 = vpop.xlane.xlu0 %533
  %v535 = vsel %vm144, %v405, 0.0
  %536 = vadd.xlane.f32.xlu0 %v535
  %v537 = vpop.xlane.xlu0 %536
  %v538 = vsel %vm140, %v407, 0.0
  %539 = vadd.xlane.f32.xlu0 %v538
  %v540 = vpop.xlane.xlu0 %539
  %v541 = vsel %vm144, %v409, 0.0
  %542 = vadd.xlane.f32.xlu0 %v541
  %v543 = vpop.xlane.xlu0 %542
  %v544 = vsel %vm140, %v411, 0.0
  %545 = vadd.xlane.f32.xlu0 %v544
  %v546 = vpop.xlane.xlu0 %545
  %v547 = vsel %vm144, %v413, 0.0
  %548 = vadd.xlane.f32.xlu0 %v547
  %v549 = vpop.xlane.xlu0 %548
  %v550 = vsel %vm140, %v415, 0.0
  %551 = vadd.xlane.f32.xlu0 %v550
  %v552 = vpop.xlane.xlu0 %551
  %v553 = vsel %vm144, %v417, 0.0
  %554 = vadd.xlane.f32.xlu0 %v553
  %v555 = vpop.xlane.xlu0 %554
  %v556 = vsel %vm140, %v419, 0.0
  %557 = vadd.xlane.f32.xlu0 %v556
  %v558 = vpop.xlane.xlu0 %557
  %v559 = vsel %vm144, %v421, 0.0
  %560 = vadd.xlane.f32.xlu0 %v559
  %v561 = vpop.xlane.xlu0 %560
  %v562 = vsel %vm140, %v423, 0.0
  %563 = vadd.xlane.f32.xlu0 %v562
  %v564 = vpop.xlane.xlu0 %563
  %v565 = vsel %vm144, %v425, 0.0
  %566 = vadd.xlane.f32.xlu0 %v565
  %v567 = vpop.xlane.xlu0 %566
  %v568 = vsel %vm140, %v427, 0.0
  %569 = vadd.xlane.f32.xlu0 %v568
  %v570 = vpop.xlane.xlu0 %569
  %v571 = vsel %vm144, %v429, 0.0
  %572 = vadd.xlane.f32.xlu0 %v571
  %v573 = vpop.xlane.xlu0 %572
  %v574 = vsel %vm140, %v431, 0.0
  %575 = vadd.xlane.f32.xlu0 %v574
  %v576 = vpop.xlane.xlu0 %575
  %v577 = vsel %vm144, %v433, 0.0
  %578 = vadd.xlane.f32.xlu0 %v577
  %v579 = vpop.xlane.xlu0 %578
  %v580 = vsel %vm140, %v435, 0.0
  %581 = vadd.xlane.f32.xlu0 %v580
  %v582 = vpop.xlane.xlu0 %581
  %v583 = vsel %vm144, %v437, 0.0
  %584 = vadd.xlane.f32.xlu0 %v583
  %v585 = vpop.xlane.xlu0 %584
  %v586 = vsel %vm140, %v439, 0.0
  %587 = vadd.xlane.f32.xlu0 %v586
  %v588 = vpop.xlane.xlu0 %587
  %v589 = vsel %vm144, %v441, 0.0
  %590 = vadd.xlane.f32.xlu0 %v589
  %v591 = vpop.xlane.xlu0 %590
  %v592 = vsel %vm140, %v443, 0.0
  %593 = vadd.xlane.f32.xlu0 %v592
  %v594 = vpop.xlane.xlu0 %593
  %v595 = vsel %vm144, %v445, 0.0
  %596 = vadd.xlane.f32.xlu0 %v595
  %v597 = vpop.xlane.xlu0 %596
  %v598 = vsel %vm140, %v447, 0.0
  %599 = vadd.xlane.f32.xlu0 %v598
  %v600 = vpop.xlane.xlu0 %599
  %v601 = vsel %vm144, %v449, 0.0
  %602 = vadd.xlane.f32.xlu0 %v601
  %v603 = vpop.xlane.xlu0 %602
  %v604 = vsel %vm140, %v451, 0.0
  %605 = vadd.xlane.f32.xlu0 %v604
  %v606 = vpop.xlane.xlu0 %605
  %v607 = vsel %vm144, %v453, 0.0
  %608 = vadd.xlane.f32.xlu0 %v607
  %v609 = vpop.xlane.xlu0 %608
  %v610 = vsel %vm140, %v455, 0.0
  %611 = vadd.xlane.f32.xlu0 %v610
  %v612 = vpop.xlane.xlu0 %611
  %v613 = vsel %vm144, %v457, 0.0
  %614 = vadd.xlane.f32.xlu0 %v613
  %v615 = vpop.xlane.xlu0 %614
  %v616 = vsel %vm140, %v459, 0.0
  %617 = vadd.xlane.f32.xlu0 %v616
  %v618 = vpop.xlane.xlu0 %617
  %v619 = vsel %vm144, %v461, 0.0
  %620 = vadd.xlane.f32.xlu0 %v619
  %v621 = vpop.xlane.xlu0 %620
  %v622 = vsel %vm140, %v463, 0.0
  %623 = vadd.xlane.f32.xlu0 %v622
  %v624 = vpop.xlane.xlu0 %623
  %v625 = vsel %vm144, %v465, 0.0
  %626 = vadd.xlane.f32.xlu0 %v625
  %v627 = vpop.xlane.xlu0 %626
  %v628 = vsel %vm140, %v467, 0.0
  %629 = vadd.xlane.f32.xlu0 %v628
  %v630 = vpop.xlane.xlu0 %629
  %v631 = vsel %vm144, %v469, 0.0
  %632 = vadd.xlane.f32.xlu0 %v631
  %v633 = vpop.xlane.xlu0 %632
  %v634 = vsel %vm140, %v471, 0.0
  %635 = vadd.xlane.f32.xlu0 %v634
  %v636 = vpop.xlane.xlu0 %635
  %v637 = vsel %vm144, %v473, 0.0
  %638 = vadd.xlane.f32.xlu0 %v637
  %v639 = vpop.xlane.xlu0 %638
  %v640 = vsel %vm140, %v475, 0.0
  %641 = vadd.xlane.f32.xlu0 %v640
  %v642 = vpop.xlane.xlu0 %641
  %v643 = vsel %vm144, %v477, 0.0
  %644 = vadd.xlane.f32.xlu0 %v643
  %v645 = vpop.xlane.xlu0 %644
  %v646 = vsel %vm140, %v479, 0.0
  %647 = vadd.xlane.f32.xlu0 %v646
  %v648 = vpop.xlane.xlu0 %647
  %v649 = vsel %vm144, %v481, 0.0
  %650 = vadd.xlane.f32.xlu0 %v649
  %v651 = vpop.xlane.xlu0 %650
  %v652 = vsel %vm140, %v483, 0.0
  %653 = vadd.xlane.f32.xlu0 %v652
  %v654 = vpop.xlane.xlu0 %653
  %v655 = vsel %vm144, %v485, 0.0
  %656 = vadd.xlane.f32.xlu0 %v655
  %v657 = vpop.xlane.xlu0 %656
  %v658 = vsel %vm140, %v487, 0.0
  %659 = vadd.xlane.f32.xlu0 %v658
  %v660 = vpop.xlane.xlu0 %659
  %v661 = vsel %vm144, %v489, 0.0
  %662 = vadd.xlane.f32.xlu0 %v661
  %v663 = vpop.xlane.xlu0 %662
  %v664 = vsel %vm140, %v491, 0.0
  %665 = vadd.xlane.f32.xlu0 %v664
  %v666 = vpop.xlane.xlu0 %665
  %v667 = vsel %vm144, %v493, 0.0
  %668 = vadd.xlane.f32.xlu0 %v667
  %v669 = vpop.xlane.xlu0 %668
  %v670 = vsel %vm140, %v495, 0.0
  %671 = vadd.xlane.f32.xlu0 %v670
  %v672 = vpop.xlane.xlu0 %671
  %v673 = vsel %vm144, %v497, 0.0
  %674 = vadd.xlane.f32.xlu0 %v673
  %v675 = vpop.xlane.xlu0 %674
  %v676 = vsel %vm140, %v499, 0.0
  %677 = vadd.xlane.f32.xlu0 %v676
  %v678 = vpop.xlane.xlu0 %677
  %v679 = vsel %vm144, %v501, 0.0
  %680 = vadd.xlane.f32.xlu0 %v679
  %v681 = vpop.xlane.xlu0 %680
  %v682 = vsel %vm140, %v503, 0.0
  %683 = vadd.xlane.f32.xlu0 %v682
  %v684 = vpop.xlane.xlu0 %683
  %v685 = vsel %vm144, %v505, 0.0
  %686 = vadd.xlane.f32.xlu0 %v685
  %v687 = vpop.xlane.xlu0 %686
  %v688 = vsel %vm140, %v507, 0.0
  %689 = vadd.xlane.f32.xlu0 %v688
  %v690 = vpop.xlane.xlu0 %689
  %v691 = vsel %vm144, %v509, 0.0
  %692 = vadd.xlane.f32.xlu0 %v691
  %v693 = vpop.xlane.xlu0 %692
  %v694 = vsel %vm140, %v511, 0.0
  %695 = vadd.xlane.f32.xlu0 %v694
  %v696 = vpop.xlane.xlu0 %695
  %v697 = vsel %vm144, %v513, 0.0
  %698 = vadd.xlane.f32.xlu0 %v697
  %v699 = vpop.xlane.xlu0 %698
  %v700 = vsel %vm140, %v515, 0.0
  %701 = vadd.xlane.f32.xlu0 %v700
  %v702 = vpop.xlane.xlu0 %701
  %v703 = vsel %vm144, %v517, 0.0
  %704 = vadd.xlane.f32.xlu0 %v703
  %v705 = vpop.xlane.xlu0 %704
  %v706 = vsel %vm140, %v519, 0.0
  %707 = vadd.xlane.f32.xlu0 %v706
  %v708 = vpop.xlane.xlu0 %707
  %v709 = vsel %vm144, %v521, 0.0
  %710 = vadd.xlane.f32.xlu0 %v709
  %v711 = vpop.xlane.xlu0 %710
  %v712 = vsel %vm140, %v523, 0.0
  %713 = vadd.xlane.f32.xlu0 %v712
  %v714 = vpop.xlane.xlu0 %713
  %v715 = vsel %vm144, %v525, 0.0
  %716 = vadd.xlane.f32.xlu0 %v715
  %v717 = vpop.xlane.xlu0 %716
  %v718 = vrcp.pop %v528
  %v719 = vmul.f32 %v528, %v718
  %v720 = vsub.f32 1.0, %v719
  %v721 = vmul.f32 %v718, %v720
  %v722 = vadd.f32 %v718, %v721
  %vm723 = vweird.f32 %v528
  %vm724 = vweird.f32 %v718
  %vm725 = vmor %vm723, %vm724
  %v726 = vsel %vm725, %v718, %v722
  %v727 = vand.u32 2147483647, %v528
  %vm728 = vcmp.eq.f32.partialorder %v727, 8.507059e+37
  %v729 = vand.u32 %v528, 2147483648
  %v730 = vor.u32 1.1754944e-38, %v729
  %v731 = vsel %vm728, %v730, %v726
  %v732 = vmul.f32 %v399, %v731
  %v733 = vrcp.pop %v531
  %v734 = vmul.f32 %v531, %v733
  %v735 = vsub.f32 1.0, %v734
  %v736 = vmul.f32 %v733, %v735
  %v737 = vadd.f32 %v733, %v736
  %vm738 = vweird.f32 %v531
  %vm739 = vweird.f32 %v733
  %vm740 = vmor %vm738, %vm739
  %v741 = vsel %vm740, %v733, %v737
  %v742 = vand.u32 2147483647, %v531
  %vm743 = vcmp.eq.f32.partialorder %v742, 8.507059e+37
  %v744 = vand.u32 %v531, 2147483648
  %v745 = vor.u32 1.1754944e-38, %v744
  %v746 = vsel %vm743, %v745, %v741
  %v747 = vmul.f32 %v401, %v746
  %v748 = vrcp.pop %v534
  %v749 = vmul.f32 %v534, %v748
  %v750 = vsub.f32 1.0, %v749
  %v751 = vmul.f32 %v748, %v750
  %v752 = vadd.f32 %v748, %v751
  %vm753 = vweird.f32 %v534
  %vm754 = vweird.f32 %v748
  %vm755 = vmor %vm753, %vm754
  %v756 = vsel %vm755, %v748, %v752
  %v757 = vand.u32 2147483647, %v534
  %vm758 = vcmp.eq.f32.partialorder %v757, 8.507059e+37
  %v759 = vand.u32 %v534, 2147483648
  %v760 = vor.u32 1.1754944e-38, %v759
  %v761 = vsel %vm758, %v760, %v756
  %v762 = vmul.f32 %v403, %v761
  %v763 = vrcp.pop %v537
  %v764 = vmul.f32 %v537, %v763
  %v765 = vsub.f32 1.0, %v764
  %v766 = vmul.f32 %v763, %v765
  %v767 = vadd.f32 %v763, %v766
  %vm768 = vweird.f32 %v537
  %vm769 = vweird.f32 %v763
  %vm770 = vmor %vm768, %vm769
  %v771 = vsel %vm770, %v763, %v767
  %v772 = vand.u32 2147483647, %v537
  %vm773 = vcmp.eq.f32.partialorder %v772, 8.507059e+37
  %v774 = vand.u32 %v537, 2147483648
  %v775 = vor.u32 1.1754944e-38, %v774
  %v776 = vsel %vm773, %v775, %v771
  %v777 = vmul.f32 %v405, %v776
  %v778 = vrcp.pop %v540
  %v779 = vmul.f32 %v540, %v778
  %v780 = vsub.f32 1.0, %v779
  %v781 = vmul.f32 %v778, %v780
  %v782 = vadd.f32 %v778, %v781
  %vm783 = vweird.f32 %v540
  %vm784 = vweird.f32 %v778
  %vm785 = vmor %vm783, %vm784
  %v786 = vsel %vm785, %v778, %v782
  %v787 = vand.u32 2147483647, %v540
  %vm788 = vcmp.eq.f32.partialorder %v787, 8.507059e+37
  %v789 = vand.u32 %v540, 2147483648
  %v790 = vor.u32 1.1754944e-38, %v789
  %v791 = vsel %vm788, %v790, %v786
  %v792 = vmul.f32 %v407, %v791
  %v793 = vrcp.pop %v543
  %v794 = vmul.f32 %v543, %v793
  %v795 = vsub.f32 1.0, %v794
  %v796 = vmul.f32 %v793, %v795
  %v797 = vadd.f32 %v793, %v796
  %vm798 = vweird.f32 %v543
  %vm799 = vweird.f32 %v793
  %vm800 = vmor %vm798, %vm799
  %v801 = vsel %vm800, %v793, %v797
  %v802 = vand.u32 2147483647, %v543
  %vm803 = vcmp.eq.f32.partialorder %v802, 8.507059e+37
  %v804 = vand.u32 %v543, 2147483648
  %v805 = vor.u32 1.1754944e-38, %v804
  %v806 = vsel %vm803, %v805, %v801
  %v807 = vmul.f32 %v409, %v806
  %v808 = vrcp.pop %v546
  %v809 = vmul.f32 %v546, %v808
  %v810 = vsub.f32 1.0, %v809
  %v811 = vmul.f32 %v808, %v810
  %v812 = vadd.f32 %v808, %v811
  %vm813 = vweird.f32 %v546
  %vm814 = vweird.f32 %v808
  %vm815 = vmor %vm813, %vm814
  %v816 = vsel %vm815, %v808, %v812
  %v817 = vand.u32 2147483647, %v546
  %vm818 = vcmp.eq.f32.partialorder %v817, 8.507059e+37
  %v819 = vand.u32 %v546, 2147483648
  %v820 = vor.u32 1.1754944e-38, %v819
  %v821 = vsel %vm818, %v820, %v816
  %v822 = vmul.f32 %v411, %v821
  %v823 = vrcp.pop %v549
  %v824 = vmul.f32 %v549, %v823
  %v825 = vsub.f32 1.0, %v824
  %v826 = vmul.f32 %v823, %v825
  %v827 = vadd.f32 %v823, %v826
  %vm828 = vweird.f32 %v549
  %vm829 = vweird.f32 %v823
  %vm830 = vmor %vm828, %vm829
  %v831 = vsel %vm830, %v823, %v827
  %v832 = vand.u32 2147483647, %v549
  %vm833 = vcmp.eq.f32.partialorder %v832, 8.507059e+37
  %v834 = vand.u32 %v549, 2147483648
  %v835 = vor.u32 1.1754944e-38, %v834
  %v836 = vsel %vm833, %v835, %v831
  %v837 = vmul.f32 %v413, %v836
  %v838 = vrcp.pop %v552
  %v839 = vmul.f32 %v552, %v838
  %v840 = vsub.f32 1.0, %v839
  %v841 = vmul.f32 %v838, %v840
  %v842 = vadd.f32 %v838, %v841
  %vm843 = vweird.f32 %v552
  %vm844 = vweird.f32 %v838
  %vm845 = vmor %vm843, %vm844
  %v846 = vsel %vm845, %v838, %v842
  %v847 = vand.u32 2147483647, %v552
  %vm848 = vcmp.eq.f32.partialorder %v847, 8.507059e+37
  %v849 = vand.u32 %v552, 2147483648
  %v850 = vor.u32 1.1754944e-38, %v849
  %v851 = vsel %vm848, %v850, %v846
  %v852 = vmul.f32 %v415, %v851
  %v853 = vrcp.pop %v555
  %v854 = vmul.f32 %v555, %v853
  %v855 = vsub.f32 1.0, %v854
  %v856 = vmul.f32 %v853, %v855
  %v857 = vadd.f32 %v853, %v856
  %vm858 = vweird.f32 %v555
  %vm859 = vweird.f32 %v853
  %vm860 = vmor %vm858, %vm859
  %v861 = vsel %vm860, %v853, %v857
  %v862 = vand.u32 2147483647, %v555
  %vm863 = vcmp.eq.f32.partialorder %v862, 8.507059e+37
  %v864 = vand.u32 %v555, 2147483648
  %v865 = vor.u32 1.1754944e-38, %v864
  %v866 = vsel %vm863, %v865, %v861
  %v867 = vmul.f32 %v417, %v866
  %v868 = vrcp.pop %v558
  %v869 = vmul.f32 %v558, %v868
  %v870 = vsub.f32 1.0, %v869
  %v871 = vmul.f32 %v868, %v870
  %v872 = vadd.f32 %v868, %v871
  %vm873 = vweird.f32 %v558
  %vm874 = vweird.f32 %v868
  %vm875 = vmor %vm873, %vm874
  %v876 = vsel %vm875, %v868, %v872
  %v877 = vand.u32 2147483647, %v558
  %vm878 = vcmp.eq.f32.partialorder %v877, 8.507059e+37
  %v879 = vand.u32 %v558, 2147483648
  %v880 = vor.u32 1.1754944e-38, %v879
  %v881 = vsel %vm878, %v880, %v876
  %v882 = vmul.f32 %v419, %v881
  %v883 = vrcp.pop %v561
  %v884 = vmul.f32 %v561, %v883
  %v885 = vsub.f32 1.0, %v884
  %v886 = vmul.f32 %v883, %v885
  %v887 = vadd.f32 %v883, %v886
  %vm888 = vweird.f32 %v561
  %vm889 = vweird.f32 %v883
  %vm890 = vmor %vm888, %vm889
  %v891 = vsel %vm890, %v883, %v887
  %v892 = vand.u32 2147483647, %v561
  %vm893 = vcmp.eq.f32.partialorder %v892, 8.507059e+37
  %v894 = vand.u32 %v561, 2147483648
  %v895 = vor.u32 1.1754944e-38, %v894
  %v896 = vsel %vm893, %v895, %v891
  %v897 = vmul.f32 %v421, %v896
  %v898 = vrcp.pop %v564
  %v899 = vmul.f32 %v564, %v898
  %v900 = vsub.f32 1.0, %v899
  %v901 = vmul.f32 %v898, %v900
  %v902 = vadd.f32 %v898, %v901
  %vm903 = vweird.f32 %v564
  %vm904 = vweird.f32 %v898
  %vm905 = vmor %vm903, %vm904
  %v906 = vsel %vm905, %v898, %v902
  %v907 = vand.u32 2147483647, %v564
  %vm908 = vcmp.eq.f32.partialorder %v907, 8.507059e+37
  %v909 = vand.u32 %v564, 2147483648
  %v910 = vor.u32 1.1754944e-38, %v909
  %v911 = vsel %vm908, %v910, %v906
  %v912 = vmul.f32 %v423, %v911
  %v913 = vrcp.pop %v567
  %v914 = vmul.f32 %v567, %v913
  %v915 = vsub.f32 1.0, %v914
  %v916 = vmul.f32 %v913, %v915
  %v917 = vadd.f32 %v913, %v916
  %vm918 = vweird.f32 %v567
  %vm919 = vweird.f32 %v913
  %vm920 = vmor %vm918, %vm919
  %v921 = vsel %vm920, %v913, %v917
  %v922 = vand.u32 2147483647, %v567
  %vm923 = vcmp.eq.f32.partialorder %v922, 8.507059e+37
  %v924 = vand.u32 %v567, 2147483648
  %v925 = vor.u32 1.1754944e-38, %v924
  %v926 = vsel %vm923, %v925, %v921
  %v927 = vmul.f32 %v425, %v926
  %v928 = vrcp.pop %v570
  %v929 = vmul.f32 %v570, %v928
  %v930 = vsub.f32 1.0, %v929
  %v931 = vmul.f32 %v928, %v930
  %v932 = vadd.f32 %v928, %v931
  %vm933 = vweird.f32 %v570
  %vm934 = vweird.f32 %v928
  %vm935 = vmor %vm933, %vm934
  %v936 = vsel %vm935, %v928, %v932
  %v937 = vand.u32 2147483647, %v570
  %vm938 = vcmp.eq.f32.partialorder %v937, 8.507059e+37
  %v939 = vand.u32 %v570, 2147483648
  %v940 = vor.u32 1.1754944e-38, %v939
  %v941 = vsel %vm938, %v940, %v936
  %v942 = vmul.f32 %v427, %v941
  %v943 = vrcp.pop %v573
  %v944 = vmul.f32 %v573, %v943
  %v945 = vsub.f32 1.0, %v944
  %v946 = vmul.f32 %v943, %v945
  %v947 = vadd.f32 %v943, %v946
  %vm948 = vweird.f32 %v573
  %vm949 = vweird.f32 %v943
  %vm950 = vmor %vm948, %vm949
  %v951 = vsel %vm950, %v943, %v947
  %v952 = vand.u32 2147483647, %v573
  %vm953 = vcmp.eq.f32.partialorder %v952, 8.507059e+37
  %v954 = vand.u32 %v573, 2147483648
  %v955 = vor.u32 1.1754944e-38, %v954
  %v956 = vsel %vm953, %v955, %v951
  %v957 = vmul.f32 %v429, %v956
  %v958 = vrcp.pop %v576
  %v959 = vmul.f32 %v576, %v958
  %v960 = vsub.f32 1.0, %v959
  %v961 = vmul.f32 %v958, %v960
  %v962 = vadd.f32 %v958, %v961
  %vm963 = vweird.f32 %v576
  %vm964 = vweird.f32 %v958
  %vm965 = vmor %vm963, %vm964
  %v966 = vsel %vm965, %v958, %v962
  %v967 = vand.u32 2147483647, %v576
  %vm968 = vcmp.eq.f32.partialorder %v967, 8.507059e+37
  %v969 = vand.u32 %v576, 2147483648
  %v970 = vor.u32 1.1754944e-38, %v969
  %v971 = vsel %vm968, %v970, %v966
  %v972 = vmul.f32 %v431, %v971
  %v973 = vrcp.pop %v579
  %v974 = vmul.f32 %v579, %v973
  %v975 = vsub.f32 1.0, %v974
  %v976 = vmul.f32 %v973, %v975
  %v977 = vadd.f32 %v973, %v976
  %vm978 = vweird.f32 %v579
  %vm979 = vweird.f32 %v973
  %vm980 = vmor %vm978, %vm979
  %v981 = vsel %vm980, %v973, %v977
  %v982 = vand.u32 2147483647, %v579
  %vm983 = vcmp.eq.f32.partialorder %v982, 8.507059e+37
  %v984 = vand.u32 %v579, 2147483648
  %v985 = vor.u32 1.1754944e-38, %v984
  %v986 = vsel %vm983, %v985, %v981
  %v987 = vmul.f32 %v433, %v986
  %v988 = vrcp.pop %v582
  %v989 = vmul.f32 %v582, %v988
  %v990 = vsub.f32 1.0, %v989
  %v991 = vmul.f32 %v988, %v990
  %v992 = vadd.f32 %v988, %v991
  %vm993 = vweird.f32 %v582
  %vm994 = vweird.f32 %v988
  %vm995 = vmor %vm993, %vm994
  %v996 = vsel %vm995, %v988, %v992
  %v997 = vand.u32 2147483647, %v582
  %vm998 = vcmp.eq.f32.partialorder %v997, 8.507059e+37
  %v999 = vand.u32 %v582, 2147483648
  %v1000 = vor.u32 1.1754944e-38, %v999
  %v1001 = vsel %vm998, %v1000, %v996
  %v1002 = vmul.f32 %v435, %v1001
  %v1003 = vrcp.pop %v585
  %v1004 = vmul.f32 %v585, %v1003
  %v1005 = vsub.f32 1.0, %v1004
  %v1006 = vmul.f32 %v1003, %v1005
  %v1007 = vadd.f32 %v1003, %v1006
  %vm1008 = vweird.f32 %v585
  %vm1009 = vweird.f32 %v1003
  %vm1010 = vmor %vm1008, %vm1009
  %v1011 = vsel %vm1010, %v1003, %v1007
  %v1012 = vand.u32 2147483647, %v585
  %vm1013 = vcmp.eq.f32.partialorder %v1012, 8.507059e+37
  %v1014 = vand.u32 %v585, 2147483648
  %v1015 = vor.u32 1.1754944e-38, %v1014
  %v1016 = vsel %vm1013, %v1015, %v1011
  %v1017 = vmul.f32 %v437, %v1016
  %v1018 = vrcp.pop %v588
  %v1019 = vmul.f32 %v588, %v1018
  %v1020 = vsub.f32 1.0, %v1019
  %v1021 = vmul.f32 %v1018, %v1020
  %v1022 = vadd.f32 %v1018, %v1021
  %vm1023 = vweird.f32 %v588
  %vm1024 = vweird.f32 %v1018
  %vm1025 = vmor %vm1023, %vm1024
  %v1026 = vsel %vm1025, %v1018, %v1022
  %v1027 = vand.u32 2147483647, %v588
  %vm1028 = vcmp.eq.f32.partialorder %v1027, 8.507059e+37
  %v1029 = vand.u32 %v588, 2147483648
  %v1030 = vor.u32 1.1754944e-38, %v1029
  %v1031 = vsel %vm1028, %v1030, %v1026
  %v1032 = vmul.f32 %v439, %v1031
  %v1033 = vrcp.pop %v591
  %v1034 = vmul.f32 %v591, %v1033
  %v1035 = vsub.f32 1.0, %v1034
  %v1036 = vmul.f32 %v1033, %v1035
  %v1037 = vadd.f32 %v1033, %v1036
  %vm1038 = vweird.f32 %v591
  %vm1039 = vweird.f32 %v1033
  %vm1040 = vmor %vm1038, %vm1039
  %v1041 = vsel %vm1040, %v1033, %v1037
  %v1042 = vand.u32 2147483647, %v591
  %vm1043 = vcmp.eq.f32.partialorder %v1042, 8.507059e+37
  %v1044 = vand.u32 %v591, 2147483648
  %v1045 = vor.u32 1.1754944e-38, %v1044
  %v1046 = vsel %vm1043, %v1045, %v1041
  %v1047 = vmul.f32 %v441, %v1046
  %v1048 = vrcp.pop %v594
  %v1049 = vmul.f32 %v594, %v1048
  %v1050 = vsub.f32 1.0, %v1049
  %v1051 = vmul.f32 %v1048, %v1050
  %v1052 = vadd.f32 %v1048, %v1051
  %vm1053 = vweird.f32 %v594
  %vm1054 = vweird.f32 %v1048
  %vm1055 = vmor %vm1053, %vm1054
  %v1056 = vsel %vm1055, %v1048, %v1052
  %v1057 = vand.u32 2147483647, %v594
  %vm1058 = vcmp.eq.f32.partialorder %v1057, 8.507059e+37
  %v1059 = vand.u32 %v594, 2147483648
  %v1060 = vor.u32 1.1754944e-38, %v1059
  %v1061 = vsel %vm1058, %v1060, %v1056
  %v1062 = vmul.f32 %v443, %v1061
  %v1063 = vrcp.pop %v597
  %v1064 = vmul.f32 %v597, %v1063
  %v1065 = vsub.f32 1.0, %v1064
  %v1066 = vmul.f32 %v1063, %v1065
  %v1067 = vadd.f32 %v1063, %v1066
  %vm1068 = vweird.f32 %v597
  %vm1069 = vweird.f32 %v1063
  %vm1070 = vmor %vm1068, %vm1069
  %v1071 = vsel %vm1070, %v1063, %v1067
  %v1072 = vand.u32 2147483647, %v597
  %vm1073 = vcmp.eq.f32.partialorder %v1072, 8.507059e+37
  %v1074 = vand.u32 %v597, 2147483648
  %v1075 = vor.u32 1.1754944e-38, %v1074
  %v1076 = vsel %vm1073, %v1075, %v1071
  %v1077 = vmul.f32 %v445, %v1076
  %v1078 = vrcp.pop %v600
  %v1079 = vmul.f32 %v600, %v1078
  %v1080 = vsub.f32 1.0, %v1079
  %v1081 = vmul.f32 %v1078, %v1080
  %v1082 = vadd.f32 %v1078, %v1081
  %vm1083 = vweird.f32 %v600
  %vm1084 = vweird.f32 %v1078
  %vm1085 = vmor %vm1083, %vm1084
  %v1086 = vsel %vm1085, %v1078, %v1082
  %v1087 = vand.u32 2147483647, %v600
  %vm1088 = vcmp.eq.f32.partialorder %v1087, 8.507059e+37
  %v1089 = vand.u32 %v600, 2147483648
  %v1090 = vor.u32 1.1754944e-38, %v1089
  %v1091 = vsel %vm1088, %v1090, %v1086
  %v1092 = vmul.f32 %v447, %v1091
  %v1093 = vrcp.pop %v603
  %v1094 = vmul.f32 %v603, %v1093
  %v1095 = vsub.f32 1.0, %v1094
  %v1096 = vmul.f32 %v1093, %v1095
  %v1097 = vadd.f32 %v1093, %v1096
  %vm1098 = vweird.f32 %v603
  %vm1099 = vweird.f32 %v1093
  %vm1100 = vmor %vm1098, %vm1099
  %v1101 = vsel %vm1100, %v1093, %v1097
  %v1102 = vand.u32 2147483647, %v603
  %vm1103 = vcmp.eq.f32.partialorder %v1102, 8.507059e+37
  %v1104 = vand.u32 %v603, 2147483648
  %v1105 = vor.u32 1.1754944e-38, %v1104
  %v1106 = vsel %vm1103, %v1105, %v1101
  %v1107 = vmul.f32 %v449, %v1106
  %v1108 = vrcp.pop %v606
  %v1109 = vmul.f32 %v606, %v1108
  %v1110 = vsub.f32 1.0, %v1109
  %v1111 = vmul.f32 %v1108, %v1110
  %v1112 = vadd.f32 %v1108, %v1111
  %vm1113 = vweird.f32 %v606
  %vm1114 = vweird.f32 %v1108
  %vm1115 = vmor %vm1113, %vm1114
  %v1116 = vsel %vm1115, %v1108, %v1112
  %v1117 = vand.u32 2147483647, %v606
  %vm1118 = vcmp.eq.f32.partialorder %v1117, 8.507059e+37
  %v1119 = vand.u32 %v606, 2147483648
  %v1120 = vor.u32 1.1754944e-38, %v1119
  %v1121 = vsel %vm1118, %v1120, %v1116
  %v1122 = vmul.f32 %v451, %v1121
  %v1123 = vrcp.pop %v609
  %v1124 = vmul.f32 %v609, %v1123
  %v1125 = vsub.f32 1.0, %v1124
  %v1126 = vmul.f32 %v1123, %v1125
  %v1127 = vadd.f32 %v1123, %v1126
  %vm1128 = vweird.f32 %v609
  %vm1129 = vweird.f32 %v1123
  %vm1130 = vmor %vm1128, %vm1129
  %v1131 = vsel %vm1130, %v1123, %v1127
  %v1132 = vand.u32 2147483647, %v609
  %vm1133 = vcmp.eq.f32.partialorder %v1132, 8.507059e+37
  %v1134 = vand.u32 %v609, 2147483648
  %v1135 = vor.u32 1.1754944e-38, %v1134
  %v1136 = vsel %vm1133, %v1135, %v1131
  %v1137 = vmul.f32 %v453, %v1136
  %v1138 = vrcp.pop %v612
  %v1139 = vmul.f32 %v612, %v1138
  %v1140 = vsub.f32 1.0, %v1139
  %v1141 = vmul.f32 %v1138, %v1140
  %v1142 = vadd.f32 %v1138, %v1141
  %vm1143 = vweird.f32 %v612
  %vm1144 = vweird.f32 %v1138
  %vm1145 = vmor %vm1143, %vm1144
  %v1146 = vsel %vm1145, %v1138, %v1142
  %v1147 = vand.u32 2147483647, %v612
  %vm1148 = vcmp.eq.f32.partialorder %v1147, 8.507059e+37
  %v1149 = vand.u32 %v612, 2147483648
  %v1150 = vor.u32 1.1754944e-38, %v1149
  %v1151 = vsel %vm1148, %v1150, %v1146
  %v1152 = vmul.f32 %v455, %v1151
  %v1153 = vrcp.pop %v615
  %v1154 = vmul.f32 %v615, %v1153
  %v1155 = vsub.f32 1.0, %v1154
  %v1156 = vmul.f32 %v1153, %v1155
  %v1157 = vadd.f32 %v1153, %v1156
  %vm1158 = vweird.f32 %v615
  %vm1159 = vweird.f32 %v1153
  %vm1160 = vmor %vm1158, %vm1159
  %v1161 = vsel %vm1160, %v1153, %v1157
  %v1162 = vand.u32 2147483647, %v615
  %vm1163 = vcmp.eq.f32.partialorder %v1162, 8.507059e+37
  %v1164 = vand.u32 %v615, 2147483648
  %v1165 = vor.u32 1.1754944e-38, %v1164
  %v1166 = vsel %vm1163, %v1165, %v1161
  %v1167 = vmul.f32 %v457, %v1166
  %v1168 = vrcp.pop %v618
  %v1169 = vmul.f32 %v618, %v1168
  %v1170 = vsub.f32 1.0, %v1169
  %v1171 = vmul.f32 %v1168, %v1170
  %v1172 = vadd.f32 %v1168, %v1171
  %vm1173 = vweird.f32 %v618
  %vm1174 = vweird.f32 %v1168
  %vm1175 = vmor %vm1173, %vm1174
  %v1176 = vsel %vm1175, %v1168, %v1172
  %v1177 = vand.u32 2147483647, %v618
  %vm1178 = vcmp.eq.f32.partialorder %v1177, 8.507059e+37
  %v1179 = vand.u32 %v618, 2147483648
  %v1180 = vor.u32 1.1754944e-38, %v1179
  %v1181 = vsel %vm1178, %v1180, %v1176
  %v1182 = vmul.f32 %v459, %v1181
  %v1183 = vrcp.pop %v621
  %v1184 = vmul.f32 %v621, %v1183
  %v1185 = vsub.f32 1.0, %v1184
  %v1186 = vmul.f32 %v1183, %v1185
  %v1187 = vadd.f32 %v1183, %v1186
  %vm1188 = vweird.f32 %v621
  %vm1189 = vweird.f32 %v1183
  %vm1190 = vmor %vm1188, %vm1189
  %v1191 = vsel %vm1190, %v1183, %v1187
  %v1192 = vand.u32 2147483647, %v621
  %vm1193 = vcmp.eq.f32.partialorder %v1192, 8.507059e+37
  %v1194 = vand.u32 %v621, 2147483648
  %v1195 = vor.u32 1.1754944e-38, %v1194
  %v1196 = vsel %vm1193, %v1195, %v1191
  %v1197 = vmul.f32 %v461, %v1196
  %v1198 = vrcp.pop %v624
  %v1199 = vmul.f32 %v624, %v1198
  %v1200 = vsub.f32 1.0, %v1199
  %v1201 = vmul.f32 %v1198, %v1200
  %v1202 = vadd.f32 %v1198, %v1201
  %vm1203 = vweird.f32 %v624
  %vm1204 = vweird.f32 %v1198
  %vm1205 = vmor %vm1203, %vm1204
  %v1206 = vsel %vm1205, %v1198, %v1202
  %v1207 = vand.u32 2147483647, %v624
  %vm1208 = vcmp.eq.f32.partialorder %v1207, 8.507059e+37
  %v1209 = vand.u32 %v624, 2147483648
  %v1210 = vor.u32 1.1754944e-38, %v1209
  %v1211 = vsel %vm1208, %v1210, %v1206
  %v1212 = vmul.f32 %v463, %v1211
  %v1213 = vrcp.pop %v627
  %v1214 = vmul.f32 %v627, %v1213
  %v1215 = vsub.f32 1.0, %v1214
  %v1216 = vmul.f32 %v1213, %v1215
  %v1217 = vadd.f32 %v1213, %v1216
  %vm1218 = vweird.f32 %v627
  %vm1219 = vweird.f32 %v1213
  %vm1220 = vmor %vm1218, %vm1219
  %v1221 = vsel %vm1220, %v1213, %v1217
  %v1222 = vand.u32 2147483647, %v627
  %vm1223 = vcmp.eq.f32.partialorder %v1222, 8.507059e+37
  %v1224 = vand.u32 %v627, 2147483648
  %v1225 = vor.u32 1.1754944e-38, %v1224
  %v1226 = vsel %vm1223, %v1225, %v1221
  %v1227 = vmul.f32 %v465, %v1226
  %v1228 = vrcp.pop %v630
  %v1229 = vmul.f32 %v630, %v1228
  %v1230 = vsub.f32 1.0, %v1229
  %v1231 = vmul.f32 %v1228, %v1230
  %v1232 = vadd.f32 %v1228, %v1231
  %vm1233 = vweird.f32 %v630
  %vm1234 = vweird.f32 %v1228
  %vm1235 = vmor %vm1233, %vm1234
  %v1236 = vsel %vm1235, %v1228, %v1232
  %v1237 = vand.u32 2147483647, %v630
  %vm1238 = vcmp.eq.f32.partialorder %v1237, 8.507059e+37
  %v1239 = vand.u32 %v630, 2147483648
  %v1240 = vor.u32 1.1754944e-38, %v1239
  %v1241 = vsel %vm1238, %v1240, %v1236
  %v1242 = vmul.f32 %v467, %v1241
  %v1243 = vrcp.pop %v633
  %v1244 = vmul.f32 %v633, %v1243
  %v1245 = vsub.f32 1.0, %v1244
  %v1246 = vmul.f32 %v1243, %v1245
  %v1247 = vadd.f32 %v1243, %v1246
  %vm1248 = vweird.f32 %v633
  %vm1249 = vweird.f32 %v1243
  %vm1250 = vmor %vm1248, %vm1249
  %v1251 = vsel %vm1250, %v1243, %v1247
  %v1252 = vand.u32 2147483647, %v633
  %vm1253 = vcmp.eq.f32.partialorder %v1252, 8.507059e+37
  %v1254 = vand.u32 %v633, 2147483648
  %v1255 = vor.u32 1.1754944e-38, %v1254
  %v1256 = vsel %vm1253, %v1255, %v1251
  %v1257 = vmul.f32 %v469, %v1256
  %v1258 = vrcp.pop %v636
  %v1259 = vmul.f32 %v636, %v1258
  %v1260 = vsub.f32 1.0, %v1259
  %v1261 = vmul.f32 %v1258, %v1260
  %v1262 = vadd.f32 %v1258, %v1261
  %vm1263 = vweird.f32 %v636
  %vm1264 = vweird.f32 %v1258
  %vm1265 = vmor %vm1263, %vm1264
  %v1266 = vsel %vm1265, %v1258, %v1262
  %v1267 = vand.u32 2147483647, %v636
  %vm1268 = vcmp.eq.f32.partialorder %v1267, 8.507059e+37
  %v1269 = vand.u32 %v636, 2147483648
  %v1270 = vor.u32 1.1754944e-38, %v1269
  %v1271 = vsel %vm1268, %v1270, %v1266
  %v1272 = vmul.f32 %v471, %v1271
  %v1273 = vrcp.pop %v639
  %v1274 = vmul.f32 %v639, %v1273
  %v1275 = vsub.f32 1.0, %v1274
  %v1276 = vmul.f32 %v1273, %v1275
  %v1277 = vadd.f32 %v1273, %v1276
  %vm1278 = vweird.f32 %v639
  %vm1279 = vweird.f32 %v1273
  %vm1280 = vmor %vm1278, %vm1279
  %v1281 = vsel %vm1280, %v1273, %v1277
  %v1282 = vand.u32 2147483647, %v639
  %vm1283 = vcmp.eq.f32.partialorder %v1282, 8.507059e+37
  %v1284 = vand.u32 %v639, 2147483648
  %v1285 = vor.u32 1.1754944e-38, %v1284
  %v1286 = vsel %vm1283, %v1285, %v1281
  %v1287 = vmul.f32 %v473, %v1286
  %v1288 = vrcp.pop %v642
  %v1289 = vmul.f32 %v642, %v1288
  %v1290 = vsub.f32 1.0, %v1289
  %v1291 = vmul.f32 %v1288, %v1290
  %v1292 = vadd.f32 %v1288, %v1291
  %vm1293 = vweird.f32 %v642
  %vm1294 = vweird.f32 %v1288
  %vm1295 = vmor %vm1293, %vm1294
  %v1296 = vsel %vm1295, %v1288, %v1292
  %v1297 = vand.u32 2147483647, %v642
  %vm1298 = vcmp.eq.f32.partialorder %v1297, 8.507059e+37
  %v1299 = vand.u32 %v642, 2147483648
  %v1300 = vor.u32 1.1754944e-38, %v1299
  %v1301 = vsel %vm1298, %v1300, %v1296
  %v1302 = vmul.f32 %v475, %v1301
  %v1303 = vrcp.pop %v645
  %v1304 = vmul.f32 %v645, %v1303
  %v1305 = vsub.f32 1.0, %v1304
  %v1306 = vmul.f32 %v1303, %v1305
  %v1307 = vadd.f32 %v1303, %v1306
  %vm1308 = vweird.f32 %v645
  %vm1309 = vweird.f32 %v1303
  %vm1310 = vmor %vm1308, %vm1309
  %v1311 = vsel %vm1310, %v1303, %v1307
  %v1312 = vand.u32 2147483647, %v645
  %vm1313 = vcmp.eq.f32.partialorder %v1312, 8.507059e+37
  %v1314 = vand.u32 %v645, 2147483648
  %v1315 = vor.u32 1.1754944e-38, %v1314
  %v1316 = vsel %vm1313, %v1315, %v1311
  %v1317 = vmul.f32 %v477, %v1316
  %v1318 = vrcp.pop %v648
  %v1319 = vmul.f32 %v648, %v1318
  %v1320 = vsub.f32 1.0, %v1319
  %v1321 = vmul.f32 %v1318, %v1320
  %v1322 = vadd.f32 %v1318, %v1321
  %vm1323 = vweird.f32 %v648
  %vm1324 = vweird.f32 %v1318
  %vm1325 = vmor %vm1323, %vm1324
  %v1326 = vsel %vm1325, %v1318, %v1322
  %v1327 = vand.u32 2147483647, %v648
  %vm1328 = vcmp.eq.f32.partialorder %v1327, 8.507059e+37
  %v1329 = vand.u32 %v648, 2147483648
  %v1330 = vor.u32 1.1754944e-38, %v1329
  %v1331 = vsel %vm1328, %v1330, %v1326
  %v1332 = vmul.f32 %v479, %v1331
  %v1333 = vrcp.pop %v651
  %v1334 = vmul.f32 %v651, %v1333
  %v1335 = vsub.f32 1.0, %v1334
  %v1336 = vmul.f32 %v1333, %v1335
  %v1337 = vadd.f32 %v1333, %v1336
  %vm1338 = vweird.f32 %v651
  %vm1339 = vweird.f32 %v1333
  %vm1340 = vmor %vm1338, %vm1339
  %v1341 = vsel %vm1340, %v1333, %v1337
  %v1342 = vand.u32 2147483647, %v651
  %vm1343 = vcmp.eq.f32.partialorder %v1342, 8.507059e+37
  %v1344 = vand.u32 %v651, 2147483648
  %v1345 = vor.u32 1.1754944e-38, %v1344
  %v1346 = vsel %vm1343, %v1345, %v1341
  %v1347 = vmul.f32 %v481, %v1346
  %v1348 = vrcp.pop %v654
  %v1349 = vmul.f32 %v654, %v1348
  %v1350 = vsub.f32 1.0, %v1349
  %v1351 = vmul.f32 %v1348, %v1350
  %v1352 = vadd.f32 %v1348, %v1351
  %vm1353 = vweird.f32 %v654
  %vm1354 = vweird.f32 %v1348
  %vm1355 = vmor %vm1353, %vm1354
  %v1356 = vsel %vm1355, %v1348, %v1352
  %v1357 = vand.u32 2147483647, %v654
  %vm1358 = vcmp.eq.f32.partialorder %v1357, 8.507059e+37
  %v1359 = vand.u32 %v654, 2147483648
  %v1360 = vor.u32 1.1754944e-38, %v1359
  %v1361 = vsel %vm1358, %v1360, %v1356
  %v1362 = vmul.f32 %v483, %v1361
  %v1363 = vrcp.pop %v657
  %v1364 = vmul.f32 %v657, %v1363
  %v1365 = vsub.f32 1.0, %v1364
  %v1366 = vmul.f32 %v1363, %v1365
  %v1367 = vadd.f32 %v1363, %v1366
  %vm1368 = vweird.f32 %v657
  %vm1369 = vweird.f32 %v1363
  %vm1370 = vmor %vm1368, %vm1369
  %v1371 = vsel %vm1370, %v1363, %v1367
  %v1372 = vand.u32 2147483647, %v657
  %vm1373 = vcmp.eq.f32.partialorder %v1372, 8.507059e+37
  %v1374 = vand.u32 %v657, 2147483648
  %v1375 = vor.u32 1.1754944e-38, %v1374
  %v1376 = vsel %vm1373, %v1375, %v1371
  %v1377 = vmul.f32 %v485, %v1376
  %v1378 = vrcp.pop %v660
  %v1379 = vmul.f32 %v660, %v1378
  %v1380 = vsub.f32 1.0, %v1379
  %v1381 = vmul.f32 %v1378, %v1380
  %v1382 = vadd.f32 %v1378, %v1381
  %vm1383 = vweird.f32 %v660
  %vm1384 = vweird.f32 %v1378
  %vm1385 = vmor %vm1383, %vm1384
  %v1386 = vsel %vm1385, %v1378, %v1382
  %v1387 = vand.u32 2147483647, %v660
  %vm1388 = vcmp.eq.f32.partialorder %v1387, 8.507059e+37
  %v1389 = vand.u32 %v660, 2147483648
  %v1390 = vor.u32 1.1754944e-38, %v1389
  %v1391 = vsel %vm1388, %v1390, %v1386
  %v1392 = vmul.f32 %v487, %v1391
  %v1393 = vrcp.pop %v663
  %v1394 = vmul.f32 %v663, %v1393
  %v1395 = vsub.f32 1.0, %v1394
  %v1396 = vmul.f32 %v1393, %v1395
  %v1397 = vadd.f32 %v1393, %v1396
  %vm1398 = vweird.f32 %v663
  %vm1399 = vweird.f32 %v1393
  %vm1400 = vmor %vm1398, %vm1399
  %v1401 = vsel %vm1400, %v1393, %v1397
  %v1402 = vand.u32 2147483647, %v663
  %vm1403 = vcmp.eq.f32.partialorder %v1402, 8.507059e+37
  %v1404 = vand.u32 %v663, 2147483648
  %v1405 = vor.u32 1.1754944e-38, %v1404
  %v1406 = vsel %vm1403, %v1405, %v1401
  %v1407 = vmul.f32 %v489, %v1406
  %v1408 = vrcp.pop %v666
  %v1409 = vmul.f32 %v666, %v1408
  %v1410 = vsub.f32 1.0, %v1409
  %v1411 = vmul.f32 %v1408, %v1410
  %v1412 = vadd.f32 %v1408, %v1411
  %vm1413 = vweird.f32 %v666
  %vm1414 = vweird.f32 %v1408
  %vm1415 = vmor %vm1413, %vm1414
  %v1416 = vsel %vm1415, %v1408, %v1412
  %v1417 = vand.u32 2147483647, %v666
  %vm1418 = vcmp.eq.f32.partialorder %v1417, 8.507059e+37
  %v1419 = vand.u32 %v666, 2147483648
  %v1420 = vor.u32 1.1754944e-38, %v1419
  %v1421 = vsel %vm1418, %v1420, %v1416
  %v1422 = vmul.f32 %v491, %v1421
  %v1423 = vrcp.pop %v669
  %v1424 = vmul.f32 %v669, %v1423
  %v1425 = vsub.f32 1.0, %v1424
  %v1426 = vmul.f32 %v1423, %v1425
  %v1427 = vadd.f32 %v1423, %v1426
  %vm1428 = vweird.f32 %v669
  %vm1429 = vweird.f32 %v1423
  %vm1430 = vmor %vm1428, %vm1429
  %v1431 = vsel %vm1430, %v1423, %v1427
  %v1432 = vand.u32 2147483647, %v669
  %vm1433 = vcmp.eq.f32.partialorder %v1432, 8.507059e+37
  %v1434 = vand.u32 %v669, 2147483648
  %v1435 = vor.u32 1.1754944e-38, %v1434
  %v1436 = vsel %vm1433, %v1435, %v1431
  %v1437 = vmul.f32 %v493, %v1436
  %v1438 = vrcp.pop %v672
  %v1439 = vmul.f32 %v672, %v1438
  %v1440 = vsub.f32 1.0, %v1439
  %v1441 = vmul.f32 %v1438, %v1440
  %v1442 = vadd.f32 %v1438, %v1441
  %vm1443 = vweird.f32 %v672
  %vm1444 = vweird.f32 %v1438
  %vm1445 = vmor %vm1443, %vm1444
  %v1446 = vsel %vm1445, %v1438, %v1442
  %v1447 = vand.u32 2147483647, %v672
  %vm1448 = vcmp.eq.f32.partialorder %v1447, 8.507059e+37
  %v1449 = vand.u32 %v672, 2147483648
  %v1450 = vor.u32 1.1754944e-38, %v1449
  %v1451 = vsel %vm1448, %v1450, %v1446
  %v1452 = vmul.f32 %v495, %v1451
  %v1453 = vrcp.pop %v675
  %v1454 = vmul.f32 %v675, %v1453
  %v1455 = vsub.f32 1.0, %v1454
  %v1456 = vmul.f32 %v1453, %v1455
  %v1457 = vadd.f32 %v1453, %v1456
  %vm1458 = vweird.f32 %v675
  %vm1459 = vweird.f32 %v1453
  %vm1460 = vmor %vm1458, %vm1459
  %v1461 = vsel %vm1460, %v1453, %v1457
  %v1462 = vand.u32 2147483647, %v675
  %vm1463 = vcmp.eq.f32.partialorder %v1462, 8.507059e+37
  %v1464 = vand.u32 %v675, 2147483648
  %v1465 = vor.u32 1.1754944e-38, %v1464
  %v1466 = vsel %vm1463, %v1465, %v1461
  %v1467 = vmul.f32 %v497, %v1466
  %v1468 = vrcp.pop %v678
  %v1469 = vmul.f32 %v678, %v1468
  %v1470 = vsub.f32 1.0, %v1469
  %v1471 = vmul.f32 %v1468, %v1470
  %v1472 = vadd.f32 %v1468, %v1471
  %vm1473 = vweird.f32 %v678
  %vm1474 = vweird.f32 %v1468
  %vm1475 = vmor %vm1473, %vm1474
  %v1476 = vsel %vm1475, %v1468, %v1472
  %v1477 = vand.u32 2147483647, %v678
  %vm1478 = vcmp.eq.f32.partialorder %v1477, 8.507059e+37
  %v1479 = vand.u32 %v678, 2147483648
  %v1480 = vor.u32 1.1754944e-38, %v1479
  %v1481 = vsel %vm1478, %v1480, %v1476
  %v1482 = vmul.f32 %v499, %v1481
  %v1483 = vrcp.pop %v681
  %v1484 = vmul.f32 %v681, %v1483
  %v1485 = vsub.f32 1.0, %v1484
  %v1486 = vmul.f32 %v1483, %v1485
  %v1487 = vadd.f32 %v1483, %v1486
  %vm1488 = vweird.f32 %v681
  %vm1489 = vweird.f32 %v1483
  %vm1490 = vmor %vm1488, %vm1489
  %v1491 = vsel %vm1490, %v1483, %v1487
  %v1492 = vand.u32 2147483647, %v681
  %vm1493 = vcmp.eq.f32.partialorder %v1492, 8.507059e+37
  %v1494 = vand.u32 %v681, 2147483648
  %v1495 = vor.u32 1.1754944e-38, %v1494
  %v1496 = vsel %vm1493, %v1495, %v1491
  %v1497 = vmul.f32 %v501, %v1496
  %v1498 = vrcp.pop %v684
  %v1499 = vmul.f32 %v684, %v1498
  %v1500 = vsub.f32 1.0, %v1499
  %v1501 = vmul.f32 %v1498, %v1500
  %v1502 = vadd.f32 %v1498, %v1501
  %vm1503 = vweird.f32 %v684
  %vm1504 = vweird.f32 %v1498
  %vm1505 = vmor %vm1503, %vm1504
  %v1506 = vsel %vm1505, %v1498, %v1502
  %v1507 = vand.u32 2147483647, %v684
  %vm1508 = vcmp.eq.f32.partialorder %v1507, 8.507059e+37
  %v1509 = vand.u32 %v684, 2147483648
  %v1510 = vor.u32 1.1754944e-38, %v1509
  %v1511 = vsel %vm1508, %v1510, %v1506
  %v1512 = vmul.f32 %v503, %v1511
  %v1513 = vrcp.pop %v687
  %v1514 = vmul.f32 %v687, %v1513
  %v1515 = vsub.f32 1.0, %v1514
  %v1516 = vmul.f32 %v1513, %v1515
  %v1517 = vadd.f32 %v1513, %v1516
  %vm1518 = vweird.f32 %v687
  %vm1519 = vweird.f32 %v1513
  %vm1520 = vmor %vm1518, %vm1519
  %v1521 = vsel %vm1520, %v1513, %v1517
  %v1522 = vand.u32 2147483647, %v687
  %vm1523 = vcmp.eq.f32.partialorder %v1522, 8.507059e+37
  %v1524 = vand.u32 %v687, 2147483648
  %v1525 = vor.u32 1.1754944e-38, %v1524
  %v1526 = vsel %vm1523, %v1525, %v1521
  %v1527 = vmul.f32 %v505, %v1526
  %v1528 = vrcp.pop %v690
  %v1529 = vmul.f32 %v690, %v1528
  %v1530 = vsub.f32 1.0, %v1529
  %v1531 = vmul.f32 %v1528, %v1530
  %v1532 = vadd.f32 %v1528, %v1531
  %vm1533 = vweird.f32 %v690
  %vm1534 = vweird.f32 %v1528
  %vm1535 = vmor %vm1533, %vm1534
  %v1536 = vsel %vm1535, %v1528, %v1532
  %v1537 = vand.u32 2147483647, %v690
  %vm1538 = vcmp.eq.f32.partialorder %v1537, 8.507059e+37
  %v1539 = vand.u32 %v690, 2147483648
  %v1540 = vor.u32 1.1754944e-38, %v1539
  %v1541 = vsel %vm1538, %v1540, %v1536
  %v1542 = vmul.f32 %v507, %v1541
  %v1543 = vrcp.pop %v693
  %v1544 = vmul.f32 %v693, %v1543
  %v1545 = vsub.f32 1.0, %v1544
  %v1546 = vmul.f32 %v1543, %v1545
  %v1547 = vadd.f32 %v1543, %v1546
  %vm1548 = vweird.f32 %v693
  %vm1549 = vweird.f32 %v1543
  %vm1550 = vmor %vm1548, %vm1549
  %v1551 = vsel %vm1550, %v1543, %v1547
  %v1552 = vand.u32 2147483647, %v693
  %vm1553 = vcmp.eq.f32.partialorder %v1552, 8.507059e+37
  %v1554 = vand.u32 %v693, 2147483648
  %v1555 = vor.u32 1.1754944e-38, %v1554
  %v1556 = vsel %vm1553, %v1555, %v1551
  %v1557 = vmul.f32 %v509, %v1556
  %v1558 = vrcp.pop %v696
  %v1559 = vmul.f32 %v696, %v1558
  %v1560 = vsub.f32 1.0, %v1559
  %v1561 = vmul.f32 %v1558, %v1560
  %v1562 = vadd.f32 %v1558, %v1561
  %vm1563 = vweird.f32 %v696
  %vm1564 = vweird.f32 %v1558
  %vm1565 = vmor %vm1563, %vm1564
  %v1566 = vsel %vm1565, %v1558, %v1562
  %v1567 = vand.u32 2147483647, %v696
  %vm1568 = vcmp.eq.f32.partialorder %v1567, 8.507059e+37
  %v1569 = vand.u32 %v696, 2147483648
  %v1570 = vor.u32 1.1754944e-38, %v1569
  %v1571 = vsel %vm1568, %v1570, %v1566
  %v1572 = vmul.f32 %v511, %v1571
  %v1573 = vrcp.pop %v699
  %v1574 = vmul.f32 %v699, %v1573
  %v1575 = vsub.f32 1.0, %v1574
  %v1576 = vmul.f32 %v1573, %v1575
  %v1577 = vadd.f32 %v1573, %v1576
  %vm1578 = vweird.f32 %v699
  %vm1579 = vweird.f32 %v1573
  %vm1580 = vmor %vm1578, %vm1579
  %v1581 = vsel %vm1580, %v1573, %v1577
  %v1582 = vand.u32 2147483647, %v699
  %vm1583 = vcmp.eq.f32.partialorder %v1582, 8.507059e+37
  %v1584 = vand.u32 %v699, 2147483648
  %v1585 = vor.u32 1.1754944e-38, %v1584
  %v1586 = vsel %vm1583, %v1585, %v1581
  %v1587 = vmul.f32 %v513, %v1586
  %v1588 = vrcp.pop %v702
  %v1589 = vmul.f32 %v702, %v1588
  %v1590 = vsub.f32 1.0, %v1589
  %v1591 = vmul.f32 %v1588, %v1590
  %v1592 = vadd.f32 %v1588, %v1591
  %vm1593 = vweird.f32 %v702
  %vm1594 = vweird.f32 %v1588
  %vm1595 = vmor %vm1593, %vm1594
  %v1596 = vsel %vm1595, %v1588, %v1592
  %v1597 = vand.u32 2147483647, %v702
  %vm1598 = vcmp.eq.f32.partialorder %v1597, 8.507059e+37
  %v1599 = vand.u32 %v702, 2147483648
  %v1600 = vor.u32 1.1754944e-38, %v1599
  %v1601 = vsel %vm1598, %v1600, %v1596
  %v1602 = vmul.f32 %v515, %v1601
  %v1603 = vrcp.pop %v705
  %v1604 = vmul.f32 %v705, %v1603
  %v1605 = vsub.f32 1.0, %v1604
  %v1606 = vmul.f32 %v1603, %v1605
  %v1607 = vadd.f32 %v1603, %v1606
  %vm1608 = vweird.f32 %v705
  %vm1609 = vweird.f32 %v1603
  %vm1610 = vmor %vm1608, %vm1609
  %v1611 = vsel %vm1610, %v1603, %v1607
  %v1612 = vand.u32 2147483647, %v705
  %vm1613 = vcmp.eq.f32.partialorder %v1612, 8.507059e+37
  %v1614 = vand.u32 %v705, 2147483648
  %v1615 = vor.u32 1.1754944e-38, %v1614
  %v1616 = vsel %vm1613, %v1615, %v1611
  %v1617 = vmul.f32 %v517, %v1616
  %v1618 = vrcp.pop %v708
  %v1619 = vmul.f32 %v708, %v1618
  %v1620 = vsub.f32 1.0, %v1619
  %v1621 = vmul.f32 %v1618, %v1620
  %v1622 = vadd.f32 %v1618, %v1621
  %vm1623 = vweird.f32 %v708
  %vm1624 = vweird.f32 %v1618
  %vm1625 = vmor %vm1623, %vm1624
  %v1626 = vsel %vm1625, %v1618, %v1622
  %v1627 = vand.u32 2147483647, %v708
  %vm1628 = vcmp.eq.f32.partialorder %v1627, 8.507059e+37
  %v1629 = vand.u32 %v708, 2147483648
  %v1630 = vor.u32 1.1754944e-38, %v1629
  %v1631 = vsel %vm1628, %v1630, %v1626
  %v1632 = vmul.f32 %v519, %v1631
  %v1633 = vrcp.pop %v711
  %v1634 = vmul.f32 %v711, %v1633
  %v1635 = vsub.f32 1.0, %v1634
  %v1636 = vmul.f32 %v1633, %v1635
  %v1637 = vadd.f32 %v1633, %v1636
  %vm1638 = vweird.f32 %v711
  %vm1639 = vweird.f32 %v1633
  %vm1640 = vmor %vm1638, %vm1639
  %v1641 = vsel %vm1640, %v1633, %v1637
  %v1642 = vand.u32 2147483647, %v711
  %vm1643 = vcmp.eq.f32.partialorder %v1642, 8.507059e+37
  %v1644 = vand.u32 %v711, 2147483648
  %v1645 = vor.u32 1.1754944e-38, %v1644
  %v1646 = vsel %vm1643, %v1645, %v1641
  %v1647 = vmul.f32 %v521, %v1646
  %v1648 = vrcp.pop %v714
  %v1649 = vmul.f32 %v714, %v1648
  %v1650 = vsub.f32 1.0, %v1649
  %v1651 = vmul.f32 %v1648, %v1650
  %v1652 = vadd.f32 %v1648, %v1651
  %vm1653 = vweird.f32 %v714
  %vm1654 = vweird.f32 %v1648
  %vm1655 = vmor %vm1653, %vm1654
  %v1656 = vsel %vm1655, %v1648, %v1652
  %v1657 = vand.u32 2147483647, %v714
  %vm1658 = vcmp.eq.f32.partialorder %v1657, 8.507059e+37
  %v1659 = vand.u32 %v714, 2147483648
  %v1660 = vor.u32 1.1754944e-38, %v1659
  %v1661 = vsel %vm1658, %v1660, %v1656
  %v1662 = vmul.f32 %v523, %v1661
  %v1663 = vrcp.pop %v717
  %v1664 = vmul.f32 %v717, %v1663
  %v1665 = vsub.f32 1.0, %v1664
  %v1666 = vmul.f32 %v1663, %v1665
  %v1667 = vadd.f32 %v1663, %v1666
  %vm1668 = vweird.f32 %v717
  %vm1669 = vweird.f32 %v1663
  %vm1670 = vmor %vm1668, %vm1669
  %v1671 = vsel %vm1670, %v1663, %v1667
  %v1672 = vand.u32 2147483647, %v717
  %vm1673 = vcmp.eq.f32.partialorder %v1672, 8.507059e+37
  %v1674 = vand.u32 %v717, 2147483648
  %v1675 = vor.u32 1.1754944e-38, %v1674
  %v1676 = vsel %vm1673, %v1675, %v1671
  %v1677 = vmul.f32 %v525, %v1676
  %v1678 = vld [vmem:[%s1] sm:$0xf]
  %v1679 = vld [vmem:[%s1 + $0x4] sm:$0x1]
  %v1680 = vld [vmem:[%s1 + $0x8] sm:$0xf]
  %v1681 = vld [vmem:[%s1 + $0xc] sm:$0x1]
  %v1682 = vld [vmem:[%s1 + $0x10] sm:$0xf]
  %v1683 = vld [vmem:[%s1 + $0x14] sm:$0x1]
  %v1684 = vld [vmem:[%s1 + $0x18] sm:$0xf]
  %v1685 = vld [vmem:[%s1 + $0x1c] sm:$0x1]
  %v1686 = vld [vmem:[%s1 + $0x20] sm:$0xf]
  %v1687 = vld [vmem:[%s1 + $0x24] sm:$0x1]
  %v1688 = vld [vmem:[%s1 + $0x28] sm:$0xf]
  %v1689 = vld [vmem:[%s1 + $0x2c] sm:$0x1]
  %v1690 = vld [vmem:[%s1 + $0x30] sm:$0xf]
  %v1691 = vld [vmem:[%s1 + $0x34] sm:$0x1]
  %v1692 = vld [vmem:[%s1 + $0x38] sm:$0xf]
  %v1693 = vld [vmem:[%s1 + $0x3c] sm:$0x1]
  %v1694 = vld [vmem:[%s1 + $0x40] sm:$0xf]
  %v1695 = vld [vmem:[%s1 + $0x44] sm:$0x1]
  %v1696 = vld [vmem:[%s1 + $0x48] sm:$0xf]
  %v1697 = vld [vmem:[%s1 + $0x4c] sm:$0x1]
  %v1698 = vld [vmem:[%s1 + $0x50] sm:$0xf]
  %v1699 = vld [vmem:[%s1 + $0x54] sm:$0x1]
  %v1700 = vld [vmem:[%s1 + $0x58] sm:$0xf]
  %v1701 = vld [vmem:[%s1 + $0x5c] sm:$0x1]
  %v1702 = vld [vmem:[%s1 + $0x60] sm:$0xf]
  %v1703 = vld [vmem:[%s1 + $0x64] sm:$0x1]
  %v1704 = vld [vmem:[%s1 + $0x68] sm:$0xf]
  %v1705 = vld [vmem:[%s1 + $0x6c] sm:$0x1]
  %v1706 = vld [vmem:[%s1 + $0x70] sm:$0xf]
  %v1707 = vld [vmem:[%s1 + $0x74] sm:$0x1]
  %v1708 = vld [vmem:[%s1 + $0x78] sm:$0xf]
  %v1709 = vld [vmem:[%s1 + $0x7c] sm:$0x1]
  %v1710 = vld [vmem:[%s1 + $0x80] sm:$0xf]
  %v1711 = vld [vmem:[%s1 + $0x84] sm:$0x1]
  %v1712 = vld [vmem:[%s1 + $0x88] sm:$0xf]
  %v1713 = vld [vmem:[%s1 + $0x8c] sm:$0x1]
  %v1714 = vld [vmem:[%s1 + $0x90] sm:$0xf]
  %v1715 = vld [vmem:[%s1 + $0x94] sm:$0x1]
  %v1716 = vld [vmem:[%s1 + $0x98] sm:$0xf]
  %v1717 = vld [vmem:[%s1 + $0x9c] sm:$0x1]
  %v1718 = vld [vmem:[%s1 + $0xa0] sm:$0xf]
  %v1719 = vld [vmem:[%s1 + $0xa4] sm:$0x1]
  %v1720 = vld [vmem:[%s1 + $0xa8] sm:$0xf]
  %v1721 = vld [vmem:[%s1 + $0xac] sm:$0x1]
  %v1722 = vld [vmem:[%s1 + $0xb0] sm:$0xf]
  %v1723 = vld [vmem:[%s1 + $0xb4] sm:$0x1]
  %v1724 = vld [vmem:[%s1 + $0xb8] sm:$0xf]
  %v1725 = vld [vmem:[%s1 + $0xbc] sm:$0x1]
  %v1726 = vld [vmem:[%s1 + $0xc0] sm:$0xf]
  %v1727 = vld [vmem:[%s1 + $0xc4] sm:$0x1]
  %v1728 = vld [vmem:[%s1 + $0xc8] sm:$0xf]
  %v1729 = vld [vmem:[%s1 + $0xcc] sm:$0x1]
  %v1730 = vld [vmem:[%s1 + $0xd0] sm:$0xf]
  %v1731 = vld [vmem:[%s1 + $0xd4] sm:$0x1]
  %v1732 = vld [vmem:[%s1 + $0xd8] sm:$0xf]
  %v1733 = vld [vmem:[%s1 + $0xdc] sm:$0x1]
  %v1734 = vld [vmem:[%s1 + $0xe0] sm:$0xf]
  %v1735 = vld [vmem:[%s1 + $0xe4] sm:$0x1]
  %v1736 = vld [vmem:[%s1 + $0xe8] sm:$0xf]
  %v1737 = vld [vmem:[%s1 + $0xec] sm:$0x1]
  %v1738 = vld [vmem:[%s1 + $0xf0] sm:$0xf]
  %v1739 = vld [vmem:[%s1 + $0xf4] sm:$0x1]
  %v1740 = vld [vmem:[%s1 + $0xf8] sm:$0xf]
  %v1741 = vld [vmem:[%s1 + $0xfc] sm:$0x1]
  %v1742 = vpack.c.bf16 %v732, %v732
  %v1743 = vpack.c.bf16 %v747, %v747
  %v1744 = vpack.c.bf16 %v762, %v762
  %v1745 = vpack.c.bf16 %v777, %v777
  %v1746 = vpack.c.bf16 %v792, %v792
  %v1747 = vpack.c.bf16 %v807, %v807
  %v1748 = vpack.c.bf16 %v822, %v822
  %v1749 = vpack.c.bf16 %v837, %v837
  %v1750 = vpack.c.bf16 %v852, %v852
  %v1751 = vpack.c.bf16 %v867, %v867
  %v1752 = vpack.c.bf16 %v882, %v882
  %v1753 = vpack.c.bf16 %v897, %v897
  %v1754 = vpack.c.bf16 %v912, %v912
  %v1755 = vpack.c.bf16 %v927, %v927
  %v1756 = vpack.c.bf16 %v942, %v942
  %v1757 = vpack.c.bf16 %v957, %v957
  %v1758 = vpack.c.bf16 %v972, %v972
  %v1759 = vpack.c.bf16 %v987, %v987
  %v1760 = vpack.c.bf16 %v1002, %v1002
  %v1761 = vpack.c.bf16 %v1017, %v1017
  %v1762 = vpack.c.bf16 %v1032, %v1032
  %v1763 = vpack.c.bf16 %v1047, %v1047
  %v1764 = vpack.c.bf16 %v1062, %v1062
  %v1765 = vpack.c.bf16 %v1077, %v1077
  %v1766 = vpack.c.bf16 %v1092, %v1092
  %v1767 = vpack.c.bf16 %v1107, %v1107
  %v1768 = vpack.c.bf16 %v1122, %v1122
  %v1769 = vpack.c.bf16 %v1137, %v1137
  %v1770 = vpack.c.bf16 %v1152, %v1152
  %v1771 = vpack.c.bf16 %v1167, %v1167
  %v1772 = vpack.c.bf16 %v1182, %v1182
  %v1773 = vpack.c.bf16 %v1197, %v1197
  %v1774 = vpack.c.bf16 %v1212, %v1212
  %v1775 = vpack.c.bf16 %v1227, %v1227
  %v1776 = vpack.c.bf16 %v1242, %v1242
  %v1777 = vpack.c.bf16 %v1257, %v1257
  %v1778 = vpack.c.bf16 %v1272, %v1272
  %v1779 = vpack.c.bf16 %v1287, %v1287
  %v1780 = vpack.c.bf16 %v1302, %v1302
  %v1781 = vpack.c.bf16 %v1317, %v1317
  %v1782 = vpack.c.bf16 %v1332, %v1332
  %v1783 = vpack.c.bf16 %v1347, %v1347
  %v1784 = vpack.c.bf16 %v1362, %v1362
  %v1785 = vpack.c.bf16 %v1377, %v1377
  %v1786 = vpack.c.bf16 %v1392, %v1392
  %v1787 = vpack.c.bf16 %v1407, %v1407
  %v1788 = vpack.c.bf16 %v1422, %v1422
  %v1789 = vpack.c.bf16 %v1437, %v1437
  %v1790 = vpack.c.bf16 %v1452, %v1452
  %v1791 = vpack.c.bf16 %v1467, %v1467
  %v1792 = vpack.c.bf16 %v1482, %v1482
  %v1793 = vpack.c.bf16 %v1497, %v1497
  %v1794 = vpack.c.bf16 %v1512, %v1512
  %v1795 = vpack.c.bf16 %v1527, %v1527
  %v1796 = vpack.c.bf16 %v1542, %v1542
  %v1797 = vpack.c.bf16 %v1557, %v1557
  %v1798 = vpack.c.bf16 %v1572, %v1572
  %v1799 = vpack.c.bf16 %v1587, %v1587
  %v1800 = vpack.c.bf16 %v1602, %v1602
  %v1801 = vpack.c.bf16 %v1617, %v1617
  %v1802 = vpack.c.bf16 %v1632, %v1632
  %v1803 = vpack.c.bf16 %v1647, %v1647
  %v1804 = vpack.c.bf16 %v1662, %v1662
  %v1805 = vpack.c.bf16 %v1677, %v1677
  %v1808 = vunpack.c.l.b16 %v1742
  %v1809 = vunpack.c.l.b16 %v1743
  %v1810 = vpack.c.b16 %v1809, %v1808
  %v1813 = vunpack.c.l.b16 %v1678
  %v1814 = vunpack.c.l.b16 %v1679
  %v1815 = vpack.c.b16 %v1814, %v1813
  %v1817 = vsel %vm140, %v1810, 0
  %vm1819 = vcmask 1043456
  %vm1820 = vcmask 1044480
  %v1821 = vsel %vm1819, 4294967295, 65535
  %v1822 = vsel %vm1820, %v1821, 0
  %v1824 = vand.u32 %v1815, %v1822
  %1826 = vmatpush.bf16.msra.mxu0 0
  %1827 = vmatpush.bf16.msra.mxu0 0
  %1828 = vmatpush.bf16.msra.mxu0 0
  %1829 = vmatpush.bf16.msra.mxu0 0
  %1830 = vmatpush.bf16.msra.mxu0 0
  %1831 = vmatpush.bf16.msra.mxu0 0
  %1832 = vmatpush.bf16.msra.mxu0 0
  %1833 = vmatpush.bf16.msra.mxu0 %v1824
  %1834 = vmatmul.bf16.gmra.mxu0 %v1817
  %v1835 = vpop.f32.mrf.mxu0
  %v1836 = vadd.f32 0.0, %v1835
  %v1837 = vpop.f32.mrf.mxu0
  %v1838 = vadd.f32 0.0, %v1837
  %1839 = vdwg.mxu0
  %v1842 = vunpack.c.l.b16 %v1744
  %v1843 = vunpack.c.l.b16 %v1745
  %v1844 = vpack.c.b16 %v1843, %v1842
  %v1847 = vunpack.c.l.b16 %v1680
  %v1848 = vunpack.c.l.b16 %v1681
  %v1849 = vpack.c.b16 %v1848, %v1847
  %v1851 = vsel %vm140, %v1844, 0
  %v1854 = vand.u32 %v1849, %v1822
  %1856 = vmatpush.bf16.msra.mxu0 0
  %1857 = vmatpush.bf16.msra.mxu0 0
  %1858 = vmatpush.bf16.msra.mxu0 0
  %1859 = vmatpush.bf16.msra.mxu0 0
  %1860 = vmatpush.bf16.msra.mxu0 0
  %1861 = vmatpush.bf16.msra.mxu0 0
  %1862 = vmatpush.bf16.msra.mxu0 0
  %1863 = vmatpush.bf16.msra.mxu0 %v1854
  %1864 = vmatmul.bf16.gmra.mxu0 %v1851
  %v1865 = vpop.f32.mrf.mxu0
  %v1866 = vadd.f32 0.0, %v1865
  %v1867 = vpop.f32.mrf.mxu0
  %v1868 = vadd.f32 0.0, %v1867
  %1869 = vdwg.mxu0
  %v1872 = vunpack.c.l.b16 %v1746
  %v1873 = vunpack.c.l.b16 %v1747
  %v1874 = vpack.c.b16 %v1873, %v1872
  %v1877 = vunpack.c.l.b16 %v1682
  %v1878 = vunpack.c.l.b16 %v1683
  %v1879 = vpack.c.b16 %v1878, %v1877
  %v1881 = vsel %vm140, %v1874, 0
  %v1884 = vand.u32 %v1879, %v1822
  %1886 = vmatpush.bf16.msra.mxu0 0
  %1887 = vmatpush.bf16.msra.mxu0 0
  %1888 = vmatpush.bf16.msra.mxu0 0
  %1889 = vmatpush.bf16.msra.mxu0 0
  %1890 = vmatpush.bf16.msra.mxu0 0
  %1891 = vmatpush.bf16.msra.mxu0 0
  %1892 = vmatpush.bf16.msra.mxu0 0
  %1893 = vmatpush.bf16.msra.mxu0 %v1884
  %1894 = vmatmul.bf16.gmra.mxu0 %v1881
  %v1895 = vpop.f32.mrf.mxu0
  %v1896 = vadd.f32 0.0, %v1895
  %v1897 = vpop.f32.mrf.mxu0
  %v1898 = vadd.f32 0.0, %v1897
  %1899 = vdwg.mxu0
  %v1902 = vunpack.c.l.b16 %v1748
  %v1903 = vunpack.c.l.b16 %v1749
  %v1904 = vpack.c.b16 %v1903, %v1902
  %v1907 = vunpack.c.l.b16 %v1684
  %v1908 = vunpack.c.l.b16 %v1685
  %v1909 = vpack.c.b16 %v1908, %v1907
  %v1911 = vsel %vm140, %v1904, 0
  %v1914 = vand.u32 %v1909, %v1822
  %1916 = vmatpush.bf16.msra.mxu0 0
  %1917 = vmatpush.bf16.msra.mxu0 0
  %1918 = vmatpush.bf16.msra.mxu0 0
  %1919 = vmatpush.bf16.msra.mxu0 0
  %1920 = vmatpush.bf16.msra.mxu0 0
  %1921 = vmatpush.bf16.msra.mxu0 0
  %1922 = vmatpush.bf16.msra.mxu0 0
  %1923 = vmatpush.bf16.msra.mxu0 %v1914
  %1924 = vmatmul.bf16.gmra.mxu0 %v1911
  %v1925 = vpop.f32.mrf.mxu0
  %v1926 = vadd.f32 0.0, %v1925
  %v1927 = vpop.f32.mrf.mxu0
  %v1928 = vadd.f32 0.0, %v1927
  %1929 = vdwg.mxu0
  %v1932 = vunpack.c.l.b16 %v1750
  %v1933 = vunpack.c.l.b16 %v1751
  %v1934 = vpack.c.b16 %v1933, %v1932
  %v1937 = vunpack.c.l.b16 %v1686
  %v1938 = vunpack.c.l.b16 %v1687
  %v1939 = vpack.c.b16 %v1938, %v1937
  %v1941 = vsel %vm140, %v1934, 0
  %v1944 = vand.u32 %v1939, %v1822
  %1946 = vmatpush.bf16.msra.mxu0 0
  %1947 = vmatpush.bf16.msra.mxu0 0
  %1948 = vmatpush.bf16.msra.mxu0 0
  %1949 = vmatpush.bf16.msra.mxu0 0
  %1950 = vmatpush.bf16.msra.mxu0 0
  %1951 = vmatpush.bf16.msra.mxu0 0
  %1952 = vmatpush.bf16.msra.mxu0 0
  %1953 = vmatpush.bf16.msra.mxu0 %v1944
  %1954 = vmatmul.bf16.gmra.mxu0 %v1941
  %v1955 = vpop.f32.mrf.mxu0
  %v1956 = vadd.f32 0.0, %v1955
  %v1957 = vpop.f32.mrf.mxu0
  %v1958 = vadd.f32 0.0, %v1957
  %1959 = vdwg.mxu0
  %v1962 = vunpack.c.l.b16 %v1752
  %v1963 = vunpack.c.l.b16 %v1753
  %v1964 = vpack.c.b16 %v1963, %v1962
  %v1967 = vunpack.c.l.b16 %v1688
  %v1968 = vunpack.c.l.b16 %v1689
  %v1969 = vpack.c.b16 %v1968, %v1967
  %v1971 = vsel %vm140, %v1964, 0
  %v1974 = vand.u32 %v1969, %v1822
  %1976 = vmatpush.bf16.msra.mxu0 0
  %1977 = vmatpush.bf16.msra.mxu0 0
  %1978 = vmatpush.bf16.msra.mxu0 0
  %1979 = vmatpush.bf16.msra.mxu0 0
  %1980 = vmatpush.bf16.msra.mxu0 0
  %1981 = vmatpush.bf16.msra.mxu0 0
  %1982 = vmatpush.bf16.msra.mxu0 0
  %1983 = vmatpush.bf16.msra.mxu0 %v1974
  %1984 = vmatmul.bf16.gmra.mxu0 %v1971
  %v1985 = vpop.f32.mrf.mxu0
  %v1986 = vadd.f32 0.0, %v1985
  %v1987 = vpop.f32.mrf.mxu0
  %v1988 = vadd.f32 0.0, %v1987
  %1989 = vdwg.mxu0
  %v1992 = vunpack.c.l.b16 %v1754
  %v1993 = vunpack.c.l.b16 %v1755
  %v1994 = vpack.c.b16 %v1993, %v1992
  %v1997 = vunpack.c.l.b16 %v1690
  %v1998 = vunpack.c.l.b16 %v1691
  %v1999 = vpack.c.b16 %v1998, %v1997
  %v2001 = vsel %vm140, %v1994, 0
  %v2004 = vand.u32 %v1999, %v1822
  %2006 = vmatpush.bf16.msra.mxu0 0
  %2007 = vmatpush.bf16.msra.mxu0 0
  %2008 = vmatpush.bf16.msra.mxu0 0
  %2009 = vmatpush.bf16.msra.mxu0 0
  %2010 = vmatpush.bf16.msra.mxu0 0
  %2011 = vmatpush.bf16.msra.mxu0 0
  %2012 = vmatpush.bf16.msra.mxu0 0
  %2013 = vmatpush.bf16.msra.mxu0 %v2004
  %2014 = vmatmul.bf16.gmra.mxu0 %v2001
  %v2015 = vpop.f32.mrf.mxu0
  %v2016 = vadd.f32 0.0, %v2015
  %v2017 = vpop.f32.mrf.mxu0
  %v2018 = vadd.f32 0.0, %v2017
  %2019 = vdwg.mxu0
  %v2022 = vunpack.c.l.b16 %v1756
  %v2023 = vunpack.c.l.b16 %v1757
  %v2024 = vpack.c.b16 %v2023, %v2022
  %v2027 = vunpack.c.l.b16 %v1692
  %v2028 = vunpack.c.l.b16 %v1693
  %v2029 = vpack.c.b16 %v2028, %v2027
  %v2031 = vsel %vm140, %v2024, 0
  %v2034 = vand.u32 %v2029, %v1822
  %2036 = vmatpush.bf16.msra.mxu0 0
  %2037 = vmatpush.bf16.msra.mxu0 0
  %2038 = vmatpush.bf16.msra.mxu0 0
  %2039 = vmatpush.bf16.msra.mxu0 0
  %2040 = vmatpush.bf16.msra.mxu0 0
  %2041 = vmatpush.bf16.msra.mxu0 0
  %2042 = vmatpush.bf16.msra.mxu0 0
  %2043 = vmatpush.bf16.msra.mxu0 %v2034
  %2044 = vmatmul.bf16.gmra.mxu0 %v2031
  %v2045 = vpop.f32.mrf.mxu0
  %v2046 = vadd.f32 0.0, %v2045
  %v2047 = vpop.f32.mrf.mxu0
  %v2048 = vadd.f32 0.0, %v2047
  %2049 = vdwg.mxu0
  %v2052 = vunpack.c.l.b16 %v1758
  %v2053 = vunpack.c.l.b16 %v1759
  %v2054 = vpack.c.b16 %v2053, %v2052
  %v2057 = vunpack.c.l.b16 %v1694
  %v2058 = vunpack.c.l.b16 %v1695
  %v2059 = vpack.c.b16 %v2058, %v2057
  %v2061 = vsel %vm140, %v2054, 0
  %v2064 = vand.u32 %v2059, %v1822
  %2066 = vmatpush.bf16.msra.mxu0 0
  %2067 = vmatpush.bf16.msra.mxu0 0
  %2068 = vmatpush.bf16.msra.mxu0 0
  %2069 = vmatpush.bf16.msra.mxu0 0
  %2070 = vmatpush.bf16.msra.mxu0 0
  %2071 = vmatpush.bf16.msra.mxu0 0
  %2072 = vmatpush.bf16.msra.mxu0 0
  %2073 = vmatpush.bf16.msra.mxu0 %v2064
  %2074 = vmatmul.bf16.gmra.mxu0 %v2061
  %v2075 = vpop.f32.mrf.mxu0
  %v2076 = vadd.f32 0.0, %v2075
  %v2077 = vpop.f32.mrf.mxu0
  %v2078 = vadd.f32 0.0, %v2077
  %2079 = vdwg.mxu0
  %v2082 = vunpack.c.l.b16 %v1760
  %v2083 = vunpack.c.l.b16 %v1761
  %v2084 = vpack.c.b16 %v2083, %v2082
  %v2087 = vunpack.c.l.b16 %v1696
  %v2088 = vunpack.c.l.b16 %v1697
  %v2089 = vpack.c.b16 %v2088, %v2087
  %v2091 = vsel %vm140, %v2084, 0
  %v2094 = vand.u32 %v2089, %v1822
  %2096 = vmatpush.bf16.msra.mxu0 0
  %2097 = vmatpush.bf16.msra.mxu0 0
  %2098 = vmatpush.bf16.msra.mxu0 0
  %2099 = vmatpush.bf16.msra.mxu0 0
  %2100 = vmatpush.bf16.msra.mxu0 0
  %2101 = vmatpush.bf16.msra.mxu0 0
  %2102 = vmatpush.bf16.msra.mxu0 0
  %2103 = vmatpush.bf16.msra.mxu0 %v2094
  %2104 = vmatmul.bf16.gmra.mxu0 %v2091
  %v2105 = vpop.f32.mrf.mxu0
  %v2106 = vadd.f32 0.0, %v2105
  %v2107 = vpop.f32.mrf.mxu0
  %v2108 = vadd.f32 0.0, %v2107
  %2109 = vdwg.mxu0
  %v2112 = vunpack.c.l.b16 %v1762
  %v2113 = vunpack.c.l.b16 %v1763
  %v2114 = vpack.c.b16 %v2113, %v2112
  %v2117 = vunpack.c.l.b16 %v1698
  %v2118 = vunpack.c.l.b16 %v1699
  %v2119 = vpack.c.b16 %v2118, %v2117
  %v2121 = vsel %vm140, %v2114, 0
  %v2124 = vand.u32 %v2119, %v1822
  %2126 = vmatpush.bf16.msra.mxu0 0
  %2127 = vmatpush.bf16.msra.mxu0 0
  %2128 = vmatpush.bf16.msra.mxu0 0
  %2129 = vmatpush.bf16.msra.mxu0 0
  %2130 = vmatpush.bf16.msra.mxu0 0
  %2131 = vmatpush.bf16.msra.mxu0 0
  %2132 = vmatpush.bf16.msra.mxu0 0
  %2133 = vmatpush.bf16.msra.mxu0 %v2124
  %2134 = vmatmul.bf16.gmra.mxu0 %v2121
  %v2135 = vpop.f32.mrf.mxu0
  %v2136 = vadd.f32 0.0, %v2135
  %v2137 = vpop.f32.mrf.mxu0
  %v2138 = vadd.f32 0.0, %v2137
  %2139 = vdwg.mxu0
  %v2142 = vunpack.c.l.b16 %v1764
  %v2143 = vunpack.c.l.b16 %v1765
  %v2144 = vpack.c.b16 %v2143, %v2142
  %v2147 = vunpack.c.l.b16 %v1700
  %v2148 = vunpack.c.l.b16 %v1701
  %v2149 = vpack.c.b16 %v2148, %v2147
  %v2151 = vsel %vm140, %v2144, 0
  %v2154 = vand.u32 %v2149, %v1822
  %2156 = vmatpush.bf16.msra.mxu0 0
  %2157 = vmatpush.bf16.msra.mxu0 0
  %2158 = vmatpush.bf16.msra.mxu0 0
  %2159 = vmatpush.bf16.msra.mxu0 0
  %2160 = vmatpush.bf16.msra.mxu0 0
  %2161 = vmatpush.bf16.msra.mxu0 0
  %2162 = vmatpush.bf16.msra.mxu0 0
  %2163 = vmatpush.bf16.msra.mxu0 %v2154
  %2164 = vmatmul.bf16.gmra.mxu0 %v2151
  %v2165 = vpop.f32.mrf.mxu0
  %v2166 = vadd.f32 0.0, %v2165
  %v2167 = vpop.f32.mrf.mxu0
  %v2168 = vadd.f32 0.0, %v2167
  %2169 = vdwg.mxu0
  %v2172 = vunpack.c.l.b16 %v1766
  %v2173 = vunpack.c.l.b16 %v1767
  %v2174 = vpack.c.b16 %v2173, %v2172
  %v2177 = vunpack.c.l.b16 %v1702
  %v2178 = vunpack.c.l.b16 %v1703
  %v2179 = vpack.c.b16 %v2178, %v2177
  %v2181 = vsel %vm140, %v2174, 0
  %v2184 = vand.u32 %v2179, %v1822
  %2186 = vmatpush.bf16.msra.mxu0 0
  %2187 = vmatpush.bf16.msra.mxu0 0
  %2188 = vmatpush.bf16.msra.mxu0 0
  %2189 = vmatpush.bf16.msra.mxu0 0
  %2190 = vmatpush.bf16.msra.mxu0 0
  %2191 = vmatpush.bf16.msra.mxu0 0
  %2192 = vmatpush.bf16.msra.mxu0 0
  %2193 = vmatpush.bf16.msra.mxu0 %v2184
  %2194 = vmatmul.bf16.gmra.mxu0 %v2181
  %v2195 = vpop.f32.mrf.mxu0
  %v2196 = vadd.f32 0.0, %v2195
  %v2197 = vpop.f32.mrf.mxu0
  %v2198 = vadd.f32 0.0, %v2197
  %2199 = vdwg.mxu0
  %v2202 = vunpack.c.l.b16 %v1768
  %v2203 = vunpack.c.l.b16 %v1769
  %v2204 = vpack.c.b16 %v2203, %v2202
  %v2207 = vunpack.c.l.b16 %v1704
  %v2208 = vunpack.c.l.b16 %v1705
  %v2209 = vpack.c.b16 %v2208, %v2207
  %v2211 = vsel %vm140, %v2204, 0
  %v2214 = vand.u32 %v2209, %v1822
  %2216 = vmatpush.bf16.msra.mxu0 0
  %2217 = vmatpush.bf16.msra.mxu0 0
  %2218 = vmatpush.bf16.msra.mxu0 0
  %2219 = vmatpush.bf16.msra.mxu0 0
  %2220 = vmatpush.bf16.msra.mxu0 0
  %2221 = vmatpush.bf16.msra.mxu0 0
  %2222 = vmatpush.bf16.msra.mxu0 0
  %2223 = vmatpush.bf16.msra.mxu0 %v2214
  %2224 = vmatmul.bf16.gmra.mxu0 %v2211
  %v2225 = vpop.f32.mrf.mxu0
  %v2226 = vadd.f32 0.0, %v2225
  %v2227 = vpop.f32.mrf.mxu0
  %v2228 = vadd.f32 0.0, %v2227
  %2229 = vdwg.mxu0
  %v2232 = vunpack.c.l.b16 %v1770
  %v2233 = vunpack.c.l.b16 %v1771
  %v2234 = vpack.c.b16 %v2233, %v2232
  %v2237 = vunpack.c.l.b16 %v1706
  %v2238 = vunpack.c.l.b16 %v1707
  %v2239 = vpack.c.b16 %v2238, %v2237
  %v2241 = vsel %vm140, %v2234, 0
  %v2244 = vand.u32 %v2239, %v1822
  %2246 = vmatpush.bf16.msra.mxu0 0
  %2247 = vmatpush.bf16.msra.mxu0 0
  %2248 = vmatpush.bf16.msra.mxu0 0
  %2249 = vmatpush.bf16.msra.mxu0 0
  %2250 = vmatpush.bf16.msra.mxu0 0
  %2251 = vmatpush.bf16.msra.mxu0 0
  %2252 = vmatpush.bf16.msra.mxu0 0
  %2253 = vmatpush.bf16.msra.mxu0 %v2244
  %2254 = vmatmul.bf16.gmra.mxu0 %v2241
  %v2255 = vpop.f32.mrf.mxu0
  %v2256 = vadd.f32 0.0, %v2255
  %v2257 = vpop.f32.mrf.mxu0
  %v2258 = vadd.f32 0.0, %v2257
  %2259 = vdwg.mxu0
  %v2262 = vunpack.c.l.b16 %v1772
  %v2263 = vunpack.c.l.b16 %v1773
  %v2264 = vpack.c.b16 %v2263, %v2262
  %v2267 = vunpack.c.l.b16 %v1708
  %v2268 = vunpack.c.l.b16 %v1709
  %v2269 = vpack.c.b16 %v2268, %v2267
  %v2271 = vsel %vm140, %v2264, 0
  %v2274 = vand.u32 %v2269, %v1822
  %2276 = vmatpush.bf16.msra.mxu0 0
  %2277 = vmatpush.bf16.msra.mxu0 0
  %2278 = vmatpush.bf16.msra.mxu0 0
  %2279 = vmatpush.bf16.msra.mxu0 0
  %2280 = vmatpush.bf16.msra.mxu0 0
  %2281 = vmatpush.bf16.msra.mxu0 0
  %2282 = vmatpush.bf16.msra.mxu0 0
  %2283 = vmatpush.bf16.msra.mxu0 %v2274
  %2284 = vmatmul.bf16.gmra.mxu0 %v2271
  %v2285 = vpop.f32.mrf.mxu0
  %v2286 = vadd.f32 0.0, %v2285
  %v2287 = vpop.f32.mrf.mxu0
  %v2288 = vadd.f32 0.0, %v2287
  %2289 = vdwg.mxu0
  %v2292 = vunpack.c.l.b16 %v1774
  %v2293 = vunpack.c.l.b16 %v1775
  %v2294 = vpack.c.b16 %v2293, %v2292
  %v2297 = vunpack.c.l.b16 %v1710
  %v2298 = vunpack.c.l.b16 %v1711
  %v2299 = vpack.c.b16 %v2298, %v2297
  %v2301 = vsel %vm140, %v2294, 0
  %v2304 = vand.u32 %v2299, %v1822
  %2306 = vmatpush.bf16.msra.mxu0 0
  %2307 = vmatpush.bf16.msra.mxu0 0
  %2308 = vmatpush.bf16.msra.mxu0 0
  %2309 = vmatpush.bf16.msra.mxu0 0
  %2310 = vmatpush.bf16.msra.mxu0 0
  %2311 = vmatpush.bf16.msra.mxu0 0
  %2312 = vmatpush.bf16.msra.mxu0 0
  %2313 = vmatpush.bf16.msra.mxu0 %v2304
  %2314 = vmatmul.bf16.gmra.mxu0 %v2301
  %v2315 = vpop.f32.mrf.mxu0
  %v2316 = vadd.f32 0.0, %v2315
  %v2317 = vpop.f32.mrf.mxu0
  %v2318 = vadd.f32 0.0, %v2317
  %2319 = vdwg.mxu0
  %v2322 = vunpack.c.l.b16 %v1776
  %v2323 = vunpack.c.l.b16 %v1777
  %v2324 = vpack.c.b16 %v2323, %v2322
  %v2327 = vunpack.c.l.b16 %v1712
  %v2328 = vunpack.c.l.b16 %v1713
  %v2329 = vpack.c.b16 %v2328, %v2327
  %v2331 = vsel %vm140, %v2324, 0
  %v2334 = vand.u32 %v2329, %v1822
  %2336 = vmatpush.bf16.msra.mxu0 0
  %2337 = vmatpush.bf16.msra.mxu0 0
  %2338 = vmatpush.bf16.msra.mxu0 0
  %2339 = vmatpush.bf16.msra.mxu0 0
  %2340 = vmatpush.bf16.msra.mxu0 0
  %2341 = vmatpush.bf16.msra.mxu0 0
  %2342 = vmatpush.bf16.msra.mxu0 0
  %2343 = vmatpush.bf16.msra.mxu0 %v2334
  %2344 = vmatmul.bf16.gmra.mxu0 %v2331
  %v2345 = vpop.f32.mrf.mxu0
  %v2346 = vadd.f32 0.0, %v2345
  %v2347 = vpop.f32.mrf.mxu0
  %v2348 = vadd.f32 0.0, %v2347
  %2349 = vdwg.mxu0
  %v2352 = vunpack.c.l.b16 %v1778
  %v2353 = vunpack.c.l.b16 %v1779
  %v2354 = vpack.c.b16 %v2353, %v2352
  %v2357 = vunpack.c.l.b16 %v1714
  %v2358 = vunpack.c.l.b16 %v1715
  %v2359 = vpack.c.b16 %v2358, %v2357
  %v2361 = vsel %vm140, %v2354, 0
  %v2364 = vand.u32 %v2359, %v1822
  %2366 = vmatpush.bf16.msra.mxu0 0
  %2367 = vmatpush.bf16.msra.mxu0 0
  %2368 = vmatpush.bf16.msra.mxu0 0
  %2369 = vmatpush.bf16.msra.mxu0 0
  %2370 = vmatpush.bf16.msra.mxu0 0
  %2371 = vmatpush.bf16.msra.mxu0 0
  %2372 = vmatpush.bf16.msra.mxu0 0
  %2373 = vmatpush.bf16.msra.mxu0 %v2364
  %2374 = vmatmul.bf16.gmra.mxu0 %v2361
  %v2375 = vpop.f32.mrf.mxu0
  %v2376 = vadd.f32 0.0, %v2375
  %v2377 = vpop.f32.mrf.mxu0
  %v2378 = vadd.f32 0.0, %v2377
  %2379 = vdwg.mxu0
  %v2382 = vunpack.c.l.b16 %v1780
  %v2383 = vunpack.c.l.b16 %v1781
  %v2384 = vpack.c.b16 %v2383, %v2382
  %v2387 = vunpack.c.l.b16 %v1716
  %v2388 = vunpack.c.l.b16 %v1717
  %v2389 = vpack.c.b16 %v2388, %v2387
  %v2391 = vsel %vm140, %v2384, 0
  %v2394 = vand.u32 %v2389, %v1822
  %2396 = vmatpush.bf16.msra.mxu0 0
  %2397 = vmatpush.bf16.msra.mxu0 0
  %2398 = vmatpush.bf16.msra.mxu0 0
  %2399 = vmatpush.bf16.msra.mxu0 0
  %2400 = vmatpush.bf16.msra.mxu0 0
  %2401 = vmatpush.bf16.msra.mxu0 0
  %2402 = vmatpush.bf16.msra.mxu0 0
  %2403 = vmatpush.bf16.msra.mxu0 %v2394
  %2404 = vmatmul.bf16.gmra.mxu0 %v2391
  %v2405 = vpop.f32.mrf.mxu0
  %v2406 = vadd.f32 0.0, %v2405
  %v2407 = vpop.f32.mrf.mxu0
  %v2408 = vadd.f32 0.0, %v2407
  %2409 = vdwg.mxu0
  %v2412 = vunpack.c.l.b16 %v1782
  %v2413 = vunpack.c.l.b16 %v1783
  %v2414 = vpack.c.b16 %v2413, %v2412
  %v2417 = vunpack.c.l.b16 %v1718
  %v2418 = vunpack.c.l.b16 %v1719
  %v2419 = vpack.c.b16 %v2418, %v2417
  %v2421 = vsel %vm140, %v2414, 0
  %v2424 = vand.u32 %v2419, %v1822
  %2426 = vmatpush.bf16.msra.mxu0 0
  %2427 = vmatpush.bf16.msra.mxu0 0
  %2428 = vmatpush.bf16.msra.mxu0 0
  %2429 = vmatpush.bf16.msra.mxu0 0
  %2430 = vmatpush.bf16.msra.mxu0 0
  %2431 = vmatpush.bf16.msra.mxu0 0
  %2432 = vmatpush.bf16.msra.mxu0 0
  %2433 = vmatpush.bf16.msra.mxu0 %v2424
  %2434 = vmatmul.bf16.gmra.mxu0 %v2421
  %v2435 = vpop.f32.mrf.mxu0
  %v2436 = vadd.f32 0.0, %v2435
  %v2437 = vpop.f32.mrf.mxu0
  %v2438 = vadd.f32 0.0, %v2437
  %2439 = vdwg.mxu0
  %v2442 = vunpack.c.l.b16 %v1784
  %v2443 = vunpack.c.l.b16 %v1785
  %v2444 = vpack.c.b16 %v2443, %v2442
  %v2447 = vunpack.c.l.b16 %v1720
  %v2448 = vunpack.c.l.b16 %v1721
  %v2449 = vpack.c.b16 %v2448, %v2447
  %v2451 = vsel %vm140, %v2444, 0
  %v2454 = vand.u32 %v2449, %v1822
  %2456 = vmatpush.bf16.msra.mxu0 0
  %2457 = vmatpush.bf16.msra.mxu0 0
  %2458 = vmatpush.bf16.msra.mxu0 0
  %2459 = vmatpush.bf16.msra.mxu0 0
  %2460 = vmatpush.bf16.msra.mxu0 0
  %2461 = vmatpush.bf16.msra.mxu0 0
  %2462 = vmatpush.bf16.msra.mxu0 0
  %2463 = vmatpush.bf16.msra.mxu0 %v2454
  %2464 = vmatmul.bf16.gmra.mxu0 %v2451
  %v2465 = vpop.f32.mrf.mxu0
  %v2466 = vadd.f32 0.0, %v2465
  %v2467 = vpop.f32.mrf.mxu0
  %v2468 = vadd.f32 0.0, %v2467
  %2469 = vdwg.mxu0
  %v2472 = vunpack.c.l.b16 %v1786
  %v2473 = vunpack.c.l.b16 %v1787
  %v2474 = vpack.c.b16 %v2473, %v2472
  %v2477 = vunpack.c.l.b16 %v1722
  %v2478 = vunpack.c.l.b16 %v1723
  %v2479 = vpack.c.b16 %v2478, %v2477
  %v2481 = vsel %vm140, %v2474, 0
  %v2484 = vand.u32 %v2479, %v1822
  %2486 = vmatpush.bf16.msra.mxu0 0
  %2487 = vmatpush.bf16.msra.mxu0 0
  %2488 = vmatpush.bf16.msra.mxu0 0
  %2489 = vmatpush.bf16.msra.mxu0 0
  %2490 = vmatpush.bf16.msra.mxu0 0
  %2491 = vmatpush.bf16.msra.mxu0 0
  %2492 = vmatpush.bf16.msra.mxu0 0
  %2493 = vmatpush.bf16.msra.mxu0 %v2484
  %2494 = vmatmul.bf16.gmra.mxu0 %v2481
  %v2495 = vpop.f32.mrf.mxu0
  %v2496 = vadd.f32 0.0, %v2495
  %v2497 = vpop.f32.mrf.mxu0
  %v2498 = vadd.f32 0.0, %v2497
  %2499 = vdwg.mxu0
  %v2502 = vunpack.c.l.b16 %v1788
  %v2503 = vunpack.c.l.b16 %v1789
  %v2504 = vpack.c.b16 %v2503, %v2502
  %v2507 = vunpack.c.l.b16 %v1724
  %v2508 = vunpack.c.l.b16 %v1725
  %v2509 = vpack.c.b16 %v2508, %v2507
  %v2511 = vsel %vm140, %v2504, 0
  %v2514 = vand.u32 %v2509, %v1822
  %2516 = vmatpush.bf16.msra.mxu0 0
  %2517 = vmatpush.bf16.msra.mxu0 0
  %2518 = vmatpush.bf16.msra.mxu0 0
  %2519 = vmatpush.bf16.msra.mxu0 0
  %2520 = vmatpush.bf16.msra.mxu0 0
  %2521 = vmatpush.bf16.msra.mxu0 0
  %2522 = vmatpush.bf16.msra.mxu0 0
  %2523 = vmatpush.bf16.msra.mxu0 %v2514
  %2524 = vmatmul.bf16.gmra.mxu0 %v2511
  %v2525 = vpop.f32.mrf.mxu0
  %v2526 = vadd.f32 0.0, %v2525
  %v2527 = vpop.f32.mrf.mxu0
  %v2528 = vadd.f32 0.0, %v2527
  %2529 = vdwg.mxu0
  %v2532 = vunpack.c.l.b16 %v1790
  %v2533 = vunpack.c.l.b16 %v1791
  %v2534 = vpack.c.b16 %v2533, %v2532
  %v2537 = vunpack.c.l.b16 %v1726
  %v2538 = vunpack.c.l.b16 %v1727
  %v2539 = vpack.c.b16 %v2538, %v2537
  %v2541 = vsel %vm140, %v2534, 0
  %v2544 = vand.u32 %v2539, %v1822
  %2546 = vmatpush.bf16.msra.mxu0 0
  %2547 = vmatpush.bf16.msra.mxu0 0
  %2548 = vmatpush.bf16.msra.mxu0 0
  %2549 = vmatpush.bf16.msra.mxu0 0
  %2550 = vmatpush.bf16.msra.mxu0 0
  %2551 = vmatpush.bf16.msra.mxu0 0
  %2552 = vmatpush.bf16.msra.mxu0 0
  %2553 = vmatpush.bf16.msra.mxu0 %v2544
  %2554 = vmatmul.bf16.gmra.mxu0 %v2541
  %v2555 = vpop.f32.mrf.mxu0
  %v2556 = vadd.f32 0.0, %v2555
  %v2557 = vpop.f32.mrf.mxu0
  %v2558 = vadd.f32 0.0, %v2557
  %2559 = vdwg.mxu0
  %v2562 = vunpack.c.l.b16 %v1792
  %v2563 = vunpack.c.l.b16 %v1793
  %v2564 = vpack.c.b16 %v2563, %v2562
  %v2567 = vunpack.c.l.b16 %v1728
  %v2568 = vunpack.c.l.b16 %v1729
  %v2569 = vpack.c.b16 %v2568, %v2567
  %v2571 = vsel %vm140, %v2564, 0
  %v2574 = vand.u32 %v2569, %v1822
  %2576 = vmatpush.bf16.msra.mxu0 0
  %2577 = vmatpush.bf16.msra.mxu0 0
  %2578 = vmatpush.bf16.msra.mxu0 0
  %2579 = vmatpush.bf16.msra.mxu0 0
  %2580 = vmatpush.bf16.msra.mxu0 0
  %2581 = vmatpush.bf16.msra.mxu0 0
  %2582 = vmatpush.bf16.msra.mxu0 0
  %2583 = vmatpush.bf16.msra.mxu0 %v2574
  %2584 = vmatmul.bf16.gmra.mxu0 %v2571
  %v2585 = vpop.f32.mrf.mxu0
  %v2586 = vadd.f32 0.0, %v2585
  %v2587 = vpop.f32.mrf.mxu0
  %v2588 = vadd.f32 0.0, %v2587
  %2589 = vdwg.mxu0
  %v2592 = vunpack.c.l.b16 %v1794
  %v2593 = vunpack.c.l.b16 %v1795
  %v2594 = vpack.c.b16 %v2593, %v2592
  %v2597 = vunpack.c.l.b16 %v1730
  %v2598 = vunpack.c.l.b16 %v1731
  %v2599 = vpack.c.b16 %v2598, %v2597
  %v2601 = vsel %vm140, %v2594, 0
  %v2604 = vand.u32 %v2599, %v1822
  %2606 = vmatpush.bf16.msra.mxu0 0
  %2607 = vmatpush.bf16.msra.mxu0 0
  %2608 = vmatpush.bf16.msra.mxu0 0
  %2609 = vmatpush.bf16.msra.mxu0 0
  %2610 = vmatpush.bf16.msra.mxu0 0
  %2611 = vmatpush.bf16.msra.mxu0 0
  %2612 = vmatpush.bf16.msra.mxu0 0
  %2613 = vmatpush.bf16.msra.mxu0 %v2604
  %2614 = vmatmul.bf16.gmra.mxu0 %v2601
  %v2615 = vpop.f32.mrf.mxu0
  %v2616 = vadd.f32 0.0, %v2615
  %v2617 = vpop.f32.mrf.mxu0
  %v2618 = vadd.f32 0.0, %v2617
  %2619 = vdwg.mxu0
  %v2622 = vunpack.c.l.b16 %v1796
  %v2623 = vunpack.c.l.b16 %v1797
  %v2624 = vpack.c.b16 %v2623, %v2622
  %v2627 = vunpack.c.l.b16 %v1732
  %v2628 = vunpack.c.l.b16 %v1733
  %v2629 = vpack.c.b16 %v2628, %v2627
  %v2631 = vsel %vm140, %v2624, 0
  %v2634 = vand.u32 %v2629, %v1822
  %2636 = vmatpush.bf16.msra.mxu0 0
  %2637 = vmatpush.bf16.msra.mxu0 0
  %2638 = vmatpush.bf16.msra.mxu0 0
  %2639 = vmatpush.bf16.msra.mxu0 0
  %2640 = vmatpush.bf16.msra.mxu0 0
  %2641 = vmatpush.bf16.msra.mxu0 0
  %2642 = vmatpush.bf16.msra.mxu0 0
  %2643 = vmatpush.bf16.msra.mxu0 %v2634
  %2644 = vmatmul.bf16.gmra.mxu0 %v2631
  %v2645 = vpop.f32.mrf.mxu0
  %v2646 = vadd.f32 0.0, %v2645
  %v2647 = vpop.f32.mrf.mxu0
  %v2648 = vadd.f32 0.0, %v2647
  %2649 = vdwg.mxu0
  %v2652 = vunpack.c.l.b16 %v1798
  %v2653 = vunpack.c.l.b16 %v1799
  %v2654 = vpack.c.b16 %v2653, %v2652
  %v2657 = vunpack.c.l.b16 %v1734
  %v2658 = vunpack.c.l.b16 %v1735
  %v2659 = vpack.c.b16 %v2658, %v2657
  %v2661 = vsel %vm140, %v2654, 0
  %v2664 = vand.u32 %v2659, %v1822
  %2666 = vmatpush.bf16.msra.mxu0 0
  %2667 = vmatpush.bf16.msra.mxu0 0
  %2668 = vmatpush.bf16.msra.mxu0 0
  %2669 = vmatpush.bf16.msra.mxu0 0
  %2670 = vmatpush.bf16.msra.mxu0 0
  %2671 = vmatpush.bf16.msra.mxu0 0
  %2672 = vmatpush.bf16.msra.mxu0 0
  %2673 = vmatpush.bf16.msra.mxu0 %v2664
  %2674 = vmatmul.bf16.gmra.mxu0 %v2661
  %v2675 = vpop.f32.mrf.mxu0
  %v2676 = vadd.f32 0.0, %v2675
  %v2677 = vpop.f32.mrf.mxu0
  %v2678 = vadd.f32 0.0, %v2677
  %2679 = vdwg.mxu0
  %v2682 = vunpack.c.l.b16 %v1800
  %v2683 = vunpack.c.l.b16 %v1801
  %v2684 = vpack.c.b16 %v2683, %v2682
  %v2687 = vunpack.c.l.b16 %v1736
  %v2688 = vunpack.c.l.b16 %v1737
  %v2689 = vpack.c.b16 %v2688, %v2687
  %v2691 = vsel %vm140, %v2684, 0
  %v2694 = vand.u32 %v2689, %v1822
  %2696 = vmatpush.bf16.msra.mxu0 0
  %2697 = vmatpush.bf16.msra.mxu0 0
  %2698 = vmatpush.bf16.msra.mxu0 0
  %2699 = vmatpush.bf16.msra.mxu0 0
  %2700 = vmatpush.bf16.msra.mxu0 0
  %2701 = vmatpush.bf16.msra.mxu0 0
  %2702 = vmatpush.bf16.msra.mxu0 0
  %2703 = vmatpush.bf16.msra.mxu0 %v2694
  %2704 = vmatmul.bf16.gmra.mxu0 %v2691
  %v2705 = vpop.f32.mrf.mxu0
  %v2706 = vadd.f32 0.0, %v2705
  %v2707 = vpop.f32.mrf.mxu0
  %v2708 = vadd.f32 0.0, %v2707
  %2709 = vdwg.mxu0
  %v2712 = vunpack.c.l.b16 %v1802
  %v2713 = vunpack.c.l.b16 %v1803
  %v2714 = vpack.c.b16 %v2713, %v2712
  %v2717 = vunpack.c.l.b16 %v1738
  %v2718 = vunpack.c.l.b16 %v1739
  %v2719 = vpack.c.b16 %v2718, %v2717
  %v2721 = vsel %vm140, %v2714, 0
  %v2724 = vand.u32 %v2719, %v1822
  %2726 = vmatpush.bf16.msra.mxu0 0
  %2727 = vmatpush.bf16.msra.mxu0 0
  %2728 = vmatpush.bf16.msra.mxu0 0
  %2729 = vmatpush.bf16.msra.mxu0 0
  %2730 = vmatpush.bf16.msra.mxu0 0
  %2731 = vmatpush.bf16.msra.mxu0 0
  %2732 = vmatpush.bf16.msra.mxu0 0
  %2733 = vmatpush.bf16.msra.mxu0 %v2724
  %2734 = vmatmul.bf16.gmra.mxu0 %v2721
  %v2735 = vpop.f32.mrf.mxu0
  %v2736 = vadd.f32 0.0, %v2735
  %v2737 = vpop.f32.mrf.mxu0
  %v2738 = vadd.f32 0.0, %v2737
  %2739 = vdwg.mxu0
  %v2742 = vunpack.c.l.b16 %v1804
  %v2743 = vunpack.c.l.b16 %v1805
  %v2744 = vpack.c.b16 %v2743, %v2742
  %v2747 = vunpack.c.l.b16 %v1740
  %v2748 = vunpack.c.l.b16 %v1741
  %v2749 = vpack.c.b16 %v2748, %v2747
  %v2751 = vsel %vm140, %v2744, 0
  %v2754 = vand.u32 %v2749, %v1822
  %2756 = vmatpush.bf16.msra.mxu0 0
  %2757 = vmatpush.bf16.msra.mxu0 0
  %2758 = vmatpush.bf16.msra.mxu0 0
  %2759 = vmatpush.bf16.msra.mxu0 0
  %2760 = vmatpush.bf16.msra.mxu0 0
  %2761 = vmatpush.bf16.msra.mxu0 0
  %2762 = vmatpush.bf16.msra.mxu0 0
  %2763 = vmatpush.bf16.msra.mxu0 %v2754
  %2764 = vmatmul.bf16.gmra.mxu0 %v2751
  %v2765 = vpop.f32.mrf.mxu0
  %v2766 = vadd.f32 0.0, %v2765
  %v2767 = vpop.f32.mrf.mxu0
  %v2768 = vadd.f32 0.0, %v2767
  %2769 = vdwg.mxu0
  %vm2770 = vcmask 261120
  %2771 = vst.msk [vmem:[%s2] sm:$0xff] %vm2770, %v1836
  %vm2772 = vcmask 253952
  %2773 = vst.msk [vmem:[%s2 + $0x8] sm:$0x1] %vm2772, %v1838
  %2774 = vst.msk [vmem:[%s2 + $0x10] sm:$0xff] %vm2770, %v1866
  %2775 = vst.msk [vmem:[%s2 + $0x18] sm:$0x1] %vm2772, %v1868
  %2776 = vst.msk [vmem:[%s2 + $0x20] sm:$0xff] %vm2770, %v1896
  %2777 = vst.msk [vmem:[%s2 + $0x28] sm:$0x1] %vm2772, %v1898
  %2778 = vst.msk [vmem:[%s2 + $0x30] sm:$0xff] %vm2770, %v1926
  %2779 = vst.msk [vmem:[%s2 + $0x38] sm:$0x1] %vm2772, %v1928
  %2780 = vst.msk [vmem:[%s2 + $0x40] sm:$0xff] %vm2770, %v1956
  %2781 = vst.msk [vmem:[%s2 + $0x48] sm:$0x1] %vm2772, %v1958
  %2782 = vst.msk [vmem:[%s2 + $0x50] sm:$0xff] %vm2770, %v1986
  %2783 = vst.msk [vmem:[%s2 + $0x58] sm:$0x1] %vm2772, %v1988
  %2784 = vst.msk [vmem:[%s2 + $0x60] sm:$0xff] %vm2770, %v2016
  %2785 = vst.msk [vmem:[%s2 + $0x68] sm:$0x1] %vm2772, %v2018
  %2786 = vst.msk [vmem:[%s2 + $0x70] sm:$0xff] %vm2770, %v2046
  %2787 = vst.msk [vmem:[%s2 + $0x78] sm:$0x1] %vm2772, %v2048
  %2788 = vst.msk [vmem:[%s2 + $0x80] sm:$0xff] %vm2770, %v2076
  %2789 = vst.msk [vmem:[%s2 + $0x88] sm:$0x1] %vm2772, %v2078
  %2790 = vst.msk [vmem:[%s2 + $0x90] sm:$0xff] %vm2770, %v2106
  %2791 = vst.msk [vmem:[%s2 + $0x98] sm:$0x1] %vm2772, %v2108
  %2792 = vst.msk [vmem:[%s2 + $0xa0] sm:$0xff] %vm2770, %v2136
  %2793 = vst.msk [vmem:[%s2 + $0xa8] sm:$0x1] %vm2772, %v2138
  %2794 = vst.msk [vmem:[%s2 + $0xb0] sm:$0xff] %vm2770, %v2166
  %2795 = vst.msk [vmem:[%s2 + $0xb8] sm:$0x1] %vm2772, %v2168
  %2796 = vst.msk [vmem:[%s2 + $0xc0] sm:$0xff] %vm2770, %v2196
  %2797 = vst.msk [vmem:[%s2 + $0xc8] sm:$0x1] %vm2772, %v2198
  %2798 = vst.msk [vmem:[%s2 + $0xd0] sm:$0xff] %vm2770, %v2226
  %2799 = vst.msk [vmem:[%s2 + $0xd8] sm:$0x1] %vm2772, %v2228
  %2800 = vst.msk [vmem:[%s2 + $0xe0] sm:$0xff] %vm2770, %v2256
  %2801 = vst.msk [vmem:[%s2 + $0xe8] sm:$0x1] %vm2772, %v2258
  %2802 = vst.msk [vmem:[%s2 + $0xf0] sm:$0xff] %vm2770, %v2286
  %2803 = vst.msk [vmem:[%s2 + $0xf8] sm:$0x1] %vm2772, %v2288
  %2804 = vst.msk [vmem:[%s2 + $0x100] sm:$0xff] %vm2770, %v2316
  %2805 = vst.msk [vmem:[%s2 + $0x108] sm:$0x1] %vm2772, %v2318
  %2806 = vst.msk [vmem:[%s2 + $0x110] sm:$0xff] %vm2770, %v2346
  %2807 = vst.msk [vmem:[%s2 + $0x118] sm:$0x1] %vm2772, %v2348
  %2808 = vst.msk [vmem:[%s2 + $0x120] sm:$0xff] %vm2770, %v2376
  %2809 = vst.msk [vmem:[%s2 + $0x128] sm:$0x1] %vm2772, %v2378
  %2810 = vst.msk [vmem:[%s2 + $0x130] sm:$0xff] %vm2770, %v2406
  %2811 = vst.msk [vmem:[%s2 + $0x138] sm:$0x1] %vm2772, %v2408
  %2812 = vst.msk [vmem:[%s2 + $0x140] sm:$0xff] %vm2770, %v2436
  %2813 = vst.msk [vmem:[%s2 + $0x148] sm:$0x1] %vm2772, %v2438
  %2814 = vst.msk [vmem:[%s2 + $0x150] sm:$0xff] %vm2770, %v2466
  %2815 = vst.msk [vmem:[%s2 + $0x158] sm:$0x1] %vm2772, %v2468
  %2816 = vst.msk [vmem:[%s2 + $0x160] sm:$0xff] %vm2770, %v2496
  %2817 = vst.msk [vmem:[%s2 + $0x168] sm:$0x1] %vm2772, %v2498
  %2818 = vst.msk [vmem:[%s2 + $0x170] sm:$0xff] %vm2770, %v2526
  %2819 = vst.msk [vmem:[%s2 + $0x178] sm:$0x1] %vm2772, %v2528
  %2820 = vst.msk [vmem:[%s2 + $0x180] sm:$0xff] %vm2770, %v2556
  %2821 = vst.msk [vmem:[%s2 + $0x188] sm:$0x1] %vm2772, %v2558
  %2822 = vst.msk [vmem:[%s2 + $0x190] sm:$0xff] %vm2770, %v2586
  %2823 = vst.msk [vmem:[%s2 + $0x198] sm:$0x1] %vm2772, %v2588
  %2824 = vst.msk [vmem:[%s2 + $0x1a0] sm:$0xff] %vm2770, %v2616
  %2825 = vst.msk [vmem:[%s2 + $0x1a8] sm:$0x1] %vm2772, %v2618
  %2826 = vst.msk [vmem:[%s2 + $0x1b0] sm:$0xff] %vm2770, %v2646
  %2827 = vst.msk [vmem:[%s2 + $0x1b8] sm:$0x1] %vm2772, %v2648
  %2828 = vst.msk [vmem:[%s2 + $0x1c0] sm:$0xff] %vm2770, %v2676
  %2829 = vst.msk [vmem:[%s2 + $0x1c8] sm:$0x1] %vm2772, %v2678
  %2830 = vst.msk [vmem:[%s2 + $0x1d0] sm:$0xff] %vm2770, %v2706
  %2831 = vst.msk [vmem:[%s2 + $0x1d8] sm:$0x1] %vm2772, %v2708
  %2832 = vst.msk [vmem:[%s2 + $0x1e0] sm:$0xff] %vm2770, %v2736
  %2833 = vst.msk [vmem:[%s2 + $0x1e8] sm:$0x1] %vm2772, %v2738
  %2834 = vst.msk [vmem:[%s2 + $0x1f0] sm:$0xff] %vm2770, %v2766
  %2835 = vst.msk [vmem:[%s2 + $0x1f8] sm:$0x1] %vm2772, %v2768
  // Predicated region
  $region10: #{_lambda_.23} parent=0 // pred_check
    _
  $region11: #{_lambda_.23} parent=0 // pred_check_branch
    %2837 = sbr.rel (0) target = $region13
  $region12: #{_lambda_.23} parent=0 // pred_region
    _
  $region13: #{_lambda_.23} parent=0 // pred_fallthru
    _
  // Predicated region
  $region14: #{_lambda_.23} parent=0 // pred_check
    _
  $region15: #{_lambda_.23} parent=0 // pred_check_branch
    %2839 = sbr.rel (0) target = $region17
  $region16: #{_lambda_.23} parent=0 // pred_region
    _
  $region17: #{_lambda_.23} parent=0 // pred_fallthru
    _

// kernel: _lambda_.24
$region0: #{_lambda_.24}
  #allocation0 [shape = 'u32[]', space=smem, size = 0x4, offset = 0x4, fixed_abs, tag = 'smem constant byte address 0x4 - core index']
  #allocation1 [shape = 'u32[72,128]{1,0:T(1,128)}', space=vmem, size = 0x9000, scoped, tag = 'internal scratch']
  %s0 = inlined_call_operand.vmem [shape: bf16[128,32], index: 0, kind: input, shape index: {}]
  %s1 = inlined_call_operand.vmem [shape: bf16[32,128], index: 1, kind: input, shape index: {}]
  %s2 = inlined_call_operand.vmem [shape: f32[1,128], index: 2, kind: input, shape index: {}]
  %s3 = inlined_call_operand.vmem [shape: f32[128,128], index: 3, kind: output, shape index: {}]
  %s4 = sld [smem:[#allocation0]]
  $region22: #{_lambda_.24} parent=0
    _
  %s6 = ssub.s32 1, %s4
  %s7 = scalar_select 0, %s6, %s4
  // Predicated region
  $region2: #{_lambda_.24} parent=0 // pred_check
    _
  $region3: #{_lambda_.24} parent=0 // pred_check_branch
    %9 = sbr.rel (0) target = $region5
  $region4: #{_lambda_.24} parent=0 // pred_region
    _
  $region5: #{_lambda_.24} parent=0 // pred_fallthru
    _
  // Predicated region
  $region6: #{_lambda_.24} parent=0 // pred_check
    _
  $region7: #{_lambda_.24} parent=0 // pred_check_branch
    %11 = sbr.rel (0) target = $region9
  $region8: #{_lambda_.24} parent=0 // pred_region
    _
  $region9: #{_lambda_.24} parent=0 // pred_fallthru
    _
  // Predicated region
  $region10: #{_lambda_.24} parent=0 // pred_check
    _
  $region11: #{_lambda_.24} parent=0 // pred_check_branch
    %13 = sbr.rel (0) target = $region13
  $region12: #{_lambda_.24} parent=0 // pred_region
    _
  $region13: #{_lambda_.24} parent=0 // pred_fallthru
    _
  %v15 = vld [vmem:[%s0] sm:$0xf]
  %v16 = vld [vmem:[%s0 + $0x4] sm:$0xf]
  %v17 = vld [vmem:[%s0 + $0x8] sm:$0xf]
  %v18 = vld [vmem:[%s0 + $0xc] sm:$0xf]
  %v19 = vld [vmem:[%s0 + $0x10] sm:$0xf]
  %v20 = vld [vmem:[%s0 + $0x14] sm:$0xf]
  %v21 = vld [vmem:[%s0 + $0x18] sm:$0xf]
  %v22 = vld [vmem:[%s0 + $0x1c] sm:$0xf]
  %v23 = vld [vmem:[%s0 + $0x20] sm:$0xf]
  %v24 = vld [vmem:[%s0 + $0x24] sm:$0xf]
  %v25 = vld [vmem:[%s0 + $0x28] sm:$0xf]
  %v26 = vld [vmem:[%s0 + $0x2c] sm:$0xf]
  %v27 = vld [vmem:[%s0 + $0x30] sm:$0xf]
  %v28 = vld [vmem:[%s0 + $0x34] sm:$0xf]
  %v29 = vld [vmem:[%s0 + $0x38] sm:$0xf]
  %v30 = vld [vmem:[%s0 + $0x3c] sm:$0xf]
  %v31 = vld [vmem:[%s1] sm:$0xf]
  %v32 = vld [vmem:[%s1 + $0x4] sm:$0xf]
  %v33 = vld [vmem:[%s1 + $0x8] sm:$0xf]
  %v34 = vld [vmem:[%s1 + $0xc] sm:$0xf]
  %v35 = vld [vmem:[%s2] sm:$0x1]
  %v37 = vperm.slane %v35, 0
  %v55 = vunpack.c.l.b16 %v15
  %v56 = vunpack.c.l.b16 %v16
  %v57 = vunpack.c.l.b16 %v17
  %v58 = vunpack.c.l.b16 %v18
  %v59 = vunpack.c.l.b16 %v19
  %v60 = vunpack.c.l.b16 %v20
  %v61 = vunpack.c.l.b16 %v21
  %v62 = vunpack.c.l.b16 %v22
  %v63 = vunpack.c.l.b16 %v23
  %v64 = vunpack.c.l.b16 %v24
  %v65 = vunpack.c.l.b16 %v25
  %v66 = vunpack.c.l.b16 %v26
  %v67 = vunpack.c.l.b16 %v27
  %v68 = vunpack.c.l.b16 %v28
  %v69 = vunpack.c.l.b16 %v29
  %v70 = vunpack.c.l.b16 %v30
  %v71 = vpack.c.b16 %v56, %v55
  %v72 = vpack.c.b16 %v58, %v57
  %v73 = vpack.c.b16 %v60, %v59
  %v74 = vpack.c.b16 %v62, %v61
  %v75 = vpack.c.b16 %v64, %v63
  %v76 = vpack.c.b16 %v66, %v65
  %v77 = vpack.c.b16 %v68, %v67
  %v78 = vpack.c.b16 %v70, %v69
  %v83 = vunpack.c.l.b16 %v31
  %v84 = vunpack.c.l.b16 %v32
  %v85 = vunpack.c.l.b16 %v33
  %v86 = vunpack.c.l.b16 %v34
  %v87 = vpack.c.b16 %v84, %v83
  %v88 = vpack.c.b16 %v86, %v85
  %vm91 = vcmask 261120
  %v93 = vsel %vm91, %v71, 0
  %v96 = vsel %vm91, %v72, 0
  %v99 = vsel %vm91, %v73, 0
  %v102 = vsel %vm91, %v74, 0
  %v105 = vsel %vm91, %v75, 0
  %v108 = vsel %vm91, %v76, 0
  %v111 = vsel %vm91, %v77, 0
  %v114 = vsel %vm91, %v78, 0
  %116 = vmatpush.bf16.msra.mxu0 0
  %117 = vmatpush.bf16.msra.mxu0 0
  %118 = vmatpush.bf16.msra.mxu0 0
  %119 = vmatpush.bf16.msra.mxu0 0
  %120 = vmatpush.bf16.msra.mxu0 0
  %121 = vmatpush.bf16.msra.mxu0 0
  %122 = vmatpush.bf16.msra.mxu0 %v88
  %123 = vmatpush.bf16.msra.mxu0 %v87
  %124 = vmatmul.bf16.gmra.mxu0 %v93
  %v125 = vpop.f32.mrf.mxu0
  %v126 = vadd.f32 %v37, %v125
  %v127 = vpop.f32.mrf.mxu0
  %v128 = vadd.f32 %v37, %v127
  %129 = vmatmul.bf16.gmra.mxu0 %v96
  %v130 = vpop.f32.mrf.mxu0
  %v131 = vadd.f32 %v37, %v130
  %v132 = vpop.f32.mrf.mxu0
  %v133 = vadd.f32 %v37, %v132
  %134 = vmatmul.bf16.gmra.mxu0 %v99
  %v135 = vpop.f32.mrf.mxu0
  %v136 = vadd.f32 %v37, %v135
  %v137 = vpop.f32.mrf.mxu0
  %v138 = vadd.f32 %v37, %v137
  %139 = vmatmul.bf16.gmra.mxu0 %v102
  %v140 = vpop.f32.mrf.mxu0
  %v141 = vadd.f32 %v37, %v140
  %v142 = vpop.f32.mrf.mxu0
  %v143 = vadd.f32 %v37, %v142
  %144 = vmatmul.bf16.gmra.mxu0 %v105
  %v145 = vpop.f32.mrf.mxu0
  %v146 = vadd.f32 %v37, %v145
  %v147 = vpop.f32.mrf.mxu0
  %v148 = vadd.f32 %v37, %v147
  %149 = vmatmul.bf16.gmra.mxu0 %v108
  %v150 = vpop.f32.mrf.mxu0
  %v151 = vadd.f32 %v37, %v150
  %v152 = vpop.f32.mrf.mxu0
  %v153 = vadd.f32 %v37, %v152
  %154 = vmatmul.bf16.gmra.mxu0 %v111
  %v155 = vpop.f32.mrf.mxu0
  %v156 = vadd.f32 %v37, %v155
  %v157 = vpop.f32.mrf.mxu0
  %v158 = vadd.f32 %v37, %v157
  %159 = vmatmul.bf16.gmra.mxu0 %v114
  %v160 = vpop.f32.mrf.mxu0
  %v161 = vadd.f32 %v37, %v160
  %v162 = vpop.f32.mrf.mxu0
  %v163 = vadd.f32 %v37, %v162
  %164 = vdwg.mxu0
  %165 = vst [vmem:[%s3] sm:$0xff] %v126
  %166 = vst [vmem:[%s3 + $0x8] sm:$0xff] %v128
  %167 = vst [vmem:[%s3 + $0x10] sm:$0xff] %v131
  %168 = vst [vmem:[%s3 + $0x18] sm:$0xff] %v133
  %169 = vst [vmem:[%s3 + $0x20] sm:$0xff] %v136
  %170 = vst [vmem:[%s3 + $0x28] sm:$0xff] %v138
  %171 = vst [vmem:[%s3 + $0x30] sm:$0xff] %v141
  %172 = vst [vmem:[%s3 + $0x38] sm:$0xff] %v143
  %173 = vst [vmem:[%s3 + $0x40] sm:$0xff] %v146
  %174 = vst [vmem:[%s3 + $0x48] sm:$0xff] %v148
  %175 = vst [vmem:[%s3 + $0x50] sm:$0xff] %v151
  %176 = vst [vmem:[%s3 + $0x58] sm:$0xff] %v153
  %177 = vst [vmem:[%s3 + $0x60] sm:$0xff] %v156
  %178 = vst [vmem:[%s3 + $0x68] sm:$0xff] %v158
  %179 = vst [vmem:[%s3 + $0x70] sm:$0xff] %v161
  %180 = vst [vmem:[%s3 + $0x78] sm:$0xff] %v163
  // Predicated region
  $region14: #{_lambda_.24} parent=0 // pred_check
    _
  $region15: #{_lambda_.24} parent=0 // pred_check_branch
    %182 = sbr.rel (0) target = $region17
  $region16: #{_lambda_.24} parent=0 // pred_region
    _
  $region17: #{_lambda_.24} parent=0 // pred_fallthru
    _
  // Predicated region
  $region18: #{_lambda_.24} parent=0 // pred_check
    _
  $region19: #{_lambda_.24} parent=0 // pred_check_branch
    %184 = sbr.rel (0) target = $region21
  $region20: #{_lambda_.24} parent=0 // pred_region
    _
  $region21: #{_lambda_.24} parent=0 // pred_fallthru
    _

// kernel: _lambda_.25
$region0: #{_lambda_.25}
  #allocation0 [shape = 'u32[]', space=smem, size = 0x4, offset = 0x4, fixed_abs, tag = 'smem constant byte address 0x4 - core index']
  #allocation1 [shape = 'u32[72,128]{1,0:T(1,128)}', space=vmem, size = 0x9000, scoped, tag = 'internal scratch']
  %s0 = inlined_call_operand.vmem [shape: f32[128,32], index: 0, kind: input, shape index: {}]
  %s1 = inlined_call_operand.vmem [shape: f32[1,32], index: 1, kind: input, shape index: {}]
  %s2 = inlined_call_operand.vmem [shape: f32[1,32], index: 2, kind: input, shape index: {}]
  %s3 = inlined_call_operand.vmem [shape: bf16[32,128], index: 3, kind: input, shape index: {}]
  %s4 = inlined_call_operand.vmem [shape: f32[1,128], index: 4, kind: input, shape index: {}]
  %s5 = inlined_call_operand.vmem [shape: f32[128,128], index: 5, kind: output, shape index: {}]
  %s6 = sld [smem:[#allocation0]]
  $region30: #{_lambda_.25} parent=0
    _
  %s8 = ssub.s32 1, %s6
  %s9 = scalar_select 0, %s8, %s6
  // Predicated region
  $region2: #{_lambda_.25} parent=0 // pred_check
    _
  $region3: #{_lambda_.25} parent=0 // pred_check_branch
    %11 = sbr.rel (0) target = $region5
  $region4: #{_lambda_.25} parent=0 // pred_region
    _
  $region5: #{_lambda_.25} parent=0 // pred_fallthru
    _
  // Predicated region
  $region6: #{_lambda_.25} parent=0 // pred_check
    _
  $region7: #{_lambda_.25} parent=0 // pred_check_branch
    %13 = sbr.rel (0) target = $region9
  $region8: #{_lambda_.25} parent=0 // pred_region
    _
  $region9: #{_lambda_.25} parent=0 // pred_fallthru
    _
  // Predicated region
  $region10: #{_lambda_.25} parent=0 // pred_check
    _
  $region11: #{_lambda_.25} parent=0 // pred_check_branch
    %15 = sbr.rel (0) target = $region13
  $region12: #{_lambda_.25} parent=0 // pred_region
    _
  $region13: #{_lambda_.25} parent=0 // pred_fallthru
    _
  // Predicated region
  $region14: #{_lambda_.25} parent=0 // pred_check
    _
  $region15: #{_lambda_.25} parent=0 // pred_check_branch
    %17 = sbr.rel (0) target = $region17
  $region16: #{_lambda_.25} parent=0 // pred_region
    _
  $region17: #{_lambda_.25} parent=0 // pred_fallthru
    _
  // Predicated region
  $region18: #{_lambda_.25} parent=0 // pred_check
    _
  $region19: #{_lambda_.25} parent=0 // pred_check_branch
    %19 = sbr.rel (0) target = $region21
  $region20: #{_lambda_.25} parent=0 // pred_region
    _
  $region21: #{_lambda_.25} parent=0 // pred_fallthru
    _
  %v21 = vld [vmem:[%s0] sm:$0xff]
  %v22 = vld [vmem:[%s0 + $0x8] sm:$0xff]
  %v23 = vld [vmem:[%s0 + $0x10] sm:$0xff]
  %v24 = vld [vmem:[%s0 + $0x18] sm:$0xff]
  %v25 = vld [vmem:[%s0 + $0x20] sm:$0xff]
  %v26 = vld [vmem:[%s0 + $0x28] sm:$0xff]
  %v27 = vld [vmem:[%s0 + $0x30] sm:$0xff]
  %v28 = vld [vmem:[%s0 + $0x38] sm:$0xff]
  %v29 = vld [vmem:[%s0 + $0x40] sm:$0xff]
  %v30 = vld [vmem:[%s0 + $0x48] sm:$0xff]
  %v31 = vld [vmem:[%s0 + $0x50] sm:$0xff]
  %v32 = vld [vmem:[%s0 + $0x58] sm:$0xff]
  %v33 = vld [vmem:[%s0 + $0x60] sm:$0xff]
  %v34 = vld [vmem:[%s0 + $0x68] sm:$0xff]
  %v35 = vld [vmem:[%s0 + $0x70] sm:$0xff]
  %v36 = vld [vmem:[%s0 + $0x78] sm:$0xff]
  %vm37 = vcmask 261120
  %v38 = vsel %vm37, %v21, 0.0
  %39 = vadd.xlane.f32.xlu0 %v38
  %v40 = vpop.xlane.xlu0 %39
  %v41 = vsel %vm37, %v22, 0.0
  %42 = vadd.xlane.f32.xlu0 %v41
  %v43 = vpop.xlane.xlu0 %42
  %v44 = vsel %vm37, %v23, 0.0
  %45 = vadd.xlane.f32.xlu0 %v44
  %v46 = vpop.xlane.xlu0 %45
  %v47 = vsel %vm37, %v24, 0.0
  %48 = vadd.xlane.f32.xlu0 %v47
  %v49 = vpop.xlane.xlu0 %48
  %v50 = vsel %vm37, %v25, 0.0
  %51 = vadd.xlane.f32.xlu0 %v50
  %v52 = vpop.xlane.xlu0 %51
  %v53 = vsel %vm37, %v26, 0.0
  %54 = vadd.xlane.f32.xlu0 %v53
  %v55 = vpop.xlane.xlu0 %54
  %v56 = vsel %vm37, %v27, 0.0
  %57 = vadd.xlane.f32.xlu0 %v56
  %v58 = vpop.xlane.xlu0 %57
  %v59 = vsel %vm37, %v28, 0.0
  %60 = vadd.xlane.f32.xlu0 %v59
  %v61 = vpop.xlane.xlu0 %60
  %v62 = vsel %vm37, %v29, 0.0
  %63 = vadd.xlane.f32.xlu0 %v62
  %v64 = vpop.xlane.xlu0 %63
  %v65 = vsel %vm37, %v30, 0.0
  %66 = vadd.xlane.f32.xlu0 %v65
  %v67 = vpop.xlane.xlu0 %66
  %v68 = vsel %vm37, %v31, 0.0
  %69 = vadd.xlane.f32.xlu0 %v68
  %v70 = vpop.xlane.xlu0 %69
  %v71 = vsel %vm37, %v32, 0.0
  %72 = vadd.xlane.f32.xlu0 %v71
  %v73 = vpop.xlane.xlu0 %72
  %v74 = vsel %vm37, %v33, 0.0
  %75 = vadd.xlane.f32.xlu0 %v74
  %v76 = vpop.xlane.xlu0 %75
  %v77 = vsel %vm37, %v34, 0.0
  %78 = vadd.xlane.f32.xlu0 %v77
  %v79 = vpop.xlane.xlu0 %78
  %v80 = vsel %vm37, %v35, 0.0
  %81 = vadd.xlane.f32.xlu0 %v80
  %v82 = vpop.xlane.xlu0 %81
  %v83 = vsel %vm37, %v36, 0.0
  %84 = vadd.xlane.f32.xlu0 %v83
  %v85 = vpop.xlane.xlu0 %84
  %v86 = vrcp.pop 32.0
  %v87 = vmul.f32 32.0, %v86
  %v88 = vsub.f32 1.0, %v87
  %v89 = vmul.f32 %v86, %v88
  %v90 = vadd.f32 %v86, %v89
  %vm91 = vweird.f32 %v86
  %v92 = vsel %vm91, %v86, %v90
  %v93 = vmul.f32 %v40, %v92
  %v94 = vmul.f32 %v43, %v92
  %v95 = vmul.f32 %v46, %v92
  %v96 = vmul.f32 %v49, %v92
  %v97 = vmul.f32 %v52, %v92
  %v98 = vmul.f32 %v55, %v92
  %v99 = vmul.f32 %v58, %v92
  %v100 = vmul.f32 %v61, %v92
  %v101 = vmul.f32 %v64, %v92
  %v102 = vmul.f32 %v67, %v92
  %v103 = vmul.f32 %v70, %v92
  %v104 = vmul.f32 %v73, %v92
  %v105 = vmul.f32 %v76, %v92
  %v106 = vmul.f32 %v79, %v92
  %v107 = vmul.f32 %v82, %v92
  %v108 = vmul.f32 %v85, %v92
  %v109 = vsub.f32 %v21, %v93
  %v110 = vsub.f32 %v22, %v94
  %v111 = vsub.f32 %v23, %v95
  %v112 = vsub.f32 %v24, %v96
  %v113 = vsub.f32 %v25, %v97
  %v114 = vsub.f32 %v26, %v98
  %v115 = vsub.f32 %v27, %v99
  %v116 = vsub.f32 %v28, %v100
  %v117 = vsub.f32 %v29, %v101
  %v118 = vsub.f32 %v30, %v102
  %v119 = vsub.f32 %v31, %v103
  %v120 = vsub.f32 %v32, %v104
  %v121 = vsub.f32 %v33, %v105
  %v122 = vsub.f32 %v34, %v106
  %v123 = vsub.f32 %v35, %v107
  %v124 = vsub.f32 %v36, %v108
  %v125 = vmul.f32 %v109, %v109
  %v126 = vmul.f32 %v110, %v110
  %v127 = vmul.f32 %v111, %v111
  %v128 = vmul.f32 %v112, %v112
  %v129 = vmul.f32 %v113, %v113
  %v130 = vmul.f32 %v114, %v114
  %v131 = vmul.f32 %v115, %v115
  %v132 = vmul.f32 %v116, %v116
  %v133 = vmul.f32 %v117, %v117
  %v134 = vmul.f32 %v118, %v118
  %v135 = vmul.f32 %v119, %v119
  %v136 = vmul.f32 %v120, %v120
  %v137 = vmul.f32 %v121, %v121
  %v138 = vmul.f32 %v122, %v122
  %v139 = vmul.f32 %v123, %v123
  %v140 = vmul.f32 %v124, %v124
  %v141 = vsel %vm37, %v125, 0.0
  %142 = vadd.xlane.f32.xlu0 %v141
  %v143 = vpop.xlane.xlu0 %142
  %v144 = vsel %vm37, %v126, 0.0
  %145 = vadd.xlane.f32.xlu0 %v144
  %v146 = vpop.xlane.xlu0 %145
  %v147 = vsel %vm37, %v127, 0.0
  %148 = vadd.xlane.f32.xlu0 %v147
  %v149 = vpop.xlane.xlu0 %148
  %v150 = vsel %vm37, %v128, 0.0
  %151 = vadd.xlane.f32.xlu0 %v150
  %v152 = vpop.xlane.xlu0 %151
  %v153 = vsel %vm37, %v129, 0.0
  %154 = vadd.xlane.f32.xlu0 %v153
  %v155 = vpop.xlane.xlu0 %154
  %v156 = vsel %vm37, %v130, 0.0
  %157 = vadd.xlane.f32.xlu0 %v156
  %v158 = vpop.xlane.xlu0 %157
  %v159 = vsel %vm37, %v131, 0.0
  %160 = vadd.xlane.f32.xlu0 %v159
  %v161 = vpop.xlane.xlu0 %160
  %v162 = vsel %vm37, %v132, 0.0
  %163 = vadd.xlane.f32.xlu0 %v162
  %v164 = vpop.xlane.xlu0 %163
  %v165 = vsel %vm37, %v133, 0.0
  %166 = vadd.xlane.f32.xlu0 %v165
  %v167 = vpop.xlane.xlu0 %166
  %v168 = vsel %vm37, %v134, 0.0
  %169 = vadd.xlane.f32.xlu0 %v168
  %v170 = vpop.xlane.xlu0 %169
  %v171 = vsel %vm37, %v135, 0.0
  %172 = vadd.xlane.f32.xlu0 %v171
  %v173 = vpop.xlane.xlu0 %172
  %v174 = vsel %vm37, %v136, 0.0
  %175 = vadd.xlane.f32.xlu0 %v174
  %v176 = vpop.xlane.xlu0 %175
  %v177 = vsel %vm37, %v137, 0.0
  %178 = vadd.xlane.f32.xlu0 %v177
  %v179 = vpop.xlane.xlu0 %178
  %v180 = vsel %vm37, %v138, 0.0
  %181 = vadd.xlane.f32.xlu0 %v180
  %v182 = vpop.xlane.xlu0 %181
  %v183 = vsel %vm37, %v139, 0.0
  %184 = vadd.xlane.f32.xlu0 %v183
  %v185 = vpop.xlane.xlu0 %184
  %v186 = vsel %vm37, %v140, 0.0
  %187 = vadd.xlane.f32.xlu0 %v186
  %v188 = vpop.xlane.xlu0 %187
  %v189 = vmul.f32 %v143, %v92
  %v190 = vmul.f32 %v146, %v92
  %v191 = vmul.f32 %v149, %v92
  %v192 = vmul.f32 %v152, %v92
  %v193 = vmul.f32 %v155, %v92
  %v194 = vmul.f32 %v158, %v92
  %v195 = vmul.f32 %v161, %v92
  %v196 = vmul.f32 %v164, %v92
  %v197 = vmul.f32 %v167, %v92
  %v198 = vmul.f32 %v170, %v92
  %v199 = vmul.f32 %v173, %v92
  %v200 = vmul.f32 %v176, %v92
  %v201 = vmul.f32 %v179, %v92
  %v202 = vmul.f32 %v182, %v92
  %v203 = vmul.f32 %v185, %v92
  %v204 = vmul.f32 %v188, %v92
  %v205 = vadd.f32 %v189, 1e-05
  %v206 = vadd.f32 %v190, 1e-05
  %v207 = vadd.f32 %v191, 1e-05
  %v208 = vadd.f32 %v192, 1e-05
  %v209 = vadd.f32 %v193, 1e-05
  %v210 = vadd.f32 %v194, 1e-05
  %v211 = vadd.f32 %v195, 1e-05
  %v212 = vadd.f32 %v196, 1e-05
  %v213 = vadd.f32 %v197, 1e-05
  %v214 = vadd.f32 %v198, 1e-05
  %v215 = vadd.f32 %v199, 1e-05
  %v216 = vadd.f32 %v200, 1e-05
  %v217 = vadd.f32 %v201, 1e-05
  %v218 = vadd.f32 %v202, 1e-05
  %v219 = vadd.f32 %v203, 1e-05
  %v220 = vadd.f32 %v204, 1e-05
  %v221 = vrsqrt.pop %v205
  %v222 = vmul.f32 %v221, %v205
  %v223 = vmul.f32 %v222, %v221
  %v224 = vmul.f32 0.5, %v223
  %v225 = vsub.f32 1.5, %v224
  %v226 = vmul.f32 %v221, %v225
  %vm227 = vweird.f32 %v205
  %vm228 = vweird.f32 %v221
  %vm229 = vmor %vm227, %vm228
  %v230 = vsel %vm229, %v221, %v226
  %v231 = vrsqrt.pop %v206
  %v232 = vmul.f32 %v231, %v206
  %v233 = vmul.f32 %v232, %v231
  %v234 = vmul.f32 0.5, %v233
  %v235 = vsub.f32 1.5, %v234
  %v236 = vmul.f32 %v231, %v235
  %vm237 = vweird.f32 %v206
  %vm238 = vweird.f32 %v231
  %vm239 = vmor %vm237, %vm238
  %v240 = vsel %vm239, %v231, %v236
  %v241 = vrsqrt.pop %v207
  %v242 = vmul.f32 %v241, %v207
  %v243 = vmul.f32 %v242, %v241
  %v244 = vmul.f32 0.5, %v243
  %v245 = vsub.f32 1.5, %v244
  %v246 = vmul.f32 %v241, %v245
  %vm247 = vweird.f32 %v207
  %vm248 = vweird.f32 %v241
  %vm249 = vmor %vm247, %vm248
  %v250 = vsel %vm249, %v241, %v246
  %v251 = vrsqrt.pop %v208
  %v252 = vmul.f32 %v251, %v208
  %v253 = vmul.f32 %v252, %v251
  %v254 = vmul.f32 0.5, %v253
  %v255 = vsub.f32 1.5, %v254
  %v256 = vmul.f32 %v251, %v255
  %vm257 = vweird.f32 %v208
  %vm258 = vweird.f32 %v251
  %vm259 = vmor %vm257, %vm258
  %v260 = vsel %vm259, %v251, %v256
  %v261 = vrsqrt.pop %v209
  %v262 = vmul.f32 %v261, %v209
  %v263 = vmul.f32 %v262, %v261
  %v264 = vmul.f32 0.5, %v263
  %v265 = vsub.f32 1.5, %v264
  %v266 = vmul.f32 %v261, %v265
  %vm267 = vweird.f32 %v209
  %vm268 = vweird.f32 %v261
  %vm269 = vmor %vm267, %vm268
  %v270 = vsel %vm269, %v261, %v266
  %v271 = vrsqrt.pop %v210
  %v272 = vmul.f32 %v271, %v210
  %v273 = vmul.f32 %v272, %v271
  %v274 = vmul.f32 0.5, %v273
  %v275 = vsub.f32 1.5, %v274
  %v276 = vmul.f32 %v271, %v275
  %vm277 = vweird.f32 %v210
  %vm278 = vweird.f32 %v271
  %vm279 = vmor %vm277, %vm278
  %v280 = vsel %vm279, %v271, %v276
  %v281 = vrsqrt.pop %v211
  %v282 = vmul.f32 %v281, %v211
  %v283 = vmul.f32 %v282, %v281
  %v284 = vmul.f32 0.5, %v283
  %v285 = vsub.f32 1.5, %v284
  %v286 = vmul.f32 %v281, %v285
  %vm287 = vweird.f32 %v211
  %vm288 = vweird.f32 %v281
  %vm289 = vmor %vm287, %vm288
  %v290 = vsel %vm289, %v281, %v286
  %v291 = vrsqrt.pop %v212
  %v292 = vmul.f32 %v291, %v212
  %v293 = vmul.f32 %v292, %v291
  %v294 = vmul.f32 0.5, %v293
  %v295 = vsub.f32 1.5, %v294
  %v296 = vmul.f32 %v291, %v295
  %vm297 = vweird.f32 %v212
  %vm298 = vweird.f32 %v291
  %vm299 = vmor %vm297, %vm298
  %v300 = vsel %vm299, %v291, %v296
  %v301 = vrsqrt.pop %v213
  %v302 = vmul.f32 %v301, %v213
  %v303 = vmul.f32 %v302, %v301
  %v304 = vmul.f32 0.5, %v303
  %v305 = vsub.f32 1.5, %v304
  %v306 = vmul.f32 %v301, %v305
  %vm307 = vweird.f32 %v213
  %vm308 = vweird.f32 %v301
  %vm309 = vmor %vm307, %vm308
  %v310 = vsel %vm309, %v301, %v306
  %v311 = vrsqrt.pop %v214
  %v312 = vmul.f32 %v311, %v214
  %v313 = vmul.f32 %v312, %v311
  %v314 = vmul.f32 0.5, %v313
  %v315 = vsub.f32 1.5, %v314
  %v316 = vmul.f32 %v311, %v315
  %vm317 = vweird.f32 %v214
  %vm318 = vweird.f32 %v311
  %vm319 = vmor %vm317, %vm318
  %v320 = vsel %vm319, %v311, %v316
  %v321 = vrsqrt.pop %v215
  %v322 = vmul.f32 %v321, %v215
  %v323 = vmul.f32 %v322, %v321
  %v324 = vmul.f32 0.5, %v323
  %v325 = vsub.f32 1.5, %v324
  %v326 = vmul.f32 %v321, %v325
  %vm327 = vweird.f32 %v215
  %vm328 = vweird.f32 %v321
  %vm329 = vmor %vm327, %vm328
  %v330 = vsel %vm329, %v321, %v326
  %v331 = vrsqrt.pop %v216
  %v332 = vmul.f32 %v331, %v216
  %v333 = vmul.f32 %v332, %v331
  %v334 = vmul.f32 0.5, %v333
  %v335 = vsub.f32 1.5, %v334
  %v336 = vmul.f32 %v331, %v335
  %vm337 = vweird.f32 %v216
  %vm338 = vweird.f32 %v331
  %vm339 = vmor %vm337, %vm338
  %v340 = vsel %vm339, %v331, %v336
  %v341 = vrsqrt.pop %v217
  %v342 = vmul.f32 %v341, %v217
  %v343 = vmul.f32 %v342, %v341
  %v344 = vmul.f32 0.5, %v343
  %v345 = vsub.f32 1.5, %v344
  %v346 = vmul.f32 %v341, %v345
  %vm347 = vweird.f32 %v217
  %vm348 = vweird.f32 %v341
  %vm349 = vmor %vm347, %vm348
  %v350 = vsel %vm349, %v341, %v346
  %v351 = vrsqrt.pop %v218
  %v352 = vmul.f32 %v351, %v218
  %v353 = vmul.f32 %v352, %v351
  %v354 = vmul.f32 0.5, %v353
  %v355 = vsub.f32 1.5, %v354
  %v356 = vmul.f32 %v351, %v355
  %vm357 = vweird.f32 %v218
  %vm358 = vweird.f32 %v351
  %vm359 = vmor %vm357, %vm358
  %v360 = vsel %vm359, %v351, %v356
  %v361 = vrsqrt.pop %v219
  %v362 = vmul.f32 %v361, %v219
  %v363 = vmul.f32 %v362, %v361
  %v364 = vmul.f32 0.5, %v363
  %v365 = vsub.f32 1.5, %v364
  %v366 = vmul.f32 %v361, %v365
  %vm367 = vweird.f32 %v219
  %vm368 = vweird.f32 %v361
  %vm369 = vmor %vm367, %vm368
  %v370 = vsel %vm369, %v361, %v366
  %v371 = vrsqrt.pop %v220
  %v372 = vmul.f32 %v371, %v220
  %v373 = vmul.f32 %v372, %v371
  %v374 = vmul.f32 0.5, %v373
  %v375 = vsub.f32 1.5, %v374
  %v376 = vmul.f32 %v371, %v375
  %vm377 = vweird.f32 %v220
  %vm378 = vweird.f32 %v371
  %vm379 = vmor %vm377, %vm378
  %v380 = vsel %vm379, %v371, %v376
  %v381 = vmul.f32 %v109, %v230
  %v382 = vmul.f32 %v110, %v240
  %v383 = vmul.f32 %v111, %v250
  %v384 = vmul.f32 %v112, %v260
  %v385 = vmul.f32 %v113, %v270
  %v386 = vmul.f32 %v114, %v280
  %v387 = vmul.f32 %v115, %v290
  %v388 = vmul.f32 %v116, %v300
  %v389 = vmul.f32 %v117, %v310
  %v390 = vmul.f32 %v118, %v320
  %v391 = vmul.f32 %v119, %v330
  %v392 = vmul.f32 %v120, %v340
  %v393 = vmul.f32 %v121, %v350
  %v394 = vmul.f32 %v122, %v360
  %v395 = vmul.f32 %v123, %v370
  %v396 = vmul.f32 %v124, %v380
  %v397 = vld [vmem:[%s1] sm:$0x1]
  %v399 = vperm.slane %v397, 0
  %v401 = vmul.f32 %v381, %v399
  %v402 = vmul.f32 %v382, %v399
  %v403 = vmul.f32 %v383, %v399
  %v404 = vmul.f32 %v384, %v399
  %v405 = vmul.f32 %v385, %v399
  %v406 = vmul.f32 %v386, %v399
  %v407 = vmul.f32 %v387, %v399
  %v408 = vmul.f32 %v388, %v399
  %v409 = vmul.f32 %v389, %v399
  %v410 = vmul.f32 %v390, %v399
  %v411 = vmul.f32 %v391, %v399
  %v412 = vmul.f32 %v392, %v399
  %v413 = vmul.f32 %v393, %v399
  %v414 = vmul.f32 %v394, %v399
  %v415 = vmul.f32 %v395, %v399
  %v416 = vmul.f32 %v396, %v399
  %v417 = vld [vmem:[%s2] sm:$0x1]
  %v419 = vperm.slane %v417, 0
  %v421 = vadd.f32 %v401, %v419
  %v422 = vadd.f32 %v402, %v419
  %v423 = vadd.f32 %v403, %v419
  %v424 = vadd.f32 %v404, %v419
  %v425 = vadd.f32 %v405, %v419
  %v426 = vadd.f32 %v406, %v419
  %v427 = vadd.f32 %v407, %v419
  %v428 = vadd.f32 %v408, %v419
  %v429 = vadd.f32 %v409, %v419
  %v430 = vadd.f32 %v410, %v419
  %v431 = vadd.f32 %v411, %v419
  %v432 = vadd.f32 %v412, %v419
  %v433 = vadd.f32 %v413, %v419
  %v434 = vadd.f32 %v414, %v419
  %v435 = vadd.f32 %v415, %v419
  %v436 = vadd.f32 %v416, %v419
  %v437 = vpack.c.bf16 %v422, %v421
  %v438 = vpack.c.bf16 %v424, %v423
  %v439 = vpack.c.bf16 %v426, %v425
  %v440 = vpack.c.bf16 %v428, %v427
  %v441 = vpack.c.bf16 %v430, %v429
  %v442 = vpack.c.bf16 %v432, %v431
  %v443 = vpack.c.bf16 %v434, %v433
  %v444 = vpack.c.bf16 %v436, %v435
  %v445 = vld [vmem:[%s3] sm:$0xf]
  %v446 = vld [vmem:[%s3 + $0x4] sm:$0xf]
  %v447 = vld [vmem:[%s3 + $0x8] sm:$0xf]
  %v448 = vld [vmem:[%s3 + $0xc] sm:$0xf]
  %v449 = vld [vmem:[%s4] sm:$0x1]
  %v451 = vperm.slane %v449, 0
  %v457 = vunpack.c.l.b16 %v445
  %v458 = vunpack.c.l.b16 %v446
  %v459 = vunpack.c.l.b16 %v447
  %v460 = vunpack.c.l.b16 %v448
  %v461 = vpack.c.b16 %v458, %v457
  %v462 = vpack.c.b16 %v460, %v459
  %v466 = vsel %vm37, %v437, 0
  %v469 = vsel %vm37, %v438, 0
  %v472 = vsel %vm37, %v439, 0
  %v475 = vsel %vm37, %v440, 0
  %v478 = vsel %vm37, %v441, 0
  %v481 = vsel %vm37, %v442, 0
  %v484 = vsel %vm37, %v443, 0
  %v487 = vsel %vm37, %v444, 0
  %489 = vmatpush.bf16.msra.mxu0 0
  %490 = vmatpush.bf16.msra.mxu0 0
  %491 = vmatpush.bf16.msra.mxu0 0
  %492 = vmatpush.bf16.msra.mxu0 0
  %493 = vmatpush.bf16.msra.mxu0 0
  %494 = vmatpush.bf16.msra.mxu0 0
  %495 = vmatpush.bf16.msra.mxu0 %v462
  %496 = vmatpush.bf16.msra.mxu0 %v461
  %497 = vmatmul.bf16.gmra.mxu0 %v466
  %v498 = vpop.f32.mrf.mxu0
  %v499 = vadd.f32 %v451, %v498
  %v500 = vpop.f32.mrf.mxu0
  %v501 = vadd.f32 %v451, %v500
  %502 = vmatmul.bf16.gmra.mxu0 %v469
  %v503 = vpop.f32.mrf.mxu0
  %v504 = vadd.f32 %v451, %v503
  %v505 = vpop.f32.mrf.mxu0
  %v506 = vadd.f32 %v451, %v505
  %507 = vmatmul.bf16.gmra.mxu0 %v472
  %v508 = vpop.f32.mrf.mxu0
  %v509 = vadd.f32 %v451, %v508
  %v510 = vpop.f32.mrf.mxu0
  %v511 = vadd.f32 %v451, %v510
  %512 = vmatmul.bf16.gmra.mxu0 %v475
  %v513 = vpop.f32.mrf.mxu0
  %v514 = vadd.f32 %v451, %v513
  %v515 = vpop.f32.mrf.mxu0
  %v516 = vadd.f32 %v451, %v515
  %517 = vmatmul.bf16.gmra.mxu0 %v478
  %v518 = vpop.f32.mrf.mxu0
  %v519 = vadd.f32 %v451, %v518
  %v520 = vpop.f32.mrf.mxu0
  %v521 = vadd.f32 %v451, %v520
  %522 = vmatmul.bf16.gmra.mxu0 %v481
  %v523 = vpop.f32.mrf.mxu0
  %v524 = vadd.f32 %v451, %v523
  %v525 = vpop.f32.mrf.mxu0
  %v526 = vadd.f32 %v451, %v525
  %527 = vmatmul.bf16.gmra.mxu0 %v484
  %v528 = vpop.f32.mrf.mxu0
  %v529 = vadd.f32 %v451, %v528
  %v530 = vpop.f32.mrf.mxu0
  %v531 = vadd.f32 %v451, %v530
  %532 = vmatmul.bf16.gmra.mxu0 %v487
  %v533 = vpop.f32.mrf.mxu0
  %v534 = vadd.f32 %v451, %v533
  %v535 = vpop.f32.mrf.mxu0
  %v536 = vadd.f32 %v451, %v535
  %537 = vdwg.mxu0
  %v538 = vmul.f32 %v499, 0.5
  %v539 = vmul.f32 %v501, 0.5
  %v540 = vmul.f32 %v504, 0.5
  %v541 = vmul.f32 %v506, 0.5
  %v542 = vmul.f32 %v509, 0.5
  %v543 = vmul.f32 %v511, 0.5
  %v544 = vmul.f32 %v514, 0.5
  %v545 = vmul.f32 %v516, 0.5
  %v546 = vmul.f32 %v519, 0.5
  %v547 = vmul.f32 %v521, 0.5
  %v548 = vmul.f32 %v524, 0.5
  %v549 = vmul.f32 %v526, 0.5
  %v550 = vmul.f32 %v529, 0.5
  %v551 = vmul.f32 %v531, 0.5
  %v552 = vmul.f32 %v534, 0.5
  %v553 = vmul.f32 %v536, 0.5
  %v554 = vmul.f32 %v499, 0.70710677
  %v555 = vmul.f32 %v501, 0.70710677
  %v556 = vmul.f32 %v504, 0.70710677
  %v557 = vmul.f32 %v506, 0.70710677
  %v558 = vmul.f32 %v509, 0.70710677
  %v559 = vmul.f32 %v511, 0.70710677
  %v560 = vmul.f32 %v514, 0.70710677
  %v561 = vmul.f32 %v516, 0.70710677
  %v562 = vmul.f32 %v519, 0.70710677
  %v563 = vmul.f32 %v521, 0.70710677
  %v564 = vmul.f32 %v524, 0.70710677
  %v565 = vmul.f32 %v526, 0.70710677
  %v566 = vmul.f32 %v529, 0.70710677
  %v567 = vmul.f32 %v531, 0.70710677
  %v568 = vmul.f32 %v534, 0.70710677
  %v569 = vmul.f32 %v536, 0.70710677
  %v570 = vand.u32 2147483647, %v554
  %v571 = vand.u32 2147483647, %v555
  %v572 = vand.u32 2147483647, %v556
  %v573 = vand.u32 2147483647, %v557
  %v574 = vand.u32 2147483647, %v558
  %v575 = vand.u32 2147483647, %v559
  %v576 = vand.u32 2147483647, %v560
  %v577 = vand.u32 2147483647, %v561
  %v578 = vand.u32 2147483647, %v562
  %v579 = vand.u32 2147483647, %v563
  %v580 = vand.u32 2147483647, %v564
  %v581 = vand.u32 2147483647, %v565
  %v582 = vand.u32 2147483647, %v566
  %v583 = vand.u32 2147483647, %v567
  %v584 = vand.u32 2147483647, %v568
  %v585 = vand.u32 2147483647, %v569
  %v586 = vmul.f32 %v570, 0.3275911
  %v587 = vmul.f32 %v571, 0.3275911
  %v588 = vmul.f32 %v572, 0.3275911
  %v589 = vmul.f32 %v573, 0.3275911
  %v590 = vmul.f32 %v574, 0.3275911
  %v591 = vmul.f32 %v575, 0.3275911
  %v592 = vmul.f32 %v576, 0.3275911
  %v593 = vmul.f32 %v577, 0.3275911
  %v594 = vmul.f32 %v578, 0.3275911
  %v595 = vmul.f32 %v579, 0.3275911
  %v596 = vmul.f32 %v580, 0.3275911
  %v597 = vmul.f32 %v581, 0.3275911
  %v598 = vmul.f32 %v582, 0.3275911
  %v599 = vmul.f32 %v583, 0.3275911
  %v600 = vmul.f32 %v584, 0.3275911
  %v601 = vmul.f32 %v585, 0.3275911
  %v602 = vadd.f32 %v586, 1.0
  %v603 = vadd.f32 %v587, 1.0
  %v604 = vadd.f32 %v588, 1.0
  %v605 = vadd.f32 %v589, 1.0
  %v606 = vadd.f32 %v590, 1.0
  %v607 = vadd.f32 %v591, 1.0
  %v608 = vadd.f32 %v592, 1.0
  %v609 = vadd.f32 %v593, 1.0
  %v610 = vadd.f32 %v594, 1.0
  %v611 = vadd.f32 %v595, 1.0
  %v612 = vadd.f32 %v596, 1.0
  %v613 = vadd.f32 %v597, 1.0
  %v614 = vadd.f32 %v598, 1.0
  %v615 = vadd.f32 %v599, 1.0
  %v616 = vadd.f32 %v600, 1.0
  %v617 = vadd.f32 %v601, 1.0
  %v618 = vrcp.pop %v602
  %v619 = vmul.f32 %v602, %v618
  %v620 = vsub.f32 1.0, %v619
  %v621 = vmul.f32 %v618, %v620
  %v622 = vadd.f32 %v618, %v621
  %vm623 = vweird.f32 %v602
  %vm624 = vweird.f32 %v618
  %vm625 = vmor %vm623, %vm624
  %v626 = vsel %vm625, %v618, %v622
  %v627 = vand.u32 2147483647, %v602
  %vm628 = vcmp.eq.f32.partialorder %v627, 8.507059e+37
  %v629 = vand.u32 %v602, 2147483648
  %v630 = vor.u32 1.1754944e-38, %v629
  %v631 = vsel %vm628, %v630, %v626
  %v632 = vmul.f32 1.0, %v631
  %v633 = vrcp.pop %v603
  %v634 = vmul.f32 %v603, %v633
  %v635 = vsub.f32 1.0, %v634
  %v636 = vmul.f32 %v633, %v635
  %v637 = vadd.f32 %v633, %v636
  %vm638 = vweird.f32 %v603
  %vm639 = vweird.f32 %v633
  %vm640 = vmor %vm638, %vm639
  %v641 = vsel %vm640, %v633, %v637
  %v642 = vand.u32 2147483647, %v603
  %vm643 = vcmp.eq.f32.partialorder %v642, 8.507059e+37
  %v644 = vand.u32 %v603, 2147483648
  %v645 = vor.u32 1.1754944e-38, %v644
  %v646 = vsel %vm643, %v645, %v641
  %v647 = vmul.f32 1.0, %v646
  %v648 = vrcp.pop %v604
  %v649 = vmul.f32 %v604, %v648
  %v650 = vsub.f32 1.0, %v649
  %v651 = vmul.f32 %v648, %v650
  %v652 = vadd.f32 %v648, %v651
  %vm653 = vweird.f32 %v604
  %vm654 = vweird.f32 %v648
  %vm655 = vmor %vm653, %vm654
  %v656 = vsel %vm655, %v648, %v652
  %v657 = vand.u32 2147483647, %v604
  %vm658 = vcmp.eq.f32.partialorder %v657, 8.507059e+37
  %v659 = vand.u32 %v604, 2147483648
  %v660 = vor.u32 1.1754944e-38, %v659
  %v661 = vsel %vm658, %v660, %v656
  %v662 = vmul.f32 1.0, %v661
  %v663 = vrcp.pop %v605
  %v664 = vmul.f32 %v605, %v663
  %v665 = vsub.f32 1.0, %v664
  %v666 = vmul.f32 %v663, %v665
  %v667 = vadd.f32 %v663, %v666
  %vm668 = vweird.f32 %v605
  %vm669 = vweird.f32 %v663
  %vm670 = vmor %vm668, %vm669
  %v671 = vsel %vm670, %v663, %v667
  %v672 = vand.u32 2147483647, %v605
  %vm673 = vcmp.eq.f32.partialorder %v672, 8.507059e+37
  %v674 = vand.u32 %v605, 2147483648
  %v675 = vor.u32 1.1754944e-38, %v674
  %v676 = vsel %vm673, %v675, %v671
  %v677 = vmul.f32 1.0, %v676
  %v678 = vrcp.pop %v606
  %v679 = vmul.f32 %v606, %v678
  %v680 = vsub.f32 1.0, %v679
  %v681 = vmul.f32 %v678, %v680
  %v682 = vadd.f32 %v678, %v681
  %vm683 = vweird.f32 %v606
  %vm684 = vweird.f32 %v678
  %vm685 = vmor %vm683, %vm684
  %v686 = vsel %vm685, %v678, %v682
  %v687 = vand.u32 2147483647, %v606
  %vm688 = vcmp.eq.f32.partialorder %v687, 8.507059e+37
  %v689 = vand.u32 %v606, 2147483648
  %v690 = vor.u32 1.1754944e-38, %v689
  %v691 = vsel %vm688, %v690, %v686
  %v692 = vmul.f32 1.0, %v691
  %v693 = vrcp.pop %v607
  %v694 = vmul.f32 %v607, %v693
  %v695 = vsub.f32 1.0, %v694
  %v696 = vmul.f32 %v693, %v695
  %v697 = vadd.f32 %v693, %v696
  %vm698 = vweird.f32 %v607
  %vm699 = vweird.f32 %v693
  %vm700 = vmor %vm698, %vm699
  %v701 = vsel %vm700, %v693, %v697
  %v702 = vand.u32 2147483647, %v607
  %vm703 = vcmp.eq.f32.partialorder %v702, 8.507059e+37
  %v704 = vand.u32 %v607, 2147483648
  %v705 = vor.u32 1.1754944e-38, %v704
  %v706 = vsel %vm703, %v705, %v701
  %v707 = vmul.f32 1.0, %v706
  %v708 = vrcp.pop %v608
  %v709 = vmul.f32 %v608, %v708
  %v710 = vsub.f32 1.0, %v709
  %v711 = vmul.f32 %v708, %v710
  %v712 = vadd.f32 %v708, %v711
  %vm713 = vweird.f32 %v608
  %vm714 = vweird.f32 %v708
  %vm715 = vmor %vm713, %vm714
  %v716 = vsel %vm715, %v708, %v712
  %v717 = vand.u32 2147483647, %v608
  %vm718 = vcmp.eq.f32.partialorder %v717, 8.507059e+37
  %v719 = vand.u32 %v608, 2147483648
  %v720 = vor.u32 1.1754944e-38, %v719
  %v721 = vsel %vm718, %v720, %v716
  %v722 = vmul.f32 1.0, %v721
  %v723 = vrcp.pop %v609
  %v724 = vmul.f32 %v609, %v723
  %v725 = vsub.f32 1.0, %v724
  %v726 = vmul.f32 %v723, %v725
  %v727 = vadd.f32 %v723, %v726
  %vm728 = vweird.f32 %v609
  %vm729 = vweird.f32 %v723
  %vm730 = vmor %vm728, %vm729
  %v731 = vsel %vm730, %v723, %v727
  %v732 = vand.u32 2147483647, %v609
  %vm733 = vcmp.eq.f32.partialorder %v732, 8.507059e+37
  %v734 = vand.u32 %v609, 2147483648
  %v735 = vor.u32 1.1754944e-38, %v734
  %v736 = vsel %vm733, %v735, %v731
  %v737 = vmul.f32 1.0, %v736
  %v738 = vrcp.pop %v610
  %v739 = vmul.f32 %v610, %v738
  %v740 = vsub.f32 1.0, %v739
  %v741 = vmul.f32 %v738, %v740
  %v742 = vadd.f32 %v738, %v741
  %vm743 = vweird.f32 %v610
  %vm744 = vweird.f32 %v738
  %vm745 = vmor %vm743, %vm744
  %v746 = vsel %vm745, %v738, %v742
  %v747 = vand.u32 2147483647, %v610
  %vm748 = vcmp.eq.f32.partialorder %v747, 8.507059e+37
  %v749 = vand.u32 %v610, 2147483648
  %v750 = vor.u32 1.1754944e-38, %v749
  %v751 = vsel %vm748, %v750, %v746
  %v752 = vmul.f32 1.0, %v751
  %v753 = vrcp.pop %v611
  %v754 = vmul.f32 %v611, %v753
  %v755 = vsub.f32 1.0, %v754
  %v756 = vmul.f32 %v753, %v755
  %v757 = vadd.f32 %v753, %v756
  %vm758 = vweird.f32 %v611
  %vm759 = vweird.f32 %v753
  %vm760 = vmor %vm758, %vm759
  %v761 = vsel %vm760, %v753, %v757
  %v762 = vand.u32 2147483647, %v611
  %vm763 = vcmp.eq.f32.partialorder %v762, 8.507059e+37
  %v764 = vand.u32 %v611, 2147483648
  %v765 = vor.u32 1.1754944e-38, %v764
  %v766 = vsel %vm763, %v765, %v761
  %v767 = vmul.f32 1.0, %v766
  %v768 = vrcp.pop %v612
  %v769 = vmul.f32 %v612, %v768
  %v770 = vsub.f32 1.0, %v769
  %v771 = vmul.f32 %v768, %v770
  %v772 = vadd.f32 %v768, %v771
  %vm773 = vweird.f32 %v612
  %vm774 = vweird.f32 %v768
  %vm775 = vmor %vm773, %vm774
  %v776 = vsel %vm775, %v768, %v772
  %v777 = vand.u32 2147483647, %v612
  %vm778 = vcmp.eq.f32.partialorder %v777, 8.507059e+37
  %v779 = vand.u32 %v612, 2147483648
  %v780 = vor.u32 1.1754944e-38, %v779
  %v781 = vsel %vm778, %v780, %v776
  %v782 = vmul.f32 1.0, %v781
  %v783 = vrcp.pop %v613
  %v784 = vmul.f32 %v613, %v783
  %v785 = vsub.f32 1.0, %v784
  %v786 = vmul.f32 %v783, %v785
  %v787 = vadd.f32 %v783, %v786
  %vm788 = vweird.f32 %v613
  %vm789 = vweird.f32 %v783
  %vm790 = vmor %vm788, %vm789
  %v791 = vsel %vm790, %v783, %v787
  %v792 = vand.u32 2147483647, %v613
  %vm793 = vcmp.eq.f32.partialorder %v792, 8.507059e+37
  %v794 = vand.u32 %v613, 2147483648
  %v795 = vor.u32 1.1754944e-38, %v794
  %v796 = vsel %vm793, %v795, %v791
  %v797 = vmul.f32 1.0, %v796
  %v798 = vrcp.pop %v614
  %v799 = vmul.f32 %v614, %v798
  %v800 = vsub.f32 1.0, %v799
  %v801 = vmul.f32 %v798, %v800
  %v802 = vadd.f32 %v798, %v801
  %vm803 = vweird.f32 %v614
  %vm804 = vweird.f32 %v798
  %vm805 = vmor %vm803, %vm804
  %v806 = vsel %vm805, %v798, %v802
  %v807 = vand.u32 2147483647, %v614
  %vm808 = vcmp.eq.f32.partialorder %v807, 8.507059e+37
  %v809 = vand.u32 %v614, 2147483648
  %v810 = vor.u32 1.1754944e-38, %v809
  %v811 = vsel %vm808, %v810, %v806
  %v812 = vmul.f32 1.0, %v811
  %v813 = vrcp.pop %v615
  %v814 = vmul.f32 %v615, %v813
  %v815 = vsub.f32 1.0, %v814
  %v816 = vmul.f32 %v813, %v815
  %v817 = vadd.f32 %v813, %v816
  %vm818 = vweird.f32 %v615
  %vm819 = vweird.f32 %v813
  %vm820 = vmor %vm818, %vm819
  %v821 = vsel %vm820, %v813, %v817
  %v822 = vand.u32 2147483647, %v615
  %vm823 = vcmp.eq.f32.partialorder %v822, 8.507059e+37
  %v824 = vand.u32 %v615, 2147483648
  %v825 = vor.u32 1.1754944e-38, %v824
  %v826 = vsel %vm823, %v825, %v821
  %v827 = vmul.f32 1.0, %v826
  %v828 = vrcp.pop %v616
  %v829 = vmul.f32 %v616, %v828
  %v830 = vsub.f32 1.0, %v829
  %v831 = vmul.f32 %v828, %v830
  %v832 = vadd.f32 %v828, %v831
  %vm833 = vweird.f32 %v616
  %vm834 = vweird.f32 %v828
  %vm835 = vmor %vm833, %vm834
  %v836 = vsel %vm835, %v828, %v832
  %v837 = vand.u32 2147483647, %v616
  %vm838 = vcmp.eq.f32.partialorder %v837, 8.507059e+37
  %v839 = vand.u32 %v616, 2147483648
  %v840 = vor.u32 1.1754944e-38, %v839
  %v841 = vsel %vm838, %v840, %v836
  %v842 = vmul.f32 1.0, %v841
  %v843 = vrcp.pop %v617
  %v844 = vmul.f32 %v617, %v843
  %v845 = vsub.f32 1.0, %v844
  %v846 = vmul.f32 %v843, %v845
  %v847 = vadd.f32 %v843, %v846
  %vm848 = vweird.f32 %v617
  %vm849 = vweird.f32 %v843
  %vm850 = vmor %vm848, %vm849
  %v851 = vsel %vm850, %v843, %v847
  %v852 = vand.u32 2147483647, %v617
  %vm853 = vcmp.eq.f32.partialorder %v852, 8.507059e+37
  %v854 = vand.u32 %v617, 2147483648
  %v855 = vor.u32 1.1754944e-38, %v854
  %v856 = vsel %vm853, %v855, %v851
  %v857 = vmul.f32 1.0, %v856
  %v858 = vmul.f32 %v632, 1.0614054
  %v859 = vmul.f32 %v647, 1.0614054
  %v860 = vmul.f32 %v662, 1.0614054
  %v861 = vmul.f32 %v677, 1.0614054
  %v862 = vmul.f32 %v692, 1.0614054
  %v863 = vmul.f32 %v707, 1.0614054
  %v864 = vmul.f32 %v722, 1.0614054
  %v865 = vmul.f32 %v737, 1.0614054
  %v866 = vmul.f32 %v752, 1.0614054
  %v867 = vmul.f32 %v767, 1.0614054
  %v868 = vmul.f32 %v782, 1.0614054
  %v869 = vmul.f32 %v797, 1.0614054
  %v870 = vmul.f32 %v812, 1.0614054
  %v871 = vmul.f32 %v827, 1.0614054
  %v872 = vmul.f32 %v842, 1.0614054
  %v873 = vmul.f32 %v857, 1.0614054
  %v874 = vadd.f32 %v858, -1.4531521
  %v875 = vadd.f32 %v859, -1.4531521
  %v876 = vadd.f32 %v860, -1.4531521
  %v877 = vadd.f32 %v861, -1.4531521
  %v878 = vadd.f32 %v862, -1.4531521
  %v879 = vadd.f32 %v863, -1.4531521
  %v880 = vadd.f32 %v864, -1.4531521
  %v881 = vadd.f32 %v865, -1.4531521
  %v882 = vadd.f32 %v866, -1.4531521
  %v883 = vadd.f32 %v867, -1.4531521
  %v884 = vadd.f32 %v868, -1.4531521
  %v885 = vadd.f32 %v869, -1.4531521
  %v886 = vadd.f32 %v870, -1.4531521
  %v887 = vadd.f32 %v871, -1.4531521
  %v888 = vadd.f32 %v872, -1.4531521
  %v889 = vadd.f32 %v873, -1.4531521
  %v890 = vmul.f32 %v874, %v632
  %v891 = vmul.f32 %v875, %v647
  %v892 = vmul.f32 %v876, %v662
  %v893 = vmul.f32 %v877, %v677
  %v894 = vmul.f32 %v878, %v692
  %v895 = vmul.f32 %v879, %v707
  %v896 = vmul.f32 %v880, %v722
  %v897 = vmul.f32 %v881, %v737
  %v898 = vmul.f32 %v882, %v752
  %v899 = vmul.f32 %v883, %v767
  %v900 = vmul.f32 %v884, %v782
  %v901 = vmul.f32 %v885, %v797
  %v902 = vmul.f32 %v886, %v812
  %v903 = vmul.f32 %v887, %v827
  %v904 = vmul.f32 %v888, %v842
  %v905 = vmul.f32 %v889, %v857
  %v906 = vadd.f32 %v890, 1.4214138
  %v907 = vadd.f32 %v891, 1.4214138
  %v908 = vadd.f32 %v892, 1.4214138
  %v909 = vadd.f32 %v893, 1.4214138
  %v910 = vadd.f32 %v894, 1.4214138
  %v911 = vadd.f32 %v895, 1.4214138
  %v912 = vadd.f32 %v896, 1.4214138
  %v913 = vadd.f32 %v897, 1.4214138
  %v914 = vadd.f32 %v898, 1.4214138
  %v915 = vadd.f32 %v899, 1.4214138
  %v916 = vadd.f32 %v900, 1.4214138
  %v917 = vadd.f32 %v901, 1.4214138
  %v918 = vadd.f32 %v902, 1.4214138
  %v919 = vadd.f32 %v903, 1.4214138
  %v920 = vadd.f32 %v904, 1.4214138
  %v921 = vadd.f32 %v905, 1.4214138
  %v922 = vmul.f32 %v906, %v632
  %v923 = vmul.f32 %v907, %v647
  %v924 = vmul.f32 %v908, %v662
  %v925 = vmul.f32 %v909, %v677
  %v926 = vmul.f32 %v910, %v692
  %v927 = vmul.f32 %v911, %v707
  %v928 = vmul.f32 %v912, %v722
  %v929 = vmul.f32 %v913, %v737
  %v930 = vmul.f32 %v914, %v752
  %v931 = vmul.f32 %v915, %v767
  %v932 = vmul.f32 %v916, %v782
  %v933 = vmul.f32 %v917, %v797
  %v934 = vmul.f32 %v918, %v812
  %v935 = vmul.f32 %v919, %v827
  %v936 = vmul.f32 %v920, %v842
  %v937 = vmul.f32 %v921, %v857
  %v938 = vadd.f32 %v922, -0.28449672
  %v939 = vadd.f32 %v923, -0.28449672
  %v940 = vadd.f32 %v924, -0.28449672
  %v941 = vadd.f32 %v925, -0.28449672
  %v942 = vadd.f32 %v926, -0.28449672
  %v943 = vadd.f32 %v927, -0.28449672
  %v944 = vadd.f32 %v928, -0.28449672
  %v945 = vadd.f32 %v929, -0.28449672
  %v946 = vadd.f32 %v930, -0.28449672
  %v947 = vadd.f32 %v931, -0.28449672
  %v948 = vadd.f32 %v932, -0.28449672
  %v949 = vadd.f32 %v933, -0.28449672
  %v950 = vadd.f32 %v934, -0.28449672
  %v951 = vadd.f32 %v935, -0.28449672
  %v952 = vadd.f32 %v936, -0.28449672
  %v953 = vadd.f32 %v937, -0.28449672
  %v954 = vmul.f32 %v938, %v632
  %v955 = vmul.f32 %v939, %v647
  %v956 = vmul.f32 %v940, %v662
  %v957 = vmul.f32 %v941, %v677
  %v958 = vmul.f32 %v942, %v692
  %v959 = vmul.f32 %v943, %v707
  %v960 = vmul.f32 %v944, %v722
  %v961 = vmul.f32 %v945, %v737
  %v962 = vmul.f32 %v946, %v752
  %v963 = vmul.f32 %v947, %v767
  %v964 = vmul.f32 %v948, %v782
  %v965 = vmul.f32 %v949, %v797
  %v966 = vmul.f32 %v950, %v812
  %v967 = vmul.f32 %v951, %v827
  %v968 = vmul.f32 %v952, %v842
  %v969 = vmul.f32 %v953, %v857
  %v970 = vadd.f32 %v954, 0.2548296
  %v971 = vadd.f32 %v955, 0.2548296
  %v972 = vadd.f32 %v956, 0.2548296
  %v973 = vadd.f32 %v957, 0.2548296
  %v974 = vadd.f32 %v958, 0.2548296
  %v975 = vadd.f32 %v959, 0.2548296
  %v976 = vadd.f32 %v960, 0.2548296
  %v977 = vadd.f32 %v961, 0.2548296
  %v978 = vadd.f32 %v962, 0.2548296
  %v979 = vadd.f32 %v963, 0.2548296
  %v980 = vadd.f32 %v964, 0.2548296
  %v981 = vadd.f32 %v965, 0.2548296
  %v982 = vadd.f32 %v966, 0.2548296
  %v983 = vadd.f32 %v967, 0.2548296
  %v984 = vadd.f32 %v968, 0.2548296
  %v985 = vadd.f32 %v969, 0.2548296
  %v986 = vmul.f32 %v970, %v632
  %v987 = vmul.f32 %v971, %v647
  %v988 = vmul.f32 %v972, %v662
  %v989 = vmul.f32 %v973, %v677
  %v990 = vmul.f32 %v974, %v692
  %v991 = vmul.f32 %v975, %v707
  %v992 = vmul.f32 %v976, %v722
  %v993 = vmul.f32 %v977, %v737
  %v994 = vmul.f32 %v978, %v752
  %v995 = vmul.f32 %v979, %v767
  %v996 = vmul.f32 %v980, %v782
  %v997 = vmul.f32 %v981, %v797
  %v998 = vmul.f32 %v982, %v812
  %v999 = vmul.f32 %v983, %v827
  %v1000 = vmul.f32 %v984, %v842
  %v1001 = vmul.f32 %v985, %v857
  %v1002 = vsub.f32 0.0, %v570
  %v1003 = vsub.f32 0.0, %v571
  %v1004 = vsub.f32 0.0, %v572
  %v1005 = vsub.f32 0.0, %v573
  %v1006 = vsub.f32 0.0, %v574
  %v1007 = vsub.f32 0.0, %v575
  %v1008 = vsub.f32 0.0, %v576
  %v1009 = vsub.f32 0.0, %v577
  %v1010 = vsub.f32 0.0, %v578
  %v1011 = vsub.f32 0.0, %v579
  %v1012 = vsub.f32 0.0, %v580
  %v1013 = vsub.f32 0.0, %v581
  %v1014 = vsub.f32 0.0, %v582
  %v1015 = vsub.f32 0.0, %v583
  %v1016 = vsub.f32 0.0, %v584
  %v1017 = vsub.f32 0.0, %v585
  %v1018 = vmul.f32 %v1002, %v570
  %v1019 = vmul.f32 %v1003, %v571
  %v1020 = vmul.f32 %v1004, %v572
  %v1021 = vmul.f32 %v1005, %v573
  %v1022 = vmul.f32 %v1006, %v574
  %v1023 = vmul.f32 %v1007, %v575
  %v1024 = vmul.f32 %v1008, %v576
  %v1025 = vmul.f32 %v1009, %v577
  %v1026 = vmul.f32 %v1010, %v578
  %v1027 = vmul.f32 %v1011, %v579
  %v1028 = vmul.f32 %v1012, %v580
  %v1029 = vmul.f32 %v1013, %v581
  %v1030 = vmul.f32 %v1014, %v582
  %v1031 = vmul.f32 %v1015, %v583
  %v1032 = vmul.f32 %v1016, %v584
  %v1033 = vmul.f32 %v1017, %v585
  %v1034 = vmul.f32 %v1018, 1.442695
  %v1035 = vpow.pop %v1034
  %v1036 = vmul.f32 %v1019, 1.442695
  %v1037 = vpow.pop %v1036
  %v1038 = vmul.f32 %v1020, 1.442695
  %v1039 = vpow.pop %v1038
  %v1040 = vmul.f32 %v1021, 1.442695
  %v1041 = vpow.pop %v1040
  %v1042 = vmul.f32 %v1022, 1.442695
  %v1043 = vpow.pop %v1042
  %v1044 = vmul.f32 %v1023, 1.442695
  %v1045 = vpow.pop %v1044
  %v1046 = vmul.f32 %v1024, 1.442695
  %v1047 = vpow.pop %v1046
  %v1048 = vmul.f32 %v1025, 1.442695
  %v1049 = vpow.pop %v1048
  %v1050 = vmul.f32 %v1026, 1.442695
  %v1051 = vpow.pop %v1050
  %v1052 = vmul.f32 %v1027, 1.442695
  %v1053 = vpow.pop %v1052
  %v1054 = vmul.f32 %v1028, 1.442695
  %v1055 = vpow.pop %v1054
  %v1056 = vmul.f32 %v1029, 1.442695
  %v1057 = vpow.pop %v1056
  %v1058 = vmul.f32 %v1030, 1.442695
  %v1059 = vpow.pop %v1058
  %v1060 = vmul.f32 %v1031, 1.442695
  %v1061 = vpow.pop %v1060
  %v1062 = vmul.f32 %v1032, 1.442695
  %v1063 = vpow.pop %v1062
  %v1064 = vmul.f32 %v1033, 1.442695
  %v1065 = vpow.pop %v1064
  %v1066 = vmul.f32 %v986, %v1035
  %v1067 = vmul.f32 %v987, %v1037
  %v1068 = vmul.f32 %v988, %v1039
  %v1069 = vmul.f32 %v989, %v1041
  %v1070 = vmul.f32 %v990, %v1043
  %v1071 = vmul.f32 %v991, %v1045
  %v1072 = vmul.f32 %v992, %v1047
  %v1073 = vmul.f32 %v993, %v1049
  %v1074 = vmul.f32 %v994, %v1051
  %v1075 = vmul.f32 %v995, %v1053
  %v1076 = vmul.f32 %v996, %v1055
  %v1077 = vmul.f32 %v997, %v1057
  %v1078 = vmul.f32 %v998, %v1059
  %v1079 = vmul.f32 %v999, %v1061
  %v1080 = vmul.f32 %v1000, %v1063
  %v1081 = vmul.f32 %v1001, %v1065
  %v1082 = vsub.f32 1.0, %v1066
  %v1083 = vsub.f32 1.0, %v1067
  %v1084 = vsub.f32 1.0, %v1068
  %v1085 = vsub.f32 1.0, %v1069
  %v1086 = vsub.f32 1.0, %v1070
  %v1087 = vsub.f32 1.0, %v1071
  %v1088 = vsub.f32 1.0, %v1072
  %v1089 = vsub.f32 1.0, %v1073
  %v1090 = vsub.f32 1.0, %v1074
  %v1091 = vsub.f32 1.0, %v1075
  %v1092 = vsub.f32 1.0, %v1076
  %v1093 = vsub.f32 1.0, %v1077
  %v1094 = vsub.f32 1.0, %v1078
  %v1095 = vsub.f32 1.0, %v1079
  %v1096 = vsub.f32 1.0, %v1080
  %v1097 = vsub.f32 1.0, %v1081
  %vm1098 = vcmp.ge.f32.partialorder %v554, 0.0
  %vm1099 = vcmp.ge.f32.partialorder %v555, 0.0
  %vm1100 = vcmp.ge.f32.partialorder %v556, 0.0
  %vm1101 = vcmp.ge.f32.partialorder %v557, 0.0
  %vm1102 = vcmp.ge.f32.partialorder %v558, 0.0
  %vm1103 = vcmp.ge.f32.partialorder %v559, 0.0
  %vm1104 = vcmp.ge.f32.partialorder %v560, 0.0
  %vm1105 = vcmp.ge.f32.partialorder %v561, 0.0
  %vm1106 = vcmp.ge.f32.partialorder %v562, 0.0
  %vm1107 = vcmp.ge.f32.partialorder %v563, 0.0
  %vm1108 = vcmp.ge.f32.partialorder %v564, 0.0
  %vm1109 = vcmp.ge.f32.partialorder %v565, 0.0
  %vm1110 = vcmp.ge.f32.partialorder %v566, 0.0
  %vm1111 = vcmp.ge.f32.partialorder %v567, 0.0
  %vm1112 = vcmp.ge.f32.partialorder %v568, 0.0
  %vm1113 = vcmp.ge.f32.partialorder %v569, 0.0
  %v1114 = vsub.f32 0.0, %v1082
  %v1115 = vsub.f32 0.0, %v1083
  %v1116 = vsub.f32 0.0, %v1084
  %v1117 = vsub.f32 0.0, %v1085
  %v1118 = vsub.f32 0.0, %v1086
  %v1119 = vsub.f32 0.0, %v1087
  %v1120 = vsub.f32 0.0, %v1088
  %v1121 = vsub.f32 0.0, %v1089
  %v1122 = vsub.f32 0.0, %v1090
  %v1123 = vsub.f32 0.0, %v1091
  %v1124 = vsub.f32 0.0, %v1092
  %v1125 = vsub.f32 0.0, %v1093
  %v1126 = vsub.f32 0.0, %v1094
  %v1127 = vsub.f32 0.0, %v1095
  %v1128 = vsub.f32 0.0, %v1096
  %v1129 = vsub.f32 0.0, %v1097
  %v1130 = vsel %vm1098, %v1082, %v1114
  %v1131 = vsel %vm1099, %v1083, %v1115
  %v1132 = vsel %vm1100, %v1084, %v1116
  %v1133 = vsel %vm1101, %v1085, %v1117
  %v1134 = vsel %vm1102, %v1086, %v1118
  %v1135 = vsel %vm1103, %v1087, %v1119
  %v1136 = vsel %vm1104, %v1088, %v1120
  %v1137 = vsel %vm1105, %v1089, %v1121
  %v1138 = vsel %vm1106, %v1090, %v1122
  %v1139 = vsel %vm1107, %v1091, %v1123
  %v1140 = vsel %vm1108, %v1092, %v1124
  %v1141 = vsel %vm1109, %v1093, %v1125
  %v1142 = vsel %vm1110, %v1094, %v1126
  %v1143 = vsel %vm1111, %v1095, %v1127
  %v1144 = vsel %vm1112, %v1096, %v1128
  %v1145 = vsel %vm1113, %v1097, %v1129
  %v1146 = vadd.f32 %v1130, 1.0
  %v1147 = vadd.f32 %v1131, 1.0
  %v1148 = vadd.f32 %v1132, 1.0
  %v1149 = vadd.f32 %v1133, 1.0
  %v1150 = vadd.f32 %v1134, 1.0
  %v1151 = vadd.f32 %v1135, 1.0
  %v1152 = vadd.f32 %v1136, 1.0
  %v1153 = vadd.f32 %v1137, 1.0
  %v1154 = vadd.f32 %v1138, 1.0
  %v1155 = vadd.f32 %v1139, 1.0
  %v1156 = vadd.f32 %v1140, 1.0
  %v1157 = vadd.f32 %v1141, 1.0
  %v1158 = vadd.f32 %v1142, 1.0
  %v1159 = vadd.f32 %v1143, 1.0
  %v1160 = vadd.f32 %v1144, 1.0
  %v1161 = vadd.f32 %v1145, 1.0
  %v1162 = vmul.f32 %v538, %v1146
  %v1163 = vmul.f32 %v539, %v1147
  %v1164 = vmul.f32 %v540, %v1148
  %v1165 = vmul.f32 %v541, %v1149
  %v1166 = vmul.f32 %v542, %v1150
  %v1167 = vmul.f32 %v543, %v1151
  %v1168 = vmul.f32 %v544, %v1152
  %v1169 = vmul.f32 %v545, %v1153
  %v1170 = vmul.f32 %v546, %v1154
  %v1171 = vmul.f32 %v547, %v1155
  %v1172 = vmul.f32 %v548, %v1156
  %v1173 = vmul.f32 %v549, %v1157
  %v1174 = vmul.f32 %v550, %v1158
  %v1175 = vmul.f32 %v551, %v1159
  %v1176 = vmul.f32 %v552, %v1160
  %v1177 = vmul.f32 %v553, %v1161
  %1178 = vst [vmem:[%s5] sm:$0xff] %v1162
  %1179 = vst [vmem:[%s5 + $0x8] sm:$0xff] %v1163
  %1180 = vst [vmem:[%s5 + $0x10] sm:$0xff] %v1164
  %1181 = vst [vmem:[%s5 + $0x18] sm:$0xff] %v1165
  %1182 = vst [vmem:[%s5 + $0x20] sm:$0xff] %v1166
  %1183 = vst [vmem:[%s5 + $0x28] sm:$0xff] %v1167
  %1184 = vst [vmem:[%s5 + $0x30] sm:$0xff] %v1168
  %1185 = vst [vmem:[%s5 + $0x38] sm:$0xff] %v1169
  %1186 = vst [vmem:[%s5 + $0x40] sm:$0xff] %v1170
  %1187 = vst [vmem:[%s5 + $0x48] sm:$0xff] %v1171
  %1188 = vst [vmem:[%s5 + $0x50] sm:$0xff] %v1172
  %1189 = vst [vmem:[%s5 + $0x58] sm:$0xff] %v1173
  %1190 = vst [vmem:[%s5 + $0x60] sm:$0xff] %v1174
  %1191 = vst [vmem:[%s5 + $0x68] sm:$0xff] %v1175
  %1192 = vst [vmem:[%s5 + $0x70] sm:$0xff] %v1176
  %1193 = vst [vmem:[%s5 + $0x78] sm:$0xff] %v1177
  // Predicated region
  $region22: #{_lambda_.25} parent=0 // pred_check
    _
  $region23: #{_lambda_.25} parent=0 // pred_check_branch
    %1195 = sbr.rel (0) target = $region25
  $region24: #{_lambda_.25} parent=0 // pred_region
    _
  $region25: #{_lambda_.25} parent=0 // pred_fallthru
    _
  // Predicated region
  $region26: #{_lambda_.25} parent=0 // pred_check
    _
  $region27: #{_lambda_.25} parent=0 // pred_check_branch
    %1197 = sbr.rel (0) target = $region29
  $region28: #{_lambda_.25} parent=0 // pred_region
    _
  $region29: #{_lambda_.25} parent=0 // pred_fallthru
    _

// kernel: _lambda_.27
$region0: #{_lambda_.27}
  #allocation0 [shape = 'u32[]', space=smem, size = 0x4, offset = 0x4, fixed_abs, tag = 'smem constant byte address 0x4 - core index']
  #allocation1 [shape = 'u32[72,128]{1,0:T(1,128)}', space=vmem, size = 0x9000, scoped, tag = 'internal scratch']
  %s0 = inlined_call_operand.vmem [shape: bf16[32,128], index: 0, kind: input, shape index: {}]
  %s1 = inlined_call_operand.vmem [shape: bf16[128,128], index: 1, kind: input, shape index: {}]
  %s2 = inlined_call_operand.vmem [shape: f32[1,128], index: 2, kind: input, shape index: {}]
  %s3 = inlined_call_operand.vmem [shape: f32[32,128], index: 3, kind: output, shape index: {}]
  %s4 = sld [smem:[#allocation0]]
  $region22: #{_lambda_.27} parent=0
    _
  %s6 = ssub.s32 1, %s4
  %s7 = scalar_select 0, %s6, %s4
  // Predicated region
  $region2: #{_lambda_.27} parent=0 // pred_check
    _
  $region3: #{_lambda_.27} parent=0 // pred_check_branch
    %9 = sbr.rel (0) target = $region5
  $region4: #{_lambda_.27} parent=0 // pred_region
    _
  $region5: #{_lambda_.27} parent=0 // pred_fallthru
    _
  // Predicated region
  $region6: #{_lambda_.27} parent=0 // pred_check
    _
  $region7: #{_lambda_.27} parent=0 // pred_check_branch
    %11 = sbr.rel (0) target = $region9
  $region8: #{_lambda_.27} parent=0 // pred_region
    _
  $region9: #{_lambda_.27} parent=0 // pred_fallthru
    _
  // Predicated region
  $region10: #{_lambda_.27} parent=0 // pred_check
    _
  $region11: #{_lambda_.27} parent=0 // pred_check_branch
    %13 = sbr.rel (0) target = $region13
  $region12: #{_lambda_.27} parent=0 // pred_region
    _
  $region13: #{_lambda_.27} parent=0 // pred_fallthru
    _
  %v14 = vld [vmem:[%s0] sm:$0xf]
  %v15 = vld [vmem:[%s0 + $0x4] sm:$0xf]
  %v16 = vld [vmem:[%s0 + $0x8] sm:$0xf]
  %v17 = vld [vmem:[%s0 + $0xc] sm:$0xf]
  %v18 = vld [vmem:[%s1] sm:$0xf]
  %v19 = vld [vmem:[%s1 + $0x4] sm:$0xf]
  %v20 = vld [vmem:[%s1 + $0x8] sm:$0xf]
  %v21 = vld [vmem:[%s1 + $0xc] sm:$0xf]
  %v22 = vld [vmem:[%s1 + $0x10] sm:$0xf]
  %v23 = vld [vmem:[%s1 + $0x14] sm:$0xf]
  %v24 = vld [vmem:[%s1 + $0x18] sm:$0xf]
  %v25 = vld [vmem:[%s1 + $0x1c] sm:$0xf]
  %v26 = vld [vmem:[%s1 + $0x20] sm:$0xf]
  %v27 = vld [vmem:[%s1 + $0x24] sm:$0xf]
  %v28 = vld [vmem:[%s1 + $0x28] sm:$0xf]
  %v29 = vld [vmem:[%s1 + $0x2c] sm:$0xf]
  %v30 = vld [vmem:[%s1 + $0x30] sm:$0xf]
  %v31 = vld [vmem:[%s1 + $0x34] sm:$0xf]
  %v32 = vld [vmem:[%s1 + $0x38] sm:$0xf]
  %v33 = vld [vmem:[%s1 + $0x3c] sm:$0xf]
  %v34 = vld [vmem:[%s2] sm:$0x1]
  %v36 = vperm.slane %v34, 0
  %v42 = vunpack.c.l.b16 %v14
  %v43 = vunpack.c.l.b16 %v15
  %v44 = vunpack.c.l.b16 %v16
  %v45 = vunpack.c.l.b16 %v17
  %v46 = vpack.c.b16 %v43, %v42
  %v47 = vpack.c.b16 %v45, %v44
  %v66 = vunpack.c.l.b16 %v18
  %v67 = vunpack.c.l.b16 %v19
  %v68 = vunpack.c.l.b16 %v20
  %v69 = vunpack.c.l.b16 %v21
  %v70 = vunpack.c.l.b16 %v22
  %v71 = vunpack.c.l.b16 %v23
  %v72 = vunpack.c.l.b16 %v24
  %v73 = vunpack.c.l.b16 %v25
  %v74 = vunpack.c.l.b16 %v26
  %v75 = vunpack.c.l.b16 %v27
  %v76 = vunpack.c.l.b16 %v28
  %v77 = vunpack.c.l.b16 %v29
  %v78 = vunpack.c.l.b16 %v30
  %v79 = vunpack.c.l.b16 %v31
  %v80 = vunpack.c.l.b16 %v32
  %v81 = vunpack.c.l.b16 %v33
  %v82 = vpack.c.b16 %v67, %v66
  %v83 = vpack.c.b16 %v69, %v68
  %v84 = vpack.c.b16 %v71, %v70
  %v85 = vpack.c.b16 %v73, %v72
  %v86 = vpack.c.b16 %v75, %v74
  %v87 = vpack.c.b16 %v77, %v76
  %v88 = vpack.c.b16 %v79, %v78
  %v89 = vpack.c.b16 %v81, %v80
  %98 = vmatpush.bf16.msra.mxu0 %v89
  %99 = vmatpush.bf16.msra.mxu0 %v88
  %100 = vmatpush.bf16.msra.mxu0 %v87
  %101 = vmatpush.bf16.msra.mxu0 %v86
  %102 = vmatpush.bf16.msra.mxu0 %v85
  %103 = vmatpush.bf16.msra.mxu0 %v84
  %104 = vmatpush.bf16.msra.mxu0 %v83
  %105 = vmatpush.bf16.msra.mxu0 %v82
  %106 = vmatmul.bf16.gmra.mxu0 %v46
  %v107 = vpop.f32.mrf.mxu0
  %v108 = vadd.f32 %v36, %v107
  %v109 = vpop.f32.mrf.mxu0
  %v110 = vadd.f32 %v36, %v109
  %111 = vmatmul.bf16.gmra.mxu0 %v47
  %v112 = vpop.f32.mrf.mxu0
  %v113 = vadd.f32 %v36, %v112
  %v114 = vpop.f32.mrf.mxu0
  %v115 = vadd.f32 %v36, %v114
  %116 = vdwg.mxu0
  %117 = vst [vmem:[%s3] sm:$0xff] %v108
  %118 = vst [vmem:[%s3 + $0x8] sm:$0xff] %v110
  %119 = vst [vmem:[%s3 + $0x10] sm:$0xff] %v113
  %120 = vst [vmem:[%s3 + $0x18] sm:$0xff] %v115
  // Predicated region
  $region14: #{_lambda_.27} parent=0 // pred_check
    _
  $region15: #{_lambda_.27} parent=0 // pred_check_branch
    %122 = sbr.rel (0) target = $region17
  $region16: #{_lambda_.27} parent=0 // pred_region
    _
  $region17: #{_lambda_.27} parent=0 // pred_fallthru
    _
  // Predicated region
  $region18: #{_lambda_.27} parent=0 // pred_check
    _
  $region19: #{_lambda_.27} parent=0 // pred_check_branch
    %124 = sbr.rel (0) target = $region21
  $region20: #{_lambda_.27} parent=0 // pred_region
    _
  $region21: #{_lambda_.27} parent=0 // pred_fallthru
    _

// kernel: _lambda_.28
$region0: #{_lambda_.28}
  #allocation0 [shape = 'u32[]', space=smem, size = 0x4, offset = 0x4, fixed_abs, tag = 'smem constant byte address 0x4 - core index']
  #allocation1 [shape = 'u32[72,128]{1,0:T(1,128)}', space=vmem, size = 0x9000, scoped, tag = 'internal scratch']
  %s0 = inlined_call_operand.vmem [shape: f32[32,64], index: 0, kind: input, shape index: {}]
  %s1 = inlined_call_operand.vmem [shape: f32[1,64], index: 1, kind: input, shape index: {}]
  %s2 = inlined_call_operand.vmem [shape: f32[1,64], index: 2, kind: input, shape index: {}]
  %s3 = inlined_call_operand.vmem [shape: bf16[64,256], index: 3, kind: input, shape index: {}]
  %s4 = inlined_call_operand.vmem [shape: f32[1,256], index: 4, kind: input, shape index: {}]
  %s5 = inlined_call_operand.vmem [shape: f32[32,256], index: 5, kind: output, shape index: {}]
  %s6 = sld [smem:[#allocation0]]
  $region30: #{_lambda_.28} parent=0
    _
  %s8 = ssub.s32 1, %s6
  %s9 = scalar_select 0, %s8, %s6
  // Predicated region
  $region2: #{_lambda_.28} parent=0 // pred_check
    _
  $region3: #{_lambda_.28} parent=0 // pred_check_branch
    %11 = sbr.rel (0) target = $region5
  $region4: #{_lambda_.28} parent=0 // pred_region
    _
  $region5: #{_lambda_.28} parent=0 // pred_fallthru
    _
  // Predicated region
  $region6: #{_lambda_.28} parent=0 // pred_check
    _
  $region7: #{_lambda_.28} parent=0 // pred_check_branch
    %13 = sbr.rel (0) target = $region9
  $region8: #{_lambda_.28} parent=0 // pred_region
    _
  $region9: #{_lambda_.28} parent=0 // pred_fallthru
    _
  // Predicated region
  $region10: #{_lambda_.28} parent=0 // pred_check
    _
  $region11: #{_lambda_.28} parent=0 // pred_check_branch
    %15 = sbr.rel (0) target = $region13
  $region12: #{_lambda_.28} parent=0 // pred_region
    _
  $region13: #{_lambda_.28} parent=0 // pred_fallthru
    _
  // Predicated region
  $region14: #{_lambda_.28} parent=0 // pred_check
    _
  $region15: #{_lambda_.28} parent=0 // pred_check_branch
    %17 = sbr.rel (0) target = $region17
  $region16: #{_lambda_.28} parent=0 // pred_region
    _
  $region17: #{_lambda_.28} parent=0 // pred_fallthru
    _
  // Predicated region
  $region18: #{_lambda_.28} parent=0 // pred_check
    _
  $region19: #{_lambda_.28} parent=0 // pred_check_branch
    %19 = sbr.rel (0) target = $region21
  $region20: #{_lambda_.28} parent=0 // pred_region
    _
  $region21: #{_lambda_.28} parent=0 // pred_fallthru
    _
  %v21 = vld [vmem:[%s0] sm:$0xff]
  %v22 = vld [vmem:[%s0 + $0x8] sm:$0xff]
  %v23 = vld [vmem:[%s0 + $0x10] sm:$0xff]
  %v24 = vld [vmem:[%s0 + $0x18] sm:$0xff]
  %vm25 = vcmask 523264
  %v26 = vsel %vm25, %v21, 0.0
  %27 = vadd.xlane.f32.xlu0 %v26
  %v28 = vpop.xlane.xlu0 %27
  %v29 = vsel %vm25, %v22, 0.0
  %30 = vadd.xlane.f32.xlu0 %v29
  %v31 = vpop.xlane.xlu0 %30
  %v32 = vsel %vm25, %v23, 0.0
  %33 = vadd.xlane.f32.xlu0 %v32
  %v34 = vpop.xlane.xlu0 %33
  %v35 = vsel %vm25, %v24, 0.0
  %36 = vadd.xlane.f32.xlu0 %v35
  %v37 = vpop.xlane.xlu0 %36
  %v38 = vrcp.pop 64.0
  %v39 = vmul.f32 64.0, %v38
  %v40 = vsub.f32 1.0, %v39
  %v41 = vmul.f32 %v38, %v40
  %v42 = vadd.f32 %v38, %v41
  %vm43 = vweird.f32 %v38
  %v44 = vsel %vm43, %v38, %v42
  %v45 = vmul.f32 %v28, %v44
  %v46 = vmul.f32 %v31, %v44
  %v47 = vmul.f32 %v34, %v44
  %v48 = vmul.f32 %v37, %v44
  %v49 = vsub.f32 %v21, %v45
  %v50 = vsub.f32 %v22, %v46
  %v51 = vsub.f32 %v23, %v47
  %v52 = vsub.f32 %v24, %v48
  %v53 = vmul.f32 %v49, %v49
  %v54 = vmul.f32 %v50, %v50
  %v55 = vmul.f32 %v51, %v51
  %v56 = vmul.f32 %v52, %v52
  %v57 = vsel %vm25, %v53, 0.0
  %58 = vadd.xlane.f32.xlu0 %v57
  %v59 = vpop.xlane.xlu0 %58
  %v60 = vsel %vm25, %v54, 0.0
  %61 = vadd.xlane.f32.xlu0 %v60
  %v62 = vpop.xlane.xlu0 %61
  %v63 = vsel %vm25, %v55, 0.0
  %64 = vadd.xlane.f32.xlu0 %v63
  %v65 = vpop.xlane.xlu0 %64
  %v66 = vsel %vm25, %v56, 0.0
  %67 = vadd.xlane.f32.xlu0 %v66
  %v68 = vpop.xlane.xlu0 %67
  %v69 = vmul.f32 %v59, %v44
  %v70 = vmul.f32 %v62, %v44
  %v71 = vmul.f32 %v65, %v44
  %v72 = vmul.f32 %v68, %v44
  %v73 = vadd.f32 %v69, 1e-05
  %v74 = vadd.f32 %v70, 1e-05
  %v75 = vadd.f32 %v71, 1e-05
  %v76 = vadd.f32 %v72, 1e-05
  %v77 = vrsqrt.pop %v73
  %v78 = vmul.f32 %v77, %v73
  %v79 = vmul.f32 %v78, %v77
  %v80 = vmul.f32 0.5, %v79
  %v81 = vsub.f32 1.5, %v80
  %v82 = vmul.f32 %v77, %v81
  %vm83 = vweird.f32 %v73
  %vm84 = vweird.f32 %v77
  %vm85 = vmor %vm83, %vm84
  %v86 = vsel %vm85, %v77, %v82
  %v87 = vrsqrt.pop %v74
  %v88 = vmul.f32 %v87, %v74
  %v89 = vmul.f32 %v88, %v87
  %v90 = vmul.f32 0.5, %v89
  %v91 = vsub.f32 1.5, %v90
  %v92 = vmul.f32 %v87, %v91
  %vm93 = vweird.f32 %v74
  %vm94 = vweird.f32 %v87
  %vm95 = vmor %vm93, %vm94
  %v96 = vsel %vm95, %v87, %v92
  %v97 = vrsqrt.pop %v75
  %v98 = vmul.f32 %v97, %v75
  %v99 = vmul.f32 %v98, %v97
  %v100 = vmul.f32 0.5, %v99
  %v101 = vsub.f32 1.5, %v100
  %v102 = vmul.f32 %v97, %v101
  %vm103 = vweird.f32 %v75
  %vm104 = vweird.f32 %v97
  %vm105 = vmor %vm103, %vm104
  %v106 = vsel %vm105, %v97, %v102
  %v107 = vrsqrt.pop %v76
  %v108 = vmul.f32 %v107, %v76
  %v109 = vmul.f32 %v108, %v107
  %v110 = vmul.f32 0.5, %v109
  %v111 = vsub.f32 1.5, %v110
  %v112 = vmul.f32 %v107, %v111
  %vm113 = vweird.f32 %v76
  %vm114 = vweird.f32 %v107
  %vm115 = vmor %vm113, %vm114
  %v116 = vsel %vm115, %v107, %v112
  %v117 = vmul.f32 %v49, %v86
  %v118 = vmul.f32 %v50, %v96
  %v119 = vmul.f32 %v51, %v106
  %v120 = vmul.f32 %v52, %v116
  %v121 = vld [vmem:[%s1] sm:$0x1]
  %v123 = vperm.slane %v121, 0
  %v125 = vmul.f32 %v117, %v123
  %v126 = vmul.f32 %v118, %v123
  %v127 = vmul.f32 %v119, %v123
  %v128 = vmul.f32 %v120, %v123
  %v129 = vld [vmem:[%s2] sm:$0x1]
  %v131 = vperm.slane %v129, 0
  %v133 = vadd.f32 %v125, %v131
  %v134 = vadd.f32 %v126, %v131
  %v135 = vadd.f32 %v127, %v131
  %v136 = vadd.f32 %v128, %v131
  %v137 = vpack.c.bf16 %v134, %v133
  %v138 = vpack.c.bf16 %v136, %v135
  %v139 = vld [vmem:[%s3] sm:$0xff]
  %v140 = vld [vmem:[%s3 + $0x8] sm:$0xff]
  %v141 = vld [vmem:[%s3 + $0x10] sm:$0xff]
  %v142 = vld [vmem:[%s3 + $0x18] sm:$0xff]
  %v143 = vld [vmem:[%s3 + $0x20] sm:$0xff]
  %v144 = vld [vmem:[%s3 + $0x28] sm:$0xff]
  %v145 = vld [vmem:[%s3 + $0x30] sm:$0xff]
  %v146 = vld [vmem:[%s3 + $0x38] sm:$0xff]
  %v147 = vld [vmem:[%s4] sm:$0x3]
  %v149 = vperm.slane %v147, 0
  %v150 = vperm.slane %v147, 1
  %v161 = vunpack.c.l.b16 %v139
  %v162 = vunpack.c.h.b16 %v139
  %v163 = vunpack.c.l.b16 %v140
  %v164 = vunpack.c.h.b16 %v140
  %v165 = vunpack.c.l.b16 %v141
  %v166 = vunpack.c.h.b16 %v141
  %v167 = vunpack.c.l.b16 %v142
  %v168 = vunpack.c.h.b16 %v142
  %v169 = vunpack.c.l.b16 %v143
  %v170 = vunpack.c.h.b16 %v143
  %v171 = vunpack.c.l.b16 %v144
  %v172 = vunpack.c.h.b16 %v144
  %v173 = vunpack.c.l.b16 %v145
  %v174 = vunpack.c.h.b16 %v145
  %v175 = vunpack.c.l.b16 %v146
  %v176 = vunpack.c.h.b16 %v146
  %v177 = vpack.c.b16 %v163, %v161
  %v178 = vpack.c.b16 %v164, %v162
  %v179 = vpack.c.b16 %v167, %v165
  %v180 = vpack.c.b16 %v168, %v166
  %v181 = vpack.c.b16 %v171, %v169
  %v182 = vpack.c.b16 %v172, %v170
  %v183 = vpack.c.b16 %v175, %v173
  %v184 = vpack.c.b16 %v176, %v174
  %v194 = vsel %vm25, %v137, 0
  %v197 = vsel %vm25, %v138, 0
  %199 = vmatpush.bf16.msra.mxu0 0
  %200 = vmatpush.bf16.msra.mxu0 0
  %201 = vmatpush.bf16.msra.mxu0 0
  %202 = vmatpush.bf16.msra.mxu0 0
  %203 = vmatpush.bf16.msra.mxu0 %v183
  %204 = vmatpush.bf16.msra.mxu0 %v181
  %205 = vmatpush.bf16.msra.mxu0 %v179
  %206 = vmatpush.bf16.msra.mxu0 %v177
  %207 = vmatmul.bf16.gmra.mxu0 %v194
  %v208 = vpop.f32.mrf.mxu0
  %v209 = vadd.f32 %v149, %v208
  %v210 = vpop.f32.mrf.mxu0
  %v211 = vadd.f32 %v149, %v210
  %212 = vmatmul.bf16.gmra.mxu0 %v197
  %v213 = vpop.f32.mrf.mxu0
  %v214 = vadd.f32 %v149, %v213
  %v215 = vpop.f32.mrf.mxu0
  %v216 = vadd.f32 %v149, %v215
  %217 = vdwg.mxu0
  %218 = vmatpush.bf16.msra.mxu0 0
  %219 = vmatpush.bf16.msra.mxu0 0
  %220 = vmatpush.bf16.msra.mxu0 0
  %221 = vmatpush.bf16.msra.mxu0 0
  %222 = vmatpush.bf16.msra.mxu0 %v184
  %223 = vmatpush.bf16.msra.mxu0 %v182
  %224 = vmatpush.bf16.msra.mxu0 %v180
  %225 = vmatpush.bf16.msra.mxu0 %v178
  %226 = vmatmul.bf16.gmra.mxu0 %v194
  %v227 = vpop.f32.mrf.mxu0
  %v228 = vadd.f32 %v150, %v227
  %v229 = vpop.f32.mrf.mxu0
  %v230 = vadd.f32 %v150, %v229
  %231 = vmatmul.bf16.gmra.mxu0 %v197
  %v232 = vpop.f32.mrf.mxu0
  %v233 = vadd.f32 %v150, %v232
  %v234 = vpop.f32.mrf.mxu0
  %v235 = vadd.f32 %v150, %v234
  %236 = vdwg.mxu0
  %237 = vst [vmem:[%s5] sm:$0xff] %v209
  %238 = vst [vmem:[%s5 + $0x8] sm:$0xff] %v228
  %239 = vst [vmem:[%s5 + $0x10] sm:$0xff] %v211
  %240 = vst [vmem:[%s5 + $0x18] sm:$0xff] %v230
  %241 = vst [vmem:[%s5 + $0x20] sm:$0xff] %v214
  %242 = vst [vmem:[%s5 + $0x28] sm:$0xff] %v233
  %243 = vst [vmem:[%s5 + $0x30] sm:$0xff] %v216
  %244 = vst [vmem:[%s5 + $0x38] sm:$0xff] %v235
  // Predicated region
  $region22: #{_lambda_.28} parent=0 // pred_check
    _
  $region23: #{_lambda_.28} parent=0 // pred_check_branch
    %246 = sbr.rel (0) target = $region25
  $region24: #{_lambda_.28} parent=0 // pred_region
    _
  $region25: #{_lambda_.28} parent=0 // pred_fallthru
    _
  // Predicated region
  $region26: #{_lambda_.28} parent=0 // pred_check
    _
  $region27: #{_lambda_.28} parent=0 // pred_check_branch
    %248 = sbr.rel (0) target = $region29
  $region28: #{_lambda_.28} parent=0 // pred_region
    _
  $region29: #{_lambda_.28} parent=0 // pred_fallthru
    _

// kernel: _lambda_.29
$region0: #{_lambda_.29}
  #allocation0 [shape = 'u32[]', space=smem, size = 0x4, offset = 0x4, fixed_abs, tag = 'smem constant byte address 0x4 - core index']
  #allocation1 [shape = 'u32[72,128]{1,0:T(1,128)}', space=vmem, size = 0x9000, scoped, tag = 'internal scratch']
  %s0 = inlined_call_operand.vmem [shape: bf16[4,16,32], index: 0, kind: input, shape index: {}]
  %s1 = inlined_call_operand.vmem [shape: bf16[4,16,32], index: 1, kind: input, shape index: {}]
  %s2 = inlined_call_operand.vmem [shape: bf16[4,16,32], index: 2, kind: input, shape index: {}]
  %s3 = inlined_call_operand.vmem [shape: f32[4,16,32], index: 3, kind: output, shape index: {}]
  %s4 = sld [smem:[#allocation0]]
  $region22: #{_lambda_.29} parent=0
    _
  %s6 = ssub.s32 1, %s4
  %s7 = scalar_select 0, %s6, %s4
  // Predicated region
  $region2: #{_lambda_.29} parent=0 // pred_check
    _
  $region3: #{_lambda_.29} parent=0 // pred_check_branch
    %9 = sbr.rel (0) target = $region5
  $region4: #{_lambda_.29} parent=0 // pred_region
    _
  $region5: #{_lambda_.29} parent=0 // pred_fallthru
    _
  // Predicated region
  $region6: #{_lambda_.29} parent=0 // pred_check
    _
  $region7: #{_lambda_.29} parent=0 // pred_check_branch
    %11 = sbr.rel (0) target = $region9
  $region8: #{_lambda_.29} parent=0 // pred_region
    _
  $region9: #{_lambda_.29} parent=0 // pred_fallthru
    _
  // Predicated region
  $region10: #{_lambda_.29} parent=0 // pred_check
    _
  $region11: #{_lambda_.29} parent=0 // pred_check_branch
    %13 = sbr.rel (0) target = $region13
  $region12: #{_lambda_.29} parent=0 // pred_region
    _
  $region13: #{_lambda_.29} parent=0 // pred_fallthru
    _
  %v15 = vld [vmem:[%s0] sm:$0xf]
  %v16 = vld [vmem:[%s0 + $0x4] sm:$0xf]
  %v17 = vld [vmem:[%s0 + $0x8] sm:$0xf]
  %v18 = vld [vmem:[%s0 + $0xc] sm:$0xf]
  %v19 = vld [vmem:[%s0 + $0x10] sm:$0xf]
  %v20 = vld [vmem:[%s0 + $0x14] sm:$0xf]
  %v21 = vld [vmem:[%s0 + $0x18] sm:$0xf]
  %v22 = vld [vmem:[%s0 + $0x1c] sm:$0xf]
  %v23 = vld [vmem:[%s1] sm:$0xf]
  %v24 = vld [vmem:[%s1 + $0x4] sm:$0xf]
  %v25 = vld [vmem:[%s1 + $0x8] sm:$0xf]
  %v26 = vld [vmem:[%s1 + $0xc] sm:$0xf]
  %v27 = vld [vmem:[%s1 + $0x10] sm:$0xf]
  %v28 = vld [vmem:[%s1 + $0x14] sm:$0xf]
  %v29 = vld [vmem:[%s1 + $0x18] sm:$0xf]
  %v30 = vld [vmem:[%s1 + $0x1c] sm:$0xf]
  %v31 = vld [vmem:[%s2] sm:$0xf]
  %v32 = vld [vmem:[%s2 + $0x4] sm:$0xf]
  %v33 = vld [vmem:[%s2 + $0x8] sm:$0xf]
  %v34 = vld [vmem:[%s2 + $0xc] sm:$0xf]
  %v35 = vld [vmem:[%s2 + $0x10] sm:$0xf]
  %v36 = vld [vmem:[%s2 + $0x14] sm:$0xf]
  %v37 = vld [vmem:[%s2 + $0x18] sm:$0xf]
  %v38 = vld [vmem:[%s2 + $0x1c] sm:$0xf]
  %v41 = vunpack.c.l.b16 %v15
  %v42 = vunpack.c.l.b16 %v16
  %v43 = vpack.c.b16 %v42, %v41
  %v46 = vunpack.c.l.b16 %v23
  %v47 = vunpack.c.l.b16 %v24
  %v48 = vpack.c.b16 %v47, %v46
  %vm49 = vcmask 261120
  %v51 = vsel %vm49, %v43, 0
  %v54 = vsel %vm49, %v48, 0
  %56 = vmatpush.bf16.xpose.msra.mxu0 0
  %57 = vmatpush.bf16.xpose.msra.mxu0 0
  %58 = vmatpush.bf16.xpose.msra.mxu0 0
  %59 = vmatpush.bf16.xpose.msra.mxu0 0
  %60 = vmatpush.bf16.xpose.msra.mxu0 0
  %61 = vmatpush.bf16.xpose.msra.mxu0 0
  %62 = vmatpush.bf16.xpose.msra.mxu0 0
  %63 = vmatpush.bf16.xpose.msra.mxu0 %v54
  %64 = vmatmul.bf16.gmra.mxu0 %v51
  %v65 = vpop.f32.mrf.mxu0
  %v66 = vadd.f32 0.0, %v65
  %v67 = vpop.f32.mrf.mxu0
  %v68 = vadd.f32 0.0, %v67
  %69 = vdwg.mxu0
  %v72 = vunpack.c.l.b16 %v17
  %v73 = vunpack.c.l.b16 %v18
  %v74 = vpack.c.b16 %v73, %v72
  %v77 = vunpack.c.l.b16 %v25
  %v78 = vunpack.c.l.b16 %v26
  %v79 = vpack.c.b16 %v78, %v77
  %v81 = vsel %vm49, %v74, 0
  %v84 = vsel %vm49, %v79, 0
  %86 = vmatpush.bf16.xpose.msra.mxu0 0
  %87 = vmatpush.bf16.xpose.msra.mxu0 0
  %88 = vmatpush.bf16.xpose.msra.mxu0 0
  %89 = vmatpush.bf16.xpose.msra.mxu0 0
  %90 = vmatpush.bf16.xpose.msra.mxu0 0
  %91 = vmatpush.bf16.xpose.msra.mxu0 0
  %92 = vmatpush.bf16.xpose.msra.mxu0 0
  %93 = vmatpush.bf16.xpose.msra.mxu0 %v84
  %94 = vmatmul.bf16.gmra.mxu0 %v81
  %v95 = vpop.f32.mrf.mxu0
  %v96 = vadd.f32 0.0, %v95
  %v97 = vpop.f32.mrf.mxu0
  %v98 = vadd.f32 0.0, %v97
  %99 = vdwg.mxu0
  %v102 = vunpack.c.l.b16 %v19
  %v103 = vunpack.c.l.b16 %v20
  %v104 = vpack.c.b16 %v103, %v102
  %v107 = vunpack.c.l.b16 %v27
  %v108 = vunpack.c.l.b16 %v28
  %v109 = vpack.c.b16 %v108, %v107
  %v111 = vsel %vm49, %v104, 0
  %v114 = vsel %vm49, %v109, 0
  %116 = vmatpush.bf16.xpose.msra.mxu0 0
  %117 = vmatpush.bf16.xpose.msra.mxu0 0
  %118 = vmatpush.bf16.xpose.msra.mxu0 0
  %119 = vmatpush.bf16.xpose.msra.mxu0 0
  %120 = vmatpush.bf16.xpose.msra.mxu0 0
  %121 = vmatpush.bf16.xpose.msra.mxu0 0
  %122 = vmatpush.bf16.xpose.msra.mxu0 0
  %123 = vmatpush.bf16.xpose.msra.mxu0 %v114
  %124 = vmatmul.bf16.gmra.mxu0 %v111
  %v125 = vpop.f32.mrf.mxu0
  %v126 = vadd.f32 0.0, %v125
  %v127 = vpop.f32.mrf.mxu0
  %v128 = vadd.f32 0.0, %v127
  %129 = vdwg.mxu0
  %v132 = vunpack.c.l.b16 %v21
  %v133 = vunpack.c.l.b16 %v22
  %v134 = vpack.c.b16 %v133, %v132
  %v137 = vunpack.c.l.b16 %v29
  %v138 = vunpack.c.l.b16 %v30
  %v139 = vpack.c.b16 %v138, %v137
  %v141 = vsel %vm49, %v134, 0
  %v144 = vsel %vm49, %v139, 0
  %146 = vmatpush.bf16.xpose.msra.mxu0 0
  %147 = vmatpush.bf16.xpose.msra.mxu0 0
  %148 = vmatpush.bf16.xpose.msra.mxu0 0
  %149 = vmatpush.bf16.xpose.msra.mxu0 0
  %150 = vmatpush.bf16.xpose.msra.mxu0 0
  %151 = vmatpush.bf16.xpose.msra.mxu0 0
  %152 = vmatpush.bf16.xpose.msra.mxu0 0
  %153 = vmatpush.bf16.xpose.msra.mxu0 %v144
  %154 = vmatmul.bf16.gmra.mxu0 %v141
  %v155 = vpop.f32.mrf.mxu0
  %v156 = vadd.f32 0.0, %v155
  %v157 = vpop.f32.mrf.mxu0
  %v158 = vadd.f32 0.0, %v157
  %159 = vdwg.mxu0
  %v160 = vmul.f32 %v66, 0.17677669
  %v161 = vmul.f32 %v68, 0.17677669
  %v162 = vmul.f32 %v96, 0.17677669
  %v163 = vmul.f32 %v98, 0.17677669
  %v164 = vmul.f32 %v126, 0.17677669
  %v165 = vmul.f32 %v128, 0.17677669
  %v166 = vmul.f32 %v156, 0.17677669
  %v167 = vmul.f32 %v158, 0.17677669
  %vm168 = vcmask 130048
  %v169 = vsel %vm168, %v160, -inf
  %170 = vmax.xlane.f32.xlu0 %v169
  %v171 = vpop.xlane.xlu0 %170
  %v172 = vsel %vm168, %v161, -inf
  %173 = vmax.xlane.f32.xlu0 %v172
  %v174 = vpop.xlane.xlu0 %173
  %v175 = vsel %vm168, %v162, -inf
  %176 = vmax.xlane.f32.xlu0 %v175
  %v177 = vpop.xlane.xlu0 %176
  %v178 = vsel %vm168, %v163, -inf
  %179 = vmax.xlane.f32.xlu0 %v178
  %v180 = vpop.xlane.xlu0 %179
  %v181 = vsel %vm168, %v164, -inf
  %182 = vmax.xlane.f32.xlu0 %v181
  %v183 = vpop.xlane.xlu0 %182
  %v184 = vsel %vm168, %v165, -inf
  %185 = vmax.xlane.f32.xlu0 %v184
  %v186 = vpop.xlane.xlu0 %185
  %v187 = vsel %vm168, %v166, -inf
  %188 = vmax.xlane.f32.xlu0 %v187
  %v189 = vpop.xlane.xlu0 %188
  %v190 = vsel %vm168, %v167, -inf
  %191 = vmax.xlane.f32.xlu0 %v190
  %v192 = vpop.xlane.xlu0 %191
  %v193 = vsub.f32 %v160, %v171
  %v194 = vsub.f32 %v161, %v174
  %v195 = vsub.f32 %v162, %v177
  %v196 = vsub.f32 %v163, %v180
  %v197 = vsub.f32 %v164, %v183
  %v198 = vsub.f32 %v165, %v186
  %v199 = vsub.f32 %v166, %v189
  %v200 = vsub.f32 %v167, %v192
  %v201 = vmul.f32 %v193, 1.442695
  %v202 = vpow.pop %v201
  %v203 = vmul.f32 %v194, 1.442695
  %v204 = vpow.pop %v203
  %v205 = vmul.f32 %v195, 1.442695
  %v206 = vpow.pop %v205
  %v207 = vmul.f32 %v196, 1.442695
  %v208 = vpow.pop %v207
  %v209 = vmul.f32 %v197, 1.442695
  %v210 = vpow.pop %v209
  %v211 = vmul.f32 %v198, 1.442695
  %v212 = vpow.pop %v211
  %v213 = vmul.f32 %v199, 1.442695
  %v214 = vpow.pop %v213
  %v215 = vmul.f32 %v200, 1.442695
  %v216 = vpow.pop %v215
  %v217 = vsel %vm168, %v202, 0.0
  %218 = vadd.xlane.f32.xlu0 %v217
  %v219 = vpop.xlane.xlu0 %218
  %v220 = vsel %vm168, %v204, 0.0
  %221 = vadd.xlane.f32.xlu0 %v220
  %v222 = vpop.xlane.xlu0 %221
  %v223 = vsel %vm168, %v206, 0.0
  %224 = vadd.xlane.f32.xlu0 %v223
  %v225 = vpop.xlane.xlu0 %224
  %v226 = vsel %vm168, %v208, 0.0
  %227 = vadd.xlane.f32.xlu0 %v226
  %v228 = vpop.xlane.xlu0 %227
  %v229 = vsel %vm168, %v210, 0.0
  %230 = vadd.xlane.f32.xlu0 %v229
  %v231 = vpop.xlane.xlu0 %230
  %v232 = vsel %vm168, %v212, 0.0
  %233 = vadd.xlane.f32.xlu0 %v232
  %v234 = vpop.xlane.xlu0 %233
  %v235 = vsel %vm168, %v214, 0.0
  %236 = vadd.xlane.f32.xlu0 %v235
  %v237 = vpop.xlane.xlu0 %236
  %v238 = vsel %vm168, %v216, 0.0
  %239 = vadd.xlane.f32.xlu0 %v238
  %v240 = vpop.xlane.xlu0 %239
  %v241 = vrcp.pop %v219
  %v242 = vmul.f32 %v219, %v241
  %v243 = vsub.f32 1.0, %v242
  %v244 = vmul.f32 %v241, %v243
  %v245 = vadd.f32 %v241, %v244
  %vm246 = vweird.f32 %v219
  %vm247 = vweird.f32 %v241
  %vm248 = vmor %vm246, %vm247
  %v249 = vsel %vm248, %v241, %v245
  %v250 = vand.u32 2147483647, %v219
  %vm251 = vcmp.eq.f32.partialorder %v250, 8.507059e+37
  %v252 = vand.u32 %v219, 2147483648
  %v253 = vor.u32 1.1754944e-38, %v252
  %v254 = vsel %vm251, %v253, %v249
  %v255 = vmul.f32 %v202, %v254
  %v256 = vrcp.pop %v222
  %v257 = vmul.f32 %v222, %v256
  %v258 = vsub.f32 1.0, %v257
  %v259 = vmul.f32 %v256, %v258
  %v260 = vadd.f32 %v256, %v259
  %vm261 = vweird.f32 %v222
  %vm262 = vweird.f32 %v256
  %vm263 = vmor %vm261, %vm262
  %v264 = vsel %vm263, %v256, %v260
  %v265 = vand.u32 2147483647, %v222
  %vm266 = vcmp.eq.f32.partialorder %v265, 8.507059e+37
  %v267 = vand.u32 %v222, 2147483648
  %v268 = vor.u32 1.1754944e-38, %v267
  %v269 = vsel %vm266, %v268, %v264
  %v270 = vmul.f32 %v204, %v269
  %v271 = vrcp.pop %v225
  %v272 = vmul.f32 %v225, %v271
  %v273 = vsub.f32 1.0, %v272
  %v274 = vmul.f32 %v271, %v273
  %v275 = vadd.f32 %v271, %v274
  %vm276 = vweird.f32 %v225
  %vm277 = vweird.f32 %v271
  %vm278 = vmor %vm276, %vm277
  %v279 = vsel %vm278, %v271, %v275
  %v280 = vand.u32 2147483647, %v225
  %vm281 = vcmp.eq.f32.partialorder %v280, 8.507059e+37
  %v282 = vand.u32 %v225, 2147483648
  %v283 = vor.u32 1.1754944e-38, %v282
  %v284 = vsel %vm281, %v283, %v279
  %v285 = vmul.f32 %v206, %v284
  %v286 = vrcp.pop %v228
  %v287 = vmul.f32 %v228, %v286
  %v288 = vsub.f32 1.0, %v287
  %v289 = vmul.f32 %v286, %v288
  %v290 = vadd.f32 %v286, %v289
  %vm291 = vweird.f32 %v228
  %vm292 = vweird.f32 %v286
  %vm293 = vmor %vm291, %vm292
  %v294 = vsel %vm293, %v286, %v290
  %v295 = vand.u32 2147483647, %v228
  %vm296 = vcmp.eq.f32.partialorder %v295, 8.507059e+37
  %v297 = vand.u32 %v228, 2147483648
  %v298 = vor.u32 1.1754944e-38, %v297
  %v299 = vsel %vm296, %v298, %v294
  %v300 = vmul.f32 %v208, %v299
  %v301 = vrcp.pop %v231
  %v302 = vmul.f32 %v231, %v301
  %v303 = vsub.f32 1.0, %v302
  %v304 = vmul.f32 %v301, %v303
  %v305 = vadd.f32 %v301, %v304
  %vm306 = vweird.f32 %v231
  %vm307 = vweird.f32 %v301
  %vm308 = vmor %vm306, %vm307
  %v309 = vsel %vm308, %v301, %v305
  %v310 = vand.u32 2147483647, %v231
  %vm311 = vcmp.eq.f32.partialorder %v310, 8.507059e+37
  %v312 = vand.u32 %v231, 2147483648
  %v313 = vor.u32 1.1754944e-38, %v312
  %v314 = vsel %vm311, %v313, %v309
  %v315 = vmul.f32 %v210, %v314
  %v316 = vrcp.pop %v234
  %v317 = vmul.f32 %v234, %v316
  %v318 = vsub.f32 1.0, %v317
  %v319 = vmul.f32 %v316, %v318
  %v320 = vadd.f32 %v316, %v319
  %vm321 = vweird.f32 %v234
  %vm322 = vweird.f32 %v316
  %vm323 = vmor %vm321, %vm322
  %v324 = vsel %vm323, %v316, %v320
  %v325 = vand.u32 2147483647, %v234
  %vm326 = vcmp.eq.f32.partialorder %v325, 8.507059e+37
  %v327 = vand.u32 %v234, 2147483648
  %v328 = vor.u32 1.1754944e-38, %v327
  %v329 = vsel %vm326, %v328, %v324
  %v330 = vmul.f32 %v212, %v329
  %v331 = vrcp.pop %v237
  %v332 = vmul.f32 %v237, %v331
  %v333 = vsub.f32 1.0, %v332
  %v334 = vmul.f32 %v331, %v333
  %v335 = vadd.f32 %v331, %v334
  %vm336 = vweird.f32 %v237
  %vm337 = vweird.f32 %v331
  %vm338 = vmor %vm336, %vm337
  %v339 = vsel %vm338, %v331, %v335
  %v340 = vand.u32 2147483647, %v237
  %vm341 = vcmp.eq.f32.partialorder %v340, 8.507059e+37
  %v342 = vand.u32 %v237, 2147483648
  %v343 = vor.u32 1.1754944e-38, %v342
  %v344 = vsel %vm341, %v343, %v339
  %v345 = vmul.f32 %v214, %v344
  %v346 = vrcp.pop %v240
  %v347 = vmul.f32 %v240, %v346
  %v348 = vsub.f32 1.0, %v347
  %v349 = vmul.f32 %v346, %v348
  %v350 = vadd.f32 %v346, %v349
  %vm351 = vweird.f32 %v240
  %vm352 = vweird.f32 %v346
  %vm353 = vmor %vm351, %vm352
  %v354 = vsel %vm353, %v346, %v350
  %v355 = vand.u32 2147483647, %v240
  %vm356 = vcmp.eq.f32.partialorder %v355, 8.507059e+37
  %v357 = vand.u32 %v240, 2147483648
  %v358 = vor.u32 1.1754944e-38, %v357
  %v359 = vsel %vm356, %v358, %v354
  %v360 = vmul.f32 %v216, %v359
  %v361 = vpack.c.bf16 %v255, %v255
  %v362 = vpack.c.bf16 %v270, %v270
  %v363 = vpack.c.bf16 %v285, %v285
  %v364 = vpack.c.bf16 %v300, %v300
  %v365 = vpack.c.bf16 %v315, %v315
  %v366 = vpack.c.bf16 %v330, %v330
  %v367 = vpack.c.bf16 %v345, %v345
  %v368 = vpack.c.bf16 %v360, %v360
  %v371 = vunpack.c.l.b16 %v361
  %v372 = vunpack.c.l.b16 %v362
  %v373 = vpack.c.b16 %v372, %v371
  %v376 = vunpack.c.l.b16 %v31
  %v377 = vunpack.c.l.b16 %v32
  %v378 = vpack.c.b16 %v377, %v376
  %v381 = vsel %vm168, %v373, 0
  %383 = vmatpush.bf16.msra.mxu0 0
  %384 = vmatpush.bf16.msra.mxu0 0
  %385 = vmatpush.bf16.msra.mxu0 0
  %386 = vmatpush.bf16.msra.mxu0 0
  %387 = vmatpush.bf16.msra.mxu0 0
  %388 = vmatpush.bf16.msra.mxu0 0
  %389 = vmatpush.bf16.msra.mxu0 0
  %390 = vmatpush.bf16.msra.mxu0 %v378
  %391 = vmatmul.bf16.gmra.mxu0 %v381
  %v392 = vpop.f32.mrf.mxu0
  %v393 = vadd.f32 0.0, %v392
  %v394 = vpop.f32.mrf.mxu0
  %v395 = vadd.f32 0.0, %v394
  %396 = vdwg.mxu0
  %v399 = vunpack.c.l.b16 %v363
  %v400 = vunpack.c.l.b16 %v364
  %v401 = vpack.c.b16 %v400, %v399
  %v404 = vunpack.c.l.b16 %v33
  %v405 = vunpack.c.l.b16 %v34
  %v406 = vpack.c.b16 %v405, %v404
  %v409 = vsel %vm168, %v401, 0
  %411 = vmatpush.bf16.msra.mxu0 0
  %412 = vmatpush.bf16.msra.mxu0 0
  %413 = vmatpush.bf16.msra.mxu0 0
  %414 = vmatpush.bf16.msra.mxu0 0
  %415 = vmatpush.bf16.msra.mxu0 0
  %416 = vmatpush.bf16.msra.mxu0 0
  %417 = vmatpush.bf16.msra.mxu0 0
  %418 = vmatpush.bf16.msra.mxu0 %v406
  %419 = vmatmul.bf16.gmra.mxu0 %v409
  %v420 = vpop.f32.mrf.mxu0
  %v421 = vadd.f32 0.0, %v420
  %v422 = vpop.f32.mrf.mxu0
  %v423 = vadd.f32 0.0, %v422
  %424 = vdwg.mxu0
  %v427 = vunpack.c.l.b16 %v365
  %v428 = vunpack.c.l.b16 %v366
  %v429 = vpack.c.b16 %v428, %v427
  %v432 = vunpack.c.l.b16 %v35
  %v433 = vunpack.c.l.b16 %v36
  %v434 = vpack.c.b16 %v433, %v432
  %v437 = vsel %vm168, %v429, 0
  %439 = vmatpush.bf16.msra.mxu0 0
  %440 = vmatpush.bf16.msra.mxu0 0
  %441 = vmatpush.bf16.msra.mxu0 0
  %442 = vmatpush.bf16.msra.mxu0 0
  %443 = vmatpush.bf16.msra.mxu0 0
  %444 = vmatpush.bf16.msra.mxu0 0
  %445 = vmatpush.bf16.msra.mxu0 0
  %446 = vmatpush.bf16.msra.mxu0 %v434
  %447 = vmatmul.bf16.gmra.mxu0 %v437
  %v448 = vpop.f32.mrf.mxu0
  %v449 = vadd.f32 0.0, %v448
  %v450 = vpop.f32.mrf.mxu0
  %v451 = vadd.f32 0.0, %v450
  %452 = vdwg.mxu0
  %v455 = vunpack.c.l.b16 %v367
  %v456 = vunpack.c.l.b16 %v368
  %v457 = vpack.c.b16 %v456, %v455
  %v460 = vunpack.c.l.b16 %v37
  %v461 = vunpack.c.l.b16 %v38
  %v462 = vpack.c.b16 %v461, %v460
  %v465 = vsel %vm168, %v457, 0
  %467 = vmatpush.bf16.msra.mxu0 0
  %468 = vmatpush.bf16.msra.mxu0 0
  %469 = vmatpush.bf16.msra.mxu0 0
  %470 = vmatpush.bf16.msra.mxu0 0
  %471 = vmatpush.bf16.msra.mxu0 0
  %472 = vmatpush.bf16.msra.mxu0 0
  %473 = vmatpush.bf16.msra.mxu0 0
  %474 = vmatpush.bf16.msra.mxu0 %v462
  %475 = vmatmul.bf16.gmra.mxu0 %v465
  %v476 = vpop.f32.mrf.mxu0
  %v477 = vadd.f32 0.0, %v476
  %v478 = vpop.f32.mrf.mxu0
  %v479 = vadd.f32 0.0, %v478
  %480 = vdwg.mxu0
  %481 = vst.msk [vmem:[%s3] sm:$0xff] %vm49, %v393
  %482 = vst.msk [vmem:[%s3 + $0x8] sm:$0xff] %vm49, %v395
  %483 = vst.msk [vmem:[%s3 + $0x10] sm:$0xff] %vm49, %v421
  %484 = vst.msk [vmem:[%s3 + $0x18] sm:$0xff] %vm49, %v423
  %485 = vst.msk [vmem:[%s3 + $0x20] sm:$0xff] %vm49, %v449
  %486 = vst.msk [vmem:[%s3 + $0x28] sm:$0xff] %vm49, %v451
  %487 = vst.msk [vmem:[%s3 + $0x30] sm:$0xff] %vm49, %v477
  %488 = vst.msk [vmem:[%s3 + $0x38] sm:$0xff] %vm49, %v479
  // Predicated region
  $region14: #{_lambda_.29} parent=0 // pred_check
    _
  $region15: #{_lambda_.29} parent=0 // pred_check_branch
    %490 = sbr.rel (0) target = $region17
  $region16: #{_lambda_.29} parent=0 // pred_region
    _
  $region17: #{_lambda_.29} parent=0 // pred_fallthru
    _
  // Predicated region
  $region18: #{_lambda_.29} parent=0 // pred_check
    _
  $region19: #{_lambda_.29} parent=0 // pred_check_branch
    %492 = sbr.rel (0) target = $region21
  $region20: #{_lambda_.29} parent=0 // pred_region
    _
  $region21: #{_lambda_.29} parent=0 // pred_fallthru
    _

// kernel: _lambda_.30
$region0: #{_lambda_.30}
  #allocation0 [shape = 'u32[]', space=smem, size = 0x4, offset = 0x4, fixed_abs, tag = 'smem constant byte address 0x4 - core index']
  #allocation1 [shape = 'u32[72,128]{1,0:T(1,128)}', space=vmem, size = 0x9000, scoped, tag = 'internal scratch']
  %s0 = inlined_call_operand.vmem [shape: bf16[32,64], index: 0, kind: input, shape index: {}]
  %s1 = inlined_call_operand.vmem [shape: bf16[64,128], index: 1, kind: input, shape index: {}]
  %s2 = inlined_call_operand.vmem [shape: f32[1,128], index: 2, kind: input, shape index: {}]
  %s3 = inlined_call_operand.vmem [shape: f32[32,128], index: 3, kind: output, shape index: {}]
  %s4 = sld [smem:[#allocation0]]
  $region22: #{_lambda_.30} parent=0
    _
  %s6 = ssub.s32 1, %s4
  %s7 = scalar_select 0, %s6, %s4
  // Predicated region
  $region2: #{_lambda_.30} parent=0 // pred_check
    _
  $region3: #{_lambda_.30} parent=0 // pred_check_branch
    %9 = sbr.rel (0) target = $region5
  $region4: #{_lambda_.30} parent=0 // pred_region
    _
  $region5: #{_lambda_.30} parent=0 // pred_fallthru
    _
  // Predicated region
  $region6: #{_lambda_.30} parent=0 // pred_check
    _
  $region7: #{_lambda_.30} parent=0 // pred_check_branch
    %11 = sbr.rel (0) target = $region9
  $region8: #{_lambda_.30} parent=0 // pred_region
    _
  $region9: #{_lambda_.30} parent=0 // pred_fallthru
    _
  // Predicated region
  $region10: #{_lambda_.30} parent=0 // pred_check
    _
  $region11: #{_lambda_.30} parent=0 // pred_check_branch
    %13 = sbr.rel (0) target = $region13
  $region12: #{_lambda_.30} parent=0 // pred_region
    _
  $region13: #{_lambda_.30} parent=0 // pred_fallthru
    _
  %v15 = vld [vmem:[%s0] sm:$0xf]
  %v16 = vld [vmem:[%s0 + $0x4] sm:$0xf]
  %v17 = vld [vmem:[%s0 + $0x8] sm:$0xf]
  %v18 = vld [vmem:[%s0 + $0xc] sm:$0xf]
  %v19 = vld [vmem:[%s1] sm:$0xf]
  %v20 = vld [vmem:[%s1 + $0x4] sm:$0xf]
  %v21 = vld [vmem:[%s1 + $0x8] sm:$0xf]
  %v22 = vld [vmem:[%s1 + $0xc] sm:$0xf]
  %v23 = vld [vmem:[%s1 + $0x10] sm:$0xf]
  %v24 = vld [vmem:[%s1 + $0x14] sm:$0xf]
  %v25 = vld [vmem:[%s1 + $0x18] sm:$0xf]
  %v26 = vld [vmem:[%s1 + $0x1c] sm:$0xf]
  %v27 = vld [vmem:[%s2] sm:$0x1]
  %v29 = vperm.slane %v27, 0
  %v35 = vunpack.c.l.b16 %v15
  %v36 = vunpack.c.l.b16 %v16
  %v37 = vunpack.c.l.b16 %v17
  %v38 = vunpack.c.l.b16 %v18
  %v39 = vpack.c.b16 %v36, %v35
  %v40 = vpack.c.b16 %v38, %v37
  %v49 = vunpack.c.l.b16 %v19
  %v50 = vunpack.c.l.b16 %v20
  %v51 = vunpack.c.l.b16 %v21
  %v52 = vunpack.c.l.b16 %v22
  %v53 = vunpack.c.l.b16 %v23
  %v54 = vunpack.c.l.b16 %v24
  %v55 = vunpack.c.l.b16 %v25
  %v56 = vunpack.c.l.b16 %v26
  %v57 = vpack.c.b16 %v50, %v49
  %v58 = vpack.c.b16 %v52, %v51
  %v59 = vpack.c.b16 %v54, %v53
  %v60 = vpack.c.b16 %v56, %v55
  %vm65 = vcmask 523264
  %v67 = vsel %vm65, %v39, 0
  %v70 = vsel %vm65, %v40, 0
  %72 = vmatpush.bf16.msra.mxu0 0
  %73 = vmatpush.bf16.msra.mxu0 0
  %74 = vmatpush.bf16.msra.mxu0 0
  %75 = vmatpush.bf16.msra.mxu0 0
  %76 = vmatpush.bf16.msra.mxu0 %v60
  %77 = vmatpush.bf16.msra.mxu0 %v59
  %78 = vmatpush.bf16.msra.mxu0 %v58
  %79 = vmatpush.bf16.msra.mxu0 %v57
  %80 = vmatmul.bf16.gmra.mxu0 %v67
  %v81 = vpop.f32.mrf.mxu0
  %v82 = vadd.f32 %v29, %v81
  %v83 = vpop.f32.mrf.mxu0
  %v84 = vadd.f32 %v29, %v83
  %85 = vmatmul.bf16.gmra.mxu0 %v70
  %v86 = vpop.f32.mrf.mxu0
  %v87 = vadd.f32 %v29, %v86
  %v88 = vpop.f32.mrf.mxu0
  %v89 = vadd.f32 %v29, %v88
  %90 = vdwg.mxu0
  %91 = vst [vmem:[%s3] sm:$0xff] %v82
  %92 = vst [vmem:[%s3 + $0x8] sm:$0xff] %v84
  %93 = vst [vmem:[%s3 + $0x10] sm:$0xff] %v87
  %94 = vst [vmem:[%s3 + $0x18] sm:$0xff] %v89
  // Predicated region
  $region14: #{_lambda_.30} parent=0 // pred_check
    _
  $region15: #{_lambda_.30} parent=0 // pred_check_branch
    %96 = sbr.rel (0) target = $region17
  $region16: #{_lambda_.30} parent=0 // pred_region
    _
  $region17: #{_lambda_.30} parent=0 // pred_fallthru
    _
  // Predicated region
  $region18: #{_lambda_.30} parent=0 // pred_check
    _
  $region19: #{_lambda_.30} parent=0 // pred_check_branch
    %98 = sbr.rel (0) target = $region21
  $region20: #{_lambda_.30} parent=0 // pred_region
    _
  $region21: #{_lambda_.30} parent=0 // pred_fallthru
    _

// kernel: _lambda_.31
$region0: #{_lambda_.31}
  #allocation0 [shape = 'u32[]', space=smem, size = 0x4, offset = 0x4, fixed_abs, tag = 'smem constant byte address 0x4 - core index']
  #allocation1 [shape = 'u32[72,128]{1,0:T(1,128)}', space=vmem, size = 0x9000, scoped, tag = 'internal scratch']
  %s0 = inlined_call_operand.vmem [shape: f32[32,64], index: 0, kind: input, shape index: {}]
  %s1 = inlined_call_operand.vmem [shape: f32[1,64], index: 1, kind: input, shape index: {}]
  %s2 = inlined_call_operand.vmem [shape: f32[1,64], index: 2, kind: input, shape index: {}]
  %s3 = inlined_call_operand.vmem [shape: bf16[64,128], index: 3, kind: input, shape index: {}]
  %s4 = inlined_call_operand.vmem [shape: f32[1,128], index: 4, kind: input, shape index: {}]
  %s5 = inlined_call_operand.vmem [shape: f32[32,128], index: 5, kind: output, shape index: {}]
  %s6 = sld [smem:[#allocation0]]
  $region30: #{_lambda_.31} parent=0
    _
  %s8 = ssub.s32 1, %s6
  %s9 = scalar_select 0, %s8, %s6
  // Predicated region
  $region2: #{_lambda_.31} parent=0 // pred_check
    _
  $region3: #{_lambda_.31} parent=0 // pred_check_branch
    %11 = sbr.rel (0) target = $region5
  $region4: #{_lambda_.31} parent=0 // pred_region
    _
  $region5: #{_lambda_.31} parent=0 // pred_fallthru
    _
  // Predicated region
  $region6: #{_lambda_.31} parent=0 // pred_check
    _
  $region7: #{_lambda_.31} parent=0 // pred_check_branch
    %13 = sbr.rel (0) target = $region9
  $region8: #{_lambda_.31} parent=0 // pred_region
    _
  $region9: #{_lambda_.31} parent=0 // pred_fallthru
    _
  // Predicated region
  $region10: #{_lambda_.31} parent=0 // pred_check
    _
  $region11: #{_lambda_.31} parent=0 // pred_check_branch
    %15 = sbr.rel (0) target = $region13
  $region12: #{_lambda_.31} parent=0 // pred_region
    _
  $region13: #{_lambda_.31} parent=0 // pred_fallthru
    _
  // Predicated region
  $region14: #{_lambda_.31} parent=0 // pred_check
    _
  $region15: #{_lambda_.31} parent=0 // pred_check_branch
    %17 = sbr.rel (0) target = $region17
  $region16: #{_lambda_.31} parent=0 // pred_region
    _
  $region17: #{_lambda_.31} parent=0 // pred_fallthru
    _
  // Predicated region
  $region18: #{_lambda_.31} parent=0 // pred_check
    _
  $region19: #{_lambda_.31} parent=0 // pred_check_branch
    %19 = sbr.rel (0) target = $region21
  $region20: #{_lambda_.31} parent=0 // pred_region
    _
  $region21: #{_lambda_.31} parent=0 // pred_fallthru
    _
  %v21 = vld [vmem:[%s0] sm:$0xff]
  %v22 = vld [vmem:[%s0 + $0x8] sm:$0xff]
  %v23 = vld [vmem:[%s0 + $0x10] sm:$0xff]
  %v24 = vld [vmem:[%s0 + $0x18] sm:$0xff]
  %vm25 = vcmask 523264
  %v26 = vsel %vm25, %v21, 0.0
  %27 = vadd.xlane.f32.xlu0 %v26
  %v28 = vpop.xlane.xlu0 %27
  %v29 = vsel %vm25, %v22, 0.0
  %30 = vadd.xlane.f32.xlu0 %v29
  %v31 = vpop.xlane.xlu0 %30
  %v32 = vsel %vm25, %v23, 0.0
  %33 = vadd.xlane.f32.xlu0 %v32
  %v34 = vpop.xlane.xlu0 %33
  %v35 = vsel %vm25, %v24, 0.0
  %36 = vadd.xlane.f32.xlu0 %v35
  %v37 = vpop.xlane.xlu0 %36
  %v38 = vrcp.pop 64.0
  %v39 = vmul.f32 64.0, %v38
  %v40 = vsub.f32 1.0, %v39
  %v41 = vmul.f32 %v38, %v40
  %v42 = vadd.f32 %v38, %v41
  %vm43 = vweird.f32 %v38
  %v44 = vsel %vm43, %v38, %v42
  %v45 = vmul.f32 %v28, %v44
  %v46 = vmul.f32 %v31, %v44
  %v47 = vmul.f32 %v34, %v44
  %v48 = vmul.f32 %v37, %v44
  %v49 = vsub.f32 %v21, %v45
  %v50 = vsub.f32 %v22, %v46
  %v51 = vsub.f32 %v23, %v47
  %v52 = vsub.f32 %v24, %v48
  %v53 = vmul.f32 %v49, %v49
  %v54 = vmul.f32 %v50, %v50
  %v55 = vmul.f32 %v51, %v51
  %v56 = vmul.f32 %v52, %v52
  %v57 = vsel %vm25, %v53, 0.0
  %58 = vadd.xlane.f32.xlu0 %v57
  %v59 = vpop.xlane.xlu0 %58
  %v60 = vsel %vm25, %v54, 0.0
  %61 = vadd.xlane.f32.xlu0 %v60
  %v62 = vpop.xlane.xlu0 %61
  %v63 = vsel %vm25, %v55, 0.0
  %64 = vadd.xlane.f32.xlu0 %v63
  %v65 = vpop.xlane.xlu0 %64
  %v66 = vsel %vm25, %v56, 0.0
  %67 = vadd.xlane.f32.xlu0 %v66
  %v68 = vpop.xlane.xlu0 %67
  %v69 = vmul.f32 %v59, %v44
  %v70 = vmul.f32 %v62, %v44
  %v71 = vmul.f32 %v65, %v44
  %v72 = vmul.f32 %v68, %v44
  %v73 = vadd.f32 %v69, 1e-05
  %v74 = vadd.f32 %v70, 1e-05
  %v75 = vadd.f32 %v71, 1e-05
  %v76 = vadd.f32 %v72, 1e-05
  %v77 = vrsqrt.pop %v73
  %v78 = vmul.f32 %v77, %v73
  %v79 = vmul.f32 %v78, %v77
  %v80 = vmul.f32 0.5, %v79
  %v81 = vsub.f32 1.5, %v80
  %v82 = vmul.f32 %v77, %v81
  %vm83 = vweird.f32 %v73
  %vm84 = vweird.f32 %v77
  %vm85 = vmor %vm83, %vm84
  %v86 = vsel %vm85, %v77, %v82
  %v87 = vrsqrt.pop %v74
  %v88 = vmul.f32 %v87, %v74
  %v89 = vmul.f32 %v88, %v87
  %v90 = vmul.f32 0.5, %v89
  %v91 = vsub.f32 1.5, %v90
  %v92 = vmul.f32 %v87, %v91
  %vm93 = vweird.f32 %v74
  %vm94 = vweird.f32 %v87
  %vm95 = vmor %vm93, %vm94
  %v96 = vsel %vm95, %v87, %v92
  %v97 = vrsqrt.pop %v75
  %v98 = vmul.f32 %v97, %v75
  %v99 = vmul.f32 %v98, %v97
  %v100 = vmul.f32 0.5, %v99
  %v101 = vsub.f32 1.5, %v100
  %v102 = vmul.f32 %v97, %v101
  %vm103 = vweird.f32 %v75
  %vm104 = vweird.f32 %v97
  %vm105 = vmor %vm103, %vm104
  %v106 = vsel %vm105, %v97, %v102
  %v107 = vrsqrt.pop %v76
  %v108 = vmul.f32 %v107, %v76
  %v109 = vmul.f32 %v108, %v107
  %v110 = vmul.f32 0.5, %v109
  %v111 = vsub.f32 1.5, %v110
  %v112 = vmul.f32 %v107, %v111
  %vm113 = vweird.f32 %v76
  %vm114 = vweird.f32 %v107
  %vm115 = vmor %vm113, %vm114
  %v116 = vsel %vm115, %v107, %v112
  %v117 = vmul.f32 %v49, %v86
  %v118 = vmul.f32 %v50, %v96
  %v119 = vmul.f32 %v51, %v106
  %v120 = vmul.f32 %v52, %v116
  %v121 = vld [vmem:[%s1] sm:$0x1]
  %v123 = vperm.slane %v121, 0
  %v125 = vmul.f32 %v117, %v123
  %v126 = vmul.f32 %v118, %v123
  %v127 = vmul.f32 %v119, %v123
  %v128 = vmul.f32 %v120, %v123
  %v129 = vld [vmem:[%s2] sm:$0x1]
  %v131 = vperm.slane %v129, 0
  %v133 = vadd.f32 %v125, %v131
  %v134 = vadd.f32 %v126, %v131
  %v135 = vadd.f32 %v127, %v131
  %v136 = vadd.f32 %v128, %v131
  %v137 = vpack.c.bf16 %v134, %v133
  %v138 = vpack.c.bf16 %v136, %v135
  %v139 = vld [vmem:[%s3] sm:$0xf]
  %v140 = vld [vmem:[%s3 + $0x4] sm:$0xf]
  %v141 = vld [vmem:[%s3 + $0x8] sm:$0xf]
  %v142 = vld [vmem:[%s3 + $0xc] sm:$0xf]
  %v143 = vld [vmem:[%s3 + $0x10] sm:$0xf]
  %v144 = vld [vmem:[%s3 + $0x14] sm:$0xf]
  %v145 = vld [vmem:[%s3 + $0x18] sm:$0xf]
  %v146 = vld [vmem:[%s3 + $0x1c] sm:$0xf]
  %v147 = vld [vmem:[%s4] sm:$0x1]
  %v149 = vperm.slane %v147, 0
  %v159 = vunpack.c.l.b16 %v139
  %v160 = vunpack.c.l.b16 %v140
  %v161 = vunpack.c.l.b16 %v141
  %v162 = vunpack.c.l.b16 %v142
  %v163 = vunpack.c.l.b16 %v143
  %v164 = vunpack.c.l.b16 %v144
  %v165 = vunpack.c.l.b16 %v145
  %v166 = vunpack.c.l.b16 %v146
  %v167 = vpack.c.b16 %v160, %v159
  %v168 = vpack.c.b16 %v162, %v161
  %v169 = vpack.c.b16 %v164, %v163
  %v170 = vpack.c.b16 %v166, %v165
  %v176 = vsel %vm25, %v137, 0
  %v179 = vsel %vm25, %v138, 0
  %181 = vmatpush.bf16.msra.mxu0 0
  %182 = vmatpush.bf16.msra.mxu0 0
  %183 = vmatpush.bf16.msra.mxu0 0
  %184 = vmatpush.bf16.msra.mxu0 0
  %185 = vmatpush.bf16.msra.mxu0 %v170
  %186 = vmatpush.bf16.msra.mxu0 %v169
  %187 = vmatpush.bf16.msra.mxu0 %v168
  %188 = vmatpush.bf16.msra.mxu0 %v167
  %189 = vmatmul.bf16.gmra.mxu0 %v176
  %v190 = vpop.f32.mrf.mxu0
  %v191 = vadd.f32 %v149, %v190
  %v192 = vpop.f32.mrf.mxu0
  %v193 = vadd.f32 %v149, %v192
  %194 = vmatmul.bf16.gmra.mxu0 %v179
  %v195 = vpop.f32.mrf.mxu0
  %v196 = vadd.f32 %v149, %v195
  %v197 = vpop.f32.mrf.mxu0
  %v198 = vadd.f32 %v149, %v197
  %199 = vdwg.mxu0
  %v200 = vmul.f32 %v191, 0.5
  %v201 = vmul.f32 %v193, 0.5
  %v202 = vmul.f32 %v196, 0.5
  %v203 = vmul.f32 %v198, 0.5
  %v204 = vmul.f32 %v191, 0.70710677
  %v205 = vmul.f32 %v193, 0.70710677
  %v206 = vmul.f32 %v196, 0.70710677
  %v207 = vmul.f32 %v198, 0.70710677
  %v208 = vand.u32 2147483647, %v204
  %v209 = vand.u32 2147483647, %v205
  %v210 = vand.u32 2147483647, %v206
  %v211 = vand.u32 2147483647, %v207
  %v212 = vmul.f32 %v208, 0.3275911
  %v213 = vmul.f32 %v209, 0.3275911
  %v214 = vmul.f32 %v210, 0.3275911
  %v215 = vmul.f32 %v211, 0.3275911
  %v216 = vadd.f32 %v212, 1.0
  %v217 = vadd.f32 %v213, 1.0
  %v218 = vadd.f32 %v214, 1.0
  %v219 = vadd.f32 %v215, 1.0
  %v220 = vrcp.pop %v216
  %v221 = vmul.f32 %v216, %v220
  %v222 = vsub.f32 1.0, %v221
  %v223 = vmul.f32 %v220, %v222
  %v224 = vadd.f32 %v220, %v223
  %vm225 = vweird.f32 %v216
  %vm226 = vweird.f32 %v220
  %vm227 = vmor %vm225, %vm226
  %v228 = vsel %vm227, %v220, %v224
  %v229 = vand.u32 2147483647, %v216
  %vm230 = vcmp.eq.f32.partialorder %v229, 8.507059e+37
  %v231 = vand.u32 %v216, 2147483648
  %v232 = vor.u32 1.1754944e-38, %v231
  %v233 = vsel %vm230, %v232, %v228
  %v234 = vmul.f32 1.0, %v233
  %v235 = vrcp.pop %v217
  %v236 = vmul.f32 %v217, %v235
  %v237 = vsub.f32 1.0, %v236
  %v238 = vmul.f32 %v235, %v237
  %v239 = vadd.f32 %v235, %v238
  %vm240 = vweird.f32 %v217
  %vm241 = vweird.f32 %v235
  %vm242 = vmor %vm240, %vm241
  %v243 = vsel %vm242, %v235, %v239
  %v244 = vand.u32 2147483647, %v217
  %vm245 = vcmp.eq.f32.partialorder %v244, 8.507059e+37
  %v246 = vand.u32 %v217, 2147483648
  %v247 = vor.u32 1.1754944e-38, %v246
  %v248 = vsel %vm245, %v247, %v243
  %v249 = vmul.f32 1.0, %v248
  %v250 = vrcp.pop %v218
  %v251 = vmul.f32 %v218, %v250
  %v252 = vsub.f32 1.0, %v251
  %v253 = vmul.f32 %v250, %v252
  %v254 = vadd.f32 %v250, %v253
  %vm255 = vweird.f32 %v218
  %vm256 = vweird.f32 %v250
  %vm257 = vmor %vm255, %vm256
  %v258 = vsel %vm257, %v250, %v254
  %v259 = vand.u32 2147483647, %v218
  %vm260 = vcmp.eq.f32.partialorder %v259, 8.507059e+37
  %v261 = vand.u32 %v218, 2147483648
  %v262 = vor.u32 1.1754944e-38, %v261
  %v263 = vsel %vm260, %v262, %v258
  %v264 = vmul.f32 1.0, %v263
  %v265 = vrcp.pop %v219
  %v266 = vmul.f32 %v219, %v265
  %v267 = vsub.f32 1.0, %v266
  %v268 = vmul.f32 %v265, %v267
  %v269 = vadd.f32 %v265, %v268
  %vm270 = vweird.f32 %v219
  %vm271 = vweird.f32 %v265
  %vm272 = vmor %vm270, %vm271
  %v273 = vsel %vm272, %v265, %v269
  %v274 = vand.u32 2147483647, %v219
  %vm275 = vcmp.eq.f32.partialorder %v274, 8.507059e+37
  %v276 = vand.u32 %v219, 2147483648
  %v277 = vor.u32 1.1754944e-38, %v276
  %v278 = vsel %vm275, %v277, %v273
  %v279 = vmul.f32 1.0, %v278
  %v280 = vmul.f32 %v234, 1.0614054
  %v281 = vmul.f32 %v249, 1.0614054
  %v282 = vmul.f32 %v264, 1.0614054
  %v283 = vmul.f32 %v279, 1.0614054
  %v284 = vadd.f32 %v280, -1.4531521
  %v285 = vadd.f32 %v281, -1.4531521
  %v286 = vadd.f32 %v282, -1.4531521
  %v287 = vadd.f32 %v283, -1.4531521
  %v288 = vmul.f32 %v284, %v234
  %v289 = vmul.f32 %v285, %v249
  %v290 = vmul.f32 %v286, %v264
  %v291 = vmul.f32 %v287, %v279
  %v292 = vadd.f32 %v288, 1.4214138
  %v293 = vadd.f32 %v289, 1.4214138
  %v294 = vadd.f32 %v290, 1.4214138
  %v295 = vadd.f32 %v291, 1.4214138
  %v296 = vmul.f32 %v292, %v234
  %v297 = vmul.f32 %v293, %v249
  %v298 = vmul.f32 %v294, %v264
  %v299 = vmul.f32 %v295, %v279
  %v300 = vadd.f32 %v296, -0.28449672
  %v301 = vadd.f32 %v297, -0.28449672
  %v302 = vadd.f32 %v298, -0.28449672
  %v303 = vadd.f32 %v299, -0.28449672
  %v304 = vmul.f32 %v300, %v234
  %v305 = vmul.f32 %v301, %v249
  %v306 = vmul.f32 %v302, %v264
  %v307 = vmul.f32 %v303, %v279
  %v308 = vadd.f32 %v304, 0.2548296
  %v309 = vadd.f32 %v305, 0.2548296
  %v310 = vadd.f32 %v306, 0.2548296
  %v311 = vadd.f32 %v307, 0.2548296
  %v312 = vmul.f32 %v308, %v234
  %v313 = vmul.f32 %v309, %v249
  %v314 = vmul.f32 %v310, %v264
  %v315 = vmul.f32 %v311, %v279
  %v316 = vsub.f32 0.0, %v208
  %v317 = vsub.f32 0.0, %v209
  %v318 = vsub.f32 0.0, %v210
  %v319 = vsub.f32 0.0, %v211
  %v320 = vmul.f32 %v316, %v208
  %v321 = vmul.f32 %v317, %v209
  %v322 = vmul.f32 %v318, %v210
  %v323 = vmul.f32 %v319, %v211
  %v324 = vmul.f32 %v320, 1.442695
  %v325 = vpow.pop %v324
  %v326 = vmul.f32 %v321, 1.442695
  %v327 = vpow.pop %v326
  %v328 = vmul.f32 %v322, 1.442695
  %v329 = vpow.pop %v328
  %v330 = vmul.f32 %v323, 1.442695
  %v331 = vpow.pop %v330
  %v332 = vmul.f32 %v312, %v325
  %v333 = vmul.f32 %v313, %v327
  %v334 = vmul.f32 %v314, %v329
  %v335 = vmul.f32 %v315, %v331
  %v336 = vsub.f32 1.0, %v332
  %v337 = vsub.f32 1.0, %v333
  %v338 = vsub.f32 1.0, %v334
  %v339 = vsub.f32 1.0, %v335
  %vm340 = vcmp.ge.f32.partialorder %v204, 0.0
  %vm341 = vcmp.ge.f32.partialorder %v205, 0.0
  %vm342 = vcmp.ge.f32.partialorder %v206, 0.0
  %vm343 = vcmp.ge.f32.partialorder %v207, 0.0
  %v344 = vsub.f32 0.0, %v336
  %v345 = vsub.f32 0.0, %v337
  %v346 = vsub.f32 0.0, %v338
  %v347 = vsub.f32 0.0, %v339
  %v348 = vsel %vm340, %v336, %v344
  %v349 = vsel %vm341, %v337, %v345
  %v350 = vsel %vm342, %v338, %v346
  %v351 = vsel %vm343, %v339, %v347
  %v352 = vadd.f32 %v348, 1.0
  %v353 = vadd.f32 %v349, 1.0
  %v354 = vadd.f32 %v350, 1.0
  %v355 = vadd.f32 %v351, 1.0
  %v356 = vmul.f32 %v200, %v352
  %v357 = vmul.f32 %v201, %v353
  %v358 = vmul.f32 %v202, %v354
  %v359 = vmul.f32 %v203, %v355
  %360 = vst [vmem:[%s5] sm:$0xff] %v356
  %361 = vst [vmem:[%s5 + $0x8] sm:$0xff] %v357
  %362 = vst [vmem:[%s5 + $0x10] sm:$0xff] %v358
  %363 = vst [vmem:[%s5 + $0x18] sm:$0xff] %v359
  // Predicated region
  $region22: #{_lambda_.31} parent=0 // pred_check
    _
  $region23: #{_lambda_.31} parent=0 // pred_check_branch
    %365 = sbr.rel (0) target = $region25
  $region24: #{_lambda_.31} parent=0 // pred_region
    _
  $region25: #{_lambda_.31} parent=0 // pred_fallthru
    _
  // Predicated region
  $region26: #{_lambda_.31} parent=0 // pred_check
    _
  $region27: #{_lambda_.31} parent=0 // pred_check_branch
    %367 = sbr.rel (0) target = $region29
  $region28: #{_lambda_.31} parent=0 // pred_region
    _
  $region29: #{_lambda_.31} parent=0 // pred_fallthru
    _

// kernel: _lambda_.33
$region0: #{_lambda_.33}
  #allocation0 [shape = 'u32[]', space=smem, size = 0x4, offset = 0x4, fixed_abs, tag = 'smem constant byte address 0x4 - core index']
  #allocation1 [shape = 'u32[72,128]{1,0:T(1,128)}', space=vmem, size = 0x9000, scoped, tag = 'internal scratch']
  %s0 = inlined_call_operand.vmem [shape: f32[32,64], index: 0, kind: input, shape index: {}]
  %s1 = inlined_call_operand.vmem [shape: f32[1,64], index: 1, kind: input, shape index: {}]
  %s2 = inlined_call_operand.vmem [shape: f32[1,64], index: 2, kind: input, shape index: {}]
  %s3 = inlined_call_operand.hbm [shape: f32[32,64], index: 3, kind: output, shape index: {}]
  %s4 = sld [smem:[#allocation0]]
  $region22: #{_lambda_.33} parent=0
    _
  %s6 = ssub.s32 1, %s4
  %s7 = scalar_select 0, %s6, %s4
  $region1: #{_lambda_.33} parent=0
    #allocation2 [shape = 'u8[16384]{0}', space=vmem, size = 0x4000, scoped, tag = 'output window, operand 0, single buffered']
    #allocation3 [shape = 's32[1]{0}', space=sflag, size = 0x4, scoped, tag = 'scoped memory for _lambda_.33']
    %8 = vsyncpa [#allocation3], 0
    // Predicated region
    $region2: #{_lambda_.33} parent=1 // pred_check
      _
    $region3: #{_lambda_.33} parent=1 // pred_check_branch
      %10 = sbr.rel (0) target = $region5
    $region4: #{_lambda_.33} parent=1 // pred_region
      _
    $region5: #{_lambda_.33} parent=1 // pred_fallthru
      _
    // Predicated region
    $region6: #{_lambda_.33} parent=1 // pred_check
      _
    $region7: #{_lambda_.33} parent=1 // pred_check_branch
      %12 = sbr.rel (0) target = $region9
    $region8: #{_lambda_.33} parent=1 // pred_region
      _
    $region9: #{_lambda_.33} parent=1 // pred_fallthru
      _
    // Predicated region
    $region10: #{_lambda_.33} parent=1 // pred_check
      _
    $region11: #{_lambda_.33} parent=1 // pred_check_branch
      %14 = sbr.rel (0) target = $region13
    $region12: #{_lambda_.33} parent=1 // pred_region
      _
    $region13: #{_lambda_.33} parent=1 // pred_fallthru
      _
    %v15 = vld [vmem:[%s0] sm:$0xff]
    %v16 = vld [vmem:[%s0 + $0x8] sm:$0xff]
    %v17 = vld [vmem:[%s0 + $0x10] sm:$0xff]
    %v18 = vld [vmem:[%s0 + $0x18] sm:$0xff]
    %vm19 = vcmask 523264
    %v20 = vsel %vm19, %v15, 0.0
    %21 = vadd.xlane.f32.xlu0 %v20
    %v22 = vpop.xlane.xlu0 %21
    %v23 = vsel %vm19, %v16, 0.0
    %24 = vadd.xlane.f32.xlu0 %v23
    %v25 = vpop.xlane.xlu0 %24
    %v26 = vsel %vm19, %v17, 0.0
    %27 = vadd.xlane.f32.xlu0 %v26
    %v28 = vpop.xlane.xlu0 %27
    %v29 = vsel %vm19, %v18, 0.0
    %30 = vadd.xlane.f32.xlu0 %v29
    %v31 = vpop.xlane.xlu0 %30
    %v32 = vrcp.pop 64.0
    %v33 = vmul.f32 64.0, %v32
    %v34 = vsub.f32 1.0, %v33
    %v35 = vmul.f32 %v32, %v34
    %v36 = vadd.f32 %v32, %v35
    %vm37 = vweird.f32 %v32
    %v38 = vsel %vm37, %v32, %v36
    %v39 = vmul.f32 %v22, %v38
    %v40 = vmul.f32 %v25, %v38
    %v41 = vmul.f32 %v28, %v38
    %v42 = vmul.f32 %v31, %v38
    %v43 = vsub.f32 %v15, %v39
    %v44 = vsub.f32 %v16, %v40
    %v45 = vsub.f32 %v17, %v41
    %v46 = vsub.f32 %v18, %v42
    %v47 = vmul.f32 %v43, %v43
    %v48 = vmul.f32 %v44, %v44
    %v49 = vmul.f32 %v45, %v45
    %v50 = vmul.f32 %v46, %v46
    %v51 = vsel %vm19, %v47, 0.0
    %52 = vadd.xlane.f32.xlu0 %v51
    %v53 = vpop.xlane.xlu0 %52
    %v54 = vsel %vm19, %v48, 0.0
    %55 = vadd.xlane.f32.xlu0 %v54
    %v56 = vpop.xlane.xlu0 %55
    %v57 = vsel %vm19, %v49, 0.0
    %58 = vadd.xlane.f32.xlu0 %v57
    %v59 = vpop.xlane.xlu0 %58
    %v60 = vsel %vm19, %v50, 0.0
    %61 = vadd.xlane.f32.xlu0 %v60
    %v62 = vpop.xlane.xlu0 %61
    %v63 = vmul.f32 %v53, %v38
    %v64 = vmul.f32 %v56, %v38
    %v65 = vmul.f32 %v59, %v38
    %v66 = vmul.f32 %v62, %v38
    %v67 = vadd.f32 %v63, 1e-05
    %v68 = vadd.f32 %v64, 1e-05
    %v69 = vadd.f32 %v65, 1e-05
    %v70 = vadd.f32 %v66, 1e-05
    %v71 = vrsqrt.pop %v67
    %v72 = vmul.f32 %v71, %v67
    %v73 = vmul.f32 %v72, %v71
    %v74 = vmul.f32 0.5, %v73
    %v75 = vsub.f32 1.5, %v74
    %v76 = vmul.f32 %v71, %v75
    %vm77 = vweird.f32 %v67
    %vm78 = vweird.f32 %v71
    %vm79 = vmor %vm77, %vm78
    %v80 = vsel %vm79, %v71, %v76
    %v81 = vrsqrt.pop %v68
    %v82 = vmul.f32 %v81, %v68
    %v83 = vmul.f32 %v82, %v81
    %v84 = vmul.f32 0.5, %v83
    %v85 = vsub.f32 1.5, %v84
    %v86 = vmul.f32 %v81, %v85
    %vm87 = vweird.f32 %v68
    %vm88 = vweird.f32 %v81
    %vm89 = vmor %vm87, %vm88
    %v90 = vsel %vm89, %v81, %v86
    %v91 = vrsqrt.pop %v69
    %v92 = vmul.f32 %v91, %v69
    %v93 = vmul.f32 %v92, %v91
    %v94 = vmul.f32 0.5, %v93
    %v95 = vsub.f32 1.5, %v94
    %v96 = vmul.f32 %v91, %v95
    %vm97 = vweird.f32 %v69
    %vm98 = vweird.f32 %v91
    %vm99 = vmor %vm97, %vm98
    %v100 = vsel %vm99, %v91, %v96
    %v101 = vrsqrt.pop %v70
    %v102 = vmul.f32 %v101, %v70
    %v103 = vmul.f32 %v102, %v101
    %v104 = vmul.f32 0.5, %v103
    %v105 = vsub.f32 1.5, %v104
    %v106 = vmul.f32 %v101, %v105
    %vm107 = vweird.f32 %v70
    %vm108 = vweird.f32 %v101
    %vm109 = vmor %vm107, %vm108
    %v110 = vsel %vm109, %v101, %v106
    %v111 = vmul.f32 %v43, %v80
    %v112 = vmul.f32 %v44, %v90
    %v113 = vmul.f32 %v45, %v100
    %v114 = vmul.f32 %v46, %v110
    %v115 = vld [vmem:[%s1] sm:$0x1]
    %v117 = vperm.slane %v115, 0
    %v119 = vmul.f32 %v111, %v117
    %v120 = vmul.f32 %v112, %v117
    %v121 = vmul.f32 %v113, %v117
    %v122 = vmul.f32 %v114, %v117
    %v123 = vld [vmem:[%s2] sm:$0x1]
    %v125 = vperm.slane %v123, 0
    %v127 = vadd.f32 %v119, %v125
    %v128 = vadd.f32 %v120, %v125
    %v129 = vadd.f32 %v121, %v125
    %v130 = vadd.f32 %v122, %v125
    %131 = vst.msk [vmem:[#allocation2] sm:$0xff] %vm19, %v127
    %132 = vst.msk [vmem:[#allocation2 + $0x8] sm:$0xff] %vm19, %v128
    %133 = vst.msk [vmem:[#allocation2 + $0x10] sm:$0xff] %vm19, %v129
    %134 = vst.msk [vmem:[#allocation2 + $0x18] sm:$0xff] %vm19, %v130
    // Predicated region
    $region14: #{_lambda_.33} parent=1 // pred_check
      _
    $region15: #{_lambda_.33} parent=1 // pred_check_branch
      %136 = sbr.rel (0) target = $region17
    $region16: #{_lambda_.33} parent=1 // pred_region
      %138 = vsyncadd [#allocation3], 0
      %s139 = sshll.u32 [#allocation2], 4
      %s140 = int_to_ptr.vmem [resolvable:$true] %s139
      %s141 = sshll.u32 %s3, 4
      %s142 = int_to_ptr.hbm [resolvable:$true] %s141
      %147 = dma.vmem_to_hbm [thread:$0]  %s140, 512, %s142, [#allocation3], 128, 128, 8
    $region17: #{_lambda_.33} parent=1 // pred_fallthru
      _
    // Predicated region
    $region18: #{_lambda_.33} parent=1 // pred_check
      _
    $region19: #{_lambda_.33} parent=1 // pred_check_branch
      %149 = sbr.rel (0) target = $region21
    $region20: #{_lambda_.33} parent=1 // pred_region
      %151 = dma.done [#allocation3], 512
    $region21: #{_lambda_.33} parent=1 // pred_fallthru
      _
    %152 = vsyncpa [#allocation3], 1

</llo_original>
